<compile_context>
chip_gen: v7x
topology: tpu7x:2x2x1
jax: 0.10.0
libtpu: 0.0.40
codegen_flags: <defaults>
</compile_context>

<pallas_src>
import jax
import jax.numpy as jnp
from jax import lax
from jax.experimental import pallas as pl
from jax.experimental.pallas import tpu as pltpu

EPS = 1e-5  # PyTorch BatchNorm2d default eps


# ---------------------------------------------------------------- kernel ----
def _make_kernel(H, W, Cin, Cout):
    HW = H * W

    def kernel(x_ref, wd1_ref, bd1_ref, wp1_ref, bp1_ref,
               wd2x_ref, bd2x_ref, wd2p_ref, bd2p_ref,
               wp2x_ref, wp2p_ref, bp2_ref,
               w3_ref, b3_ref, o_ref,
               padx, pad12, pad22):

        relu6 = lambda v: jnp.clip(v, 0.0, 6.0)

        def zero_halo(p, C):
            # Interior is fully overwritten every grid step; only the 1-px halo
            # must read as zero ('SAME' padding).  Done every step so the batch
            # axis can be "parallel" (per-core scratch, no step-0 init needed).
            zr = jnp.zeros((1, W + 2, C), jnp.float32)
            zc = jnp.zeros((H + 2, 1, C), jnp.float32)
            p[0:1, :, :] = zr
            p[H + 1:H + 2, :, :] = zr
            p[:, 0:1, :] = zc
            p[:, W + 1:W + 2, :] = zc

        def dw_taps(p, w_ref, C):
            # 3x3 depthwise accumulation on the VPU; halo gives 'SAME' padding.
            acc = jnp.zeros((H, W, C), jnp.float32)
            for ky in range(3):
                for kx in range(3):
                    acc = acc + p[ky:ky + H, kx:kx + W, :] * w_ref[ky, kx]
            return acc

        def mm(a2d, w_ref):
            # MXU matmul, default precision (single bf16 pass, f32 accumulate).
            return jnp.dot(a2d, w_ref[...], preferred_element_type=jnp.float32)

        zero_halo(padx, Cin)
        zero_halo(pad12, Cout)
        zero_halo(pad22, Cout)

        # x goes once into its padded buffer; it is reused by conv11, conv21
        # (first Cin channels of x21) and conv3 (first Cin channels of x31).
        padx[1:H + 1, 1:W + 1, :] = x_ref[0]

        # conv11 (depthwise 3x3 + BN + ReLU6) -> conv12 (1x1 + BN + ReLU6)
        y11 = relu6(dw_taps(padx, wd1_ref, Cin) + bd1_ref[...])
        x12 = relu6(mm(y11.reshape(HW, Cin), wp1_ref) + bp1_ref[...])
        pad12[1:H + 1, 1:W + 1, :] = x12.reshape(H, W, Cout)

        # conv21 depthwise over x21 = [x, x12]: per-channel op, so the two
        # channel groups are computed independently (no concatenate / copy).
        y21x = relu6(dw_taps(padx, wd2x_ref, Cin) + bd2x_ref[...])
        y21p = relu6(dw_taps(pad12, wd2p_ref, Cout) + bd2p_ref[...])
        # conv22 pointwise over x21: contraction split over the two groups.
        x22 = relu6(mm(y21x.reshape(HW, Cin), wp2x_ref)
                    + mm(y21p.reshape(HW, Cout), wp2p_ref) + bp2_ref[...])
        pad22[1:H + 1, 1:W + 1, :] = x22.reshape(H, W, Cout)

        # conv3: one im2col matmul over x31 = [x, x12, x22] (K = 9*C2) instead
        # of 9 per-tap matmuls.  w3 is pre-laid-out host-side as (9*C2, Cout_pad)
        # with rows ordered (ky, kx, x31-channel) to match `pieces` below.
        pieces = []
        for ky in range(3):
            for kx in range(3):
                pieces.append(padx[ky:ky + H, kx:kx + W, :].reshape(HW, Cin))
                pieces.append(pad12[ky:ky + H, kx:kx + W, :].reshape(HW, Cout))
                pieces.append(pad22[ky:ky + H, kx:kx + W, :].reshape(HW, Cout))
        patches = jnp.concatenate(pieces, axis=-1)              # (HW, 9*C2)
        y3 = mm(patches, w3_ref) + b3_ref[...]                  # (HW, Cout_pad)

        # Lane-dense store: transpose the tile-aligned zero-padded result to
        # (Cout_pad, HW), keep the first Cout rows -> last (lane) dim is HW.
        o_ref[0] = jnp.transpose(y3)[0:Cout, :].astype(o_ref.dtype)

    return kernel


# ---------------------------------------------------------------- wrapper ---
def mobilenet_block_pallas(x_nchw, folded):
    x = jnp.transpose(x_nchw, (0, 2, 3, 1)).astype(jnp.float32)  # NCHW -> NHWC
    N, H, W, Cin = x.shape
    Cout = folded['wp1'].shape[1]
    C2 = Cin + 2 * Cout
    HW = H * W
    K3 = 9 * C2
    # Pad the conv3 output-channel dim to a full MXU tile: costs nothing on the
    # MXU and makes the final in-kernel transpose exactly tile-aligned.
    Cout_pad = ((Cout + 127) // 128) * 128

    # conv21/conv22 parameters split along input channels into the x / x12 groups.
    wd2x, wd2p = folded['wd2'][..., :Cin], folded['wd2'][..., Cin:]
    bd2x, bd2p = folded['bd2'][:, :Cin], folded['bd2'][:, Cin:]
    wp2x, wp2p = folded['wp2'][:Cin, :], folded['wp2'][Cin:, :]

    # conv3 weights in im2col layout: (3,3,C2,Cout) -> (9*C2, Cout), zero-padded
    # to Cout_pad output columns; folded bias padded the same way.
    w3p = jnp.zeros((K3, Cout_pad), jnp.float32)
    w3p = w3p.at[:, :Cout].set(folded['w3'].reshape(K3, Cout))
    b3p = jnp.zeros((1, Cout_pad), jnp.float32).at[:, :Cout].set(folded['b3'])

    kernel = _make_kernel(H, W, Cin, Cout)
    grid_spec = pltpu.PrefetchScalarGridSpec(
        num_scalar_prefetch=0,
        grid=(N,),                                   # one image per grid step
        in_specs=[
            pl.BlockSpec((1, H, W, Cin), lambda n: (n, 0, 0, 0)),   # x
            pl.BlockSpec((3, 3, Cin), lambda n: (0, 0, 0)),         # wd1
            pl.BlockSpec((1, Cin), lambda n: (0, 0)),               # bd1
            pl.BlockSpec((Cin, Cout), lambda n: (0, 0)),            # wp1
            pl.BlockSpec((1, Cout), lambda n: (0, 0)),              # bp1
            pl.BlockSpec((3, 3, Cin), lambda n: (0, 0, 0)),         # wd2 (x part)
            pl.BlockSpec((1, Cin), lambda n: (0, 0)),               # bd2 (x part)
            pl.BlockSpec((3, 3, Cout), lambda n: (0, 0, 0)),        # wd2 (x12 part)
            pl.BlockSpec((1, Cout), lambda n: (0, 0)),              # bd2 (x12 part)
            pl.BlockSpec((Cin, Cout), lambda n: (0, 0)),            # wp2 (x part)
            pl.BlockSpec((Cout, Cout), lambda n: (0, 0)),           # wp2 (x12 part)
            pl.BlockSpec((1, Cout), lambda n: (0, 0)),              # bp2
            pl.BlockSpec((K3, Cout_pad), lambda n: (0, 0)),         # w3 (im2col)
            pl.BlockSpec((1, Cout_pad), lambda n: (0, 0)),          # b3
        ],
        out_specs=pl.BlockSpec((1, Cout, HW), lambda n: (n, 0, 0)),
        scratch_shapes=[
            pltpu.VMEM((H + 2, W + 2, Cin), jnp.float32),    # padded x
            pltpu.VMEM((H + 2, W + 2, Cout), jnp.float32),   # padded x12
            pltpu.VMEM((H + 2, W + 2, Cout), jnp.float32),   # padded x22
        ],
    )
    # TODO(synk): at real segmentation resolutions add spatial (row) tiling with
    # a 1-row halo and an explicit vmem_limit_bytes budget (v7x has 64 MiB VMEM).
    out = pl.pallas_call(
        kernel,
        out_shape=jax.ShapeDtypeStruct((N, Cout, HW), jnp.float32),
        grid_spec=grid_spec,
        compiler_params=pltpu.CompilerParams(
            dimension_semantics=("parallel",)),       # v7x: shard batch on 2 TCs
    )(x, folded['wd1'], folded['bd1'], folded['wp1'], folded['bp1'],
      wd2x, bd2x, wd2p, bd2p, wp2x, wp2p, folded['bp2'],
      w3p, b3p)
    # (N, Cout, H*W) is already channel-major: reshape straight to NCHW.
    return out.reshape(N, Cout, H, W)


# ------------------------------------------------------------- parameters ---
def _bn_params(key, C):
    k1, k2, k3, k4 = jax.random.split(key, 4)
    gamma = 1.0 + 0.1 * jax.random.normal(k1, (C,), jnp.float32)
    beta = 0.1 * jax.random.normal(k2, (C,), jnp.float32)
    mean = 0.1 * jax.random.normal(k3, (C,), jnp.float32)
    var = 1.0 + 0.1 * jax.random.uniform(k4, (C,), jnp.float32)
    return gamma, beta, mean, var


def init_raw_params(key, Cin, Cout):
    C1, C2 = Cin + Cout, Cin + 2 * Cout
    ks = jax.random.split(key, 11)
    p = {}
    p['wd1'] = 0.2 * jax.random.normal(ks[0], (3, 3, Cin), jnp.float32)      # torch (Cin,1,3,3)
    p['bn1'] = _bn_params(ks[1], Cin)
    p['wp1'] = 0.2 * jax.random.normal(ks[2], (Cin, Cout), jnp.float32)      # torch (Cout,Cin,1,1)
    p['bn2'] = _bn_params(ks[3], Cout)
    p['wd2'] = 0.2 * jax.random.normal(ks[4], (3, 3, C1), jnp.float32)       # torch (C1,1,3,3)
    p['bn3'] = _bn_params(ks[5], C1)
    p['wp2'] = 0.2 * jax.random.normal(ks[6], (C1, Cout), jnp.float32)       # torch (Cout,C1,1,1)
    p['bn4'] = _bn_params(ks[7], Cout)
    p['w3'] = 0.2 * jax.random.normal(ks[8], (3, 3, C2, Cout), jnp.float32)  # torch (Cout,C2,3,3)
    p['b3'] = 0.1 * jax.random.normal(ks[9], (Cout,), jnp.float32)
    p['bn5'] = _bn_params(ks[10], Cout)
    return p


def fold_params(raw):
    # conv (no bias) + eval-BN  ==  conv with W*scale and bias=shift.
    def fold(gamma, beta, mean, var):
        s = gamma / jnp.sqrt(var + EPS)
        return s, beta - mean * s

    s1, t1 = fold(*raw['bn1'])
    s2, t2 = fold(*raw['bn2'])
    s3, t3 = fold(*raw['bn3'])
    s4, t4 = fold(*raw['bn4'])
    s5, t5 = fold(*raw['bn5'])
    return {
        'wd1': raw['wd1'] * s1, 'bd1': t1[None, :],
        'wp1': raw['wp1'] * s2, 'bp1': t2[None, :],
        'wd2': raw['wd2'] * s3, 'bd2': t3[None, :],
        'wp2': raw['wp2'] * s4, 'bp2': t4[None, :],
        'w3': raw['w3'] * s5, 'b3': (s5 * raw['b3'] + t5)[None, :],
    }


# ---------------------------------------------------------- JAX reference ---
def ref_forward(x_nchw, raw):
    x = jnp.transpose(x_nchw, (0, 2, 3, 1))
    dn = ('NHWC', 'HWIO', 'NHWC')

    def conv(v, w, groups=1):
        return lax.conv_general_dilated(v, w, (1, 1), 'SAME',
                                        dimension_numbers=dn,
                                        feature_group_count=groups,
                                        precision=lax.Precision.HIGHEST)

    def bn(v, params):
        gamma, beta, mean, var = params
        return gamma * (v - mean) / jnp.sqrt(var + EPS) + beta

    relu6 = lambda v: jnp.clip(v, 0.0, 6.0)
    Cin = x.shape[-1]
    y11 = relu6(bn(conv(x, raw['wd1'].reshape(3, 3, 1, Cin), groups=Cin), raw['bn1']))
    x12 = relu6(bn(conv(y11, raw['wp1'][None, None]), raw['bn2']))
    x21 = jnp.concatenate([x, x12], axis=-1)
    C1 = x21.shape[-1]
    y21 = relu6(bn(conv(x21, raw['wd2'].reshape(3, 3, 1, C1), groups=C1), raw['bn3']))
    x22 = relu6(bn(conv(y21, raw['wp2'][None, None]), raw['bn4']))
    x31 = jnp.concatenate([x21, x22], axis=-1)
    out = bn(conv(x31, raw['w3']) + raw['b3'], raw['bn5'])
    return jnp.transpose(out, (0, 3, 1, 2))


# --------------------------------------------------------------------- run --
if __name__ == "__main__":
    key = jax.random.PRNGKey(0)
    kx, kp = jax.random.split(key)
    N, Cin, Cout, H, W = 2, 4, 8, 16, 16
    x = jax.random.normal(kx, (N, Cin, H, W), jnp.float32)   # PyTorch NCHW input

    raw = init_raw_params(kp, Cin, Cout)
    folded = fold_params(raw)

    # TODO(synk): training-mode dropout / batch-stats BN are not implemented
    # (module default dropout=False; BN applied in eval mode).
    out = jax.block_until_ready(mobilenet_block_pallas(x, folded))
    ref = jax.block_until_ready(ref_forward(x, raw))

    assert out.shape == (N, Cout, H, W), out.shape
    err = float(jnp.max(jnp.abs(out - ref)))
    scale = float(jnp.max(jnp.abs(ref))) + 1e-6
    # kernel uses default (single-pass bf16) MXU precision -> relative tolerance
    assert err / scale < 3e-2, f"rel err {err / scale:.4g} (abs {err:.4g}, ref scale {scale:.4g})"
    print("KERNEL_OK")
</pallas_src>

<mosaic_0001>
module attributes {stable_mosaic.version = 11 : i64} {
  func.func @kernel(%arg0: i32, %arg1: memref<1x16x16x4xf32, #tpu.memory_space<vmem>>, %arg2: memref<3x3x4xf32, #tpu.memory_space<vmem>>, %arg3: memref<1x4xf32, #tpu.memory_space<vmem>>, %arg4: memref<4x8xf32, #tpu.memory_space<vmem>>, %arg5: memref<1x8xf32, #tpu.memory_space<vmem>>, %arg6: memref<3x3x4xf32, #tpu.memory_space<vmem>>, %arg7: memref<1x4xf32, #tpu.memory_space<vmem>>, %arg8: memref<3x3x8xf32, #tpu.memory_space<vmem>>, %arg9: memref<1x8xf32, #tpu.memory_space<vmem>>, %arg10: memref<4x8xf32, #tpu.memory_space<vmem>>, %arg11: memref<8x8xf32, #tpu.memory_space<vmem>>, %arg12: memref<1x8xf32, #tpu.memory_space<vmem>>, %arg13: memref<180x128xf32, #tpu.memory_space<vmem>>, %arg14: memref<1x128xf32, #tpu.memory_space<vmem>>, %arg15: memref<1x8x256xf32, #tpu.memory_space<vmem>>, %arg16: memref<18x18x4xf32, #tpu.memory_space<vmem>>, %arg17: memref<18x18x8xf32, #tpu.memory_space<vmem>>, %arg18: memref<18x18x8xf32, #tpu.memory_space<vmem>>) attributes {dimension_semantics = [#tpu.dimension_semantics<parallel>], iteration_bounds = array<i64: 2>, scalar_prefetch = 0 : i64, scratch_operands = 3 : i64, tpu.core_type = #tpu.core_type<tc>, window_params = [{transform_indices = @transform_0, window_bounds = array<i64: 1, 16, 16, 4>}, {pipeline_mode = #tpu.pipeline_mode<synchronous>, transform_indices = @transform_1, window_bounds = array<i64: 3, 3, 4>}, {pipeline_mode = #tpu.pipeline_mode<synchronous>, transform_indices = @transform_2, window_bounds = array<i64: 1, 4>}, {pipeline_mode = #tpu.pipeline_mode<synchronous>, transform_indices = @transform_3, window_bounds = array<i64: 4, 8>}, {pipeline_mode = #tpu.pipeline_mode<synchronous>, transform_indices = @transform_4, window_bounds = array<i64: 1, 8>}, {pipeline_mode = #tpu.pipeline_mode<synchronous>, transform_indices = @transform_5, window_bounds = array<i64: 3, 3, 4>}, {pipeline_mode = #tpu.pipeline_mode<synchronous>, transform_indices = @transform_6, window_bounds = array<i64: 1, 4>}, {pipeline_mode = #tpu.pipeline_mode<synchronous>, transform_indices = @transform_7, window_bounds = array<i64: 3, 3, 8>}, {pipeline_mode = #tpu.pipeline_mode<synchronous>, transform_indices = @transform_8, window_bounds = array<i64: 1, 8>}, {pipeline_mode = #tpu.pipeline_mode<synchronous>, transform_indices = @transform_9, window_bounds = array<i64: 4, 8>}, {pipeline_mode = #tpu.pipeline_mode<synchronous>, transform_indices = @transform_10, window_bounds = array<i64: 8, 8>}, {pipeline_mode = #tpu.pipeline_mode<synchronous>, transform_indices = @transform_11, window_bounds = array<i64: 1, 8>}, {pipeline_mode = #tpu.pipeline_mode<synchronous>, transform_indices = @transform_12, window_bounds = array<i64: 180, 128>}, {pipeline_mode = #tpu.pipeline_mode<synchronous>, transform_indices = @transform_13, window_bounds = array<i64: 1, 128>}, {transform_indices = @transform_14, window_bounds = array<i64: 1, 8, 256>}]} {
    %cst = arith.constant 0.000000e+00 : f32
    %0 = vector.broadcast %cst : f32 to vector<1x18x4xf32>
    %cst_0 = arith.constant 0.000000e+00 : f32
    %1 = vector.broadcast %cst_0 : f32 to vector<18x1x4xf32>
    %c0 = arith.constant 0 : index
    %c0_1 = arith.constant 0 : index
    %c0_2 = arith.constant 0 : index
    %2 = vector.load %arg16[%c0, %c0_1, %c0_2] : memref<18x18x4xf32, #tpu.memory_space<vmem>>, vector<1x18x4xf32>
    tpu.vector_store %arg16[%c0, %c0_1, %c0_2], %0 {strides = array<i32>} : memref<18x18x4xf32, #tpu.memory_space<vmem>>, vector<1x18x4xf32>,
    %c17 = arith.constant 17 : index
    %c0_3 = arith.constant 0 : index
    %c0_4 = arith.constant 0 : index
    %3 = vector.load %arg16[%c17, %c0_3, %c0_4] : memref<18x18x4xf32, #tpu.memory_space<vmem>>, vector<1x18x4xf32>
    tpu.vector_store %arg16[%c17, %c0_3, %c0_4], %0 {strides = array<i32>} : memref<18x18x4xf32, #tpu.memory_space<vmem>>, vector<1x18x4xf32>,
    %c0_5 = arith.constant 0 : index
    %c0_6 = arith.constant 0 : index
    %c0_7 = arith.constant 0 : index
    %4 = vector.load %arg16[%c0_5, %c0_6, %c0_7] : memref<18x18x4xf32, #tpu.memory_space<vmem>>, vector<18x1x4xf32>
    tpu.vector_store %arg16[%c0_5, %c0_6, %c0_7], %1 {strides = array<i32>} : memref<18x18x4xf32, #tpu.memory_space<vmem>>, vector<18x1x4xf32>,
    %c0_8 = arith.constant 0 : index
    %c17_9 = arith.constant 17 : index
    %c0_10 = arith.constant 0 : index
    %5 = vector.load %arg16[%c0_8, %c17_9, %c0_10] : memref<18x18x4xf32, #tpu.memory_space<vmem>>, vector<18x1x4xf32>
    tpu.vector_store %arg16[%c0_8, %c17_9, %c0_10], %1 {strides = array<i32>} : memref<18x18x4xf32, #tpu.memory_space<vmem>>, vector<18x1x4xf32>,
    %cst_11 = arith.constant 0.000000e+00 : f32
    %6 = vector.broadcast %cst_11 : f32 to vector<1x18x8xf32>
    %cst_12 = arith.constant 0.000000e+00 : f32
    %7 = vector.broadcast %cst_12 : f32 to vector<18x1x8xf32>
    %c0_13 = arith.constant 0 : index
    %c0_14 = arith.constant 0 : index
    %c0_15 = arith.constant 0 : index
    %8 = vector.load %arg17[%c0_13, %c0_14, %c0_15] : memref<18x18x8xf32, #tpu.memory_space<vmem>>, vector<1x18x8xf32>
    tpu.vector_store %arg17[%c0_13, %c0_14, %c0_15], %6 {strides = array<i32>} : memref<18x18x8xf32, #tpu.memory_space<vmem>>, vector<1x18x8xf32>,
    %c17_16 = arith.constant 17 : index
    %c0_17 = arith.constant 0 : index
    %c0_18 = arith.constant 0 : index
    %9 = vector.load %arg17[%c17_16, %c0_17, %c0_18] : memref<18x18x8xf32, #tpu.memory_space<vmem>>, vector<1x18x8xf32>
    tpu.vector_store %arg17[%c17_16, %c0_17, %c0_18], %6 {strides = array<i32>} : memref<18x18x8xf32, #tpu.memory_space<vmem>>, vector<1x18x8xf32>,
    %c0_19 = arith.constant 0 : index
    %c0_20 = arith.constant 0 : index
    %c0_21 = arith.constant 0 : index
    %10 = vector.load %arg17[%c0_19, %c0_20, %c0_21] : memref<18x18x8xf32, #tpu.memory_space<vmem>>, vector<18x1x8xf32>
    tpu.vector_store %arg17[%c0_19, %c0_20, %c0_21], %7 {strides = array<i32>} : memref<18x18x8xf32, #tpu.memory_space<vmem>>, vector<18x1x8xf32>,
    %c0_22 = arith.constant 0 : index
    %c17_23 = arith.constant 17 : index
    %c0_24 = arith.constant 0 : index
    %11 = vector.load %arg17[%c0_22, %c17_23, %c0_24] : memref<18x18x8xf32, #tpu.memory_space<vmem>>, vector<18x1x8xf32>
    tpu.vector_store %arg17[%c0_22, %c17_23, %c0_24], %7 {strides = array<i32>} : memref<18x18x8xf32, #tpu.memory_space<vmem>>, vector<18x1x8xf32>,
    %cst_25 = arith.constant 0.000000e+00 : f32
    %12 = vector.broadcast %cst_25 : f32 to vector<1x18x8xf32>
    %cst_26 = arith.constant 0.000000e+00 : f32
    %13 = vector.broadcast %cst_26 : f32 to vector<18x1x8xf32>
    %c0_27 = arith.constant 0 : index
    %c0_28 = arith.constant 0 : index
    %c0_29 = arith.constant 0 : index
    %14 = vector.load %arg18[%c0_27, %c0_28, %c0_29] : memref<18x18x8xf32, #tpu.memory_space<vmem>>, vector<1x18x8xf32>
    tpu.vector_store %arg18[%c0_27, %c0_28, %c0_29], %12 {strides = array<i32>} : memref<18x18x8xf32, #tpu.memory_space<vmem>>, vector<1x18x8xf32>,
    %c17_30 = arith.constant 17 : index
    %c0_31 = arith.constant 0 : index
    %c0_32 = arith.constant 0 : index
    %15 = vector.load %arg18[%c17_30, %c0_31, %c0_32] : memref<18x18x8xf32, #tpu.memory_space<vmem>>, vector<1x18x8xf32>
    tpu.vector_store %arg18[%c17_30, %c0_31, %c0_32], %12 {strides = array<i32>} : memref<18x18x8xf32, #tpu.memory_space<vmem>>, vector<1x18x8xf32>,
    %c0_33 = arith.constant 0 : index
    %c0_34 = arith.constant 0 : index
    %c0_35 = arith.constant 0 : index
    %16 = vector.load %arg18[%c0_33, %c0_34, %c0_35] : memref<18x18x8xf32, #tpu.memory_space<vmem>>, vector<18x1x8xf32>
    tpu.vector_store %arg18[%c0_33, %c0_34, %c0_35], %13 {strides = array<i32>} : memref<18x18x8xf32, #tpu.memory_space<vmem>>, vector<18x1x8xf32>,
    %c0_36 = arith.constant 0 : index
    %c17_37 = arith.constant 17 : index
    %c0_38 = arith.constant 0 : index
    %17 = vector.load %arg18[%c0_36, %c17_37, %c0_38] : memref<18x18x8xf32, #tpu.memory_space<vmem>>, vector<18x1x8xf32>
    tpu.vector_store %arg18[%c0_36, %c17_37, %c0_38], %13 {strides = array<i32>} : memref<18x18x8xf32, #tpu.memory_space<vmem>>, vector<18x1x8xf32>,
    %c0_39 = arith.constant 0 : index
    %c0_40 = arith.constant 0 : index
    %c0_41 = arith.constant 0 : index
    %c0_42 = arith.constant 0 : index
    %18 = vector.load %arg1[%c0_39, %c0_40, %c0_41, %c0_42] : memref<1x16x16x4xf32, #tpu.memory_space<vmem>>, vector<1x16x16x4xf32>
    %19 = vector.shape_cast %18 : vector<1x16x16x4xf32> to vector<16x16x4xf32>
    %c1 = arith.constant 1 : index
    %c1_43 = arith.constant 1 : index
    %c0_44 = arith.constant 0 : index
    %20 = vector.load %arg16[%c1, %c1_43, %c0_44] : memref<18x18x4xf32, #tpu.memory_space<vmem>>, vector<16x16x4xf32>
    tpu.vector_store %arg16[%c1, %c1_43, %c0_44], %19 {strides = array<i32>} : memref<18x18x4xf32, #tpu.memory_space<vmem>>, vector<16x16x4xf32>,
    %cst_45 = arith.constant 0.000000e+00 : f32
    %21 = vector.broadcast %cst_45 : f32 to vector<16x16x4xf32>
    %c0_46 = arith.constant 0 : index
    %c0_47 = arith.constant 0 : index
    %c0_48 = arith.constant 0 : index
    %22 = vector.load %arg16[%c0_46, %c0_47, %c0_48] : memref<18x18x4xf32, #tpu.memory_space<vmem>>, vector<16x16x4xf32>
    %c0_49 = arith.constant 0 : index
    %c0_50 = arith.constant 0 : index
    %c0_51 = arith.constant 0 : index
    %23 = vector.load %arg2[%c0_49, %c0_50, %c0_51] : memref<3x3x4xf32, #tpu.memory_space<vmem>>, vector<1x1x4xf32>
    %24 = vector.shape_cast %23 : vector<1x1x4xf32> to vector<4xf32>
    %25 = vector.shape_cast %24 : vector<4xf32> to vector<1x1x4xf32>
    %26 = vector.broadcast %25 : vector<1x1x4xf32> to vector<16x16x4xf32>
    %27 = arith.mulf %22, %26 : vector<16x16x4xf32>
    %28 = arith.addf %21, %27 : vector<16x16x4xf32>
    %c0_52 = arith.constant 0 : index
    %c1_53 = arith.constant 1 : index
    %c0_54 = arith.constant 0 : index
    %29 = vector.load %arg16[%c0_52, %c1_53, %c0_54] : memref<18x18x4xf32, #tpu.memory_space<vmem>>, vector<16x16x4xf32>
    %c0_55 = arith.constant 0 : index
    %c1_56 = arith.constant 1 : index
    %c0_57 = arith.constant 0 : index
    %30 = vector.load %arg2[%c0_55, %c1_56, %c0_57] : memref<3x3x4xf32, #tpu.memory_space<vmem>>, vector<1x1x4xf32>
    %31 = vector.shape_cast %30 : vector<1x1x4xf32> to vector<4xf32>
    %32 = vector.shape_cast %31 : vector<4xf32> to vector<1x1x4xf32>
    %33 = vector.broadcast %32 : vector<1x1x4xf32> to vector<16x16x4xf32>
    %34 = arith.mulf %29, %33 : vector<16x16x4xf32>
    %35 = arith.addf %28, %34 : vector<16x16x4xf32>
    %c0_58 = arith.constant 0 : index
    %c2 = arith.constant 2 : index
    %c0_59 = arith.constant 0 : index
    %36 = vector.load %arg16[%c0_58, %c2, %c0_59] : memref<18x18x4xf32, #tpu.memory_space<vmem>>, vector<16x16x4xf32>
    %c0_60 = arith.constant 0 : index
    %c2_61 = arith.constant 2 : index
    %c0_62 = arith.constant 0 : index
    %37 = vector.load %arg2[%c0_60, %c2_61, %c0_62] : memref<3x3x4xf32, #tpu.memory_space<vmem>>, vector<1x1x4xf32>
    %38 = vector.shape_cast %37 : vector<1x1x4xf32> to vector<4xf32>
    %39 = vector.shape_cast %38 : vector<4xf32> to vector<1x1x4xf32>
    %40 = vector.broadcast %39 : vector<1x1x4xf32> to vector<16x16x4xf32>
    %41 = arith.mulf %36, %40 : vector<16x16x4xf32>
    %42 = arith.addf %35, %41 : vector<16x16x4xf32>
    %c1_63 = arith.constant 1 : index
    %c0_64 = arith.constant 0 : index
    %c0_65 = arith.constant 0 : index
    %43 = vector.load %arg16[%c1_63, %c0_64, %c0_65] : memref<18x18x4xf32, #tpu.memory_space<vmem>>, vector<16x16x4xf32>
    %c1_66 = arith.constant 1 : index
    %c0_67 = arith.constant 0 : index
    %c0_68 = arith.constant 0 : index
    %44 = vector.load %arg2[%c1_66, %c0_67, %c0_68] : memref<3x3x4xf32, #tpu.memory_space<vmem>>, vector<1x1x4xf32>
    %45 = vector.shape_cast %44 : vector<1x1x4xf32> to vector<4xf32>
    %46 = vector.shape_cast %45 : vector<4xf32> to vector<1x1x4xf32>
    %47 = vector.broadcast %46 : vector<1x1x4xf32> to vector<16x16x4xf32>
    %48 = arith.mulf %43, %47 : vector<16x16x4xf32>
    %49 = arith.addf %42, %48 : vector<16x16x4xf32>
    %c1_69 = arith.constant 1 : index
    %c1_70 = arith.constant 1 : index
    %c0_71 = arith.constant 0 : index
    %50 = vector.load %arg16[%c1_69, %c1_70, %c0_71] : memref<18x18x4xf32, #tpu.memory_space<vmem>>, vector<16x16x4xf32>
    %c1_72 = arith.constant 1 : index
    %c1_73 = arith.constant 1 : index
    %c0_74 = arith.constant 0 : index
    %51 = vector.load %arg2[%c1_72, %c1_73, %c0_74] : memref<3x3x4xf32, #tpu.memory_space<vmem>>, vector<1x1x4xf32>
    %52 = vector.shape_cast %51 : vector<1x1x4xf32> to vector<4xf32>
    %53 = vector.shape_cast %52 : vector<4xf32> to vector<1x1x4xf32>
    %54 = vector.broadcast %53 : vector<1x1x4xf32> to vector<16x16x4xf32>
    %55 = arith.mulf %50, %54 : vector<16x16x4xf32>
    %56 = arith.addf %49, %55 : vector<16x16x4xf32>
    %c1_75 = arith.constant 1 : index
    %c2_76 = arith.constant 2 : index
    %c0_77 = arith.constant 0 : index
    %57 = vector.load %arg16[%c1_75, %c2_76, %c0_77] : memref<18x18x4xf32, #tpu.memory_space<vmem>>, vector<16x16x4xf32>
    %c1_78 = arith.constant 1 : index
    %c2_79 = arith.constant 2 : index
    %c0_80 = arith.constant 0 : index
    %58 = vector.load %arg2[%c1_78, %c2_79, %c0_80] : memref<3x3x4xf32, #tpu.memory_space<vmem>>, vector<1x1x4xf32>
    %59 = vector.shape_cast %58 : vector<1x1x4xf32> to vector<4xf32>
    %60 = vector.shape_cast %59 : vector<4xf32> to vector<1x1x4xf32>
    %61 = vector.broadcast %60 : vector<1x1x4xf32> to vector<16x16x4xf32>
    %62 = arith.mulf %57, %61 : vector<16x16x4xf32>
    %63 = arith.addf %56, %62 : vector<16x16x4xf32>
    %c2_81 = arith.constant 2 : index
    %c0_82 = arith.constant 0 : index
    %c0_83 = arith.constant 0 : index
    %64 = vector.load %arg16[%c2_81, %c0_82, %c0_83] : memref<18x18x4xf32, #tpu.memory_space<vmem>>, vector<16x16x4xf32>
    %c2_84 = arith.constant 2 : index
    %c0_85 = arith.constant 0 : index
    %c0_86 = arith.constant 0 : index
    %65 = vector.load %arg2[%c2_84, %c0_85, %c0_86] : memref<3x3x4xf32, #tpu.memory_space<vmem>>, vector<1x1x4xf32>
    %66 = vector.shape_cast %65 : vector<1x1x4xf32> to vector<4xf32>
    %67 = vector.shape_cast %66 : vector<4xf32> to vector<1x1x4xf32>
    %68 = vector.broadcast %67 : vector<1x1x4xf32> to vector<16x16x4xf32>
    %69 = arith.mulf %64, %68 : vector<16x16x4xf32>
    %70 = arith.addf %63, %69 : vector<16x16x4xf32>
    %c2_87 = arith.constant 2 : index
    %c1_88 = arith.constant 1 : index
    %c0_89 = arith.constant 0 : index
    %71 = vector.load %arg16[%c2_87, %c1_88, %c0_89] : memref<18x18x4xf32, #tpu.memory_space<vmem>>, vector<16x16x4xf32>
    %c2_90 = arith.constant 2 : index
    %c1_91 = arith.constant 1 : index
    %c0_92 = arith.constant 0 : index
    %72 = vector.load %arg2[%c2_90, %c1_91, %c0_92] : memref<3x3x4xf32, #tpu.memory_space<vmem>>, vector<1x1x4xf32>
    %73 = vector.shape_cast %72 : vector<1x1x4xf32> to vector<4xf32>
    %74 = vector.shape_cast %73 : vector<4xf32> to vector<1x1x4xf32>
    %75 = vector.broadcast %74 : vector<1x1x4xf32> to vector<16x16x4xf32>
    %76 = arith.mulf %71, %75 : vector<16x16x4xf32>
    %77 = arith.addf %70, %76 : vector<16x16x4xf32>
    %c2_93 = arith.constant 2 : index
    %c2_94 = arith.constant 2 : index
    %c0_95 = arith.constant 0 : index
    %78 = vector.load %arg16[%c2_93, %c2_94, %c0_95] : memref<18x18x4xf32, #tpu.memory_space<vmem>>, vector<16x16x4xf32>
    %c2_96 = arith.constant 2 : index
    %c2_97 = arith.constant 2 : index
    %c0_98 = arith.constant 0 : index
    %79 = vector.load %arg2[%c2_96, %c2_97, %c0_98] : memref<3x3x4xf32, #tpu.memory_space<vmem>>, vector<1x1x4xf32>
    %80 = vector.shape_cast %79 : vector<1x1x4xf32> to vector<4xf32>
    %81 = vector.shape_cast %80 : vector<4xf32> to vector<1x1x4xf32>
    %82 = vector.broadcast %81 : vector<1x1x4xf32> to vector<16x16x4xf32>
    %83 = arith.mulf %78, %82 : vector<16x16x4xf32>
    %84 = arith.addf %77, %83 : vector<16x16x4xf32>
    %c0_99 = arith.constant 0 : index
    %c0_100 = arith.constant 0 : index
    %85 = vector.load %arg3[%c0_99, %c0_100] : memref<1x4xf32, #tpu.memory_space<vmem>>, vector<1x4xf32>
    %86 = vector.shape_cast %85 : vector<1x4xf32> to vector<1x1x4xf32>
    %87 = vector.broadcast %86 : vector<1x1x4xf32> to vector<16x16x4xf32>
    %88 = arith.addf %84, %87 : vector<16x16x4xf32>
    %cst_101 = arith.constant 0.000000e+00 : f32
    %cst_102 = arith.constant 6.000000e+00 : f32
    %89 = vector.broadcast %cst_101 : f32 to vector<16x16x4xf32>
    %90 = arith.maximumf %89, %88 : vector<16x16x4xf32>
    %91 = vector.broadcast %cst_102 : f32 to vector<16x16x4xf32>
    %92 = arith.minimumf %91, %90 : vector<16x16x4xf32>
    %93 = vector.shape_cast %92 : vector<16x16x4xf32> to vector<256x4xf32>
    %c0_103 = arith.constant 0 : index
    %c0_104 = arith.constant 0 : index
    %94 = vector.load %arg4[%c0_103, %c0_104] : memref<4x8xf32, #tpu.memory_space<vmem>>, vector<4x8xf32>
    %cst_105 = arith.constant dense<0.000000e+00> : vector<256x8xf32>
    %95 = tpu.matmul %93, %94, %cst_105 {dimension_numbers = #tpu.dot_dimension_numbers<[1], [0], [0], [1], [0, 0, 1, 1], [], []>} : vector<256x4xf32>, vector<4x8xf32>, vector<256x8xf32> -> vector<256x8xf32>
    %c0_106 = arith.constant 0 : index
    %c0_107 = arith.constant 0 : index
    %96 = vector.load %arg5[%c0_106, %c0_107] : memref<1x8xf32, #tpu.memory_space<vmem>>, vector<1x8xf32>
    %97 = vector.broadcast %96 : vector<1x8xf32> to vector<256x8xf32>
    %98 = arith.addf %95, %97 : vector<256x8xf32>
    %cst_108 = arith.constant 0.000000e+00 : f32
    %cst_109 = arith.constant 6.000000e+00 : f32
    %99 = vector.broadcast %cst_108 : f32 to vector<256x8xf32>
    %100 = arith.maximumf %99, %98 : vector<256x8xf32>
    %101 = vector.broadcast %cst_109 : f32 to vector<256x8xf32>
    %102 = arith.minimumf %101, %100 : vector<256x8xf32>
    %103 = vector.shape_cast %102 : vector<256x8xf32> to vector<16x16x8xf32>
    %c1_110 = arith.constant 1 : index
    %c1_111 = arith.constant 1 : index
    %c0_112 = arith.constant 0 : index
    %104 = vector.load %arg17[%c1_110, %c1_111, %c0_112] : memref<18x18x8xf32, #tpu.memory_space<vmem>>, vector<16x16x8xf32>
    tpu.vector_store %arg17[%c1_110, %c1_111, %c0_112], %103 {strides = array<i32>} : memref<18x18x8xf32, #tpu.memory_space<vmem>>, vector<16x16x8xf32>,
    %cst_113 = arith.constant 0.000000e+00 : f32
    %105 = vector.broadcast %cst_113 : f32 to vector<16x16x4xf32>
    %c0_114 = arith.constant 0 : index
    %c0_115 = arith.constant 0 : index
    %c0_116 = arith.constant 0 : index
    %106 = vector.load %arg16[%c0_114, %c0_115, %c0_116] : memref<18x18x4xf32, #tpu.memory_space<vmem>>, vector<16x16x4xf32>
    %c0_117 = arith.constant 0 : index
    %c0_118 = arith.constant 0 : index
    %c0_119 = arith.constant 0 : index
    %107 = vector.load %arg6[%c0_117, %c0_118, %c0_119] : memref<3x3x4xf32, #tpu.memory_space<vmem>>, vector<1x1x4xf32>
    %108 = vector.shape_cast %107 : vector<1x1x4xf32> to vector<4xf32>
    %109 = vector.shape_cast %108 : vector<4xf32> to vector<1x1x4xf32>
    %110 = vector.broadcast %109 : vector<1x1x4xf32> to vector<16x16x4xf32>
    %111 = arith.mulf %106, %110 : vector<16x16x4xf32>
    %112 = arith.addf %105, %111 : vector<16x16x4xf32>
    %c0_120 = arith.constant 0 : index
    %c1_121 = arith.constant 1 : index
    %c0_122 = arith.constant 0 : index
    %113 = vector.load %arg16[%c0_120, %c1_121, %c0_122] : memref<18x18x4xf32, #tpu.memory_space<vmem>>, vector<16x16x4xf32>
    %c0_123 = arith.constant 0 : index
    %c1_124 = arith.constant 1 : index
    %c0_125 = arith.constant 0 : index
    %114 = vector.load %arg6[%c0_123, %c1_124, %c0_125] : memref<3x3x4xf32, #tpu.memory_space<vmem>>, vector<1x1x4xf32>
    %115 = vector.shape_cast %114 : vector<1x1x4xf32> to vector<4xf32>
    %116 = vector.shape_cast %115 : vector<4xf32> to vector<1x1x4xf32>
    %117 = vector.broadcast %116 : vector<1x1x4xf32> to vector<16x16x4xf32>
    %118 = arith.mulf %113, %117 : vector<16x16x4xf32>
    %119 = arith.addf %112, %118 : vector<16x16x4xf32>
    %c0_126 = arith.constant 0 : index
    %c2_127 = arith.constant 2 : index
    %c0_128 = arith.constant 0 : index
    %120 = vector.load %arg16[%c0_126, %c2_127, %c0_128] : memref<18x18x4xf32, #tpu.memory_space<vmem>>, vector<16x16x4xf32>
    %c0_129 = arith.constant 0 : index
    %c2_130 = arith.constant 2 : index
    %c0_131 = arith.constant 0 : index
    %121 = vector.load %arg6[%c0_129, %c2_130, %c0_131] : memref<3x3x4xf32, #tpu.memory_space<vmem>>, vector<1x1x4xf32>
    %122 = vector.shape_cast %121 : vector<1x1x4xf32> to vector<4xf32>
    %123 = vector.shape_cast %122 : vector<4xf32> to vector<1x1x4xf32>
    %124 = vector.broadcast %123 : vector<1x1x4xf32> to vector<16x16x4xf32>
    %125 = arith.mulf %120, %124 : vector<16x16x4xf32>
    %126 = arith.addf %119, %125 : vector<16x16x4xf32>
    %c1_132 = arith.constant 1 : index
    %c0_133 = arith.constant 0 : index
    %c0_134 = arith.constant 0 : index
    %127 = vector.load %arg16[%c1_132, %c0_133, %c0_134] : memref<18x18x4xf32, #tpu.memory_space<vmem>>, vector<16x16x4xf32>
    %c1_135 = arith.constant 1 : index
    %c0_136 = arith.constant 0 : index
    %c0_137 = arith.constant 0 : index
    %128 = vector.load %arg6[%c1_135, %c0_136, %c0_137] : memref<3x3x4xf32, #tpu.memory_space<vmem>>, vector<1x1x4xf32>
    %129 = vector.shape_cast %128 : vector<1x1x4xf32> to vector<4xf32>
    %130 = vector.shape_cast %129 : vector<4xf32> to vector<1x1x4xf32>
    %131 = vector.broadcast %130 : vector<1x1x4xf32> to vector<16x16x4xf32>
    %132 = arith.mulf %127, %131 : vector<16x16x4xf32>
    %133 = arith.addf %126, %132 : vector<16x16x4xf32>
    %c1_138 = arith.constant 1 : index
    %c1_139 = arith.constant 1 : index
    %c0_140 = arith.constant 0 : index
    %134 = vector.load %arg16[%c1_138, %c1_139, %c0_140] : memref<18x18x4xf32, #tpu.memory_space<vmem>>, vector<16x16x4xf32>
    %c1_141 = arith.constant 1 : index
    %c1_142 = arith.constant 1 : index
    %c0_143 = arith.constant 0 : index
    %135 = vector.load %arg6[%c1_141, %c1_142, %c0_143] : memref<3x3x4xf32, #tpu.memory_space<vmem>>, vector<1x1x4xf32>
    %136 = vector.shape_cast %135 : vector<1x1x4xf32> to vector<4xf32>
    %137 = vector.shape_cast %136 : vector<4xf32> to vector<1x1x4xf32>
    %138 = vector.broadcast %137 : vector<1x1x4xf32> to vector<16x16x4xf32>
    %139 = arith.mulf %134, %138 : vector<16x16x4xf32>
    %140 = arith.addf %133, %139 : vector<16x16x4xf32>
    %c1_144 = arith.constant 1 : index
    %c2_145 = arith.constant 2 : index
    %c0_146 = arith.constant 0 : index
    %141 = vector.load %arg16[%c1_144, %c2_145, %c0_146] : memref<18x18x4xf32, #tpu.memory_space<vmem>>, vector<16x16x4xf32>
    %c1_147 = arith.constant 1 : index
    %c2_148 = arith.constant 2 : index
    %c0_149 = arith.constant 0 : index
    %142 = vector.load %arg6[%c1_147, %c2_148, %c0_149] : memref<3x3x4xf32, #tpu.memory_space<vmem>>, vector<1x1x4xf32>
    %143 = vector.shape_cast %142 : vector<1x1x4xf32> to vector<4xf32>
    %144 = vector.shape_cast %143 : vector<4xf32> to vector<1x1x4xf32>
    %145 = vector.broadcast %144 : vector<1x1x4xf32> to vector<16x16x4xf32>
    %146 = arith.mulf %141, %145 : vector<16x16x4xf32>
    %147 = arith.addf %140, %146 : vector<16x16x4xf32>
    %c2_150 = arith.constant 2 : index
    %c0_151 = arith.constant 0 : index
    %c0_152 = arith.constant 0 : index
    %148 = vector.load %arg16[%c2_150, %c0_151, %c0_152] : memref<18x18x4xf32, #tpu.memory_space<vmem>>, vector<16x16x4xf32>
    %c2_153 = arith.constant 2 : index
    %c0_154 = arith.constant 0 : index
    %c0_155 = arith.constant 0 : index
    %149 = vector.load %arg6[%c2_153, %c0_154, %c0_155] : memref<3x3x4xf32, #tpu.memory_space<vmem>>, vector<1x1x4xf32>
    %150 = vector.shape_cast %149 : vector<1x1x4xf32> to vector<4xf32>
    %151 = vector.shape_cast %150 : vector<4xf32> to vector<1x1x4xf32>
    %152 = vector.broadcast %151 : vector<1x1x4xf32> to vector<16x16x4xf32>
    %153 = arith.mulf %148, %152 : vector<16x16x4xf32>
    %154 = arith.addf %147, %153 : vector<16x16x4xf32>
    %c2_156 = arith.constant 2 : index
    %c1_157 = arith.constant 1 : index
    %c0_158 = arith.constant 0 : index
    %155 = vector.load %arg16[%c2_156, %c1_157, %c0_158] : memref<18x18x4xf32, #tpu.memory_space<vmem>>, vector<16x16x4xf32>
    %c2_159 = arith.constant 2 : index
    %c1_160 = arith.constant 1 : index
    %c0_161 = arith.constant 0 : index
    %156 = vector.load %arg6[%c2_159, %c1_160, %c0_161] : memref<3x3x4xf32, #tpu.memory_space<vmem>>, vector<1x1x4xf32>
    %157 = vector.shape_cast %156 : vector<1x1x4xf32> to vector<4xf32>
    %158 = vector.shape_cast %157 : vector<4xf32> to vector<1x1x4xf32>
    %159 = vector.broadcast %158 : vector<1x1x4xf32> to vector<16x16x4xf32>
    %160 = arith.mulf %155, %159 : vector<16x16x4xf32>
    %161 = arith.addf %154, %160 : vector<16x16x4xf32>
    %c2_162 = arith.constant 2 : index
    %c2_163 = arith.constant 2 : index
    %c0_164 = arith.constant 0 : index
    %162 = vector.load %arg16[%c2_162, %c2_163, %c0_164] : memref<18x18x4xf32, #tpu.memory_space<vmem>>, vector<16x16x4xf32>
    %c2_165 = arith.constant 2 : index
    %c2_166 = arith.constant 2 : index
    %c0_167 = arith.constant 0 : index
    %163 = vector.load %arg6[%c2_165, %c2_166, %c0_167] : memref<3x3x4xf32, #tpu.memory_space<vmem>>, vector<1x1x4xf32>
    %164 = vector.shape_cast %163 : vector<1x1x4xf32> to vector<4xf32>
    %165 = vector.shape_cast %164 : vector<4xf32> to vector<1x1x4xf32>
    %166 = vector.broadcast %165 : vector<1x1x4xf32> to vector<16x16x4xf32>
    %167 = arith.mulf %162, %166 : vector<16x16x4xf32>
    %168 = arith.addf %161, %167 : vector<16x16x4xf32>
    %c0_168 = arith.constant 0 : index
    %c0_169 = arith.constant 0 : index
    %169 = vector.load %arg7[%c0_168, %c0_169] : memref<1x4xf32, #tpu.memory_space<vmem>>, vector<1x4xf32>
    %170 = vector.shape_cast %169 : vector<1x4xf32> to vector<1x1x4xf32>
    %171 = vector.broadcast %170 : vector<1x1x4xf32> to vector<16x16x4xf32>
    %172 = arith.addf %168, %171 : vector<16x16x4xf32>
    %cst_170 = arith.constant 0.000000e+00 : f32
    %cst_171 = arith.constant 6.000000e+00 : f32
    %173 = vector.broadcast %cst_170 : f32 to vector<16x16x4xf32>
    %174 = arith.maximumf %173, %172 : vector<16x16x4xf32>
    %175 = vector.broadcast %cst_171 : f32 to vector<16x16x4xf32>
    %176 = arith.minimumf %175, %174 : vector<16x16x4xf32>
    %cst_172 = arith.constant 0.000000e+00 : f32
    %177 = vector.broadcast %cst_172 : f32 to vector<16x16x8xf32>
    %c0_173 = arith.constant 0 : index
    %c0_174 = arith.constant 0 : index
    %c0_175 = arith.constant 0 : index
    %178 = vector.load %arg17[%c0_173, %c0_174, %c0_175] : memref<18x18x8xf32, #tpu.memory_space<vmem>>, vector<16x16x8xf32>
    %c0_176 = arith.constant 0 : index
    %c0_177 = arith.constant 0 : index
    %c0_178 = arith.constant 0 : index
    %179 = vector.load %arg8[%c0_176, %c0_177, %c0_178] : memref<3x3x8xf32, #tpu.memory_space<vmem>>, vector<1x1x8xf32>
    %180 = vector.shape_cast %179 : vector<1x1x8xf32> to vector<8xf32>
    %181 = vector.shape_cast %180 : vector<8xf32> to vector<1x1x8xf32>
    %182 = vector.broadcast %181 : vector<1x1x8xf32> to vector<16x16x8xf32>
    %183 = arith.mulf %178, %182 : vector<16x16x8xf32>
    %184 = arith.addf %177, %183 : vector<16x16x8xf32>
    %c0_179 = arith.constant 0 : index
    %c1_180 = arith.constant 1 : index
    %c0_181 = arith.constant 0 : index
    %185 = vector.load %arg17[%c0_179, %c1_180, %c0_181] : memref<18x18x8xf32, #tpu.memory_space<vmem>>, vector<16x16x8xf32>
    %c0_182 = arith.constant 0 : index
    %c1_183 = arith.constant 1 : index
    %c0_184 = arith.constant 0 : index
    %186 = vector.load %arg8[%c0_182, %c1_183, %c0_184] : memref<3x3x8xf32, #tpu.memory_space<vmem>>, vector<1x1x8xf32>
    %187 = vector.shape_cast %186 : vector<1x1x8xf32> to vector<8xf32>
    %188 = vector.shape_cast %187 : vector<8xf32> to vector<1x1x8xf32>
    %189 = vector.broadcast %188 : vector<1x1x8xf32> to vector<16x16x8xf32>
    %190 = arith.mulf %185, %189 : vector<16x16x8xf32>
    %191 = arith.addf %184, %190 : vector<16x16x8xf32>
    %c0_185 = arith.constant 0 : index
    %c2_186 = arith.constant 2 : index
    %c0_187 = arith.constant 0 : index
    %192 = vector.load %arg17[%c0_185, %c2_186, %c0_187] : memref<18x18x8xf32, #tpu.memory_space<vmem>>, vector<16x16x8xf32>
    %c0_188 = arith.constant 0 : index
    %c2_189 = arith.constant 2 : index
    %c0_190 = arith.constant 0 : index
    %193 = vector.load %arg8[%c0_188, %c2_189, %c0_190] : memref<3x3x8xf32, #tpu.memory_space<vmem>>, vector<1x1x8xf32>
    %194 = vector.shape_cast %193 : vector<1x1x8xf32> to vector<8xf32>
    %195 = vector.shape_cast %194 : vector<8xf32> to vector<1x1x8xf32>
    %196 = vector.broadcast %195 : vector<1x1x8xf32> to vector<16x16x8xf32>
    %197 = arith.mulf %192, %196 : vector<16x16x8xf32>
    %198 = arith.addf %191, %197 : vector<16x16x8xf32>
    %c1_191 = arith.constant 1 : index
    %c0_192 = arith.constant 0 : index
    %c0_193 = arith.constant 0 : index
    %199 = vector.load %arg17[%c1_191, %c0_192, %c0_193] : memref<18x18x8xf32, #tpu.memory_space<vmem>>, vector<16x16x8xf32>
    %c1_194 = arith.constant 1 : index
    %c0_195 = arith.constant 0 : index
    %c0_196 = arith.constant 0 : index
    %200 = vector.load %arg8[%c1_194, %c0_195, %c0_196] : memref<3x3x8xf32, #tpu.memory_space<vmem>>, vector<1x1x8xf32>
    %201 = vector.shape_cast %200 : vector<1x1x8xf32> to vector<8xf32>
    %202 = vector.shape_cast %201 : vector<8xf32> to vector<1x1x8xf32>
    %203 = vector.broadcast %202 : vector<1x1x8xf32> to vector<16x16x8xf32>
    %204 = arith.mulf %199, %203 : vector<16x16x8xf32>
    %205 = arith.addf %198, %204 : vector<16x16x8xf32>
    %c1_197 = arith.constant 1 : index
    %c1_198 = arith.constant 1 : index
    %c0_199 = arith.constant 0 : index
    %206 = vector.load %arg17[%c1_197, %c1_198, %c0_199] : memref<18x18x8xf32, #tpu.memory_space<vmem>>, vector<16x16x8xf32>
    %c1_200 = arith.constant 1 : index
    %c1_201 = arith.constant 1 : index
    %c0_202 = arith.constant 0 : index
    %207 = vector.load %arg8[%c1_200, %c1_201, %c0_202] : memref<3x3x8xf32, #tpu.memory_space<vmem>>, vector<1x1x8xf32>
    %208 = vector.shape_cast %207 : vector<1x1x8xf32> to vector<8xf32>
    %209 = vector.shape_cast %208 : vector<8xf32> to vector<1x1x8xf32>
    %210 = vector.broadcast %209 : vector<1x1x8xf32> to vector<16x16x8xf32>
    %211 = arith.mulf %206, %210 : vector<16x16x8xf32>
    %212 = arith.addf %205, %211 : vector<16x16x8xf32>
    %c1_203 = arith.constant 1 : index
    %c2_204 = arith.constant 2 : index
    %c0_205 = arith.constant 0 : index
    %213 = vector.load %arg17[%c1_203, %c2_204, %c0_205] : memref<18x18x8xf32, #tpu.memory_space<vmem>>, vector<16x16x8xf32>
    %c1_206 = arith.constant 1 : index
    %c2_207 = arith.constant 2 : index
    %c0_208 = arith.constant 0 : index
    %214 = vector.load %arg8[%c1_206, %c2_207, %c0_208] : memref<3x3x8xf32, #tpu.memory_space<vmem>>, vector<1x1x8xf32>
    %215 = vector.shape_cast %214 : vector<1x1x8xf32> to vector<8xf32>
    %216 = vector.shape_cast %215 : vector<8xf32> to vector<1x1x8xf32>
    %217 = vector.broadcast %216 : vector<1x1x8xf32> to vector<16x16x8xf32>
    %218 = arith.mulf %213, %217 : vector<16x16x8xf32>
    %219 = arith.addf %212, %218 : vector<16x16x8xf32>
    %c2_209 = arith.constant 2 : index
    %c0_210 = arith.constant 0 : index
    %c0_211 = arith.constant 0 : index
    %220 = vector.load %arg17[%c2_209, %c0_210, %c0_211] : memref<18x18x8xf32, #tpu.memory_space<vmem>>, vector<16x16x8xf32>
    %c2_212 = arith.constant 2 : index
    %c0_213 = arith.constant 0 : index
    %c0_214 = arith.constant 0 : index
    %221 = vector.load %arg8[%c2_212, %c0_213, %c0_214] : memref<3x3x8xf32, #tpu.memory_space<vmem>>, vector<1x1x8xf32>
    %222 = vector.shape_cast %221 : vector<1x1x8xf32> to vector<8xf32>
    %223 = vector.shape_cast %222 : vector<8xf32> to vector<1x1x8xf32>
    %224 = vector.broadcast %223 : vector<1x1x8xf32> to vector<16x16x8xf32>
    %225 = arith.mulf %220, %224 : vector<16x16x8xf32>
    %226 = arith.addf %219, %225 : vector<16x16x8xf32>
    %c2_215 = arith.constant 2 : index
    %c1_216 = arith.constant 1 : index
    %c0_217 = arith.constant 0 : index
    %227 = vector.load %arg17[%c2_215, %c1_216, %c0_217] : memref<18x18x8xf32, #tpu.memory_space<vmem>>, vector<16x16x8xf32>
    %c2_218 = arith.constant 2 : index
    %c1_219 = arith.constant 1 : index
    %c0_220 = arith.constant 0 : index
    %228 = vector.load %arg8[%c2_218, %c1_219, %c0_220] : memref<3x3x8xf32, #tpu.memory_space<vmem>>, vector<1x1x8xf32>
    %229 = vector.shape_cast %228 : vector<1x1x8xf32> to vector<8xf32>
    %230 = vector.shape_cast %229 : vector<8xf32> to vector<1x1x8xf32>
    %231 = vector.broadcast %230 : vector<1x1x8xf32> to vector<16x16x8xf32>
    %232 = arith.mulf %227, %231 : vector<16x16x8xf32>
    %233 = arith.addf %226, %232 : vector<16x16x8xf32>
    %c2_221 = arith.constant 2 : index
    %c2_222 = arith.constant 2 : index
    %c0_223 = arith.constant 0 : index
    %234 = vector.load %arg17[%c2_221, %c2_222, %c0_223] : memref<18x18x8xf32, #tpu.memory_space<vmem>>, vector<16x16x8xf32>
    %c2_224 = arith.constant 2 : index
    %c2_225 = arith.constant 2 : index
    %c0_226 = arith.constant 0 : index
    %235 = vector.load %arg8[%c2_224, %c2_225, %c0_226] : memref<3x3x8xf32, #tpu.memory_space<vmem>>, vector<1x1x8xf32>
    %236 = vector.shape_cast %235 : vector<1x1x8xf32> to vector<8xf32>
    %237 = vector.shape_cast %236 : vector<8xf32> to vector<1x1x8xf32>
    %238 = vector.broadcast %237 : vector<1x1x8xf32> to vector<16x16x8xf32>
    %239 = arith.mulf %234, %238 : vector<16x16x8xf32>
    %240 = arith.addf %233, %239 : vector<16x16x8xf32>
    %c0_227 = arith.constant 0 : index
    %c0_228 = arith.constant 0 : index
    %241 = vector.load %arg9[%c0_227, %c0_228] : memref<1x8xf32, #tpu.memory_space<vmem>>, vector<1x8xf32>
    %242 = vector.shape_cast %241 : vector<1x8xf32> to vector<1x1x8xf32>
    %243 = vector.broadcast %242 : vector<1x1x8xf32> to vector<16x16x8xf32>
    %244 = arith.addf %240, %243 : vector<16x16x8xf32>
    %cst_229 = arith.constant 0.000000e+00 : f32
    %cst_230 = arith.constant 6.000000e+00 : f32
    %245 = vector.broadcast %cst_229 : f32 to vector<16x16x8xf32>
    %246 = arith.maximumf %245, %244 : vector<16x16x8xf32>
    %247 = vector.broadcast %cst_230 : f32 to vector<16x16x8xf32>
    %248 = arith.minimumf %247, %246 : vector<16x16x8xf32>
    %249 = vector.shape_cast %176 : vector<16x16x4xf32> to vector<256x4xf32>
    %c0_231 = arith.constant 0 : index
    %c0_232 = arith.constant 0 : index
    %250 = vector.load %arg10[%c0_231, %c0_232] : memref<4x8xf32, #tpu.memory_space<vmem>>, vector<4x8xf32>
    %cst_233 = arith.constant dense<0.000000e+00> : vector<256x8xf32>
    %251 = tpu.matmul %249, %250, %cst_233 {dimension_numbers = #tpu.dot_dimension_numbers<[1], [0], [0], [1], [0, 0, 1, 1], [], []>} : vector<256x4xf32>, vector<4x8xf32>, vector<256x8xf32> -> vector<256x8xf32>
    %252 = vector.shape_cast %248 : vector<16x16x8xf32> to vector<256x8xf32>
    %c0_234 = arith.constant 0 : index
    %c0_235 = arith.constant 0 : index
    %253 = vector.load %arg11[%c0_234, %c0_235] : memref<8x8xf32, #tpu.memory_space<vmem>>, vector<8x8xf32>
    %cst_236 = arith.constant dense<0.000000e+00> : vector<256x8xf32>
    %254 = tpu.matmul %252, %253, %cst_236 {dimension_numbers = #tpu.dot_dimension_numbers<[1], [0], [0], [1], [0, 0, 1, 1], [], []>} : vector<256x8xf32>, vector<8x8xf32>, vector<256x8xf32> -> vector<256x8xf32>
    %255 = arith.addf %251, %254 : vector<256x8xf32>
    %c0_237 = arith.constant 0 : index
    %c0_238 = arith.constant 0 : index
    %256 = vector.load %arg12[%c0_237, %c0_238] : memref<1x8xf32, #tpu.memory_space<vmem>>, vector<1x8xf32>
    %257 = vector.broadcast %256 : vector<1x8xf32> to vector<256x8xf32>
    %258 = arith.addf %255, %257 : vector<256x8xf32>
    %cst_239 = arith.constant 0.000000e+00 : f32
    %cst_240 = arith.constant 6.000000e+00 : f32
    %259 = vector.broadcast %cst_239 : f32 to vector<256x8xf32>
    %260 = arith.maximumf %259, %258 : vector<256x8xf32>
    %261 = vector.broadcast %cst_240 : f32 to vector<256x8xf32>
    %262 = arith.minimumf %261, %260 : vector<256x8xf32>
    %263 = vector.shape_cast %262 : vector<256x8xf32> to vector<16x16x8xf32>
    %c1_241 = arith.constant 1 : index
    %c1_242 = arith.constant 1 : index
    %c0_243 = arith.constant 0 : index
    %264 = vector.load %arg18[%c1_241, %c1_242, %c0_243] : memref<18x18x8xf32, #tpu.memory_space<vmem>>, vector<16x16x8xf32>
    tpu.vector_store %arg18[%c1_241, %c1_242, %c0_243], %263 {strides = array<i32>} : memref<18x18x8xf32, #tpu.memory_space<vmem>>, vector<16x16x8xf32>,
    %c0_244 = arith.constant 0 : index
    %c0_245 = arith.constant 0 : index
    %c0_246 = arith.constant 0 : index
    %265 = vector.load %arg16[%c0_244, %c0_245, %c0_246] : memref<18x18x4xf32, #tpu.memory_space<vmem>>, vector<16x16x4xf32>
    %266 = vector.shape_cast %265 : vector<16x16x4xf32> to vector<256x4xf32>
    %c0_247 = arith.constant 0 : index
    %c0_248 = arith.constant 0 : index
    %c0_249 = arith.constant 0 : index
    %267 = vector.load %arg17[%c0_247, %c0_248, %c0_249] : memref<18x18x8xf32, #tpu.memory_space<vmem>>, vector<16x16x8xf32>
    %268 = vector.shape_cast %267 : vector<16x16x8xf32> to vector<256x8xf32>
    %c0_250 = arith.constant 0 : index
    %c0_251 = arith.constant 0 : index
    %c0_252 = arith.constant 0 : index
    %269 = vector.load %arg18[%c0_250, %c0_251, %c0_252] : memref<18x18x8xf32, #tpu.memory_space<vmem>>, vector<16x16x8xf32>
    %270 = vector.shape_cast %269 : vector<16x16x8xf32> to vector<256x8xf32>
    %c0_253 = arith.constant 0 : index
    %c1_254 = arith.constant 1 : index
    %c0_255 = arith.constant 0 : index
    %271 = vector.load %arg16[%c0_253, %c1_254, %c0_255] : memref<18x18x4xf32, #tpu.memory_space<vmem>>, vector<16x16x4xf32>
    %272 = vector.shape_cast %271 : vector<16x16x4xf32> to vector<256x4xf32>
    %c0_256 = arith.constant 0 : index
    %c1_257 = arith.constant 1 : index
    %c0_258 = arith.constant 0 : index
    %273 = vector.load %arg17[%c0_256, %c1_257, %c0_258] : memref<18x18x8xf32, #tpu.memory_space<vmem>>, vector<16x16x8xf32>
    %274 = vector.shape_cast %273 : vector<16x16x8xf32> to vector<256x8xf32>
    %c0_259 = arith.constant 0 : index
    %c1_260 = arith.constant 1 : index
    %c0_261 = arith.constant 0 : index
    %275 = vector.load %arg18[%c0_259, %c1_260, %c0_261] : memref<18x18x8xf32, #tpu.memory_space<vmem>>, vector<16x16x8xf32>
    %276 = vector.shape_cast %275 : vector<16x16x8xf32> to vector<256x8xf32>
    %c0_262 = arith.constant 0 : index
    %c2_263 = arith.constant 2 : index
    %c0_264 = arith.constant 0 : index
    %277 = vector.load %arg16[%c0_262, %c2_263, %c0_264] : memref<18x18x4xf32, #tpu.memory_space<vmem>>, vector<16x16x4xf32>
    %278 = vector.shape_cast %277 : vector<16x16x4xf32> to vector<256x4xf32>
    %c0_265 = arith.constant 0 : index
    %c2_266 = arith.constant 2 : index
    %c0_267 = arith.constant 0 : index
    %279 = vector.load %arg17[%c0_265, %c2_266, %c0_267] : memref<18x18x8xf32, #tpu.memory_space<vmem>>, vector<16x16x8xf32>
    %280 = vector.shape_cast %279 : vector<16x16x8xf32> to vector<256x8xf32>
    %c0_268 = arith.constant 0 : index
    %c2_269 = arith.constant 2 : index
    %c0_270 = arith.constant 0 : index
    %281 = vector.load %arg18[%c0_268, %c2_269, %c0_270] : memref<18x18x8xf32, #tpu.memory_space<vmem>>, vector<16x16x8xf32>
    %282 = vector.shape_cast %281 : vector<16x16x8xf32> to vector<256x8xf32>
    %c1_271 = arith.constant 1 : index
    %c0_272 = arith.constant 0 : index
    %c0_273 = arith.constant 0 : index
    %283 = vector.load %arg16[%c1_271, %c0_272, %c0_273] : memref<18x18x4xf32, #tpu.memory_space<vmem>>, vector<16x16x4xf32>
    %284 = vector.shape_cast %283 : vector<16x16x4xf32> to vector<256x4xf32>
    %c1_274 = arith.constant 1 : index
    %c0_275 = arith.constant 0 : index
    %c0_276 = arith.constant 0 : index
    %285 = vector.load %arg17[%c1_274, %c0_275, %c0_276] : memref<18x18x8xf32, #tpu.memory_space<vmem>>, vector<16x16x8xf32>
    %286 = vector.shape_cast %285 : vector<16x16x8xf32> to vector<256x8xf32>
    %c1_277 = arith.constant 1 : index
    %c0_278 = arith.constant 0 : index
    %c0_279 = arith.constant 0 : index
    %287 = vector.load %arg18[%c1_277, %c0_278, %c0_279] : memref<18x18x8xf32, #tpu.memory_space<vmem>>, vector<16x16x8xf32>
    %288 = vector.shape_cast %287 : vector<16x16x8xf32> to vector<256x8xf32>
    %c1_280 = arith.constant 1 : index
    %c1_281 = arith.constant 1 : index
    %c0_282 = arith.constant 0 : index
    %289 = vector.load %arg16[%c1_280, %c1_281, %c0_282] : memref<18x18x4xf32, #tpu.memory_space<vmem>>, vector<16x16x4xf32>
    %290 = vector.shape_cast %289 : vector<16x16x4xf32> to vector<256x4xf32>
    %c1_283 = arith.constant 1 : index
    %c1_284 = arith.constant 1 : index
    %c0_285 = arith.constant 0 : index
    %291 = vector.load %arg17[%c1_283, %c1_284, %c0_285] : memref<18x18x8xf32, #tpu.memory_space<vmem>>, vector<16x16x8xf32>
    %292 = vector.shape_cast %291 : vector<16x16x8xf32> to vector<256x8xf32>
    %c1_286 = arith.constant 1 : index
    %c1_287 = arith.constant 1 : index
    %c0_288 = arith.constant 0 : index
    %293 = vector.load %arg18[%c1_286, %c1_287, %c0_288] : memref<18x18x8xf32, #tpu.memory_space<vmem>>, vector<16x16x8xf32>
    %294 = vector.shape_cast %293 : vector<16x16x8xf32> to vector<256x8xf32>
    %c1_289 = arith.constant 1 : index
    %c2_290 = arith.constant 2 : index
    %c0_291 = arith.constant 0 : index
    %295 = vector.load %arg16[%c1_289, %c2_290, %c0_291] : memref<18x18x4xf32, #tpu.memory_space<vmem>>, vector<16x16x4xf32>
    %296 = vector.shape_cast %295 : vector<16x16x4xf32> to vector<256x4xf32>
    %c1_292 = arith.constant 1 : index
    %c2_293 = arith.constant 2 : index
    %c0_294 = arith.constant 0 : index
    %297 = vector.load %arg17[%c1_292, %c2_293, %c0_294] : memref<18x18x8xf32, #tpu.memory_space<vmem>>, vector<16x16x8xf32>
    %298 = vector.shape_cast %297 : vector<16x16x8xf32> to vector<256x8xf32>
    %c1_295 = arith.constant 1 : index
    %c2_296 = arith.constant 2 : index
    %c0_297 = arith.constant 0 : index
    %299 = vector.load %arg18[%c1_295, %c2_296, %c0_297] : memref<18x18x8xf32, #tpu.memory_space<vmem>>, vector<16x16x8xf32>
    %300 = vector.shape_cast %299 : vector<16x16x8xf32> to vector<256x8xf32>
    %c2_298 = arith.constant 2 : index
    %c0_299 = arith.constant 0 : index
    %c0_300 = arith.constant 0 : index
    %301 = vector.load %arg16[%c2_298, %c0_299, %c0_300] : memref<18x18x4xf32, #tpu.memory_space<vmem>>, vector<16x16x4xf32>
    %302 = vector.shape_cast %301 : vector<16x16x4xf32> to vector<256x4xf32>
    %c2_301 = arith.constant 2 : index
    %c0_302 = arith.constant 0 : index
    %c0_303 = arith.constant 0 : index
    %303 = vector.load %arg17[%c2_301, %c0_302, %c0_303] : memref<18x18x8xf32, #tpu.memory_space<vmem>>, vector<16x16x8xf32>
    %304 = vector.shape_cast %303 : vector<16x16x8xf32> to vector<256x8xf32>
    %c2_304 = arith.constant 2 : index
    %c0_305 = arith.constant 0 : index
    %c0_306 = arith.constant 0 : index
    %305 = vector.load %arg18[%c2_304, %c0_305, %c0_306] : memref<18x18x8xf32, #tpu.memory_space<vmem>>, vector<16x16x8xf32>
    %306 = vector.shape_cast %305 : vector<16x16x8xf32> to vector<256x8xf32>
    %c2_307 = arith.constant 2 : index
    %c1_308 = arith.constant 1 : index
    %c0_309 = arith.constant 0 : index
    %307 = vector.load %arg16[%c2_307, %c1_308, %c0_309] : memref<18x18x4xf32, #tpu.memory_space<vmem>>, vector<16x16x4xf32>
    %308 = vector.shape_cast %307 : vector<16x16x4xf32> to vector<256x4xf32>
    %c2_310 = arith.constant 2 : index
    %c1_311 = arith.constant 1 : index
    %c0_312 = arith.constant 0 : index
    %309 = vector.load %arg17[%c2_310, %c1_311, %c0_312] : memref<18x18x8xf32, #tpu.memory_space<vmem>>, vector<16x16x8xf32>
    %310 = vector.shape_cast %309 : vector<16x16x8xf32> to vector<256x8xf32>
    %c2_313 = arith.constant 2 : index
    %c1_314 = arith.constant 1 : index
    %c0_315 = arith.constant 0 : index
    %311 = vector.load %arg18[%c2_313, %c1_314, %c0_315] : memref<18x18x8xf32, #tpu.memory_space<vmem>>, vector<16x16x8xf32>
    %312 = vector.shape_cast %311 : vector<16x16x8xf32> to vector<256x8xf32>
    %c2_316 = arith.constant 2 : index
    %c2_317 = arith.constant 2 : index
    %c0_318 = arith.constant 0 : index
    %313 = vector.load %arg16[%c2_316, %c2_317, %c0_318] : memref<18x18x4xf32, #tpu.memory_space<vmem>>, vector<16x16x4xf32>
    %314 = vector.shape_cast %313 : vector<16x16x4xf32> to vector<256x4xf32>
    %c2_319 = arith.constant 2 : index
    %c2_320 = arith.constant 2 : index
    %c0_321 = arith.constant 0 : index
    %315 = vector.load %arg17[%c2_319, %c2_320, %c0_321] : memref<18x18x8xf32, #tpu.memory_space<vmem>>, vector<16x16x8xf32>
    %316 = vector.shape_cast %315 : vector<16x16x8xf32> to vector<256x8xf32>
    %c2_322 = arith.constant 2 : index
    %c2_323 = arith.constant 2 : index
    %c0_324 = arith.constant 0 : index
    %317 = vector.load %arg18[%c2_322, %c2_323, %c0_324] : memref<18x18x8xf32, #tpu.memory_space<vmem>>, vector<16x16x8xf32>
    %318 = vector.shape_cast %317 : vector<16x16x8xf32> to vector<256x8xf32>
    %319 = tpu.concatenate %266, %268, %270, %272, %274, %276, %278, %280, %282, %284, %286, %288, %290, %292, %294, %296 in 1 : vector<256x4xf32>, vector<256x8xf32>, vector<256x8xf32>, vector<256x4xf32>, vector<256x8xf32>, vector<256x8xf32>, vector<256x4xf32>, vector<256x8xf32>, vector<256x8xf32>, vector<256x4xf32>, vector<256x8xf32>, vector<256x8xf32>, vector<256x4xf32>, vector<256x8xf32>, vector<256x8xf32>, vector<256x4xf32> -> vector<256x104xf32>
    %320 = tpu.concatenate %298, %300, %302, %304, %306, %308, %310, %312, %314, %316, %318 in 1 : vector<256x8xf32>, vector<256x8xf32>, vector<256x4xf32>, vector<256x8xf32>, vector<256x8xf32>, vector<256x4xf32>, vector<256x8xf32>, vector<256x8xf32>, vector<256x4xf32>, vector<256x8xf32>, vector<256x8xf32> -> vector<256x76xf32>
    %321 = tpu.concatenate %319, %320 in 1 : vector<256x104xf32>, vector<256x76xf32> -> vector<256x180xf32>
    %c0_325 = arith.constant 0 : index
    %c0_326 = arith.constant 0 : index
    %322 = vector.load %arg13[%c0_325, %c0_326] : memref<180x128xf32, #tpu.memory_space<vmem>>, vector<180x128xf32>
    %cst_327 = arith.constant dense<0.000000e+00> : vector<256x128xf32>
    %323 = tpu.matmul %321, %322, %cst_327 {dimension_numbers = #tpu.dot_dimension_numbers<[1], [0], [0], [1], [0, 0, 1, 1], [], []>} : vector<256x180xf32>, vector<180x128xf32>, vector<256x128xf32> -> vector<256x128xf32>
    %c0_328 = arith.constant 0 : index
    %c0_329 = arith.constant 0 : index
    %324 = vector.load %arg14[%c0_328, %c0_329] : memref<1x128xf32, #tpu.memory_space<vmem>>, vector<1x128xf32>
    %325 = vector.broadcast %324 : vector<1x128xf32> to vector<256x128xf32>
    %326 = arith.addf %323, %325 : vector<256x128xf32>
    %327 = tpu.transpose %326, [1, 0] : vector<256x128xf32> -> vector<128x256xf32>
    %328 = vector.extract_strided_slice %327 {offsets = [0, 0], sizes = [8, 256], strides = [1, 1]} : vector<128x256xf32> to vector<8x256xf32>
    %c0_330 = arith.constant 0 : index
    %c0_331 = arith.constant 0 : index
    %c0_332 = arith.constant 0 : index
    %329 = vector.load %arg15[%c0_330, %c0_331, %c0_332] : memref<1x8x256xf32, #tpu.memory_space<vmem>>, vector<1x8x256xf32>
    %330 = vector.shape_cast %329 : vector<1x8x256xf32> to vector<8x256xf32>
    %331 = vector.shape_cast %328 : vector<8x256xf32> to vector<1x8x256xf32>
    tpu.vector_store %arg15[%c0_330, %c0_331, %c0_332], %331 {strides = array<i32>} : memref<1x8x256xf32, #tpu.memory_space<vmem>>, vector<1x8x256xf32>,
    return
  }
  func.func @transform_0(%arg0: i32) -> (i32, i32, i32, i32) {
    %c0_i32 = arith.constant 0 : i32
    %c0_i32_0 = arith.constant 0 : i32
    %c0_i32_1 = arith.constant 0 : i32
    %c0_i32_2 = arith.constant 0 : i32
    return %arg0, %c0_i32, %c0_i32_0, %c0_i32_1 : i32, i32, i32, i32
  }
  func.func @transform_1(%arg0: i32) -> (i32, i32, i32) {
    %c0_i32 = arith.constant 0 : i32
    %c0_i32_0 = arith.constant 0 : i32
    %c0_i32_1 = arith.constant 0 : i32
    %c0_i32_2 = arith.constant 0 : i32
    return %c0_i32, %c0_i32_0, %c0_i32_1 : i32, i32, i32
  }
  func.func @transform_2(%arg0: i32) -> (i32, i32) {
    %c0_i32 = arith.constant 0 : i32
    %c0_i32_0 = arith.constant 0 : i32
    %c0_i32_1 = arith.constant 0 : i32
    return %c0_i32, %c0_i32_0 : i32, i32
  }
  func.func @transform_3(%arg0: i32) -> (i32, i32) {
    %c0_i32 = arith.constant 0 : i32
    %c0_i32_0 = arith.constant 0 : i32
    %c0_i32_1 = arith.constant 0 : i32
    return %c0_i32, %c0_i32_0 : i32, i32
  }
  func.func @transform_4(%arg0: i32) -> (i32, i32) {
    %c0_i32 = arith.constant 0 : i32
    %c0_i32_0 = arith.constant 0 : i32
    %c0_i32_1 = arith.constant 0 : i32
    return %c0_i32, %c0_i32_0 : i32, i32
  }
  func.func @transform_5(%arg0: i32) -> (i32, i32, i32) {
    %c0_i32 = arith.constant 0 : i32
    %c0_i32_0 = arith.constant 0 : i32
    %c0_i32_1 = arith.constant 0 : i32
    %c0_i32_2 = arith.constant 0 : i32
    return %c0_i32, %c0_i32_0, %c0_i32_1 : i32, i32, i32
  }
  func.func @transform_6(%arg0: i32) -> (i32, i32) {
    %c0_i32 = arith.constant 0 : i32
    %c0_i32_0 = arith.constant 0 : i32
    %c0_i32_1 = arith.constant 0 : i32
    return %c0_i32, %c0_i32_0 : i32, i32
  }
  func.func @transform_7(%arg0: i32) -> (i32, i32, i32) {
    %c0_i32 = arith.constant 0 : i32
    %c0_i32_0 = arith.constant 0 : i32
    %c0_i32_1 = arith.constant 0 : i32
    %c0_i32_2 = arith.constant 0 : i32
    return %c0_i32, %c0_i32_0, %c0_i32_1 : i32, i32, i32
  }
  func.func @transform_8(%arg0: i32) -> (i32, i32) {
    %c0_i32 = arith.constant 0 : i32
    %c0_i32_0 = arith.constant 0 : i32
    %c0_i32_1 = arith.constant 0 : i32
    return %c0_i32, %c0_i32_0 : i32, i32
  }
  func.func @transform_9(%arg0: i32) -> (i32, i32) {
    %c0_i32 = arith.constant 0 : i32
    %c0_i32_0 = arith.constant 0 : i32
    %c0_i32_1 = arith.constant 0 : i32
    return %c0_i32, %c0_i32_0 : i32, i32
  }
  func.func @transform_10(%arg0: i32) -> (i32, i32) {
    %c0_i32 = arith.constant 0 : i32
    %c0_i32_0 = arith.constant 0 : i32
    %c0_i32_1 = arith.constant 0 : i32
    return %c0_i32, %c0_i32_0 : i32, i32
  }
  func.func @transform_11(%arg0: i32) -> (i32, i32) {
    %c0_i32 = arith.constant 0 : i32
    %c0_i32_0 = arith.constant 0 : i32
    %c0_i32_1 = arith.constant 0 : i32
    return %c0_i32, %c0_i32_0 : i32, i32
  }
  func.func @transform_12(%arg0: i32) -> (i32, i32) {
    %c0_i32 = arith.constant 0 : i32
    %c0_i32_0 = arith.constant 0 : i32
    %c0_i32_1 = arith.constant 0 : i32
    return %c0_i32, %c0_i32_0 : i32, i32
  }
  func.func @transform_13(%arg0: i32) -> (i32, i32) {
    %c0_i32 = arith.constant 0 : i32
    %c0_i32_0 = arith.constant 0 : i32
    %c0_i32_1 = arith.constant 0 : i32
    return %c0_i32, %c0_i32_0 : i32, i32
  }
  func.func @transform_14(%arg0: i32) -> (i32, i32, i32) {
    %c0_i32 = arith.constant 0 : i32
    %c0_i32_0 = arith.constant 0 : i32
    %c0_i32_1 = arith.constant 0 : i32
    return %arg0, %c0_i32, %c0_i32_0 : i32, i32, i32
  }
}

</mosaic_0001>

<llo_original>
// kernel: tpu_custom_call.1
$region0: #{tpu_custom_call.1}
  #allocation0 [shape = 'u32[]', space=smem, size = 0x4, offset = 0x4, fixed_abs, tag = 'smem constant byte address 0x4 - core index']
  #allocation1 [shape = 'u32[144,128]{1,0:T(1,128)}', space=vmem, size = 0x12000, scoped, tag = 'internal scratch']
  #allocation2 [shape = 'f32[18,18,4]{2,1,0:T(8,128)}', space=vmem, size = 0x36000, scoped, tag = 'scratch operand']
  #allocation3 [shape = 'f32[18,18,8]{2,1,0:T(8,128)}', space=vmem, size = 0x36000, scoped, tag = 'scratch operand']
  #allocation4 [shape = 'f32[18,18,8]{2,1,0:T(8,128)}', space=vmem, size = 0x36000, scoped, tag = 'scratch operand']
  %s0 = inlined_call_operand.vmem [shape: f32[2,16,16,4], index: 0, kind: input, shape index: {}]
  %s1 = inlined_call_operand.vmem [shape: f32[3,3,4], index: 1, kind: input, shape index: {}]
  %s2 = inlined_call_operand.vmem [shape: f32[1,4], index: 2, kind: input, shape index: {}]
  %s3 = inlined_call_operand.vmem [shape: f32[4,8], index: 3, kind: input, shape index: {}]
  %s4 = inlined_call_operand.vmem [shape: f32[1,8], index: 4, kind: input, shape index: {}]
  %s5 = inlined_call_operand.vmem [shape: f32[3,3,4], index: 5, kind: input, shape index: {}]
  %s6 = inlined_call_operand.vmem [shape: f32[1,4], index: 6, kind: input, shape index: {}]
  %s7 = inlined_call_operand.vmem [shape: f32[3,3,8], index: 7, kind: input, shape index: {}]
  %s8 = inlined_call_operand.vmem [shape: f32[1,8], index: 8, kind: input, shape index: {}]
  %s9 = inlined_call_operand.vmem [shape: f32[4,8], index: 9, kind: input, shape index: {}]
  %s10 = inlined_call_operand.vmem [shape: f32[8,8], index: 10, kind: input, shape index: {}]
  %s11 = inlined_call_operand.vmem [shape: f32[1,8], index: 11, kind: input, shape index: {}]
  %s12 = inlined_call_operand.vmem [shape: f32[180,128], index: 12, kind: input, shape index: {}]
  %s13 = inlined_call_operand.vmem [shape: f32[1,128], index: 13, kind: input, shape index: {}]
  %s14 = inlined_call_operand.hbm [shape: f32[2,8,256], index: 14, kind: output, shape index: {}]
  %s15 = sld [smem:[#allocation0]]
  $region89: #{tpu_custom_call.1} parent=0
    _
  %s17 = ssub.s32 1, %s15
  %s18 = scalar_select 0, %s17, %s15
  $region1: #{tpu_custom_call.1} parent=0
    #allocation5 [shape = 'u8[16384]{0}', space=vmem, size = 0x4000, scoped, tag = 'output window, operand 0']
    #allocation6 [shape = 's32[2]{0}', space=sflag, size = 0x8, scoped, tag = 'scoped memory for tpu_custom_call.1']
    %19 = vsyncpa [#allocation6], 0
    %s20 = scalar_lea.sflag [#allocation6], 1
    %21 = vsyncpa %s20, 0
    loop: start=0, step=1, limit=4
    $region2: #{tpu_custom_call.1} parent=1 // loop_pre_header
      _
    $region3: #{tpu_custom_call.1} parent=1 // loop_header
      %s23 = sphi 0, %s27
      %p24 = scmp.ge.s32.totalorder %s23, 4
      %s33 = sphi 0, %s35
      %s36 = sphi 0, %s33
      %s37 = sphi 0, %s36
      %s53 = sphi 0, %s37
      %s57 = sphi 0, %s57
      %s59 = sphi 0, %s57
      %s60 = sphi 0, %s59
      %s74 = sphi 0, %s60
      %s78 = sphi 0, %s78
      %s80 = sphi 0, %s78
      %s81 = sphi 0, %s80
      %s95 = sphi 0, %s81
      %s99 = sphi 0, %s99
      %s101 = sphi 0, %s99
      %s102 = sphi 0, %s101
      %s116 = sphi 0, %s102
      %s120 = sphi 0, %s120
      %s122 = sphi 0, %s120
      %s123 = sphi 0, %s122
      %s137 = sphi 0, %s123
      %s141 = sphi 0, %s141
      %s143 = sphi 0, %s141
      %s144 = sphi 0, %s143
      %s158 = sphi 0, %s144
      %s162 = sphi 0, %s162
      %s164 = sphi 0, %s162
      %s165 = sphi 0, %s164
      %s179 = sphi 0, %s165
      %s183 = sphi 0, %s183
      %s185 = sphi 0, %s183
      %s186 = sphi 0, %s185
      %s200 = sphi 0, %s186
      %s204 = sphi 0, %s204
      %s206 = sphi 0, %s204
      %s207 = sphi 0, %s206
      %s221 = sphi 0, %s207
      %s225 = sphi 0, %s225
      %s227 = sphi 0, %s225
      %s228 = sphi 0, %s227
      %s242 = sphi 0, %s228
      %s246 = sphi 0, %s246
      %s248 = sphi 0, %s246
      %s249 = sphi 0, %s248
      %s263 = sphi 0, %s249
      %s267 = sphi 0, %s267
      %s269 = sphi 0, %s267
      %s270 = sphi 0, %s269
      %s284 = sphi 0, %s270
      %s288 = sphi 0, %s288
      %s290 = sphi 0, %s288
      %s291 = sphi 0, %s290
      %s305 = sphi 0, %s291
      %s309 = sphi 0, %s309
      %s311 = sphi 0, %s309
      %s312 = sphi 0, %s311
      %s326 = sphi 0, %s312
      %s332 = sphi 0, %s334
      %s335 = sphi 0, %s332
      %s336 = sphi 0, %s335
      %s352 = sphi 0, %s336
    $region4: #{tpu_custom_call.1} parent=1 // loop_header_branch
      %26 = sbr.rel (%p24) target = $region8
    $region5: #{tpu_custom_call.1} parent=1 // loop_body
      %s28 = ssub.s32 %s23, 1
      %s29 = ssub.s32 %s23, 2
      %s30 = sadd.s32 %s23, 1
      %s31 = ssub.s32 %s23, %s30
      %p32 = scmp.eq.s32.totalorder %s31, 0
      %s34 = sadd.s32 %s33, 1
      %s35 = scalar_select %p32, %s33, %s34
      %p38 = pneg %p32
      %p39 = scmp.eq.s32.totalorder %s23, 1
      %p40 = por %p38, %p39
      %p41 = scmp.ne.s32.totalorder %s33, %s36
      %p42 = scmp.eq.s32.totalorder %s23, 0
      %p43 = por %p41, %p42
      %p44 = scmp.ne.s32.totalorder %s33, %s36
      %p45 = scmp.eq.s32.totalorder %s28, 1
      %p46 = por %p44, %p45
      %p47 = scmp.ne.s32.totalorder %s36, %s37
      %p48 = scmp.eq.s32.totalorder %s28, 0
      %p49 = por %p47, %p48
      %p50 = scmp.ne.s32.totalorder %s36, %s37
      %p51 = scmp.eq.s32.totalorder %s29, 1
      %p52 = por %p50, %p51
      %p54 = scmp.ne.s32.totalorder %s37, %s53
      %p55 = scmp.eq.s32.totalorder %s29, 0
      %p56 = por %p54, %p55
      %s58 = sadd.s32 %s57, 1
      %p61 = scmp.eq.s32.totalorder %s23, 1
      %p62 = scmp.ne.s32.totalorder %s57, %s59
      %p63 = scmp.eq.s32.totalorder %s23, 0
      %p64 = por %p62, %p63
      %p65 = scmp.ne.s32.totalorder %s57, %s59
      %p66 = scmp.eq.s32.totalorder %s28, 1
      %p67 = por %p65, %p66
      %p68 = scmp.ne.s32.totalorder %s59, %s60
      %p69 = scmp.eq.s32.totalorder %s28, 0
      %p70 = por %p68, %p69
      %p71 = scmp.ne.s32.totalorder %s59, %s60
      %p72 = scmp.eq.s32.totalorder %s29, 1
      %p73 = por %p71, %p72
      %p75 = scmp.ne.s32.totalorder %s60, %s74
      %p76 = scmp.eq.s32.totalorder %s29, 0
      %p77 = por %p75, %p76
      %s79 = sadd.s32 %s78, 1
      %p82 = scmp.eq.s32.totalorder %s23, 1
      %p83 = scmp.ne.s32.totalorder %s78, %s80
      %p84 = scmp.eq.s32.totalorder %s23, 0
      %p85 = por %p83, %p84
      %p86 = scmp.ne.s32.totalorder %s78, %s80
      %p87 = scmp.eq.s32.totalorder %s28, 1
      %p88 = por %p86, %p87
      %p89 = scmp.ne.s32.totalorder %s80, %s81
      %p90 = scmp.eq.s32.totalorder %s28, 0
      %p91 = por %p89, %p90
      %p92 = scmp.ne.s32.totalorder %s80, %s81
      %p93 = scmp.eq.s32.totalorder %s29, 1
      %p94 = por %p92, %p93
      %p96 = scmp.ne.s32.totalorder %s81, %s95
      %p97 = scmp.eq.s32.totalorder %s29, 0
      %p98 = por %p96, %p97
      %s100 = sadd.s32 %s99, 1
      %p103 = scmp.eq.s32.totalorder %s23, 1
      %p104 = scmp.ne.s32.totalorder %s99, %s101
      %p105 = scmp.eq.s32.totalorder %s23, 0
      %p106 = por %p104, %p105
      %p107 = scmp.ne.s32.totalorder %s99, %s101
      %p108 = scmp.eq.s32.totalorder %s28, 1
      %p109 = por %p107, %p108
      %p110 = scmp.ne.s32.totalorder %s101, %s102
      %p111 = scmp.eq.s32.totalorder %s28, 0
      %p112 = por %p110, %p111
      %p113 = scmp.ne.s32.totalorder %s101, %s102
      %p114 = scmp.eq.s32.totalorder %s29, 1
      %p115 = por %p113, %p114
      %p117 = scmp.ne.s32.totalorder %s102, %s116
      %p118 = scmp.eq.s32.totalorder %s29, 0
      %p119 = por %p117, %p118
      %s121 = sadd.s32 %s120, 1
      %p124 = scmp.eq.s32.totalorder %s23, 1
      %p125 = scmp.ne.s32.totalorder %s120, %s122
      %p126 = scmp.eq.s32.totalorder %s23, 0
      %p127 = por %p125, %p126
      %p128 = scmp.ne.s32.totalorder %s120, %s122
      %p129 = scmp.eq.s32.totalorder %s28, 1
      %p130 = por %p128, %p129
      %p131 = scmp.ne.s32.totalorder %s122, %s123
      %p132 = scmp.eq.s32.totalorder %s28, 0
      %p133 = por %p131, %p132
      %p134 = scmp.ne.s32.totalorder %s122, %s123
      %p135 = scmp.eq.s32.totalorder %s29, 1
      %p136 = por %p134, %p135
      %p138 = scmp.ne.s32.totalorder %s123, %s137
      %p139 = scmp.eq.s32.totalorder %s29, 0
      %p140 = por %p138, %p139
      %s142 = sadd.s32 %s141, 1
      %p145 = scmp.eq.s32.totalorder %s23, 1
      %p146 = scmp.ne.s32.totalorder %s141, %s143
      %p147 = scmp.eq.s32.totalorder %s23, 0
      %p148 = por %p146, %p147
      %p149 = scmp.ne.s32.totalorder %s141, %s143
      %p150 = scmp.eq.s32.totalorder %s28, 1
      %p151 = por %p149, %p150
      %p152 = scmp.ne.s32.totalorder %s143, %s144
      %p153 = scmp.eq.s32.totalorder %s28, 0
      %p154 = por %p152, %p153
      %p155 = scmp.ne.s32.totalorder %s143, %s144
      %p156 = scmp.eq.s32.totalorder %s29, 1
      %p157 = por %p155, %p156
      %p159 = scmp.ne.s32.totalorder %s144, %s158
      %p160 = scmp.eq.s32.totalorder %s29, 0
      %p161 = por %p159, %p160
      %s163 = sadd.s32 %s162, 1
      %p166 = scmp.eq.s32.totalorder %s23, 1
      %p167 = scmp.ne.s32.totalorder %s162, %s164
      %p168 = scmp.eq.s32.totalorder %s23, 0
      %p169 = por %p167, %p168
      %p170 = scmp.ne.s32.totalorder %s162, %s164
      %p171 = scmp.eq.s32.totalorder %s28, 1
      %p172 = por %p170, %p171
      %p173 = scmp.ne.s32.totalorder %s164, %s165
      %p174 = scmp.eq.s32.totalorder %s28, 0
      %p175 = por %p173, %p174
      %p176 = scmp.ne.s32.totalorder %s164, %s165
      %p177 = scmp.eq.s32.totalorder %s29, 1
      %p178 = por %p176, %p177
      %p180 = scmp.ne.s32.totalorder %s165, %s179
      %p181 = scmp.eq.s32.totalorder %s29, 0
      %p182 = por %p180, %p181
      %s184 = sadd.s32 %s183, 1
      %p187 = scmp.eq.s32.totalorder %s23, 1
      %p188 = scmp.ne.s32.totalorder %s183, %s185
      %p189 = scmp.eq.s32.totalorder %s23, 0
      %p190 = por %p188, %p189
      %p191 = scmp.ne.s32.totalorder %s183, %s185
      %p192 = scmp.eq.s32.totalorder %s28, 1
      %p193 = por %p191, %p192
      %p194 = scmp.ne.s32.totalorder %s185, %s186
      %p195 = scmp.eq.s32.totalorder %s28, 0
      %p196 = por %p194, %p195
      %p197 = scmp.ne.s32.totalorder %s185, %s186
      %p198 = scmp.eq.s32.totalorder %s29, 1
      %p199 = por %p197, %p198
      %p201 = scmp.ne.s32.totalorder %s186, %s200
      %p202 = scmp.eq.s32.totalorder %s29, 0
      %p203 = por %p201, %p202
      %s205 = sadd.s32 %s204, 1
      %p208 = scmp.eq.s32.totalorder %s23, 1
      %p209 = scmp.ne.s32.totalorder %s204, %s206
      %p210 = scmp.eq.s32.totalorder %s23, 0
      %p211 = por %p209, %p210
      %p212 = scmp.ne.s32.totalorder %s204, %s206
      %p213 = scmp.eq.s32.totalorder %s28, 1
      %p214 = por %p212, %p213
      %p215 = scmp.ne.s32.totalorder %s206, %s207
      %p216 = scmp.eq.s32.totalorder %s28, 0
      %p217 = por %p215, %p216
      %p218 = scmp.ne.s32.totalorder %s206, %s207
      %p219 = scmp.eq.s32.totalorder %s29, 1
      %p220 = por %p218, %p219
      %p222 = scmp.ne.s32.totalorder %s207, %s221
      %p223 = scmp.eq.s32.totalorder %s29, 0
      %p224 = por %p222, %p223
      %s226 = sadd.s32 %s225, 1
      %p229 = scmp.eq.s32.totalorder %s23, 1
      %p230 = scmp.ne.s32.totalorder %s225, %s227
      %p231 = scmp.eq.s32.totalorder %s23, 0
      %p232 = por %p230, %p231
      %p233 = scmp.ne.s32.totalorder %s225, %s227
      %p234 = scmp.eq.s32.totalorder %s28, 1
      %p235 = por %p233, %p234
      %p236 = scmp.ne.s32.totalorder %s227, %s228
      %p237 = scmp.eq.s32.totalorder %s28, 0
      %p238 = por %p236, %p237
      %p239 = scmp.ne.s32.totalorder %s227, %s228
      %p240 = scmp.eq.s32.totalorder %s29, 1
      %p241 = por %p239, %p240
      %p243 = scmp.ne.s32.totalorder %s228, %s242
      %p244 = scmp.eq.s32.totalorder %s29, 0
      %p245 = por %p243, %p244
      %s247 = sadd.s32 %s246, 1
      %p250 = scmp.eq.s32.totalorder %s23, 1
      %p251 = scmp.ne.s32.totalorder %s246, %s248
      %p252 = scmp.eq.s32.totalorder %s23, 0
      %p253 = por %p251, %p252
      %p254 = scmp.ne.s32.totalorder %s246, %s248
      %p255 = scmp.eq.s32.totalorder %s28, 1
      %p256 = por %p254, %p255
      %p257 = scmp.ne.s32.totalorder %s248, %s249
      %p258 = scmp.eq.s32.totalorder %s28, 0
      %p259 = por %p257, %p258
      %p260 = scmp.ne.s32.totalorder %s248, %s249
      %p261 = scmp.eq.s32.totalorder %s29, 1
      %p262 = por %p260, %p261
      %p264 = scmp.ne.s32.totalorder %s249, %s263
      %p265 = scmp.eq.s32.totalorder %s29, 0
      %p266 = por %p264, %p265
      %s268 = sadd.s32 %s267, 1
      %p271 = scmp.eq.s32.totalorder %s23, 1
      %p272 = scmp.ne.s32.totalorder %s267, %s269
      %p273 = scmp.eq.s32.totalorder %s23, 0
      %p274 = por %p272, %p273
      %p275 = scmp.ne.s32.totalorder %s267, %s269
      %p276 = scmp.eq.s32.totalorder %s28, 1
      %p277 = por %p275, %p276
      %p278 = scmp.ne.s32.totalorder %s269, %s270
      %p279 = scmp.eq.s32.totalorder %s28, 0
      %p280 = por %p278, %p279
      %p281 = scmp.ne.s32.totalorder %s269, %s270
      %p282 = scmp.eq.s32.totalorder %s29, 1
      %p283 = por %p281, %p282
      %p285 = scmp.ne.s32.totalorder %s270, %s284
      %p286 = scmp.eq.s32.totalorder %s29, 0
      %p287 = por %p285, %p286
      %s289 = sadd.s32 %s288, 1
      %p292 = scmp.eq.s32.totalorder %s23, 1
      %p293 = scmp.ne.s32.totalorder %s288, %s290
      %p294 = scmp.eq.s32.totalorder %s23, 0
      %p295 = por %p293, %p294
      %p296 = scmp.ne.s32.totalorder %s288, %s290
      %p297 = scmp.eq.s32.totalorder %s28, 1
      %p298 = por %p296, %p297
      %p299 = scmp.ne.s32.totalorder %s290, %s291
      %p300 = scmp.eq.s32.totalorder %s28, 0
      %p301 = por %p299, %p300
      %p302 = scmp.ne.s32.totalorder %s290, %s291
      %p303 = scmp.eq.s32.totalorder %s29, 1
      %p304 = por %p302, %p303
      %p306 = scmp.ne.s32.totalorder %s291, %s305
      %p307 = scmp.eq.s32.totalorder %s29, 0
      %p308 = por %p306, %p307
      %s310 = sadd.s32 %s309, 1
      %p313 = scmp.eq.s32.totalorder %s23, 1
      %p314 = scmp.ne.s32.totalorder %s309, %s311
      %p315 = scmp.eq.s32.totalorder %s23, 0
      %p316 = por %p314, %p315
      %p317 = scmp.ne.s32.totalorder %s309, %s311
      %p318 = scmp.eq.s32.totalorder %s28, 1
      %p319 = por %p317, %p318
      %p320 = scmp.ne.s32.totalorder %s311, %s312
      %p321 = scmp.eq.s32.totalorder %s28, 0
      %p322 = por %p320, %p321
      %p323 = scmp.ne.s32.totalorder %s311, %s312
      %p324 = scmp.eq.s32.totalorder %s29, 1
      %p325 = por %p323, %p324
      %p327 = scmp.ne.s32.totalorder %s312, %s326
      %p328 = scmp.eq.s32.totalorder %s29, 0
      %p329 = por %p327, %p328
      %s330 = ssub.s32 %s23, %s30
      %p331 = scmp.eq.s32.totalorder %s330, 0
      %s333 = sadd.s32 %s332, 1
      %s334 = scalar_select %p331, %s332, %s333
      %p337 = pneg %p331
      %p338 = scmp.eq.s32.totalorder %s23, 1
      %p339 = por %p337, %p338
      %p340 = scmp.ne.s32.totalorder %s332, %s335
      %p341 = scmp.eq.s32.totalorder %s23, 0
      %p342 = por %p340, %p341
      %p343 = scmp.ne.s32.totalorder %s332, %s335
      %p344 = scmp.eq.s32.totalorder %s28, 1
      %p345 = por %p343, %p344
      %p346 = scmp.ne.s32.totalorder %s335, %s336
      %p347 = scmp.eq.s32.totalorder %s28, 0
      %p348 = por %p346, %p347
      %p349 = scmp.ne.s32.totalorder %s335, %s336
      %p350 = scmp.eq.s32.totalorder %s29, 1
      %p351 = por %p349, %p350
      %p353 = scmp.ne.s32.totalorder %s336, %s352
      %p354 = scmp.eq.s32.totalorder %s29, 0
      %p355 = por %p353, %p354
      %p356 = scmp.le.s32.totalorder 1, %s23
      %p357 = scmp.lt.s32.totalorder %s23, 3
      %p358 = pnand %p356, %p357
      %p359 = pneg %p358
      // Predicated region
      $region9: #{tpu_custom_call.1} parent=5 // pred_check
        _
      $region10: #{tpu_custom_call.1} parent=5 // pred_check_branch
        %361 = sbr.rel (%p358) target = $region12
      $region11: #{tpu_custom_call.1} parent=5 // pred_region
        %s362 = ssub.s32 %s23, 1
        // Predicated region
        $region13: #{tpu_custom_call.1} parent=11 // pred_check
          %p363 = pneg %p70
        $region14: #{tpu_custom_call.1} parent=11 // pred_check_branch
          %365 = sbr.rel (%p363) target = $region16
        $region15: #{tpu_custom_call.1} parent=11 // pred_region
          _
        $region16: #{tpu_custom_call.1} parent=11 // pred_fallthru
          _
        // Predicated region
        $region17: #{tpu_custom_call.1} parent=11 // pred_check
          %p366 = pneg %p91
        $region18: #{tpu_custom_call.1} parent=11 // pred_check_branch
          %368 = sbr.rel (%p366) target = $region20
        $region19: #{tpu_custom_call.1} parent=11 // pred_region
          _
        $region20: #{tpu_custom_call.1} parent=11 // pred_fallthru
          _
        // Predicated region
        $region21: #{tpu_custom_call.1} parent=11 // pred_check
          %p369 = pneg %p112
        $region22: #{tpu_custom_call.1} parent=11 // pred_check_branch
          %371 = sbr.rel (%p369) target = $region24
        $region23: #{tpu_custom_call.1} parent=11 // pred_region
          _
        $region24: #{tpu_custom_call.1} parent=11 // pred_fallthru
          _
        // Predicated region
        $region25: #{tpu_custom_call.1} parent=11 // pred_check
          %p372 = pneg %p133
        $region26: #{tpu_custom_call.1} parent=11 // pred_check_branch
          %374 = sbr.rel (%p372) target = $region28
        $region27: #{tpu_custom_call.1} parent=11 // pred_region
          _
        $region28: #{tpu_custom_call.1} parent=11 // pred_fallthru
          _
        // Predicated region
        $region29: #{tpu_custom_call.1} parent=11 // pred_check
          %p375 = pneg %p154
        $region30: #{tpu_custom_call.1} parent=11 // pred_check_branch
          %377 = sbr.rel (%p375) target = $region32
        $region31: #{tpu_custom_call.1} parent=11 // pred_region
          _
        $region32: #{tpu_custom_call.1} parent=11 // pred_fallthru
          _
        // Predicated region
        $region33: #{tpu_custom_call.1} parent=11 // pred_check
          %p378 = pneg %p175
        $region34: #{tpu_custom_call.1} parent=11 // pred_check_branch
          %380 = sbr.rel (%p378) target = $region36
        $region35: #{tpu_custom_call.1} parent=11 // pred_region
          _
        $region36: #{tpu_custom_call.1} parent=11 // pred_fallthru
          _
        // Predicated region
        $region37: #{tpu_custom_call.1} parent=11 // pred_check
          %p381 = pneg %p196
        $region38: #{tpu_custom_call.1} parent=11 // pred_check_branch
          %383 = sbr.rel (%p381) target = $region40
        $region39: #{tpu_custom_call.1} parent=11 // pred_region
          _
        $region40: #{tpu_custom_call.1} parent=11 // pred_fallthru
          _
        // Predicated region
        $region41: #{tpu_custom_call.1} parent=11 // pred_check
          %p384 = pneg %p217
        $region42: #{tpu_custom_call.1} parent=11 // pred_check_branch
          %386 = sbr.rel (%p384) target = $region44
        $region43: #{tpu_custom_call.1} parent=11 // pred_region
          _
        $region44: #{tpu_custom_call.1} parent=11 // pred_fallthru
          _
        // Predicated region
        $region45: #{tpu_custom_call.1} parent=11 // pred_check
          %p387 = pneg %p238
        $region46: #{tpu_custom_call.1} parent=11 // pred_check_branch
          %389 = sbr.rel (%p387) target = $region48
        $region47: #{tpu_custom_call.1} parent=11 // pred_region
          _
        $region48: #{tpu_custom_call.1} parent=11 // pred_fallthru
          _
        // Predicated region
        $region49: #{tpu_custom_call.1} parent=11 // pred_check
          %p390 = pneg %p259
        $region50: #{tpu_custom_call.1} parent=11 // pred_check_branch
          %392 = sbr.rel (%p390) target = $region52
        $region51: #{tpu_custom_call.1} parent=11 // pred_region
          _
        $region52: #{tpu_custom_call.1} parent=11 // pred_fallthru
          _
        // Predicated region
        $region53: #{tpu_custom_call.1} parent=11 // pred_check
          %p393 = pneg %p280
        $region54: #{tpu_custom_call.1} parent=11 // pred_check_branch
          %395 = sbr.rel (%p393) target = $region56
        $region55: #{tpu_custom_call.1} parent=11 // pred_region
          _
        $region56: #{tpu_custom_call.1} parent=11 // pred_fallthru
          _
        // Predicated region
        $region57: #{tpu_custom_call.1} parent=11 // pred_check
          %p396 = pneg %p301
        $region58: #{tpu_custom_call.1} parent=11 // pred_check_branch
          %398 = sbr.rel (%p396) target = $region60
        $region59: #{tpu_custom_call.1} parent=11 // pred_region
          _
        $region60: #{tpu_custom_call.1} parent=11 // pred_fallthru
          _
        // Predicated region
        $region61: #{tpu_custom_call.1} parent=11 // pred_check
          %p399 = pneg %p322
        $region62: #{tpu_custom_call.1} parent=11 // pred_check_branch
          %401 = sbr.rel (%p399) target = $region64
        $region63: #{tpu_custom_call.1} parent=11 // pred_region
          _
        $region64: #{tpu_custom_call.1} parent=11 // pred_fallthru
          _
      $region12: #{tpu_custom_call.1} parent=5 // pred_fallthru
        _
      %p402 = scmp.lt.s32.totalorder %s23, 2
      // Predicated region
      $region65: #{tpu_custom_call.1} parent=5 // pred_check
        %p403 = pneg %p402
      $region66: #{tpu_custom_call.1} parent=5 // pred_check_branch
        %405 = sbr.rel (%p403) target = $region68
      $region67: #{tpu_custom_call.1} parent=5 // pred_region
        // Predicated region
        $region69: #{tpu_custom_call.1} parent=67 // pred_check
          %p406 = pneg %p43
        $region70: #{tpu_custom_call.1} parent=67 // pred_check_branch
          %408 = sbr.rel (%p406) target = $region72
        $region71: #{tpu_custom_call.1} parent=67 // pred_region
          %p409 = scmp.lt.s32.totalorder %s23, 1
          %s410 = scalar_select %p409, %s23, 1
          %s411 = smul.addr %s410, 32
          %s412 = smul.addr %s411, 8
          %s413 = scalar_lea.vmem %s0, %s412
        $region72: #{tpu_custom_call.1} parent=67 // pred_fallthru
          _
      $region68: #{tpu_custom_call.1} parent=5 // pred_fallthru
        _
      %p414 = scmp.le.s32.totalorder 1, %s23
      %p415 = scmp.lt.s32.totalorder %s23, 3
      %p416 = pnand %p414, %p415
      %p417 = pneg %p416
      // Predicated region
      $region73: #{tpu_custom_call.1} parent=5 // pred_check
        _
      $region74: #{tpu_custom_call.1} parent=5 // pred_check_branch
        %419 = sbr.rel (%p416) target = $region76
      $region75: #{tpu_custom_call.1} parent=5 // pred_region
        %s420 = ssub.s32 %s23, 1
        %p421 = scmp.lt.s32.totalorder %s28, 1
        %s422 = scalar_select %p421, %s28, 1
        %s423 = smul.addr %s422, 32
        %s424 = smul.addr %s423, 8
        %s425 = scalar_lea.vmem %s0, %s424
        %p426 = pneg %p49
        %p427 = pneg %p46
        %p428 = pneg %p70
        %p429 = pneg %p67
        %p430 = pneg %p91
        %p431 = pneg %p88
        %p432 = pneg %p112
        %p433 = pneg %p109
        %p434 = pneg %p133
        %p435 = pneg %p130
        %p436 = pneg %p154
        %p437 = pneg %p151
        %p438 = pneg %p175
        %p439 = pneg %p172
        %p440 = pneg %p196
        %p441 = pneg %p193
        %p442 = pneg %p217
        %p443 = pneg %p214
        %p444 = pneg %p238
        %p445 = pneg %p235
        %p446 = pneg %p259
        %p447 = pneg %p256
        %p448 = pneg %p280
        %p449 = pneg %p277
        %p450 = pneg %p301
        %p451 = pneg %p298
        %p452 = pneg %p322
        %p453 = pneg %p319
        %p454 = pneg %p348
        %p455 = pneg %p345
        %s456 = sand.u32 %s335, 1
        %s457 = scalar_lea.sflag [#allocation6], %s456
        %s458 = sand.u32 %s335, 1
        %s459 = smul.addr %s458, 16
        %s460 = scalar_lea.vmem [#allocation5], %s459
        %p461 = scmp.lt.s32.totalorder %s28, 1
        %s462 = scalar_select %p461, %s28, 1
        %s463 = smul.addr %s462, 32
        %s464 = smul.addr %s463, 8
        %s465 = scalar_lea.vmem %s0, %s464
        %vm466 = vcmask 31744
        %467 = vst.msk [vmem:[#allocation2] sm:$0xff] %vm466, 0.0
        %468 = vst.msk [vmem:[#allocation2 + $0x8] sm:$0xff] %vm466, 0.0
        %vm469 = vcmask 25600
        %470 = vst.msk [vmem:[#allocation2 + $0x10] sm:$0x3] %vm469, 0.0
        %s471 = scalar_lea.vmem [#allocation2], 408
        %472 = vst.msk [vmem:[%s471] sm:$0xff] %vm466, 0.0
        %473 = vst.msk [vmem:[%s471 + $0x8] sm:$0xff] %vm466, 0.0
        %474 = vst.msk [vmem:[%s471 + $0x10] sm:$0x3] %vm469, 0.0
        %vm475 = vcmask 24576
        %476 = vst.msk [vmem:[#allocation2] sm:$0x1] %vm475, 0.0
        %477 = vst.msk [vmem:[#allocation2 + $0x18] sm:$0x1] %vm475, 0.0
        %478 = vst.msk [vmem:[#allocation2 + $0x30] sm:$0x1] %vm475, 0.0
        %479 = vst.msk [vmem:[#allocation2 + $0x48] sm:$0x1] %vm475, 0.0
        %480 = vst.msk [vmem:[#allocation2 + $0x60] sm:$0x1] %vm475, 0.0
        %481 = vst.msk [vmem:[#allocation2 + $0x78] sm:$0x1] %vm475, 0.0
        %482 = vst.msk [vmem:[#allocation2 + $0x90] sm:$0x1] %vm475, 0.0
        %483 = vst.msk [vmem:[#allocation2 + $0xa8] sm:$0x1] %vm475, 0.0
        %484 = vst.msk [vmem:[#allocation2 + $0xc0] sm:$0x1] %vm475, 0.0
        %485 = vst.msk [vmem:[#allocation2 + $0xd8] sm:$0x1] %vm475, 0.0
        %486 = vst.msk [vmem:[#allocation2 + $0xf0] sm:$0x1] %vm475, 0.0
        %487 = vst.msk [vmem:[#allocation2 + $0x108] sm:$0x1] %vm475, 0.0
        %488 = vst.msk [vmem:[#allocation2 + $0x120] sm:$0x1] %vm475, 0.0
        %489 = vst.msk [vmem:[#allocation2 + $0x138] sm:$0x1] %vm475, 0.0
        %490 = vst.msk [vmem:[#allocation2 + $0x150] sm:$0x1] %vm475, 0.0
        %491 = vst.msk [vmem:[#allocation2 + $0x168] sm:$0x1] %vm475, 0.0
        %492 = vst.msk [vmem:[#allocation2 + $0x180] sm:$0x1] %vm475, 0.0
        %493 = vst.msk [vmem:[#allocation2 + $0x198] sm:$0x1] %vm475, 0.0
        %494 = vst.msk [vmem:[#allocation2 + $0x11] sm:$0x1] %vm475, 0.0
        %495 = vst.msk [vmem:[#allocation2 + $0x29] sm:$0x1] %vm475, 0.0
        %496 = vst.msk [vmem:[#allocation2 + $0x41] sm:$0x1] %vm475, 0.0
        %497 = vst.msk [vmem:[#allocation2 + $0x59] sm:$0x1] %vm475, 0.0
        %498 = vst.msk [vmem:[#allocation2 + $0x71] sm:$0x1] %vm475, 0.0
        %499 = vst.msk [vmem:[#allocation2 + $0x89] sm:$0x1] %vm475, 0.0
        %500 = vst.msk [vmem:[#allocation2 + $0xa1] sm:$0x1] %vm475, 0.0
        %501 = vst.msk [vmem:[#allocation2 + $0xb9] sm:$0x1] %vm475, 0.0
        %502 = vst.msk [vmem:[#allocation2 + $0xd1] sm:$0x1] %vm475, 0.0
        %503 = vst.msk [vmem:[#allocation2 + $0xe9] sm:$0x1] %vm475, 0.0
        %504 = vst.msk [vmem:[#allocation2 + $0x101] sm:$0x1] %vm475, 0.0
        %505 = vst.msk [vmem:[#allocation2 + $0x119] sm:$0x1] %vm475, 0.0
        %506 = vst.msk [vmem:[#allocation2 + $0x131] sm:$0x1] %vm475, 0.0
        %507 = vst.msk [vmem:[#allocation2 + $0x149] sm:$0x1] %vm475, 0.0
        %508 = vst.msk [vmem:[#allocation2 + $0x161] sm:$0x1] %vm475, 0.0
        %509 = vst.msk [vmem:[#allocation2 + $0x179] sm:$0x1] %vm475, 0.0
        %510 = vst.msk [vmem:[#allocation2 + $0x191] sm:$0x1] %vm475, 0.0
        %511 = vst.msk [vmem:[#allocation2 + $0x1a9] sm:$0x1] %vm475, 0.0
        %vm512 = vcmask 64512
        %513 = vst.msk [vmem:[#allocation3] sm:$0xff] %vm512, 0.0
        %514 = vst.msk [vmem:[#allocation3 + $0x8] sm:$0xff] %vm512, 0.0
        %vm515 = vcmask 58368
        %516 = vst.msk [vmem:[#allocation3 + $0x10] sm:$0x3] %vm515, 0.0
        %s517 = scalar_lea.vmem [#allocation3], 408
        %518 = vst.msk [vmem:[%s517] sm:$0xff] %vm512, 0.0
        %519 = vst.msk [vmem:[%s517 + $0x8] sm:$0xff] %vm512, 0.0
        %520 = vst.msk [vmem:[%s517 + $0x10] sm:$0x3] %vm515, 0.0
        %vm521 = vcmask 57344
        %522 = vst.msk [vmem:[#allocation3] sm:$0x1] %vm521, 0.0
        %523 = vst.msk [vmem:[#allocation3 + $0x18] sm:$0x1] %vm521, 0.0
        %524 = vst.msk [vmem:[#allocation3 + $0x30] sm:$0x1] %vm521, 0.0
        %525 = vst.msk [vmem:[#allocation3 + $0x48] sm:$0x1] %vm521, 0.0
        %526 = vst.msk [vmem:[#allocation3 + $0x60] sm:$0x1] %vm521, 0.0
        %527 = vst.msk [vmem:[#allocation3 + $0x78] sm:$0x1] %vm521, 0.0
        %528 = vst.msk [vmem:[#allocation3 + $0x90] sm:$0x1] %vm521, 0.0
        %529 = vst.msk [vmem:[#allocation3 + $0xa8] sm:$0x1] %vm521, 0.0
        %530 = vst.msk [vmem:[#allocation3 + $0xc0] sm:$0x1] %vm521, 0.0
        %531 = vst.msk [vmem:[#allocation3 + $0xd8] sm:$0x1] %vm521, 0.0
        %532 = vst.msk [vmem:[#allocation3 + $0xf0] sm:$0x1] %vm521, 0.0
        %533 = vst.msk [vmem:[#allocation3 + $0x108] sm:$0x1] %vm521, 0.0
        %534 = vst.msk [vmem:[#allocation3 + $0x120] sm:$0x1] %vm521, 0.0
        %535 = vst.msk [vmem:[#allocation3 + $0x138] sm:$0x1] %vm521, 0.0
        %536 = vst.msk [vmem:[#allocation3 + $0x150] sm:$0x1] %vm521, 0.0
        %537 = vst.msk [vmem:[#allocation3 + $0x168] sm:$0x1] %vm521, 0.0
        %538 = vst.msk [vmem:[#allocation3 + $0x180] sm:$0x1] %vm521, 0.0
        %539 = vst.msk [vmem:[#allocation3 + $0x198] sm:$0x1] %vm521, 0.0
        %540 = vst.msk [vmem:[#allocation3 + $0x11] sm:$0x1] %vm521, 0.0
        %541 = vst.msk [vmem:[#allocation3 + $0x29] sm:$0x1] %vm521, 0.0
        %542 = vst.msk [vmem:[#allocation3 + $0x41] sm:$0x1] %vm521, 0.0
        %543 = vst.msk [vmem:[#allocation3 + $0x59] sm:$0x1] %vm521, 0.0
        %544 = vst.msk [vmem:[#allocation3 + $0x71] sm:$0x1] %vm521, 0.0
        %545 = vst.msk [vmem:[#allocation3 + $0x89] sm:$0x1] %vm521, 0.0
        %546 = vst.msk [vmem:[#allocation3 + $0xa1] sm:$0x1] %vm521, 0.0
        %547 = vst.msk [vmem:[#allocation3 + $0xb9] sm:$0x1] %vm521, 0.0
        %548 = vst.msk [vmem:[#allocation3 + $0xd1] sm:$0x1] %vm521, 0.0
        %549 = vst.msk [vmem:[#allocation3 + $0xe9] sm:$0x1] %vm521, 0.0
        %550 = vst.msk [vmem:[#allocation3 + $0x101] sm:$0x1] %vm521, 0.0
        %551 = vst.msk [vmem:[#allocation3 + $0x119] sm:$0x1] %vm521, 0.0
        %552 = vst.msk [vmem:[#allocation3 + $0x131] sm:$0x1] %vm521, 0.0
        %553 = vst.msk [vmem:[#allocation3 + $0x149] sm:$0x1] %vm521, 0.0
        %554 = vst.msk [vmem:[#allocation3 + $0x161] sm:$0x1] %vm521, 0.0
        %555 = vst.msk [vmem:[#allocation3 + $0x179] sm:$0x1] %vm521, 0.0
        %556 = vst.msk [vmem:[#allocation3 + $0x191] sm:$0x1] %vm521, 0.0
        %557 = vst.msk [vmem:[#allocation3 + $0x1a9] sm:$0x1] %vm521, 0.0
        %558 = vst.msk [vmem:[#allocation4] sm:$0xff] %vm512, 0.0
        %559 = vst.msk [vmem:[#allocation4 + $0x8] sm:$0xff] %vm512, 0.0
        %560 = vst.msk [vmem:[#allocation4 + $0x10] sm:$0x3] %vm515, 0.0
        %s561 = scalar_lea.vmem [#allocation4], 408
        %562 = vst.msk [vmem:[%s561] sm:$0xff] %vm512, 0.0
        %563 = vst.msk [vmem:[%s561 + $0x8] sm:$0xff] %vm512, 0.0
        %564 = vst.msk [vmem:[%s561 + $0x10] sm:$0x3] %vm515, 0.0
        %565 = vst.msk [vmem:[#allocation4] sm:$0x1] %vm521, 0.0
        %566 = vst.msk [vmem:[#allocation4 + $0x18] sm:$0x1] %vm521, 0.0
        %567 = vst.msk [vmem:[#allocation4 + $0x30] sm:$0x1] %vm521, 0.0
        %568 = vst.msk [vmem:[#allocation4 + $0x48] sm:$0x1] %vm521, 0.0
        %569 = vst.msk [vmem:[#allocation4 + $0x60] sm:$0x1] %vm521, 0.0
        %570 = vst.msk [vmem:[#allocation4 + $0x78] sm:$0x1] %vm521, 0.0
        %571 = vst.msk [vmem:[#allocation4 + $0x90] sm:$0x1] %vm521, 0.0
        %572 = vst.msk [vmem:[#allocation4 + $0xa8] sm:$0x1] %vm521, 0.0
        %573 = vst.msk [vmem:[#allocation4 + $0xc0] sm:$0x1] %vm521, 0.0
        %574 = vst.msk [vmem:[#allocation4 + $0xd8] sm:$0x1] %vm521, 0.0
        %575 = vst.msk [vmem:[#allocation4 + $0xf0] sm:$0x1] %vm521, 0.0
        %576 = vst.msk [vmem:[#allocation4 + $0x108] sm:$0x1] %vm521, 0.0
        %577 = vst.msk [vmem:[#allocation4 + $0x120] sm:$0x1] %vm521, 0.0
        %578 = vst.msk [vmem:[#allocation4 + $0x138] sm:$0x1] %vm521, 0.0
        %579 = vst.msk [vmem:[#allocation4 + $0x150] sm:$0x1] %vm521, 0.0
        %580 = vst.msk [vmem:[#allocation4 + $0x168] sm:$0x1] %vm521, 0.0
        %581 = vst.msk [vmem:[#allocation4 + $0x180] sm:$0x1] %vm521, 0.0
        %582 = vst.msk [vmem:[#allocation4 + $0x198] sm:$0x1] %vm521, 0.0
        %583 = vst.msk [vmem:[#allocation4 + $0x11] sm:$0x1] %vm521, 0.0
        %584 = vst.msk [vmem:[#allocation4 + $0x29] sm:$0x1] %vm521, 0.0
        %585 = vst.msk [vmem:[#allocation4 + $0x41] sm:$0x1] %vm521, 0.0
        %586 = vst.msk [vmem:[#allocation4 + $0x59] sm:$0x1] %vm521, 0.0
        %587 = vst.msk [vmem:[#allocation4 + $0x71] sm:$0x1] %vm521, 0.0
        %588 = vst.msk [vmem:[#allocation4 + $0x89] sm:$0x1] %vm521, 0.0
        %589 = vst.msk [vmem:[#allocation4 + $0xa1] sm:$0x1] %vm521, 0.0
        %590 = vst.msk [vmem:[#allocation4 + $0xb9] sm:$0x1] %vm521, 0.0
        %591 = vst.msk [vmem:[#allocation4 + $0xd1] sm:$0x1] %vm521, 0.0
        %592 = vst.msk [vmem:[#allocation4 + $0xe9] sm:$0x1] %vm521, 0.0
        %593 = vst.msk [vmem:[#allocation4 + $0x101] sm:$0x1] %vm521, 0.0
        %594 = vst.msk [vmem:[#allocation4 + $0x119] sm:$0x1] %vm521, 0.0
        %595 = vst.msk [vmem:[#allocation4 + $0x131] sm:$0x1] %vm521, 0.0
        %596 = vst.msk [vmem:[#allocation4 + $0x149] sm:$0x1] %vm521, 0.0
        %597 = vst.msk [vmem:[#allocation4 + $0x161] sm:$0x1] %vm521, 0.0
        %598 = vst.msk [vmem:[#allocation4 + $0x179] sm:$0x1] %vm521, 0.0
        %599 = vst.msk [vmem:[#allocation4 + $0x191] sm:$0x1] %vm521, 0.0
        %600 = vst.msk [vmem:[#allocation4 + $0x1a9] sm:$0x1] %vm521, 0.0
        %v601 = vld [vmem:[%s465] sm:$0xff]
        %v602 = vld [vmem:[%s465 + $0x8] sm:$0xff]
        %v603 = vld [vmem:[%s465 + $0x10] sm:$0xff]
        %v604 = vld [vmem:[%s465 + $0x18] sm:$0xff]
        %v605 = vld [vmem:[%s465 + $0x20] sm:$0xff]
        %v606 = vld [vmem:[%s465 + $0x28] sm:$0xff]
        %v607 = vld [vmem:[%s465 + $0x30] sm:$0xff]
        %v608 = vld [vmem:[%s465 + $0x38] sm:$0xff]
        %v609 = vld [vmem:[%s465 + $0x40] sm:$0xff]
        %v610 = vld [vmem:[%s465 + $0x48] sm:$0xff]
        %v611 = vld [vmem:[%s465 + $0x50] sm:$0xff]
        %v612 = vld [vmem:[%s465 + $0x58] sm:$0xff]
        %v613 = vld [vmem:[%s465 + $0x60] sm:$0xff]
        %v614 = vld [vmem:[%s465 + $0x68] sm:$0xff]
        %v615 = vld [vmem:[%s465 + $0x70] sm:$0xff]
        %v616 = vld [vmem:[%s465 + $0x78] sm:$0xff]
        %v617 = vld [vmem:[%s465 + $0x80] sm:$0xff]
        %v618 = vld [vmem:[%s465 + $0x88] sm:$0xff]
        %v619 = vld [vmem:[%s465 + $0x90] sm:$0xff]
        %v620 = vld [vmem:[%s465 + $0x98] sm:$0xff]
        %v621 = vld [vmem:[%s465 + $0xa0] sm:$0xff]
        %v622 = vld [vmem:[%s465 + $0xa8] sm:$0xff]
        %v623 = vld [vmem:[%s465 + $0xb0] sm:$0xff]
        %v624 = vld [vmem:[%s465 + $0xb8] sm:$0xff]
        %v625 = vld [vmem:[%s465 + $0xc0] sm:$0xff]
        %v626 = vld [vmem:[%s465 + $0xc8] sm:$0xff]
        %v627 = vld [vmem:[%s465 + $0xd0] sm:$0xff]
        %v628 = vld [vmem:[%s465 + $0xd8] sm:$0xff]
        %v629 = vld [vmem:[%s465 + $0xe0] sm:$0xff]
        %v630 = vld [vmem:[%s465 + $0xe8] sm:$0xff]
        %v631 = vld [vmem:[%s465 + $0xf0] sm:$0xff]
        %v632 = vld [vmem:[%s465 + $0xf8] sm:$0xff]
        %s633 = scalar_lea.vmem [#allocation2], 24
        %634 = vst.msk [vmem:[%s633 + $0x1] sm:$0xff] %vm466, %v601
        %635 = vst.msk [vmem:[%s633 + $0x9] sm:$0xff] %vm466, %v602
        %636 = vst.msk [vmem:[%s633 + $0x19] sm:$0xff] %vm466, %v603
        %637 = vst.msk [vmem:[%s633 + $0x21] sm:$0xff] %vm466, %v604
        %638 = vst.msk [vmem:[%s633 + $0x31] sm:$0xff] %vm466, %v605
        %639 = vst.msk [vmem:[%s633 + $0x39] sm:$0xff] %vm466, %v606
        %640 = vst.msk [vmem:[%s633 + $0x49] sm:$0xff] %vm466, %v607
        %641 = vst.msk [vmem:[%s633 + $0x51] sm:$0xff] %vm466, %v608
        %642 = vst.msk [vmem:[%s633 + $0x61] sm:$0xff] %vm466, %v609
        %643 = vst.msk [vmem:[%s633 + $0x69] sm:$0xff] %vm466, %v610
        %644 = vst.msk [vmem:[%s633 + $0x79] sm:$0xff] %vm466, %v611
        %645 = vst.msk [vmem:[%s633 + $0x81] sm:$0xff] %vm466, %v612
        %646 = vst.msk [vmem:[%s633 + $0x91] sm:$0xff] %vm466, %v613
        %647 = vst.msk [vmem:[%s633 + $0x99] sm:$0xff] %vm466, %v614
        %648 = vst.msk [vmem:[%s633 + $0xa9] sm:$0xff] %vm466, %v615
        %649 = vst.msk [vmem:[%s633 + $0xb1] sm:$0xff] %vm466, %v616
        %650 = vst.msk [vmem:[%s633 + $0xc1] sm:$0xff] %vm466, %v617
        %651 = vst.msk [vmem:[%s633 + $0xc9] sm:$0xff] %vm466, %v618
        %652 = vst.msk [vmem:[%s633 + $0xd9] sm:$0xff] %vm466, %v619
        %653 = vst.msk [vmem:[%s633 + $0xe1] sm:$0xff] %vm466, %v620
        %654 = vst.msk [vmem:[%s633 + $0xf1] sm:$0xff] %vm466, %v621
        %655 = vst.msk [vmem:[%s633 + $0xf9] sm:$0xff] %vm466, %v622
        %656 = vst.msk [vmem:[%s633 + $0x109] sm:$0xff] %vm466, %v623
        %657 = vst.msk [vmem:[%s633 + $0x111] sm:$0xff] %vm466, %v624
        %658 = vst.msk [vmem:[%s633 + $0x121] sm:$0xff] %vm466, %v625
        %659 = vst.msk [vmem:[%s633 + $0x129] sm:$0xff] %vm466, %v626
        %660 = vst.msk [vmem:[%s633 + $0x139] sm:$0xff] %vm466, %v627
        %661 = vst.msk [vmem:[%s633 + $0x141] sm:$0xff] %vm466, %v628
        %662 = vst.msk [vmem:[%s633 + $0x151] sm:$0xff] %vm466, %v629
        %663 = vst.msk [vmem:[%s633 + $0x159] sm:$0xff] %vm466, %v630
        %664 = vst.msk [vmem:[%s633 + $0x169] sm:$0xff] %vm466, %v631
        %665 = vst.msk [vmem:[%s633 + $0x171] sm:$0xff] %vm466, %v632
        %v666 = vld [vmem:[#allocation2] sm:$0xff]
        %v667 = vld [vmem:[#allocation2 + $0x8] sm:$0xff]
        %v668 = vld [vmem:[#allocation2 + $0x18] sm:$0xff]
        %v669 = vld [vmem:[#allocation2 + $0x20] sm:$0xff]
        %v670 = vld [vmem:[#allocation2 + $0x30] sm:$0xff]
        %v671 = vld [vmem:[#allocation2 + $0x38] sm:$0xff]
        %v672 = vld [vmem:[#allocation2 + $0x48] sm:$0xff]
        %v673 = vld [vmem:[#allocation2 + $0x50] sm:$0xff]
        %v674 = vld [vmem:[#allocation2 + $0x60] sm:$0xff]
        %v675 = vld [vmem:[#allocation2 + $0x68] sm:$0xff]
        %v676 = vld [vmem:[#allocation2 + $0x78] sm:$0xff]
        %v677 = vld [vmem:[#allocation2 + $0x80] sm:$0xff]
        %v678 = vld [vmem:[#allocation2 + $0x90] sm:$0xff]
        %v679 = vld [vmem:[#allocation2 + $0x98] sm:$0xff]
        %v680 = vld [vmem:[#allocation2 + $0xa8] sm:$0xff]
        %v681 = vld [vmem:[#allocation2 + $0xb0] sm:$0xff]
        %v682 = vld [vmem:[#allocation2 + $0xc0] sm:$0xff]
        %v683 = vld [vmem:[#allocation2 + $0xc8] sm:$0xff]
        %v684 = vld [vmem:[#allocation2 + $0xd8] sm:$0xff]
        %v685 = vld [vmem:[#allocation2 + $0xe0] sm:$0xff]
        %v686 = vld [vmem:[#allocation2 + $0xf0] sm:$0xff]
        %v687 = vld [vmem:[#allocation2 + $0xf8] sm:$0xff]
        %v688 = vld [vmem:[#allocation2 + $0x108] sm:$0xff]
        %v689 = vld [vmem:[#allocation2 + $0x110] sm:$0xff]
        %v690 = vld [vmem:[#allocation2 + $0x120] sm:$0xff]
        %v691 = vld [vmem:[#allocation2 + $0x128] sm:$0xff]
        %v692 = vld [vmem:[#allocation2 + $0x138] sm:$0xff]
        %v693 = vld [vmem:[#allocation2 + $0x140] sm:$0xff]
        %v694 = vld [vmem:[#allocation2 + $0x150] sm:$0xff]
        %v695 = vld [vmem:[#allocation2 + $0x158] sm:$0xff]
        %v696 = vld [vmem:[#allocation2 + $0x168] sm:$0xff]
        %v697 = vld [vmem:[#allocation2 + $0x170] sm:$0xff]
        %v698 = vld [vmem:[%s1] sm:$0x1]
        %v699 = vlaneseq
        %v700 = vshrl.u32 %v699, 7
        %v701 = vsub.s32 0, %v700
        %v702 = vrot.slane %v698, %v701
        %v703 = vmul.f32 %v666, %v702
        %v704 = vmul.f32 %v667, %v702
        %v705 = vmul.f32 %v668, %v702
        %v706 = vmul.f32 %v669, %v702
        %v707 = vmul.f32 %v670, %v702
        %v708 = vmul.f32 %v671, %v702
        %v709 = vmul.f32 %v672, %v702
        %v710 = vmul.f32 %v673, %v702
        %v711 = vmul.f32 %v674, %v702
        %v712 = vmul.f32 %v675, %v702
        %v713 = vmul.f32 %v676, %v702
        %v714 = vmul.f32 %v677, %v702
        %v715 = vmul.f32 %v678, %v702
        %v716 = vmul.f32 %v679, %v702
        %v717 = vmul.f32 %v680, %v702
        %v718 = vmul.f32 %v681, %v702
        %v719 = vmul.f32 %v682, %v702
        %v720 = vmul.f32 %v683, %v702
        %v721 = vmul.f32 %v684, %v702
        %v722 = vmul.f32 %v685, %v702
        %v723 = vmul.f32 %v686, %v702
        %v724 = vmul.f32 %v687, %v702
        %v725 = vmul.f32 %v688, %v702
        %v726 = vmul.f32 %v689, %v702
        %v727 = vmul.f32 %v690, %v702
        %v728 = vmul.f32 %v691, %v702
        %v729 = vmul.f32 %v692, %v702
        %v730 = vmul.f32 %v693, %v702
        %v731 = vmul.f32 %v694, %v702
        %v732 = vmul.f32 %v695, %v702
        %v733 = vmul.f32 %v696, %v702
        %v734 = vmul.f32 %v697, %v702
        %v735 = vadd.f32 %v703, 0.0
        %v736 = vadd.f32 %v704, 0.0
        %v737 = vadd.f32 %v705, 0.0
        %v738 = vadd.f32 %v706, 0.0
        %v739 = vadd.f32 %v707, 0.0
        %v740 = vadd.f32 %v708, 0.0
        %v741 = vadd.f32 %v709, 0.0
        %v742 = vadd.f32 %v710, 0.0
        %v743 = vadd.f32 %v711, 0.0
        %v744 = vadd.f32 %v712, 0.0
        %v745 = vadd.f32 %v713, 0.0
        %v746 = vadd.f32 %v714, 0.0
        %v747 = vadd.f32 %v715, 0.0
        %v748 = vadd.f32 %v716, 0.0
        %v749 = vadd.f32 %v717, 0.0
        %v750 = vadd.f32 %v718, 0.0
        %v751 = vadd.f32 %v719, 0.0
        %v752 = vadd.f32 %v720, 0.0
        %v753 = vadd.f32 %v721, 0.0
        %v754 = vadd.f32 %v722, 0.0
        %v755 = vadd.f32 %v723, 0.0
        %v756 = vadd.f32 %v724, 0.0
        %v757 = vadd.f32 %v725, 0.0
        %v758 = vadd.f32 %v726, 0.0
        %v759 = vadd.f32 %v727, 0.0
        %v760 = vadd.f32 %v728, 0.0
        %v761 = vadd.f32 %v729, 0.0
        %v762 = vadd.f32 %v730, 0.0
        %v763 = vadd.f32 %v731, 0.0
        %v764 = vadd.f32 %v732, 0.0
        %v765 = vadd.f32 %v733, 0.0
        %v766 = vadd.f32 %v734, 0.0
        %v767 = vld [vmem:[#allocation2 + $0x1] sm:$0xff]
        %v768 = vld [vmem:[#allocation2 + $0x9] sm:$0xff]
        %v769 = vld [vmem:[#allocation2 + $0x19] sm:$0xff]
        %v770 = vld [vmem:[#allocation2 + $0x21] sm:$0xff]
        %v771 = vld [vmem:[#allocation2 + $0x31] sm:$0xff]
        %v772 = vld [vmem:[#allocation2 + $0x39] sm:$0xff]
        %v773 = vld [vmem:[#allocation2 + $0x49] sm:$0xff]
        %v774 = vld [vmem:[#allocation2 + $0x51] sm:$0xff]
        %v775 = vld [vmem:[#allocation2 + $0x61] sm:$0xff]
        %v776 = vld [vmem:[#allocation2 + $0x69] sm:$0xff]
        %v777 = vld [vmem:[#allocation2 + $0x79] sm:$0xff]
        %v778 = vld [vmem:[#allocation2 + $0x81] sm:$0xff]
        %v779 = vld [vmem:[#allocation2 + $0x91] sm:$0xff]
        %v780 = vld [vmem:[#allocation2 + $0x99] sm:$0xff]
        %v781 = vld [vmem:[#allocation2 + $0xa9] sm:$0xff]
        %v782 = vld [vmem:[#allocation2 + $0xb1] sm:$0xff]
        %v783 = vld [vmem:[#allocation2 + $0xc1] sm:$0xff]
        %v784 = vld [vmem:[#allocation2 + $0xc9] sm:$0xff]
        %v785 = vld [vmem:[#allocation2 + $0xd9] sm:$0xff]
        %v786 = vld [vmem:[#allocation2 + $0xe1] sm:$0xff]
        %v787 = vld [vmem:[#allocation2 + $0xf1] sm:$0xff]
        %v788 = vld [vmem:[#allocation2 + $0xf9] sm:$0xff]
        %v789 = vld [vmem:[#allocation2 + $0x109] sm:$0xff]
        %v790 = vld [vmem:[#allocation2 + $0x111] sm:$0xff]
        %v791 = vld [vmem:[#allocation2 + $0x121] sm:$0xff]
        %v792 = vld [vmem:[#allocation2 + $0x129] sm:$0xff]
        %v793 = vld [vmem:[#allocation2 + $0x139] sm:$0xff]
        %v794 = vld [vmem:[#allocation2 + $0x141] sm:$0xff]
        %v795 = vld [vmem:[#allocation2 + $0x151] sm:$0xff]
        %v796 = vld [vmem:[#allocation2 + $0x159] sm:$0xff]
        %v797 = vld [vmem:[#allocation2 + $0x169] sm:$0xff]
        %v798 = vld [vmem:[#allocation2 + $0x171] sm:$0xff]
        %v799 = vld [vmem:[%s1 + $0x1] sm:$0x1]
        %v800 = vlaneseq
        %v801 = vshrl.u32 %v800, 7
        %v802 = vsub.s32 0, %v801
        %v803 = vrot.slane %v799, %v802
        %v804 = vmul.f32 %v767, %v803
        %v805 = vmul.f32 %v768, %v803
        %v806 = vmul.f32 %v769, %v803
        %v807 = vmul.f32 %v770, %v803
        %v808 = vmul.f32 %v771, %v803
        %v809 = vmul.f32 %v772, %v803
        %v810 = vmul.f32 %v773, %v803
        %v811 = vmul.f32 %v774, %v803
        %v812 = vmul.f32 %v775, %v803
        %v813 = vmul.f32 %v776, %v803
        %v814 = vmul.f32 %v777, %v803
        %v815 = vmul.f32 %v778, %v803
        %v816 = vmul.f32 %v779, %v803
        %v817 = vmul.f32 %v780, %v803
        %v818 = vmul.f32 %v781, %v803
        %v819 = vmul.f32 %v782, %v803
        %v820 = vmul.f32 %v783, %v803
        %v821 = vmul.f32 %v784, %v803
        %v822 = vmul.f32 %v785, %v803
        %v823 = vmul.f32 %v786, %v803
        %v824 = vmul.f32 %v787, %v803
        %v825 = vmul.f32 %v788, %v803
        %v826 = vmul.f32 %v789, %v803
        %v827 = vmul.f32 %v790, %v803
        %v828 = vmul.f32 %v791, %v803
        %v829 = vmul.f32 %v792, %v803
        %v830 = vmul.f32 %v793, %v803
        %v831 = vmul.f32 %v794, %v803
        %v832 = vmul.f32 %v795, %v803
        %v833 = vmul.f32 %v796, %v803
        %v834 = vmul.f32 %v797, %v803
        %v835 = vmul.f32 %v798, %v803
        %v836 = vadd.f32 %v735, %v804
        %v837 = vadd.f32 %v736, %v805
        %v838 = vadd.f32 %v737, %v806
        %v839 = vadd.f32 %v738, %v807
        %v840 = vadd.f32 %v739, %v808
        %v841 = vadd.f32 %v740, %v809
        %v842 = vadd.f32 %v741, %v810
        %v843 = vadd.f32 %v742, %v811
        %v844 = vadd.f32 %v743, %v812
        %v845 = vadd.f32 %v744, %v813
        %v846 = vadd.f32 %v745, %v814
        %v847 = vadd.f32 %v746, %v815
        %v848 = vadd.f32 %v747, %v816
        %v849 = vadd.f32 %v748, %v817
        %v850 = vadd.f32 %v749, %v818
        %v851 = vadd.f32 %v750, %v819
        %v852 = vadd.f32 %v751, %v820
        %v853 = vadd.f32 %v752, %v821
        %v854 = vadd.f32 %v753, %v822
        %v855 = vadd.f32 %v754, %v823
        %v856 = vadd.f32 %v755, %v824
        %v857 = vadd.f32 %v756, %v825
        %v858 = vadd.f32 %v757, %v826
        %v859 = vadd.f32 %v758, %v827
        %v860 = vadd.f32 %v759, %v828
        %v861 = vadd.f32 %v760, %v829
        %v862 = vadd.f32 %v761, %v830
        %v863 = vadd.f32 %v762, %v831
        %v864 = vadd.f32 %v763, %v832
        %v865 = vadd.f32 %v764, %v833
        %v866 = vadd.f32 %v765, %v834
        %v867 = vadd.f32 %v766, %v835
        %v868 = vld [vmem:[#allocation2 + $0x2] sm:$0xff]
        %v869 = vld [vmem:[#allocation2 + $0xa] sm:$0xff]
        %v870 = vld [vmem:[#allocation2 + $0x1a] sm:$0xff]
        %v871 = vld [vmem:[#allocation2 + $0x22] sm:$0xff]
        %v872 = vld [vmem:[#allocation2 + $0x32] sm:$0xff]
        %v873 = vld [vmem:[#allocation2 + $0x3a] sm:$0xff]
        %v874 = vld [vmem:[#allocation2 + $0x4a] sm:$0xff]
        %v875 = vld [vmem:[#allocation2 + $0x52] sm:$0xff]
        %v876 = vld [vmem:[#allocation2 + $0x62] sm:$0xff]
        %v877 = vld [vmem:[#allocation2 + $0x6a] sm:$0xff]
        %v878 = vld [vmem:[#allocation2 + $0x7a] sm:$0xff]
        %v879 = vld [vmem:[#allocation2 + $0x82] sm:$0xff]
        %v880 = vld [vmem:[#allocation2 + $0x92] sm:$0xff]
        %v881 = vld [vmem:[#allocation2 + $0x9a] sm:$0xff]
        %v882 = vld [vmem:[#allocation2 + $0xaa] sm:$0xff]
        %v883 = vld [vmem:[#allocation2 + $0xb2] sm:$0xff]
        %v884 = vld [vmem:[#allocation2 + $0xc2] sm:$0xff]
        %v885 = vld [vmem:[#allocation2 + $0xca] sm:$0xff]
        %v886 = vld [vmem:[#allocation2 + $0xda] sm:$0xff]
        %v887 = vld [vmem:[#allocation2 + $0xe2] sm:$0xff]
        %v888 = vld [vmem:[#allocation2 + $0xf2] sm:$0xff]
        %v889 = vld [vmem:[#allocation2 + $0xfa] sm:$0xff]
        %v890 = vld [vmem:[#allocation2 + $0x10a] sm:$0xff]
        %v891 = vld [vmem:[#allocation2 + $0x112] sm:$0xff]
        %v892 = vld [vmem:[#allocation2 + $0x122] sm:$0xff]
        %v893 = vld [vmem:[#allocation2 + $0x12a] sm:$0xff]
        %v894 = vld [vmem:[#allocation2 + $0x13a] sm:$0xff]
        %v895 = vld [vmem:[#allocation2 + $0x142] sm:$0xff]
        %v896 = vld [vmem:[#allocation2 + $0x152] sm:$0xff]
        %v897 = vld [vmem:[#allocation2 + $0x15a] sm:$0xff]
        %v898 = vld [vmem:[#allocation2 + $0x16a] sm:$0xff]
        %v899 = vld [vmem:[#allocation2 + $0x172] sm:$0xff]
        %v900 = vld [vmem:[%s1 + $0x2] sm:$0x1]
        %v901 = vlaneseq
        %v902 = vshrl.u32 %v901, 7
        %v903 = vsub.s32 0, %v902
        %v904 = vrot.slane %v900, %v903
        %v905 = vmul.f32 %v868, %v904
        %v906 = vmul.f32 %v869, %v904
        %v907 = vmul.f32 %v870, %v904
        %v908 = vmul.f32 %v871, %v904
        %v909 = vmul.f32 %v872, %v904
        %v910 = vmul.f32 %v873, %v904
        %v911 = vmul.f32 %v874, %v904
        %v912 = vmul.f32 %v875, %v904
        %v913 = vmul.f32 %v876, %v904
        %v914 = vmul.f32 %v877, %v904
        %v915 = vmul.f32 %v878, %v904
        %v916 = vmul.f32 %v879, %v904
        %v917 = vmul.f32 %v880, %v904
        %v918 = vmul.f32 %v881, %v904
        %v919 = vmul.f32 %v882, %v904
        %v920 = vmul.f32 %v883, %v904
        %v921 = vmul.f32 %v884, %v904
        %v922 = vmul.f32 %v885, %v904
        %v923 = vmul.f32 %v886, %v904
        %v924 = vmul.f32 %v887, %v904
        %v925 = vmul.f32 %v888, %v904
        %v926 = vmul.f32 %v889, %v904
        %v927 = vmul.f32 %v890, %v904
        %v928 = vmul.f32 %v891, %v904
        %v929 = vmul.f32 %v892, %v904
        %v930 = vmul.f32 %v893, %v904
        %v931 = vmul.f32 %v894, %v904
        %v932 = vmul.f32 %v895, %v904
        %v933 = vmul.f32 %v896, %v904
        %v934 = vmul.f32 %v897, %v904
        %v935 = vmul.f32 %v898, %v904
        %v936 = vmul.f32 %v899, %v904
        %v937 = vadd.f32 %v836, %v905
        %v938 = vadd.f32 %v837, %v906
        %v939 = vadd.f32 %v838, %v907
        %v940 = vadd.f32 %v839, %v908
        %v941 = vadd.f32 %v840, %v909
        %v942 = vadd.f32 %v841, %v910
        %v943 = vadd.f32 %v842, %v911
        %v944 = vadd.f32 %v843, %v912
        %v945 = vadd.f32 %v844, %v913
        %v946 = vadd.f32 %v845, %v914
        %v947 = vadd.f32 %v846, %v915
        %v948 = vadd.f32 %v847, %v916
        %v949 = vadd.f32 %v848, %v917
        %v950 = vadd.f32 %v849, %v918
        %v951 = vadd.f32 %v850, %v919
        %v952 = vadd.f32 %v851, %v920
        %v953 = vadd.f32 %v852, %v921
        %v954 = vadd.f32 %v853, %v922
        %v955 = vadd.f32 %v854, %v923
        %v956 = vadd.f32 %v855, %v924
        %v957 = vadd.f32 %v856, %v925
        %v958 = vadd.f32 %v857, %v926
        %v959 = vadd.f32 %v858, %v927
        %v960 = vadd.f32 %v859, %v928
        %v961 = vadd.f32 %v860, %v929
        %v962 = vadd.f32 %v861, %v930
        %v963 = vadd.f32 %v862, %v931
        %v964 = vadd.f32 %v863, %v932
        %v965 = vadd.f32 %v864, %v933
        %v966 = vadd.f32 %v865, %v934
        %v967 = vadd.f32 %v866, %v935
        %v968 = vadd.f32 %v867, %v936
        %v969 = vld [vmem:[%s633] sm:$0xff]
        %v970 = vld [vmem:[%s633 + $0x8] sm:$0xff]
        %v971 = vld [vmem:[%s633 + $0x18] sm:$0xff]
        %v972 = vld [vmem:[%s633 + $0x20] sm:$0xff]
        %v973 = vld [vmem:[%s633 + $0x30] sm:$0xff]
        %v974 = vld [vmem:[%s633 + $0x38] sm:$0xff]
        %v975 = vld [vmem:[%s633 + $0x48] sm:$0xff]
        %v976 = vld [vmem:[%s633 + $0x50] sm:$0xff]
        %v977 = vld [vmem:[%s633 + $0x60] sm:$0xff]
        %v978 = vld [vmem:[%s633 + $0x68] sm:$0xff]
        %v979 = vld [vmem:[%s633 + $0x78] sm:$0xff]
        %v980 = vld [vmem:[%s633 + $0x80] sm:$0xff]
        %v981 = vld [vmem:[%s633 + $0x90] sm:$0xff]
        %v982 = vld [vmem:[%s633 + $0x98] sm:$0xff]
        %v983 = vld [vmem:[%s633 + $0xa8] sm:$0xff]
        %v984 = vld [vmem:[%s633 + $0xb0] sm:$0xff]
        %v985 = vld [vmem:[%s633 + $0xc0] sm:$0xff]
        %v986 = vld [vmem:[%s633 + $0xc8] sm:$0xff]
        %v987 = vld [vmem:[%s633 + $0xd8] sm:$0xff]
        %v988 = vld [vmem:[%s633 + $0xe0] sm:$0xff]
        %v989 = vld [vmem:[%s633 + $0xf0] sm:$0xff]
        %v990 = vld [vmem:[%s633 + $0xf8] sm:$0xff]
        %v991 = vld [vmem:[%s633 + $0x108] sm:$0xff]
        %v992 = vld [vmem:[%s633 + $0x110] sm:$0xff]
        %v993 = vld [vmem:[%s633 + $0x120] sm:$0xff]
        %v994 = vld [vmem:[%s633 + $0x128] sm:$0xff]
        %v995 = vld [vmem:[%s633 + $0x138] sm:$0xff]
        %v996 = vld [vmem:[%s633 + $0x140] sm:$0xff]
        %v997 = vld [vmem:[%s633 + $0x150] sm:$0xff]
        %v998 = vld [vmem:[%s633 + $0x158] sm:$0xff]
        %v999 = vld [vmem:[%s633 + $0x168] sm:$0xff]
        %v1000 = vld [vmem:[%s633 + $0x170] sm:$0xff]
        %s1001 = scalar_lea.vmem %s1, 4
        %v1002 = vld [vmem:[%s1001] sm:$0x1]
        %v1003 = vlaneseq
        %v1004 = vshrl.u32 %v1003, 7
        %v1005 = vsub.s32 0, %v1004
        %v1006 = vrot.slane %v1002, %v1005
        %v1007 = vmul.f32 %v969, %v1006
        %v1008 = vmul.f32 %v970, %v1006
        %v1009 = vmul.f32 %v971, %v1006
        %v1010 = vmul.f32 %v972, %v1006
        %v1011 = vmul.f32 %v973, %v1006
        %v1012 = vmul.f32 %v974, %v1006
        %v1013 = vmul.f32 %v975, %v1006
        %v1014 = vmul.f32 %v976, %v1006
        %v1015 = vmul.f32 %v977, %v1006
        %v1016 = vmul.f32 %v978, %v1006
        %v1017 = vmul.f32 %v979, %v1006
        %v1018 = vmul.f32 %v980, %v1006
        %v1019 = vmul.f32 %v981, %v1006
        %v1020 = vmul.f32 %v982, %v1006
        %v1021 = vmul.f32 %v983, %v1006
        %v1022 = vmul.f32 %v984, %v1006
        %v1023 = vmul.f32 %v985, %v1006
        %v1024 = vmul.f32 %v986, %v1006
        %v1025 = vmul.f32 %v987, %v1006
        %v1026 = vmul.f32 %v988, %v1006
        %v1027 = vmul.f32 %v989, %v1006
        %v1028 = vmul.f32 %v990, %v1006
        %v1029 = vmul.f32 %v991, %v1006
        %v1030 = vmul.f32 %v992, %v1006
        %v1031 = vmul.f32 %v993, %v1006
        %v1032 = vmul.f32 %v994, %v1006
        %v1033 = vmul.f32 %v995, %v1006
        %v1034 = vmul.f32 %v996, %v1006
        %v1035 = vmul.f32 %v997, %v1006
        %v1036 = vmul.f32 %v998, %v1006
        %v1037 = vmul.f32 %v999, %v1006
        %v1038 = vmul.f32 %v1000, %v1006
        %v1039 = vadd.f32 %v937, %v1007
        %v1040 = vadd.f32 %v938, %v1008
        %v1041 = vadd.f32 %v939, %v1009
        %v1042 = vadd.f32 %v940, %v1010
        %v1043 = vadd.f32 %v941, %v1011
        %v1044 = vadd.f32 %v942, %v1012
        %v1045 = vadd.f32 %v943, %v1013
        %v1046 = vadd.f32 %v944, %v1014
        %v1047 = vadd.f32 %v945, %v1015
        %v1048 = vadd.f32 %v946, %v1016
        %v1049 = vadd.f32 %v947, %v1017
        %v1050 = vadd.f32 %v948, %v1018
        %v1051 = vadd.f32 %v949, %v1019
        %v1052 = vadd.f32 %v950, %v1020
        %v1053 = vadd.f32 %v951, %v1021
        %v1054 = vadd.f32 %v952, %v1022
        %v1055 = vadd.f32 %v953, %v1023
        %v1056 = vadd.f32 %v954, %v1024
        %v1057 = vadd.f32 %v955, %v1025
        %v1058 = vadd.f32 %v956, %v1026
        %v1059 = vadd.f32 %v957, %v1027
        %v1060 = vadd.f32 %v958, %v1028
        %v1061 = vadd.f32 %v959, %v1029
        %v1062 = vadd.f32 %v960, %v1030
        %v1063 = vadd.f32 %v961, %v1031
        %v1064 = vadd.f32 %v962, %v1032
        %v1065 = vadd.f32 %v963, %v1033
        %v1066 = vadd.f32 %v964, %v1034
        %v1067 = vadd.f32 %v965, %v1035
        %v1068 = vadd.f32 %v966, %v1036
        %v1069 = vadd.f32 %v967, %v1037
        %v1070 = vadd.f32 %v968, %v1038
        %v1071 = vld [vmem:[%s633 + $0x1] sm:$0xff]
        %v1072 = vld [vmem:[%s633 + $0x9] sm:$0xff]
        %v1073 = vld [vmem:[%s633 + $0x19] sm:$0xff]
        %v1074 = vld [vmem:[%s633 + $0x21] sm:$0xff]
        %v1075 = vld [vmem:[%s633 + $0x31] sm:$0xff]
        %v1076 = vld [vmem:[%s633 + $0x39] sm:$0xff]
        %v1077 = vld [vmem:[%s633 + $0x49] sm:$0xff]
        %v1078 = vld [vmem:[%s633 + $0x51] sm:$0xff]
        %v1079 = vld [vmem:[%s633 + $0x61] sm:$0xff]
        %v1080 = vld [vmem:[%s633 + $0x69] sm:$0xff]
        %v1081 = vld [vmem:[%s633 + $0x79] sm:$0xff]
        %v1082 = vld [vmem:[%s633 + $0x81] sm:$0xff]
        %v1083 = vld [vmem:[%s633 + $0x91] sm:$0xff]
        %v1084 = vld [vmem:[%s633 + $0x99] sm:$0xff]
        %v1085 = vld [vmem:[%s633 + $0xa9] sm:$0xff]
        %v1086 = vld [vmem:[%s633 + $0xb1] sm:$0xff]
        %v1087 = vld [vmem:[%s633 + $0xc1] sm:$0xff]
        %v1088 = vld [vmem:[%s633 + $0xc9] sm:$0xff]
        %v1089 = vld [vmem:[%s633 + $0xd9] sm:$0xff]
        %v1090 = vld [vmem:[%s633 + $0xe1] sm:$0xff]
        %v1091 = vld [vmem:[%s633 + $0xf1] sm:$0xff]
        %v1092 = vld [vmem:[%s633 + $0xf9] sm:$0xff]
        %v1093 = vld [vmem:[%s633 + $0x109] sm:$0xff]
        %v1094 = vld [vmem:[%s633 + $0x111] sm:$0xff]
        %v1095 = vld [vmem:[%s633 + $0x121] sm:$0xff]
        %v1096 = vld [vmem:[%s633 + $0x129] sm:$0xff]
        %v1097 = vld [vmem:[%s633 + $0x139] sm:$0xff]
        %v1098 = vld [vmem:[%s633 + $0x141] sm:$0xff]
        %v1099 = vld [vmem:[%s633 + $0x151] sm:$0xff]
        %v1100 = vld [vmem:[%s633 + $0x159] sm:$0xff]
        %v1101 = vld [vmem:[%s633 + $0x169] sm:$0xff]
        %v1102 = vld [vmem:[%s633 + $0x171] sm:$0xff]
        %v1103 = vld [vmem:[%s1001 + $0x1] sm:$0x1]
        %v1104 = vlaneseq
        %v1105 = vshrl.u32 %v1104, 7
        %v1106 = vsub.s32 0, %v1105
        %v1107 = vrot.slane %v1103, %v1106
        %v1108 = vmul.f32 %v1071, %v1107
        %v1109 = vmul.f32 %v1072, %v1107
        %v1110 = vmul.f32 %v1073, %v1107
        %v1111 = vmul.f32 %v1074, %v1107
        %v1112 = vmul.f32 %v1075, %v1107
        %v1113 = vmul.f32 %v1076, %v1107
        %v1114 = vmul.f32 %v1077, %v1107
        %v1115 = vmul.f32 %v1078, %v1107
        %v1116 = vmul.f32 %v1079, %v1107
        %v1117 = vmul.f32 %v1080, %v1107
        %v1118 = vmul.f32 %v1081, %v1107
        %v1119 = vmul.f32 %v1082, %v1107
        %v1120 = vmul.f32 %v1083, %v1107
        %v1121 = vmul.f32 %v1084, %v1107
        %v1122 = vmul.f32 %v1085, %v1107
        %v1123 = vmul.f32 %v1086, %v1107
        %v1124 = vmul.f32 %v1087, %v1107
        %v1125 = vmul.f32 %v1088, %v1107
        %v1126 = vmul.f32 %v1089, %v1107
        %v1127 = vmul.f32 %v1090, %v1107
        %v1128 = vmul.f32 %v1091, %v1107
        %v1129 = vmul.f32 %v1092, %v1107
        %v1130 = vmul.f32 %v1093, %v1107
        %v1131 = vmul.f32 %v1094, %v1107
        %v1132 = vmul.f32 %v1095, %v1107
        %v1133 = vmul.f32 %v1096, %v1107
        %v1134 = vmul.f32 %v1097, %v1107
        %v1135 = vmul.f32 %v1098, %v1107
        %v1136 = vmul.f32 %v1099, %v1107
        %v1137 = vmul.f32 %v1100, %v1107
        %v1138 = vmul.f32 %v1101, %v1107
        %v1139 = vmul.f32 %v1102, %v1107
        %v1140 = vadd.f32 %v1039, %v1108
        %v1141 = vadd.f32 %v1040, %v1109
        %v1142 = vadd.f32 %v1041, %v1110
        %v1143 = vadd.f32 %v1042, %v1111
        %v1144 = vadd.f32 %v1043, %v1112
        %v1145 = vadd.f32 %v1044, %v1113
        %v1146 = vadd.f32 %v1045, %v1114
        %v1147 = vadd.f32 %v1046, %v1115
        %v1148 = vadd.f32 %v1047, %v1116
        %v1149 = vadd.f32 %v1048, %v1117
        %v1150 = vadd.f32 %v1049, %v1118
        %v1151 = vadd.f32 %v1050, %v1119
        %v1152 = vadd.f32 %v1051, %v1120
        %v1153 = vadd.f32 %v1052, %v1121
        %v1154 = vadd.f32 %v1053, %v1122
        %v1155 = vadd.f32 %v1054, %v1123
        %v1156 = vadd.f32 %v1055, %v1124
        %v1157 = vadd.f32 %v1056, %v1125
        %v1158 = vadd.f32 %v1057, %v1126
        %v1159 = vadd.f32 %v1058, %v1127
        %v1160 = vadd.f32 %v1059, %v1128
        %v1161 = vadd.f32 %v1060, %v1129
        %v1162 = vadd.f32 %v1061, %v1130
        %v1163 = vadd.f32 %v1062, %v1131
        %v1164 = vadd.f32 %v1063, %v1132
        %v1165 = vadd.f32 %v1064, %v1133
        %v1166 = vadd.f32 %v1065, %v1134
        %v1167 = vadd.f32 %v1066, %v1135
        %v1168 = vadd.f32 %v1067, %v1136
        %v1169 = vadd.f32 %v1068, %v1137
        %v1170 = vadd.f32 %v1069, %v1138
        %v1171 = vadd.f32 %v1070, %v1139
        %v1172 = vld [vmem:[%s633 + $0x2] sm:$0xff]
        %v1173 = vld [vmem:[%s633 + $0xa] sm:$0xff]
        %v1174 = vld [vmem:[%s633 + $0x1a] sm:$0xff]
        %v1175 = vld [vmem:[%s633 + $0x22] sm:$0xff]
        %v1176 = vld [vmem:[%s633 + $0x32] sm:$0xff]
        %v1177 = vld [vmem:[%s633 + $0x3a] sm:$0xff]
        %v1178 = vld [vmem:[%s633 + $0x4a] sm:$0xff]
        %v1179 = vld [vmem:[%s633 + $0x52] sm:$0xff]
        %v1180 = vld [vmem:[%s633 + $0x62] sm:$0xff]
        %v1181 = vld [vmem:[%s633 + $0x6a] sm:$0xff]
        %v1182 = vld [vmem:[%s633 + $0x7a] sm:$0xff]
        %v1183 = vld [vmem:[%s633 + $0x82] sm:$0xff]
        %v1184 = vld [vmem:[%s633 + $0x92] sm:$0xff]
        %v1185 = vld [vmem:[%s633 + $0x9a] sm:$0xff]
        %v1186 = vld [vmem:[%s633 + $0xaa] sm:$0xff]
        %v1187 = vld [vmem:[%s633 + $0xb2] sm:$0xff]
        %v1188 = vld [vmem:[%s633 + $0xc2] sm:$0xff]
        %v1189 = vld [vmem:[%s633 + $0xca] sm:$0xff]
        %v1190 = vld [vmem:[%s633 + $0xda] sm:$0xff]
        %v1191 = vld [vmem:[%s633 + $0xe2] sm:$0xff]
        %v1192 = vld [vmem:[%s633 + $0xf2] sm:$0xff]
        %v1193 = vld [vmem:[%s633 + $0xfa] sm:$0xff]
        %v1194 = vld [vmem:[%s633 + $0x10a] sm:$0xff]
        %v1195 = vld [vmem:[%s633 + $0x112] sm:$0xff]
        %v1196 = vld [vmem:[%s633 + $0x122] sm:$0xff]
        %v1197 = vld [vmem:[%s633 + $0x12a] sm:$0xff]
        %v1198 = vld [vmem:[%s633 + $0x13a] sm:$0xff]
        %v1199 = vld [vmem:[%s633 + $0x142] sm:$0xff]
        %v1200 = vld [vmem:[%s633 + $0x152] sm:$0xff]
        %v1201 = vld [vmem:[%s633 + $0x15a] sm:$0xff]
        %v1202 = vld [vmem:[%s633 + $0x16a] sm:$0xff]
        %v1203 = vld [vmem:[%s633 + $0x172] sm:$0xff]
        %v1204 = vld [vmem:[%s1001 + $0x2] sm:$0x1]
        %v1205 = vlaneseq
        %v1206 = vshrl.u32 %v1205, 7
        %v1207 = vsub.s32 0, %v1206
        %v1208 = vrot.slane %v1204, %v1207
        %v1209 = vmul.f32 %v1172, %v1208
        %v1210 = vmul.f32 %v1173, %v1208
        %v1211 = vmul.f32 %v1174, %v1208
        %v1212 = vmul.f32 %v1175, %v1208
        %v1213 = vmul.f32 %v1176, %v1208
        %v1214 = vmul.f32 %v1177, %v1208
        %v1215 = vmul.f32 %v1178, %v1208
        %v1216 = vmul.f32 %v1179, %v1208
        %v1217 = vmul.f32 %v1180, %v1208
        %v1218 = vmul.f32 %v1181, %v1208
        %v1219 = vmul.f32 %v1182, %v1208
        %v1220 = vmul.f32 %v1183, %v1208
        %v1221 = vmul.f32 %v1184, %v1208
        %v1222 = vmul.f32 %v1185, %v1208
        %v1223 = vmul.f32 %v1186, %v1208
        %v1224 = vmul.f32 %v1187, %v1208
        %v1225 = vmul.f32 %v1188, %v1208
        %v1226 = vmul.f32 %v1189, %v1208
        %v1227 = vmul.f32 %v1190, %v1208
        %v1228 = vmul.f32 %v1191, %v1208
        %v1229 = vmul.f32 %v1192, %v1208
        %v1230 = vmul.f32 %v1193, %v1208
        %v1231 = vmul.f32 %v1194, %v1208
        %v1232 = vmul.f32 %v1195, %v1208
        %v1233 = vmul.f32 %v1196, %v1208
        %v1234 = vmul.f32 %v1197, %v1208
        %v1235 = vmul.f32 %v1198, %v1208
        %v1236 = vmul.f32 %v1199, %v1208
        %v1237 = vmul.f32 %v1200, %v1208
        %v1238 = vmul.f32 %v1201, %v1208
        %v1239 = vmul.f32 %v1202, %v1208
        %v1240 = vmul.f32 %v1203, %v1208
        %v1241 = vadd.f32 %v1140, %v1209
        %v1242 = vadd.f32 %v1141, %v1210
        %v1243 = vadd.f32 %v1142, %v1211
        %v1244 = vadd.f32 %v1143, %v1212
        %v1245 = vadd.f32 %v1144, %v1213
        %v1246 = vadd.f32 %v1145, %v1214
        %v1247 = vadd.f32 %v1146, %v1215
        %v1248 = vadd.f32 %v1147, %v1216
        %v1249 = vadd.f32 %v1148, %v1217
        %v1250 = vadd.f32 %v1149, %v1218
        %v1251 = vadd.f32 %v1150, %v1219
        %v1252 = vadd.f32 %v1151, %v1220
        %v1253 = vadd.f32 %v1152, %v1221
        %v1254 = vadd.f32 %v1153, %v1222
        %v1255 = vadd.f32 %v1154, %v1223
        %v1256 = vadd.f32 %v1155, %v1224
        %v1257 = vadd.f32 %v1156, %v1225
        %v1258 = vadd.f32 %v1157, %v1226
        %v1259 = vadd.f32 %v1158, %v1227
        %v1260 = vadd.f32 %v1159, %v1228
        %v1261 = vadd.f32 %v1160, %v1229
        %v1262 = vadd.f32 %v1161, %v1230
        %v1263 = vadd.f32 %v1162, %v1231
        %v1264 = vadd.f32 %v1163, %v1232
        %v1265 = vadd.f32 %v1164, %v1233
        %v1266 = vadd.f32 %v1165, %v1234
        %v1267 = vadd.f32 %v1166, %v1235
        %v1268 = vadd.f32 %v1167, %v1236
        %v1269 = vadd.f32 %v1168, %v1237
        %v1270 = vadd.f32 %v1169, %v1238
        %v1271 = vadd.f32 %v1170, %v1239
        %v1272 = vadd.f32 %v1171, %v1240
        %s1273 = scalar_lea.vmem [#allocation2], 48
        %v1274 = vld [vmem:[%s1273] sm:$0xff]
        %v1275 = vld [vmem:[%s1273 + $0x8] sm:$0xff]
        %v1276 = vld [vmem:[%s1273 + $0x18] sm:$0xff]
        %v1277 = vld [vmem:[%s1273 + $0x20] sm:$0xff]
        %v1278 = vld [vmem:[%s1273 + $0x30] sm:$0xff]
        %v1279 = vld [vmem:[%s1273 + $0x38] sm:$0xff]
        %v1280 = vld [vmem:[%s1273 + $0x48] sm:$0xff]
        %v1281 = vld [vmem:[%s1273 + $0x50] sm:$0xff]
        %v1282 = vld [vmem:[%s1273 + $0x60] sm:$0xff]
        %v1283 = vld [vmem:[%s1273 + $0x68] sm:$0xff]
        %v1284 = vld [vmem:[%s1273 + $0x78] sm:$0xff]
        %v1285 = vld [vmem:[%s1273 + $0x80] sm:$0xff]
        %v1286 = vld [vmem:[%s1273 + $0x90] sm:$0xff]
        %v1287 = vld [vmem:[%s1273 + $0x98] sm:$0xff]
        %v1288 = vld [vmem:[%s1273 + $0xa8] sm:$0xff]
        %v1289 = vld [vmem:[%s1273 + $0xb0] sm:$0xff]
        %v1290 = vld [vmem:[%s1273 + $0xc0] sm:$0xff]
        %v1291 = vld [vmem:[%s1273 + $0xc8] sm:$0xff]
        %v1292 = vld [vmem:[%s1273 + $0xd8] sm:$0xff]
        %v1293 = vld [vmem:[%s1273 + $0xe0] sm:$0xff]
        %v1294 = vld [vmem:[%s1273 + $0xf0] sm:$0xff]
        %v1295 = vld [vmem:[%s1273 + $0xf8] sm:$0xff]
        %v1296 = vld [vmem:[%s1273 + $0x108] sm:$0xff]
        %v1297 = vld [vmem:[%s1273 + $0x110] sm:$0xff]
        %v1298 = vld [vmem:[%s1273 + $0x120] sm:$0xff]
        %v1299 = vld [vmem:[%s1273 + $0x128] sm:$0xff]
        %v1300 = vld [vmem:[%s1273 + $0x138] sm:$0xff]
        %v1301 = vld [vmem:[%s1273 + $0x140] sm:$0xff]
        %v1302 = vld [vmem:[%s1273 + $0x150] sm:$0xff]
        %v1303 = vld [vmem:[%s1273 + $0x158] sm:$0xff]
        %v1304 = vld [vmem:[%s1273 + $0x168] sm:$0xff]
        %v1305 = vld [vmem:[%s1273 + $0x170] sm:$0xff]
        %s1306 = scalar_lea.vmem %s1, 8
        %v1307 = vld [vmem:[%s1306] sm:$0x1]
        %v1308 = vlaneseq
        %v1309 = vshrl.u32 %v1308, 7
        %v1310 = vsub.s32 0, %v1309
        %v1311 = vrot.slane %v1307, %v1310
        %v1312 = vmul.f32 %v1274, %v1311
        %v1313 = vmul.f32 %v1275, %v1311
        %v1314 = vmul.f32 %v1276, %v1311
        %v1315 = vmul.f32 %v1277, %v1311
        %v1316 = vmul.f32 %v1278, %v1311
        %v1317 = vmul.f32 %v1279, %v1311
        %v1318 = vmul.f32 %v1280, %v1311
        %v1319 = vmul.f32 %v1281, %v1311
        %v1320 = vmul.f32 %v1282, %v1311
        %v1321 = vmul.f32 %v1283, %v1311
        %v1322 = vmul.f32 %v1284, %v1311
        %v1323 = vmul.f32 %v1285, %v1311
        %v1324 = vmul.f32 %v1286, %v1311
        %v1325 = vmul.f32 %v1287, %v1311
        %v1326 = vmul.f32 %v1288, %v1311
        %v1327 = vmul.f32 %v1289, %v1311
        %v1328 = vmul.f32 %v1290, %v1311
        %v1329 = vmul.f32 %v1291, %v1311
        %v1330 = vmul.f32 %v1292, %v1311
        %v1331 = vmul.f32 %v1293, %v1311
        %v1332 = vmul.f32 %v1294, %v1311
        %v1333 = vmul.f32 %v1295, %v1311
        %v1334 = vmul.f32 %v1296, %v1311
        %v1335 = vmul.f32 %v1297, %v1311
        %v1336 = vmul.f32 %v1298, %v1311
        %v1337 = vmul.f32 %v1299, %v1311
        %v1338 = vmul.f32 %v1300, %v1311
        %v1339 = vmul.f32 %v1301, %v1311
        %v1340 = vmul.f32 %v1302, %v1311
        %v1341 = vmul.f32 %v1303, %v1311
        %v1342 = vmul.f32 %v1304, %v1311
        %v1343 = vmul.f32 %v1305, %v1311
        %v1344 = vadd.f32 %v1241, %v1312
        %v1345 = vadd.f32 %v1242, %v1313
        %v1346 = vadd.f32 %v1243, %v1314
        %v1347 = vadd.f32 %v1244, %v1315
        %v1348 = vadd.f32 %v1245, %v1316
        %v1349 = vadd.f32 %v1246, %v1317
        %v1350 = vadd.f32 %v1247, %v1318
        %v1351 = vadd.f32 %v1248, %v1319
        %v1352 = vadd.f32 %v1249, %v1320
        %v1353 = vadd.f32 %v1250, %v1321
        %v1354 = vadd.f32 %v1251, %v1322
        %v1355 = vadd.f32 %v1252, %v1323
        %v1356 = vadd.f32 %v1253, %v1324
        %v1357 = vadd.f32 %v1254, %v1325
        %v1358 = vadd.f32 %v1255, %v1326
        %v1359 = vadd.f32 %v1256, %v1327
        %v1360 = vadd.f32 %v1257, %v1328
        %v1361 = vadd.f32 %v1258, %v1329
        %v1362 = vadd.f32 %v1259, %v1330
        %v1363 = vadd.f32 %v1260, %v1331
        %v1364 = vadd.f32 %v1261, %v1332
        %v1365 = vadd.f32 %v1262, %v1333
        %v1366 = vadd.f32 %v1263, %v1334
        %v1367 = vadd.f32 %v1264, %v1335
        %v1368 = vadd.f32 %v1265, %v1336
        %v1369 = vadd.f32 %v1266, %v1337
        %v1370 = vadd.f32 %v1267, %v1338
        %v1371 = vadd.f32 %v1268, %v1339
        %v1372 = vadd.f32 %v1269, %v1340
        %v1373 = vadd.f32 %v1270, %v1341
        %v1374 = vadd.f32 %v1271, %v1342
        %v1375 = vadd.f32 %v1272, %v1343
        %v1376 = vld [vmem:[%s1273 + $0x1] sm:$0xff]
        %v1377 = vld [vmem:[%s1273 + $0x9] sm:$0xff]
        %v1378 = vld [vmem:[%s1273 + $0x19] sm:$0xff]
        %v1379 = vld [vmem:[%s1273 + $0x21] sm:$0xff]
        %v1380 = vld [vmem:[%s1273 + $0x31] sm:$0xff]
        %v1381 = vld [vmem:[%s1273 + $0x39] sm:$0xff]
        %v1382 = vld [vmem:[%s1273 + $0x49] sm:$0xff]
        %v1383 = vld [vmem:[%s1273 + $0x51] sm:$0xff]
        %v1384 = vld [vmem:[%s1273 + $0x61] sm:$0xff]
        %v1385 = vld [vmem:[%s1273 + $0x69] sm:$0xff]
        %v1386 = vld [vmem:[%s1273 + $0x79] sm:$0xff]
        %v1387 = vld [vmem:[%s1273 + $0x81] sm:$0xff]
        %v1388 = vld [vmem:[%s1273 + $0x91] sm:$0xff]
        %v1389 = vld [vmem:[%s1273 + $0x99] sm:$0xff]
        %v1390 = vld [vmem:[%s1273 + $0xa9] sm:$0xff]
        %v1391 = vld [vmem:[%s1273 + $0xb1] sm:$0xff]
        %v1392 = vld [vmem:[%s1273 + $0xc1] sm:$0xff]
        %v1393 = vld [vmem:[%s1273 + $0xc9] sm:$0xff]
        %v1394 = vld [vmem:[%s1273 + $0xd9] sm:$0xff]
        %v1395 = vld [vmem:[%s1273 + $0xe1] sm:$0xff]
        %v1396 = vld [vmem:[%s1273 + $0xf1] sm:$0xff]
        %v1397 = vld [vmem:[%s1273 + $0xf9] sm:$0xff]
        %v1398 = vld [vmem:[%s1273 + $0x109] sm:$0xff]
        %v1399 = vld [vmem:[%s1273 + $0x111] sm:$0xff]
        %v1400 = vld [vmem:[%s1273 + $0x121] sm:$0xff]
        %v1401 = vld [vmem:[%s1273 + $0x129] sm:$0xff]
        %v1402 = vld [vmem:[%s1273 + $0x139] sm:$0xff]
        %v1403 = vld [vmem:[%s1273 + $0x141] sm:$0xff]
        %v1404 = vld [vmem:[%s1273 + $0x151] sm:$0xff]
        %v1405 = vld [vmem:[%s1273 + $0x159] sm:$0xff]
        %v1406 = vld [vmem:[%s1273 + $0x169] sm:$0xff]
        %v1407 = vld [vmem:[%s1273 + $0x171] sm:$0xff]
        %v1408 = vld [vmem:[%s1306 + $0x1] sm:$0x1]
        %v1409 = vlaneseq
        %v1410 = vshrl.u32 %v1409, 7
        %v1411 = vsub.s32 0, %v1410
        %v1412 = vrot.slane %v1408, %v1411
        %v1413 = vmul.f32 %v1376, %v1412
        %v1414 = vmul.f32 %v1377, %v1412
        %v1415 = vmul.f32 %v1378, %v1412
        %v1416 = vmul.f32 %v1379, %v1412
        %v1417 = vmul.f32 %v1380, %v1412
        %v1418 = vmul.f32 %v1381, %v1412
        %v1419 = vmul.f32 %v1382, %v1412
        %v1420 = vmul.f32 %v1383, %v1412
        %v1421 = vmul.f32 %v1384, %v1412
        %v1422 = vmul.f32 %v1385, %v1412
        %v1423 = vmul.f32 %v1386, %v1412
        %v1424 = vmul.f32 %v1387, %v1412
        %v1425 = vmul.f32 %v1388, %v1412
        %v1426 = vmul.f32 %v1389, %v1412
        %v1427 = vmul.f32 %v1390, %v1412
        %v1428 = vmul.f32 %v1391, %v1412
        %v1429 = vmul.f32 %v1392, %v1412
        %v1430 = vmul.f32 %v1393, %v1412
        %v1431 = vmul.f32 %v1394, %v1412
        %v1432 = vmul.f32 %v1395, %v1412
        %v1433 = vmul.f32 %v1396, %v1412
        %v1434 = vmul.f32 %v1397, %v1412
        %v1435 = vmul.f32 %v1398, %v1412
        %v1436 = vmul.f32 %v1399, %v1412
        %v1437 = vmul.f32 %v1400, %v1412
        %v1438 = vmul.f32 %v1401, %v1412
        %v1439 = vmul.f32 %v1402, %v1412
        %v1440 = vmul.f32 %v1403, %v1412
        %v1441 = vmul.f32 %v1404, %v1412
        %v1442 = vmul.f32 %v1405, %v1412
        %v1443 = vmul.f32 %v1406, %v1412
        %v1444 = vmul.f32 %v1407, %v1412
        %v1445 = vadd.f32 %v1344, %v1413
        %v1446 = vadd.f32 %v1345, %v1414
        %v1447 = vadd.f32 %v1346, %v1415
        %v1448 = vadd.f32 %v1347, %v1416
        %v1449 = vadd.f32 %v1348, %v1417
        %v1450 = vadd.f32 %v1349, %v1418
        %v1451 = vadd.f32 %v1350, %v1419
        %v1452 = vadd.f32 %v1351, %v1420
        %v1453 = vadd.f32 %v1352, %v1421
        %v1454 = vadd.f32 %v1353, %v1422
        %v1455 = vadd.f32 %v1354, %v1423
        %v1456 = vadd.f32 %v1355, %v1424
        %v1457 = vadd.f32 %v1356, %v1425
        %v1458 = vadd.f32 %v1357, %v1426
        %v1459 = vadd.f32 %v1358, %v1427
        %v1460 = vadd.f32 %v1359, %v1428
        %v1461 = vadd.f32 %v1360, %v1429
        %v1462 = vadd.f32 %v1361, %v1430
        %v1463 = vadd.f32 %v1362, %v1431
        %v1464 = vadd.f32 %v1363, %v1432
        %v1465 = vadd.f32 %v1364, %v1433
        %v1466 = vadd.f32 %v1365, %v1434
        %v1467 = vadd.f32 %v1366, %v1435
        %v1468 = vadd.f32 %v1367, %v1436
        %v1469 = vadd.f32 %v1368, %v1437
        %v1470 = vadd.f32 %v1369, %v1438
        %v1471 = vadd.f32 %v1370, %v1439
        %v1472 = vadd.f32 %v1371, %v1440
        %v1473 = vadd.f32 %v1372, %v1441
        %v1474 = vadd.f32 %v1373, %v1442
        %v1475 = vadd.f32 %v1374, %v1443
        %v1476 = vadd.f32 %v1375, %v1444
        %v1477 = vld [vmem:[%s1273 + $0x2] sm:$0xff]
        %v1478 = vld [vmem:[%s1273 + $0xa] sm:$0xff]
        %v1479 = vld [vmem:[%s1273 + $0x1a] sm:$0xff]
        %v1480 = vld [vmem:[%s1273 + $0x22] sm:$0xff]
        %v1481 = vld [vmem:[%s1273 + $0x32] sm:$0xff]
        %v1482 = vld [vmem:[%s1273 + $0x3a] sm:$0xff]
        %v1483 = vld [vmem:[%s1273 + $0x4a] sm:$0xff]
        %v1484 = vld [vmem:[%s1273 + $0x52] sm:$0xff]
        %v1485 = vld [vmem:[%s1273 + $0x62] sm:$0xff]
        %v1486 = vld [vmem:[%s1273 + $0x6a] sm:$0xff]
        %v1487 = vld [vmem:[%s1273 + $0x7a] sm:$0xff]
        %v1488 = vld [vmem:[%s1273 + $0x82] sm:$0xff]
        %v1489 = vld [vmem:[%s1273 + $0x92] sm:$0xff]
        %v1490 = vld [vmem:[%s1273 + $0x9a] sm:$0xff]
        %v1491 = vld [vmem:[%s1273 + $0xaa] sm:$0xff]
        %v1492 = vld [vmem:[%s1273 + $0xb2] sm:$0xff]
        %v1493 = vld [vmem:[%s1273 + $0xc2] sm:$0xff]
        %v1494 = vld [vmem:[%s1273 + $0xca] sm:$0xff]
        %v1495 = vld [vmem:[%s1273 + $0xda] sm:$0xff]
        %v1496 = vld [vmem:[%s1273 + $0xe2] sm:$0xff]
        %v1497 = vld [vmem:[%s1273 + $0xf2] sm:$0xff]
        %v1498 = vld [vmem:[%s1273 + $0xfa] sm:$0xff]
        %v1499 = vld [vmem:[%s1273 + $0x10a] sm:$0xff]
        %v1500 = vld [vmem:[%s1273 + $0x112] sm:$0xff]
        %v1501 = vld [vmem:[%s1273 + $0x122] sm:$0xff]
        %v1502 = vld [vmem:[%s1273 + $0x12a] sm:$0xff]
        %v1503 = vld [vmem:[%s1273 + $0x13a] sm:$0xff]
        %v1504 = vld [vmem:[%s1273 + $0x142] sm:$0xff]
        %v1505 = vld [vmem:[%s1273 + $0x152] sm:$0xff]
        %v1506 = vld [vmem:[%s1273 + $0x15a] sm:$0xff]
        %v1507 = vld [vmem:[%s1273 + $0x16a] sm:$0xff]
        %v1508 = vld [vmem:[%s1273 + $0x172] sm:$0xff]
        %v1509 = vld [vmem:[%s1306 + $0x2] sm:$0x1]
        %v1510 = vlaneseq
        %v1511 = vshrl.u32 %v1510, 7
        %v1512 = vsub.s32 0, %v1511
        %v1513 = vrot.slane %v1509, %v1512
        %v1514 = vmul.f32 %v1477, %v1513
        %v1515 = vmul.f32 %v1478, %v1513
        %v1516 = vmul.f32 %v1479, %v1513
        %v1517 = vmul.f32 %v1480, %v1513
        %v1518 = vmul.f32 %v1481, %v1513
        %v1519 = vmul.f32 %v1482, %v1513
        %v1520 = vmul.f32 %v1483, %v1513
        %v1521 = vmul.f32 %v1484, %v1513
        %v1522 = vmul.f32 %v1485, %v1513
        %v1523 = vmul.f32 %v1486, %v1513
        %v1524 = vmul.f32 %v1487, %v1513
        %v1525 = vmul.f32 %v1488, %v1513
        %v1526 = vmul.f32 %v1489, %v1513
        %v1527 = vmul.f32 %v1490, %v1513
        %v1528 = vmul.f32 %v1491, %v1513
        %v1529 = vmul.f32 %v1492, %v1513
        %v1530 = vmul.f32 %v1493, %v1513
        %v1531 = vmul.f32 %v1494, %v1513
        %v1532 = vmul.f32 %v1495, %v1513
        %v1533 = vmul.f32 %v1496, %v1513
        %v1534 = vmul.f32 %v1497, %v1513
        %v1535 = vmul.f32 %v1498, %v1513
        %v1536 = vmul.f32 %v1499, %v1513
        %v1537 = vmul.f32 %v1500, %v1513
        %v1538 = vmul.f32 %v1501, %v1513
        %v1539 = vmul.f32 %v1502, %v1513
        %v1540 = vmul.f32 %v1503, %v1513
        %v1541 = vmul.f32 %v1504, %v1513
        %v1542 = vmul.f32 %v1505, %v1513
        %v1543 = vmul.f32 %v1506, %v1513
        %v1544 = vmul.f32 %v1507, %v1513
        %v1545 = vmul.f32 %v1508, %v1513
        %v1546 = vadd.f32 %v1445, %v1514
        %v1547 = vadd.f32 %v1446, %v1515
        %v1548 = vadd.f32 %v1447, %v1516
        %v1549 = vadd.f32 %v1448, %v1517
        %v1550 = vadd.f32 %v1449, %v1518
        %v1551 = vadd.f32 %v1450, %v1519
        %v1552 = vadd.f32 %v1451, %v1520
        %v1553 = vadd.f32 %v1452, %v1521
        %v1554 = vadd.f32 %v1453, %v1522
        %v1555 = vadd.f32 %v1454, %v1523
        %v1556 = vadd.f32 %v1455, %v1524
        %v1557 = vadd.f32 %v1456, %v1525
        %v1558 = vadd.f32 %v1457, %v1526
        %v1559 = vadd.f32 %v1458, %v1527
        %v1560 = vadd.f32 %v1459, %v1528
        %v1561 = vadd.f32 %v1460, %v1529
        %v1562 = vadd.f32 %v1461, %v1530
        %v1563 = vadd.f32 %v1462, %v1531
        %v1564 = vadd.f32 %v1463, %v1532
        %v1565 = vadd.f32 %v1464, %v1533
        %v1566 = vadd.f32 %v1465, %v1534
        %v1567 = vadd.f32 %v1466, %v1535
        %v1568 = vadd.f32 %v1467, %v1536
        %v1569 = vadd.f32 %v1468, %v1537
        %v1570 = vadd.f32 %v1469, %v1538
        %v1571 = vadd.f32 %v1470, %v1539
        %v1572 = vadd.f32 %v1471, %v1540
        %v1573 = vadd.f32 %v1472, %v1541
        %v1574 = vadd.f32 %v1473, %v1542
        %v1575 = vadd.f32 %v1474, %v1543
        %v1576 = vadd.f32 %v1475, %v1544
        %v1577 = vadd.f32 %v1476, %v1545
        %v1578 = vld [vmem:[%s2] sm:$0x1]
        %v1580 = vlaneseq
        %v1581 = vshrl.u32 %v1580, 7
        %v1582 = vsub.s32 0, %v1581
        %v1583 = vrot.slane %v1578, %v1582
        %v1585 = vadd.f32 %v1546, %v1583
        %v1586 = vadd.f32 %v1547, %v1583
        %v1587 = vadd.f32 %v1548, %v1583
        %v1588 = vadd.f32 %v1549, %v1583
        %v1589 = vadd.f32 %v1550, %v1583
        %v1590 = vadd.f32 %v1551, %v1583
        %v1591 = vadd.f32 %v1552, %v1583
        %v1592 = vadd.f32 %v1553, %v1583
        %v1593 = vadd.f32 %v1554, %v1583
        %v1594 = vadd.f32 %v1555, %v1583
        %v1595 = vadd.f32 %v1556, %v1583
        %v1596 = vadd.f32 %v1557, %v1583
        %v1597 = vadd.f32 %v1558, %v1583
        %v1598 = vadd.f32 %v1559, %v1583
        %v1599 = vadd.f32 %v1560, %v1583
        %v1600 = vadd.f32 %v1561, %v1583
        %v1601 = vadd.f32 %v1562, %v1583
        %v1602 = vadd.f32 %v1563, %v1583
        %v1603 = vadd.f32 %v1564, %v1583
        %v1604 = vadd.f32 %v1565, %v1583
        %v1605 = vadd.f32 %v1566, %v1583
        %v1606 = vadd.f32 %v1567, %v1583
        %v1607 = vadd.f32 %v1568, %v1583
        %v1608 = vadd.f32 %v1569, %v1583
        %v1609 = vadd.f32 %v1570, %v1583
        %v1610 = vadd.f32 %v1571, %v1583
        %v1611 = vadd.f32 %v1572, %v1583
        %v1612 = vadd.f32 %v1573, %v1583
        %v1613 = vadd.f32 %v1574, %v1583
        %v1614 = vadd.f32 %v1575, %v1583
        %v1615 = vadd.f32 %v1576, %v1583
        %v1616 = vadd.f32 %v1577, %v1583
        %v1617 = vmax.f32 %v1585, 0.0
        %v1618 = vmax.f32 %v1586, 0.0
        %v1619 = vmax.f32 %v1587, 0.0
        %v1620 = vmax.f32 %v1588, 0.0
        %v1621 = vmax.f32 %v1589, 0.0
        %v1622 = vmax.f32 %v1590, 0.0
        %v1623 = vmax.f32 %v1591, 0.0
        %v1624 = vmax.f32 %v1592, 0.0
        %v1625 = vmax.f32 %v1593, 0.0
        %v1626 = vmax.f32 %v1594, 0.0
        %v1627 = vmax.f32 %v1595, 0.0
        %v1628 = vmax.f32 %v1596, 0.0
        %v1629 = vmax.f32 %v1597, 0.0
        %v1630 = vmax.f32 %v1598, 0.0
        %v1631 = vmax.f32 %v1599, 0.0
        %v1632 = vmax.f32 %v1600, 0.0
        %v1633 = vmax.f32 %v1601, 0.0
        %v1634 = vmax.f32 %v1602, 0.0
        %v1635 = vmax.f32 %v1603, 0.0
        %v1636 = vmax.f32 %v1604, 0.0
        %v1637 = vmax.f32 %v1605, 0.0
        %v1638 = vmax.f32 %v1606, 0.0
        %v1639 = vmax.f32 %v1607, 0.0
        %v1640 = vmax.f32 %v1608, 0.0
        %v1641 = vmax.f32 %v1609, 0.0
        %v1642 = vmax.f32 %v1610, 0.0
        %v1643 = vmax.f32 %v1611, 0.0
        %v1644 = vmax.f32 %v1612, 0.0
        %v1645 = vmax.f32 %v1613, 0.0
        %v1646 = vmax.f32 %v1614, 0.0
        %v1647 = vmax.f32 %v1615, 0.0
        %v1648 = vmax.f32 %v1616, 0.0
        %v1649 = vmin.f32 %v1617, 6.0
        %v1650 = vmin.f32 %v1618, 6.0
        %v1651 = vmin.f32 %v1619, 6.0
        %v1652 = vmin.f32 %v1620, 6.0
        %v1653 = vmin.f32 %v1621, 6.0
        %v1654 = vmin.f32 %v1622, 6.0
        %v1655 = vmin.f32 %v1623, 6.0
        %v1656 = vmin.f32 %v1624, 6.0
        %v1657 = vmin.f32 %v1625, 6.0
        %v1658 = vmin.f32 %v1626, 6.0
        %v1659 = vmin.f32 %v1627, 6.0
        %v1660 = vmin.f32 %v1628, 6.0
        %v1661 = vmin.f32 %v1629, 6.0
        %v1662 = vmin.f32 %v1630, 6.0
        %v1663 = vmin.f32 %v1631, 6.0
        %v1664 = vmin.f32 %v1632, 6.0
        %v1665 = vmin.f32 %v1633, 6.0
        %v1666 = vmin.f32 %v1634, 6.0
        %v1667 = vmin.f32 %v1635, 6.0
        %v1668 = vmin.f32 %v1636, 6.0
        %v1669 = vmin.f32 %v1637, 6.0
        %v1670 = vmin.f32 %v1638, 6.0
        %v1671 = vmin.f32 %v1639, 6.0
        %v1672 = vmin.f32 %v1640, 6.0
        %v1673 = vmin.f32 %v1641, 6.0
        %v1674 = vmin.f32 %v1642, 6.0
        %v1675 = vmin.f32 %v1643, 6.0
        %v1676 = vmin.f32 %v1644, 6.0
        %v1677 = vmin.f32 %v1645, 6.0
        %v1678 = vmin.f32 %v1646, 6.0
        %v1679 = vmin.f32 %v1647, 6.0
        %v1680 = vmin.f32 %v1648, 6.0
        %v1681 = vld [vmem:[%s3] sm:$0xf]
        %v1682 = vld [vmem:[%s4] sm:$0x1]
        %v1684 = vlaneseq
        %v1685 = vshrl.u32 %v1684, 7
        %v1686 = vsub.s32 0, %v1685
        %v1687 = vrot.slane %v1682, %v1686
        %v1690 = vsel %vm466, %v1649, 0
        %v1693 = vsel %vm466, %v1650, 0
        %v1696 = vsel %vm466, %v1651, 0
        %v1699 = vsel %vm466, %v1652, 0
        %v1702 = vsel %vm466, %v1653, 0
        %v1705 = vsel %vm466, %v1654, 0
        %v1708 = vsel %vm466, %v1655, 0
        %v1711 = vsel %vm466, %v1656, 0
        %v1714 = vsel %vm466, %v1657, 0
        %v1717 = vsel %vm466, %v1658, 0
        %v1720 = vsel %vm466, %v1659, 0
        %v1723 = vsel %vm466, %v1660, 0
        %v1726 = vsel %vm466, %v1661, 0
        %v1729 = vsel %vm466, %v1662, 0
        %v1732 = vsel %vm466, %v1663, 0
        %v1735 = vsel %vm466, %v1664, 0
        %v1738 = vsel %vm466, %v1665, 0
        %v1741 = vsel %vm466, %v1666, 0
        %v1744 = vsel %vm466, %v1667, 0
        %v1747 = vsel %vm466, %v1668, 0
        %v1750 = vsel %vm466, %v1669, 0
        %v1753 = vsel %vm466, %v1670, 0
        %v1756 = vsel %vm466, %v1671, 0
        %v1759 = vsel %vm466, %v1672, 0
        %v1762 = vsel %vm466, %v1673, 0
        %v1765 = vsel %vm466, %v1674, 0
        %v1768 = vsel %vm466, %v1675, 0
        %v1771 = vsel %vm466, %v1676, 0
        %v1774 = vsel %vm466, %v1677, 0
        %v1777 = vsel %vm466, %v1678, 0
        %v1780 = vsel %vm466, %v1679, 0
        %v1783 = vsel %vm466, %v1680, 0
        %vm1785 = vcmask 1043456
        %v1787 = vsel %vm1785, %v1681, 0
        %1789 = vmatprep.subr.mxu0 0.0
        %1790 = vmatpush1.msra.mxu0 %v1787
        %1791 = vmatprep.subr.mxu0 0.0
        %1792 = vmatpush1.msra.mxu0 0.0
        %1793 = vmatprep.subr.mxu0 0.0
        %1794 = vmatpush1.msra.mxu0 0.0
        %1795 = vmatprep.subr.mxu0 0.0
        %1796 = vmatpush1.msra.mxu0 0.0
        %1797 = vmatprep.subr.mxu0 0.0
        %1798 = vmatpush1.msra.mxu0 0.0
        %1799 = vmatprep.subr.mxu0 0.0
        %1800 = vmatpush1.msra.mxu0 0.0
        %1801 = vmatprep.subr.mxu0 0.0
        %1802 = vmatpush1.msra.mxu0 0.0
        %1803 = vmatprep.subr.mxu0 0.0
        %1804 = vmatpush1.msra.mxu0 0.0
        %1805 = vmatprep.subr.mxu0 0.0
        %1806 = vmatpush1.msra.mxu0 0.0
        %1807 = vmatprep.subr.mxu0 0.0
        %1808 = vmatpush1.msra.mxu0 0.0
        %1809 = vmatprep.subr.mxu0 0.0
        %1810 = vmatpush1.msra.mxu0 0.0
        %1811 = vmatprep.subr.mxu0 0.0
        %1812 = vmatpush1.msra.mxu0 0.0
        %1813 = vmatprep.subr.mxu0 0.0
        %1814 = vmatpush1.msra.mxu0 0.0
        %1815 = vmatprep.subr.mxu0 0.0
        %1816 = vmatpush1.msra.mxu0 0.0
        %1817 = vmatprep.subr.mxu0 0.0
        %1818 = vmatpush1.msra.mxu0 0.0
        %1819 = vmatprep.subr.mxu0 0.0
        %1820 = vmatpush1.msra.mxu0 0.0
        %1821 = vmatprep.subr.mxu0 0.0
        %1822 = vmatpush1.msra.mxu0 0.0
        %1823 = vmatprep.subr.mxu0 0.0
        %1824 = vmatpush1.msra.mxu0 0.0
        %1825 = vmatprep.subr.mxu0 0.0
        %1826 = vmatpush1.msra.mxu0 0.0
        %1827 = vmatprep.subr.mxu0 0.0
        %1828 = vmatpush1.msra.mxu0 0.0
        %1829 = vmatprep.subr.mxu0 0.0
        %1830 = vmatpush1.msra.mxu0 0.0
        %1831 = vmatprep.subr.mxu0 0.0
        %1832 = vmatpush1.msra.mxu0 0.0
        %1833 = vmatprep.subr.mxu0 0.0
        %1834 = vmatpush1.msra.mxu0 0.0
        %1835 = vmatprep.subr.mxu0 0.0
        %1836 = vmatpush1.msra.mxu0 0.0
        %1837 = vmatprep.subr.mxu0 0.0
        %1838 = vmatpush1.msra.mxu0 0.0
        %1839 = vmatprep.subr.mxu0 0.0
        %1840 = vmatpush1.msra.mxu0 0.0
        %1841 = vmatprep.subr.mxu0 0.0
        %1842 = vmatpush1.msra.mxu0 0.0
        %1843 = vmatprep.subr.mxu0 0.0
        %1844 = vmatpush1.msra.mxu0 0.0
        %1845 = vmatprep.subr.mxu0 0.0
        %1846 = vmatpush1.msra.mxu0 0.0
        %1847 = vmatprep.subr.mxu0 0.0
        %1848 = vmatpush1.msra.mxu0 0.0
        %1849 = vmatprep.subr.mxu0 0.0
        %1850 = vmatpush1.msra.mxu0 0.0
        %1851 = vmatprep.subr.mxu0 0.0
        %1852 = vmatpush1.msra.mxu0 0.0
        %1853 = vmatprep.mubr.f32.mxu0 0.0
        %1854 = vmatmul.mubr.f32.gmra.mrb[0].mxu0 %v1690
        %v1855 = vpop.f32.mrb[0].mxu0
        %v1856 = vadd.f32 %v1687, %v1855
        %v1857 = vpop.f32.mrb[0].mxu0
        %1858 = vmatprep.mubr.f32.mxu0 0.0
        %1859 = vmatmul.mubr.f32.gmra.mrb[0].mxu0 %v1693
        %v1860 = vpop.f32.mrb[0].mxu0
        %v1861 = vadd.f32 %v1687, %v1860
        %v1862 = vpop.f32.mrb[0].mxu0
        %1863 = vmatprep.mubr.f32.mxu0 0.0
        %1864 = vmatmul.mubr.f32.gmra.mrb[0].mxu0 %v1696
        %v1865 = vpop.f32.mrb[0].mxu0
        %v1866 = vadd.f32 %v1687, %v1865
        %v1867 = vpop.f32.mrb[0].mxu0
        %1868 = vmatprep.mubr.f32.mxu0 0.0
        %1869 = vmatmul.mubr.f32.gmra.mrb[0].mxu0 %v1699
        %v1870 = vpop.f32.mrb[0].mxu0
        %v1871 = vadd.f32 %v1687, %v1870
        %v1872 = vpop.f32.mrb[0].mxu0
        %1873 = vmatprep.mubr.f32.mxu0 0.0
        %1874 = vmatmul.mubr.f32.gmra.mrb[0].mxu0 %v1702
        %v1875 = vpop.f32.mrb[0].mxu0
        %v1876 = vadd.f32 %v1687, %v1875
        %v1877 = vpop.f32.mrb[0].mxu0
        %1878 = vmatprep.mubr.f32.mxu0 0.0
        %1879 = vmatmul.mubr.f32.gmra.mrb[0].mxu0 %v1705
        %v1880 = vpop.f32.mrb[0].mxu0
        %v1881 = vadd.f32 %v1687, %v1880
        %v1882 = vpop.f32.mrb[0].mxu0
        %1883 = vmatprep.mubr.f32.mxu0 0.0
        %1884 = vmatmul.mubr.f32.gmra.mrb[0].mxu0 %v1708
        %v1885 = vpop.f32.mrb[0].mxu0
        %v1886 = vadd.f32 %v1687, %v1885
        %v1887 = vpop.f32.mrb[0].mxu0
        %1888 = vmatprep.mubr.f32.mxu0 0.0
        %1889 = vmatmul.mubr.f32.gmra.mrb[0].mxu0 %v1711
        %v1890 = vpop.f32.mrb[0].mxu0
        %v1891 = vadd.f32 %v1687, %v1890
        %v1892 = vpop.f32.mrb[0].mxu0
        %1893 = vmatprep.mubr.f32.mxu0 0.0
        %1894 = vmatmul.mubr.f32.gmra.mrb[0].mxu0 %v1714
        %v1895 = vpop.f32.mrb[0].mxu0
        %v1896 = vadd.f32 %v1687, %v1895
        %v1897 = vpop.f32.mrb[0].mxu0
        %1898 = vmatprep.mubr.f32.mxu0 0.0
        %1899 = vmatmul.mubr.f32.gmra.mrb[0].mxu0 %v1717
        %v1900 = vpop.f32.mrb[0].mxu0
        %v1901 = vadd.f32 %v1687, %v1900
        %v1902 = vpop.f32.mrb[0].mxu0
        %1903 = vmatprep.mubr.f32.mxu0 0.0
        %1904 = vmatmul.mubr.f32.gmra.mrb[0].mxu0 %v1720
        %v1905 = vpop.f32.mrb[0].mxu0
        %v1906 = vadd.f32 %v1687, %v1905
        %v1907 = vpop.f32.mrb[0].mxu0
        %1908 = vmatprep.mubr.f32.mxu0 0.0
        %1909 = vmatmul.mubr.f32.gmra.mrb[0].mxu0 %v1723
        %v1910 = vpop.f32.mrb[0].mxu0
        %v1911 = vadd.f32 %v1687, %v1910
        %v1912 = vpop.f32.mrb[0].mxu0
        %1913 = vmatprep.mubr.f32.mxu0 0.0
        %1914 = vmatmul.mubr.f32.gmra.mrb[0].mxu0 %v1726
        %v1915 = vpop.f32.mrb[0].mxu0
        %v1916 = vadd.f32 %v1687, %v1915
        %v1917 = vpop.f32.mrb[0].mxu0
        %1918 = vmatprep.mubr.f32.mxu0 0.0
        %1919 = vmatmul.mubr.f32.gmra.mrb[0].mxu0 %v1729
        %v1920 = vpop.f32.mrb[0].mxu0
        %v1921 = vadd.f32 %v1687, %v1920
        %v1922 = vpop.f32.mrb[0].mxu0
        %1923 = vmatprep.mubr.f32.mxu0 0.0
        %1924 = vmatmul.mubr.f32.gmra.mrb[0].mxu0 %v1732
        %v1925 = vpop.f32.mrb[0].mxu0
        %v1926 = vadd.f32 %v1687, %v1925
        %v1927 = vpop.f32.mrb[0].mxu0
        %1928 = vmatprep.mubr.f32.mxu0 0.0
        %1929 = vmatmul.mubr.f32.gmra.mrb[0].mxu0 %v1735
        %v1930 = vpop.f32.mrb[0].mxu0
        %v1931 = vadd.f32 %v1687, %v1930
        %v1932 = vpop.f32.mrb[0].mxu0
        %1933 = vmatprep.mubr.f32.mxu0 0.0
        %1934 = vmatmul.mubr.f32.gmra.mrb[0].mxu0 %v1738
        %v1935 = vpop.f32.mrb[0].mxu0
        %v1936 = vadd.f32 %v1687, %v1935
        %v1937 = vpop.f32.mrb[0].mxu0
        %1938 = vmatprep.mubr.f32.mxu0 0.0
        %1939 = vmatmul.mubr.f32.gmra.mrb[0].mxu0 %v1741
        %v1940 = vpop.f32.mrb[0].mxu0
        %v1941 = vadd.f32 %v1687, %v1940
        %v1942 = vpop.f32.mrb[0].mxu0
        %1943 = vmatprep.mubr.f32.mxu0 0.0
        %1944 = vmatmul.mubr.f32.gmra.mrb[0].mxu0 %v1744
        %v1945 = vpop.f32.mrb[0].mxu0
        %v1946 = vadd.f32 %v1687, %v1945
        %v1947 = vpop.f32.mrb[0].mxu0
        %1948 = vmatprep.mubr.f32.mxu0 0.0
        %1949 = vmatmul.mubr.f32.gmra.mrb[0].mxu0 %v1747
        %v1950 = vpop.f32.mrb[0].mxu0
        %v1951 = vadd.f32 %v1687, %v1950
        %v1952 = vpop.f32.mrb[0].mxu0
        %1953 = vmatprep.mubr.f32.mxu0 0.0
        %1954 = vmatmul.mubr.f32.gmra.mrb[0].mxu0 %v1750
        %v1955 = vpop.f32.mrb[0].mxu0
        %v1956 = vadd.f32 %v1687, %v1955
        %v1957 = vpop.f32.mrb[0].mxu0
        %1958 = vmatprep.mubr.f32.mxu0 0.0
        %1959 = vmatmul.mubr.f32.gmra.mrb[0].mxu0 %v1753
        %v1960 = vpop.f32.mrb[0].mxu0
        %v1961 = vadd.f32 %v1687, %v1960
        %v1962 = vpop.f32.mrb[0].mxu0
        %1963 = vmatprep.mubr.f32.mxu0 0.0
        %1964 = vmatmul.mubr.f32.gmra.mrb[0].mxu0 %v1756
        %v1965 = vpop.f32.mrb[0].mxu0
        %v1966 = vadd.f32 %v1687, %v1965
        %v1967 = vpop.f32.mrb[0].mxu0
        %1968 = vmatprep.mubr.f32.mxu0 0.0
        %1969 = vmatmul.mubr.f32.gmra.mrb[0].mxu0 %v1759
        %v1970 = vpop.f32.mrb[0].mxu0
        %v1971 = vadd.f32 %v1687, %v1970
        %v1972 = vpop.f32.mrb[0].mxu0
        %1973 = vmatprep.mubr.f32.mxu0 0.0
        %1974 = vmatmul.mubr.f32.gmra.mrb[0].mxu0 %v1762
        %v1975 = vpop.f32.mrb[0].mxu0
        %v1976 = vadd.f32 %v1687, %v1975
        %v1977 = vpop.f32.mrb[0].mxu0
        %1978 = vmatprep.mubr.f32.mxu0 0.0
        %1979 = vmatmul.mubr.f32.gmra.mrb[0].mxu0 %v1765
        %v1980 = vpop.f32.mrb[0].mxu0
        %v1981 = vadd.f32 %v1687, %v1980
        %v1982 = vpop.f32.mrb[0].mxu0
        %1983 = vmatprep.mubr.f32.mxu0 0.0
        %1984 = vmatmul.mubr.f32.gmra.mrb[0].mxu0 %v1768
        %v1985 = vpop.f32.mrb[0].mxu0
        %v1986 = vadd.f32 %v1687, %v1985
        %v1987 = vpop.f32.mrb[0].mxu0
        %1988 = vmatprep.mubr.f32.mxu0 0.0
        %1989 = vmatmul.mubr.f32.gmra.mrb[0].mxu0 %v1771
        %v1990 = vpop.f32.mrb[0].mxu0
        %v1991 = vadd.f32 %v1687, %v1990
        %v1992 = vpop.f32.mrb[0].mxu0
        %1993 = vmatprep.mubr.f32.mxu0 0.0
        %1994 = vmatmul.mubr.f32.gmra.mrb[0].mxu0 %v1774
        %v1995 = vpop.f32.mrb[0].mxu0
        %v1996 = vadd.f32 %v1687, %v1995
        %v1997 = vpop.f32.mrb[0].mxu0
        %1998 = vmatprep.mubr.f32.mxu0 0.0
        %1999 = vmatmul.mubr.f32.gmra.mrb[0].mxu0 %v1777
        %v2000 = vpop.f32.mrb[0].mxu0
        %v2001 = vadd.f32 %v1687, %v2000
        %v2002 = vpop.f32.mrb[0].mxu0
        %2003 = vmatprep.mubr.f32.mxu0 0.0
        %2004 = vmatmul.mubr.f32.gmra.mrb[0].mxu0 %v1780
        %v2005 = vpop.f32.mrb[0].mxu0
        %v2006 = vadd.f32 %v1687, %v2005
        %v2007 = vpop.f32.mrb[0].mxu0
        %2008 = vmatprep.mubr.f32.mxu0 0.0
        %2009 = vmatmul.mubr.f32.gmra.mrb[0].mxu0 %v1783
        %v2010 = vpop.f32.mrb[0].mxu0
        %v2011 = vadd.f32 %v1687, %v2010
        %v2012 = vpop.f32.mrb[0].mxu0
        %2013 = vdwg.mxu0
        %v2014 = vmax.f32 %v1856, 0.0
        %v2015 = vmax.f32 %v1861, 0.0
        %v2016 = vmax.f32 %v1866, 0.0
        %v2017 = vmax.f32 %v1871, 0.0
        %v2018 = vmax.f32 %v1876, 0.0
        %v2019 = vmax.f32 %v1881, 0.0
        %v2020 = vmax.f32 %v1886, 0.0
        %v2021 = vmax.f32 %v1891, 0.0
        %v2022 = vmax.f32 %v1896, 0.0
        %v2023 = vmax.f32 %v1901, 0.0
        %v2024 = vmax.f32 %v1906, 0.0
        %v2025 = vmax.f32 %v1911, 0.0
        %v2026 = vmax.f32 %v1916, 0.0
        %v2027 = vmax.f32 %v1921, 0.0
        %v2028 = vmax.f32 %v1926, 0.0
        %v2029 = vmax.f32 %v1931, 0.0
        %v2030 = vmax.f32 %v1936, 0.0
        %v2031 = vmax.f32 %v1941, 0.0
        %v2032 = vmax.f32 %v1946, 0.0
        %v2033 = vmax.f32 %v1951, 0.0
        %v2034 = vmax.f32 %v1956, 0.0
        %v2035 = vmax.f32 %v1961, 0.0
        %v2036 = vmax.f32 %v1966, 0.0
        %v2037 = vmax.f32 %v1971, 0.0
        %v2038 = vmax.f32 %v1976, 0.0
        %v2039 = vmax.f32 %v1981, 0.0
        %v2040 = vmax.f32 %v1986, 0.0
        %v2041 = vmax.f32 %v1991, 0.0
        %v2042 = vmax.f32 %v1996, 0.0
        %v2043 = vmax.f32 %v2001, 0.0
        %v2044 = vmax.f32 %v2006, 0.0
        %v2045 = vmax.f32 %v2011, 0.0
        %v2046 = vmin.f32 %v2014, 6.0
        %v2047 = vmin.f32 %v2015, 6.0
        %v2048 = vmin.f32 %v2016, 6.0
        %v2049 = vmin.f32 %v2017, 6.0
        %v2050 = vmin.f32 %v2018, 6.0
        %v2051 = vmin.f32 %v2019, 6.0
        %v2052 = vmin.f32 %v2020, 6.0
        %v2053 = vmin.f32 %v2021, 6.0
        %v2054 = vmin.f32 %v2022, 6.0
        %v2055 = vmin.f32 %v2023, 6.0
        %v2056 = vmin.f32 %v2024, 6.0
        %v2057 = vmin.f32 %v2025, 6.0
        %v2058 = vmin.f32 %v2026, 6.0
        %v2059 = vmin.f32 %v2027, 6.0
        %v2060 = vmin.f32 %v2028, 6.0
        %v2061 = vmin.f32 %v2029, 6.0
        %v2062 = vmin.f32 %v2030, 6.0
        %v2063 = vmin.f32 %v2031, 6.0
        %v2064 = vmin.f32 %v2032, 6.0
        %v2065 = vmin.f32 %v2033, 6.0
        %v2066 = vmin.f32 %v2034, 6.0
        %v2067 = vmin.f32 %v2035, 6.0
        %v2068 = vmin.f32 %v2036, 6.0
        %v2069 = vmin.f32 %v2037, 6.0
        %v2070 = vmin.f32 %v2038, 6.0
        %v2071 = vmin.f32 %v2039, 6.0
        %v2072 = vmin.f32 %v2040, 6.0
        %v2073 = vmin.f32 %v2041, 6.0
        %v2074 = vmin.f32 %v2042, 6.0
        %v2075 = vmin.f32 %v2043, 6.0
        %v2076 = vmin.f32 %v2044, 6.0
        %v2077 = vmin.f32 %v2045, 6.0
        %s2078 = scalar_lea.vmem [#allocation3], 24
        %2079 = vst.msk [vmem:[%s2078 + $0x1] sm:$0xff] %vm512, %v2046
        %2080 = vst.msk [vmem:[%s2078 + $0x9] sm:$0xff] %vm512, %v2047
        %2081 = vst.msk [vmem:[%s2078 + $0x19] sm:$0xff] %vm512, %v2048
        %2082 = vst.msk [vmem:[%s2078 + $0x21] sm:$0xff] %vm512, %v2049
        %2083 = vst.msk [vmem:[%s2078 + $0x31] sm:$0xff] %vm512, %v2050
        %2084 = vst.msk [vmem:[%s2078 + $0x39] sm:$0xff] %vm512, %v2051
        %2085 = vst.msk [vmem:[%s2078 + $0x49] sm:$0xff] %vm512, %v2052
        %2086 = vst.msk [vmem:[%s2078 + $0x51] sm:$0xff] %vm512, %v2053
        %2087 = vst.msk [vmem:[%s2078 + $0x61] sm:$0xff] %vm512, %v2054
        %2088 = vst.msk [vmem:[%s2078 + $0x69] sm:$0xff] %vm512, %v2055
        %2089 = vst.msk [vmem:[%s2078 + $0x79] sm:$0xff] %vm512, %v2056
        %2090 = vst.msk [vmem:[%s2078 + $0x81] sm:$0xff] %vm512, %v2057
        %2091 = vst.msk [vmem:[%s2078 + $0x91] sm:$0xff] %vm512, %v2058
        %2092 = vst.msk [vmem:[%s2078 + $0x99] sm:$0xff] %vm512, %v2059
        %2093 = vst.msk [vmem:[%s2078 + $0xa9] sm:$0xff] %vm512, %v2060
        %2094 = vst.msk [vmem:[%s2078 + $0xb1] sm:$0xff] %vm512, %v2061
        %2095 = vst.msk [vmem:[%s2078 + $0xc1] sm:$0xff] %vm512, %v2062
        %2096 = vst.msk [vmem:[%s2078 + $0xc9] sm:$0xff] %vm512, %v2063
        %2097 = vst.msk [vmem:[%s2078 + $0xd9] sm:$0xff] %vm512, %v2064
        %2098 = vst.msk [vmem:[%s2078 + $0xe1] sm:$0xff] %vm512, %v2065
        %2099 = vst.msk [vmem:[%s2078 + $0xf1] sm:$0xff] %vm512, %v2066
        %2100 = vst.msk [vmem:[%s2078 + $0xf9] sm:$0xff] %vm512, %v2067
        %2101 = vst.msk [vmem:[%s2078 + $0x109] sm:$0xff] %vm512, %v2068
        %2102 = vst.msk [vmem:[%s2078 + $0x111] sm:$0xff] %vm512, %v2069
        %2103 = vst.msk [vmem:[%s2078 + $0x121] sm:$0xff] %vm512, %v2070
        %2104 = vst.msk [vmem:[%s2078 + $0x129] sm:$0xff] %vm512, %v2071
        %2105 = vst.msk [vmem:[%s2078 + $0x139] sm:$0xff] %vm512, %v2072
        %2106 = vst.msk [vmem:[%s2078 + $0x141] sm:$0xff] %vm512, %v2073
        %2107 = vst.msk [vmem:[%s2078 + $0x151] sm:$0xff] %vm512, %v2074
        %2108 = vst.msk [vmem:[%s2078 + $0x159] sm:$0xff] %vm512, %v2075
        %2109 = vst.msk [vmem:[%s2078 + $0x169] sm:$0xff] %vm512, %v2076
        %2110 = vst.msk [vmem:[%s2078 + $0x171] sm:$0xff] %vm512, %v2077
        %v2111 = vld [vmem:[#allocation2] sm:$0xff]
        %v2112 = vld [vmem:[#allocation2 + $0x8] sm:$0xff]
        %v2113 = vld [vmem:[#allocation2 + $0x18] sm:$0xff]
        %v2114 = vld [vmem:[#allocation2 + $0x20] sm:$0xff]
        %v2115 = vld [vmem:[#allocation2 + $0x30] sm:$0xff]
        %v2116 = vld [vmem:[#allocation2 + $0x38] sm:$0xff]
        %v2117 = vld [vmem:[#allocation2 + $0x48] sm:$0xff]
        %v2118 = vld [vmem:[#allocation2 + $0x50] sm:$0xff]
        %v2119 = vld [vmem:[#allocation2 + $0x60] sm:$0xff]
        %v2120 = vld [vmem:[#allocation2 + $0x68] sm:$0xff]
        %v2121 = vld [vmem:[#allocation2 + $0x78] sm:$0xff]
        %v2122 = vld [vmem:[#allocation2 + $0x80] sm:$0xff]
        %v2123 = vld [vmem:[#allocation2 + $0x90] sm:$0xff]
        %v2124 = vld [vmem:[#allocation2 + $0x98] sm:$0xff]
        %v2125 = vld [vmem:[#allocation2 + $0xa8] sm:$0xff]
        %v2126 = vld [vmem:[#allocation2 + $0xb0] sm:$0xff]
        %v2127 = vld [vmem:[#allocation2 + $0xc0] sm:$0xff]
        %v2128 = vld [vmem:[#allocation2 + $0xc8] sm:$0xff]
        %v2129 = vld [vmem:[#allocation2 + $0xd8] sm:$0xff]
        %v2130 = vld [vmem:[#allocation2 + $0xe0] sm:$0xff]
        %v2131 = vld [vmem:[#allocation2 + $0xf0] sm:$0xff]
        %v2132 = vld [vmem:[#allocation2 + $0xf8] sm:$0xff]
        %v2133 = vld [vmem:[#allocation2 + $0x108] sm:$0xff]
        %v2134 = vld [vmem:[#allocation2 + $0x110] sm:$0xff]
        %v2135 = vld [vmem:[#allocation2 + $0x120] sm:$0xff]
        %v2136 = vld [vmem:[#allocation2 + $0x128] sm:$0xff]
        %v2137 = vld [vmem:[#allocation2 + $0x138] sm:$0xff]
        %v2138 = vld [vmem:[#allocation2 + $0x140] sm:$0xff]
        %v2139 = vld [vmem:[#allocation2 + $0x150] sm:$0xff]
        %v2140 = vld [vmem:[#allocation2 + $0x158] sm:$0xff]
        %v2141 = vld [vmem:[#allocation2 + $0x168] sm:$0xff]
        %v2142 = vld [vmem:[#allocation2 + $0x170] sm:$0xff]
        %v2143 = vld [vmem:[%s5] sm:$0x1]
        %v2144 = vlaneseq
        %v2145 = vshrl.u32 %v2144, 7
        %v2146 = vsub.s32 0, %v2145
        %v2147 = vrot.slane %v2143, %v2146
        %v2148 = vmul.f32 %v2111, %v2147
        %v2149 = vmul.f32 %v2112, %v2147
        %v2150 = vmul.f32 %v2113, %v2147
        %v2151 = vmul.f32 %v2114, %v2147
        %v2152 = vmul.f32 %v2115, %v2147
        %v2153 = vmul.f32 %v2116, %v2147
        %v2154 = vmul.f32 %v2117, %v2147
        %v2155 = vmul.f32 %v2118, %v2147
        %v2156 = vmul.f32 %v2119, %v2147
        %v2157 = vmul.f32 %v2120, %v2147
        %v2158 = vmul.f32 %v2121, %v2147
        %v2159 = vmul.f32 %v2122, %v2147
        %v2160 = vmul.f32 %v2123, %v2147
        %v2161 = vmul.f32 %v2124, %v2147
        %v2162 = vmul.f32 %v2125, %v2147
        %v2163 = vmul.f32 %v2126, %v2147
        %v2164 = vmul.f32 %v2127, %v2147
        %v2165 = vmul.f32 %v2128, %v2147
        %v2166 = vmul.f32 %v2129, %v2147
        %v2167 = vmul.f32 %v2130, %v2147
        %v2168 = vmul.f32 %v2131, %v2147
        %v2169 = vmul.f32 %v2132, %v2147
        %v2170 = vmul.f32 %v2133, %v2147
        %v2171 = vmul.f32 %v2134, %v2147
        %v2172 = vmul.f32 %v2135, %v2147
        %v2173 = vmul.f32 %v2136, %v2147
        %v2174 = vmul.f32 %v2137, %v2147
        %v2175 = vmul.f32 %v2138, %v2147
        %v2176 = vmul.f32 %v2139, %v2147
        %v2177 = vmul.f32 %v2140, %v2147
        %v2178 = vmul.f32 %v2141, %v2147
        %v2179 = vmul.f32 %v2142, %v2147
        %v2180 = vadd.f32 %v2148, 0.0
        %v2181 = vadd.f32 %v2149, 0.0
        %v2182 = vadd.f32 %v2150, 0.0
        %v2183 = vadd.f32 %v2151, 0.0
        %v2184 = vadd.f32 %v2152, 0.0
        %v2185 = vadd.f32 %v2153, 0.0
        %v2186 = vadd.f32 %v2154, 0.0
        %v2187 = vadd.f32 %v2155, 0.0
        %v2188 = vadd.f32 %v2156, 0.0
        %v2189 = vadd.f32 %v2157, 0.0
        %v2190 = vadd.f32 %v2158, 0.0
        %v2191 = vadd.f32 %v2159, 0.0
        %v2192 = vadd.f32 %v2160, 0.0
        %v2193 = vadd.f32 %v2161, 0.0
        %v2194 = vadd.f32 %v2162, 0.0
        %v2195 = vadd.f32 %v2163, 0.0
        %v2196 = vadd.f32 %v2164, 0.0
        %v2197 = vadd.f32 %v2165, 0.0
        %v2198 = vadd.f32 %v2166, 0.0
        %v2199 = vadd.f32 %v2167, 0.0
        %v2200 = vadd.f32 %v2168, 0.0
        %v2201 = vadd.f32 %v2169, 0.0
        %v2202 = vadd.f32 %v2170, 0.0
        %v2203 = vadd.f32 %v2171, 0.0
        %v2204 = vadd.f32 %v2172, 0.0
        %v2205 = vadd.f32 %v2173, 0.0
        %v2206 = vadd.f32 %v2174, 0.0
        %v2207 = vadd.f32 %v2175, 0.0
        %v2208 = vadd.f32 %v2176, 0.0
        %v2209 = vadd.f32 %v2177, 0.0
        %v2210 = vadd.f32 %v2178, 0.0
        %v2211 = vadd.f32 %v2179, 0.0
        %v2212 = vld [vmem:[#allocation2 + $0x1] sm:$0xff]
        %v2213 = vld [vmem:[#allocation2 + $0x9] sm:$0xff]
        %v2214 = vld [vmem:[#allocation2 + $0x19] sm:$0xff]
        %v2215 = vld [vmem:[#allocation2 + $0x21] sm:$0xff]
        %v2216 = vld [vmem:[#allocation2 + $0x31] sm:$0xff]
        %v2217 = vld [vmem:[#allocation2 + $0x39] sm:$0xff]
        %v2218 = vld [vmem:[#allocation2 + $0x49] sm:$0xff]
        %v2219 = vld [vmem:[#allocation2 + $0x51] sm:$0xff]
        %v2220 = vld [vmem:[#allocation2 + $0x61] sm:$0xff]
        %v2221 = vld [vmem:[#allocation2 + $0x69] sm:$0xff]
        %v2222 = vld [vmem:[#allocation2 + $0x79] sm:$0xff]
        %v2223 = vld [vmem:[#allocation2 + $0x81] sm:$0xff]
        %v2224 = vld [vmem:[#allocation2 + $0x91] sm:$0xff]
        %v2225 = vld [vmem:[#allocation2 + $0x99] sm:$0xff]
        %v2226 = vld [vmem:[#allocation2 + $0xa9] sm:$0xff]
        %v2227 = vld [vmem:[#allocation2 + $0xb1] sm:$0xff]
        %v2228 = vld [vmem:[#allocation2 + $0xc1] sm:$0xff]
        %v2229 = vld [vmem:[#allocation2 + $0xc9] sm:$0xff]
        %v2230 = vld [vmem:[#allocation2 + $0xd9] sm:$0xff]
        %v2231 = vld [vmem:[#allocation2 + $0xe1] sm:$0xff]
        %v2232 = vld [vmem:[#allocation2 + $0xf1] sm:$0xff]
        %v2233 = vld [vmem:[#allocation2 + $0xf9] sm:$0xff]
        %v2234 = vld [vmem:[#allocation2 + $0x109] sm:$0xff]
        %v2235 = vld [vmem:[#allocation2 + $0x111] sm:$0xff]
        %v2236 = vld [vmem:[#allocation2 + $0x121] sm:$0xff]
        %v2237 = vld [vmem:[#allocation2 + $0x129] sm:$0xff]
        %v2238 = vld [vmem:[#allocation2 + $0x139] sm:$0xff]
        %v2239 = vld [vmem:[#allocation2 + $0x141] sm:$0xff]
        %v2240 = vld [vmem:[#allocation2 + $0x151] sm:$0xff]
        %v2241 = vld [vmem:[#allocation2 + $0x159] sm:$0xff]
        %v2242 = vld [vmem:[#allocation2 + $0x169] sm:$0xff]
        %v2243 = vld [vmem:[#allocation2 + $0x171] sm:$0xff]
        %v2244 = vld [vmem:[%s5 + $0x1] sm:$0x1]
        %v2245 = vlaneseq
        %v2246 = vshrl.u32 %v2245, 7
        %v2247 = vsub.s32 0, %v2246
        %v2248 = vrot.slane %v2244, %v2247
        %v2249 = vmul.f32 %v2212, %v2248
        %v2250 = vmul.f32 %v2213, %v2248
        %v2251 = vmul.f32 %v2214, %v2248
        %v2252 = vmul.f32 %v2215, %v2248
        %v2253 = vmul.f32 %v2216, %v2248
        %v2254 = vmul.f32 %v2217, %v2248
        %v2255 = vmul.f32 %v2218, %v2248
        %v2256 = vmul.f32 %v2219, %v2248
        %v2257 = vmul.f32 %v2220, %v2248
        %v2258 = vmul.f32 %v2221, %v2248
        %v2259 = vmul.f32 %v2222, %v2248
        %v2260 = vmul.f32 %v2223, %v2248
        %v2261 = vmul.f32 %v2224, %v2248
        %v2262 = vmul.f32 %v2225, %v2248
        %v2263 = vmul.f32 %v2226, %v2248
        %v2264 = vmul.f32 %v2227, %v2248
        %v2265 = vmul.f32 %v2228, %v2248
        %v2266 = vmul.f32 %v2229, %v2248
        %v2267 = vmul.f32 %v2230, %v2248
        %v2268 = vmul.f32 %v2231, %v2248
        %v2269 = vmul.f32 %v2232, %v2248
        %v2270 = vmul.f32 %v2233, %v2248
        %v2271 = vmul.f32 %v2234, %v2248
        %v2272 = vmul.f32 %v2235, %v2248
        %v2273 = vmul.f32 %v2236, %v2248
        %v2274 = vmul.f32 %v2237, %v2248
        %v2275 = vmul.f32 %v2238, %v2248
        %v2276 = vmul.f32 %v2239, %v2248
        %v2277 = vmul.f32 %v2240, %v2248
        %v2278 = vmul.f32 %v2241, %v2248
        %v2279 = vmul.f32 %v2242, %v2248
        %v2280 = vmul.f32 %v2243, %v2248
        %v2281 = vadd.f32 %v2180, %v2249
        %v2282 = vadd.f32 %v2181, %v2250
        %v2283 = vadd.f32 %v2182, %v2251
        %v2284 = vadd.f32 %v2183, %v2252
        %v2285 = vadd.f32 %v2184, %v2253
        %v2286 = vadd.f32 %v2185, %v2254
        %v2287 = vadd.f32 %v2186, %v2255
        %v2288 = vadd.f32 %v2187, %v2256
        %v2289 = vadd.f32 %v2188, %v2257
        %v2290 = vadd.f32 %v2189, %v2258
        %v2291 = vadd.f32 %v2190, %v2259
        %v2292 = vadd.f32 %v2191, %v2260
        %v2293 = vadd.f32 %v2192, %v2261
        %v2294 = vadd.f32 %v2193, %v2262
        %v2295 = vadd.f32 %v2194, %v2263
        %v2296 = vadd.f32 %v2195, %v2264
        %v2297 = vadd.f32 %v2196, %v2265
        %v2298 = vadd.f32 %v2197, %v2266
        %v2299 = vadd.f32 %v2198, %v2267
        %v2300 = vadd.f32 %v2199, %v2268
        %v2301 = vadd.f32 %v2200, %v2269
        %v2302 = vadd.f32 %v2201, %v2270
        %v2303 = vadd.f32 %v2202, %v2271
        %v2304 = vadd.f32 %v2203, %v2272
        %v2305 = vadd.f32 %v2204, %v2273
        %v2306 = vadd.f32 %v2205, %v2274
        %v2307 = vadd.f32 %v2206, %v2275
        %v2308 = vadd.f32 %v2207, %v2276
        %v2309 = vadd.f32 %v2208, %v2277
        %v2310 = vadd.f32 %v2209, %v2278
        %v2311 = vadd.f32 %v2210, %v2279
        %v2312 = vadd.f32 %v2211, %v2280
        %v2313 = vld [vmem:[#allocation2 + $0x2] sm:$0xff]
        %v2314 = vld [vmem:[#allocation2 + $0xa] sm:$0xff]
        %v2315 = vld [vmem:[#allocation2 + $0x1a] sm:$0xff]
        %v2316 = vld [vmem:[#allocation2 + $0x22] sm:$0xff]
        %v2317 = vld [vmem:[#allocation2 + $0x32] sm:$0xff]
        %v2318 = vld [vmem:[#allocation2 + $0x3a] sm:$0xff]
        %v2319 = vld [vmem:[#allocation2 + $0x4a] sm:$0xff]
        %v2320 = vld [vmem:[#allocation2 + $0x52] sm:$0xff]
        %v2321 = vld [vmem:[#allocation2 + $0x62] sm:$0xff]
        %v2322 = vld [vmem:[#allocation2 + $0x6a] sm:$0xff]
        %v2323 = vld [vmem:[#allocation2 + $0x7a] sm:$0xff]
        %v2324 = vld [vmem:[#allocation2 + $0x82] sm:$0xff]
        %v2325 = vld [vmem:[#allocation2 + $0x92] sm:$0xff]
        %v2326 = vld [vmem:[#allocation2 + $0x9a] sm:$0xff]
        %v2327 = vld [vmem:[#allocation2 + $0xaa] sm:$0xff]
        %v2328 = vld [vmem:[#allocation2 + $0xb2] sm:$0xff]
        %v2329 = vld [vmem:[#allocation2 + $0xc2] sm:$0xff]
        %v2330 = vld [vmem:[#allocation2 + $0xca] sm:$0xff]
        %v2331 = vld [vmem:[#allocation2 + $0xda] sm:$0xff]
        %v2332 = vld [vmem:[#allocation2 + $0xe2] sm:$0xff]
        %v2333 = vld [vmem:[#allocation2 + $0xf2] sm:$0xff]
        %v2334 = vld [vmem:[#allocation2 + $0xfa] sm:$0xff]
        %v2335 = vld [vmem:[#allocation2 + $0x10a] sm:$0xff]
        %v2336 = vld [vmem:[#allocation2 + $0x112] sm:$0xff]
        %v2337 = vld [vmem:[#allocation2 + $0x122] sm:$0xff]
        %v2338 = vld [vmem:[#allocation2 + $0x12a] sm:$0xff]
        %v2339 = vld [vmem:[#allocation2 + $0x13a] sm:$0xff]
        %v2340 = vld [vmem:[#allocation2 + $0x142] sm:$0xff]
        %v2341 = vld [vmem:[#allocation2 + $0x152] sm:$0xff]
        %v2342 = vld [vmem:[#allocation2 + $0x15a] sm:$0xff]
        %v2343 = vld [vmem:[#allocation2 + $0x16a] sm:$0xff]
        %v2344 = vld [vmem:[#allocation2 + $0x172] sm:$0xff]
        %v2345 = vld [vmem:[%s5 + $0x2] sm:$0x1]
        %v2346 = vlaneseq
        %v2347 = vshrl.u32 %v2346, 7
        %v2348 = vsub.s32 0, %v2347
        %v2349 = vrot.slane %v2345, %v2348
        %v2350 = vmul.f32 %v2313, %v2349
        %v2351 = vmul.f32 %v2314, %v2349
        %v2352 = vmul.f32 %v2315, %v2349
        %v2353 = vmul.f32 %v2316, %v2349
        %v2354 = vmul.f32 %v2317, %v2349
        %v2355 = vmul.f32 %v2318, %v2349
        %v2356 = vmul.f32 %v2319, %v2349
        %v2357 = vmul.f32 %v2320, %v2349
        %v2358 = vmul.f32 %v2321, %v2349
        %v2359 = vmul.f32 %v2322, %v2349
        %v2360 = vmul.f32 %v2323, %v2349
        %v2361 = vmul.f32 %v2324, %v2349
        %v2362 = vmul.f32 %v2325, %v2349
        %v2363 = vmul.f32 %v2326, %v2349
        %v2364 = vmul.f32 %v2327, %v2349
        %v2365 = vmul.f32 %v2328, %v2349
        %v2366 = vmul.f32 %v2329, %v2349
        %v2367 = vmul.f32 %v2330, %v2349
        %v2368 = vmul.f32 %v2331, %v2349
        %v2369 = vmul.f32 %v2332, %v2349
        %v2370 = vmul.f32 %v2333, %v2349
        %v2371 = vmul.f32 %v2334, %v2349
        %v2372 = vmul.f32 %v2335, %v2349
        %v2373 = vmul.f32 %v2336, %v2349
        %v2374 = vmul.f32 %v2337, %v2349
        %v2375 = vmul.f32 %v2338, %v2349
        %v2376 = vmul.f32 %v2339, %v2349
        %v2377 = vmul.f32 %v2340, %v2349
        %v2378 = vmul.f32 %v2341, %v2349
        %v2379 = vmul.f32 %v2342, %v2349
        %v2380 = vmul.f32 %v2343, %v2349
        %v2381 = vmul.f32 %v2344, %v2349
        %v2382 = vadd.f32 %v2281, %v2350
        %v2383 = vadd.f32 %v2282, %v2351
        %v2384 = vadd.f32 %v2283, %v2352
        %v2385 = vadd.f32 %v2284, %v2353
        %v2386 = vadd.f32 %v2285, %v2354
        %v2387 = vadd.f32 %v2286, %v2355
        %v2388 = vadd.f32 %v2287, %v2356
        %v2389 = vadd.f32 %v2288, %v2357
        %v2390 = vadd.f32 %v2289, %v2358
        %v2391 = vadd.f32 %v2290, %v2359
        %v2392 = vadd.f32 %v2291, %v2360
        %v2393 = vadd.f32 %v2292, %v2361
        %v2394 = vadd.f32 %v2293, %v2362
        %v2395 = vadd.f32 %v2294, %v2363
        %v2396 = vadd.f32 %v2295, %v2364
        %v2397 = vadd.f32 %v2296, %v2365
        %v2398 = vadd.f32 %v2297, %v2366
        %v2399 = vadd.f32 %v2298, %v2367
        %v2400 = vadd.f32 %v2299, %v2368
        %v2401 = vadd.f32 %v2300, %v2369
        %v2402 = vadd.f32 %v2301, %v2370
        %v2403 = vadd.f32 %v2302, %v2371
        %v2404 = vadd.f32 %v2303, %v2372
        %v2405 = vadd.f32 %v2304, %v2373
        %v2406 = vadd.f32 %v2305, %v2374
        %v2407 = vadd.f32 %v2306, %v2375
        %v2408 = vadd.f32 %v2307, %v2376
        %v2409 = vadd.f32 %v2308, %v2377
        %v2410 = vadd.f32 %v2309, %v2378
        %v2411 = vadd.f32 %v2310, %v2379
        %v2412 = vadd.f32 %v2311, %v2380
        %v2413 = vadd.f32 %v2312, %v2381
        %v2414 = vld [vmem:[%s633] sm:$0xff]
        %v2415 = vld [vmem:[%s633 + $0x8] sm:$0xff]
        %v2416 = vld [vmem:[%s633 + $0x18] sm:$0xff]
        %v2417 = vld [vmem:[%s633 + $0x20] sm:$0xff]
        %v2418 = vld [vmem:[%s633 + $0x30] sm:$0xff]
        %v2419 = vld [vmem:[%s633 + $0x38] sm:$0xff]
        %v2420 = vld [vmem:[%s633 + $0x48] sm:$0xff]
        %v2421 = vld [vmem:[%s633 + $0x50] sm:$0xff]
        %v2422 = vld [vmem:[%s633 + $0x60] sm:$0xff]
        %v2423 = vld [vmem:[%s633 + $0x68] sm:$0xff]
        %v2424 = vld [vmem:[%s633 + $0x78] sm:$0xff]
        %v2425 = vld [vmem:[%s633 + $0x80] sm:$0xff]
        %v2426 = vld [vmem:[%s633 + $0x90] sm:$0xff]
        %v2427 = vld [vmem:[%s633 + $0x98] sm:$0xff]
        %v2428 = vld [vmem:[%s633 + $0xa8] sm:$0xff]
        %v2429 = vld [vmem:[%s633 + $0xb0] sm:$0xff]
        %v2430 = vld [vmem:[%s633 + $0xc0] sm:$0xff]
        %v2431 = vld [vmem:[%s633 + $0xc8] sm:$0xff]
        %v2432 = vld [vmem:[%s633 + $0xd8] sm:$0xff]
        %v2433 = vld [vmem:[%s633 + $0xe0] sm:$0xff]
        %v2434 = vld [vmem:[%s633 + $0xf0] sm:$0xff]
        %v2435 = vld [vmem:[%s633 + $0xf8] sm:$0xff]
        %v2436 = vld [vmem:[%s633 + $0x108] sm:$0xff]
        %v2437 = vld [vmem:[%s633 + $0x110] sm:$0xff]
        %v2438 = vld [vmem:[%s633 + $0x120] sm:$0xff]
        %v2439 = vld [vmem:[%s633 + $0x128] sm:$0xff]
        %v2440 = vld [vmem:[%s633 + $0x138] sm:$0xff]
        %v2441 = vld [vmem:[%s633 + $0x140] sm:$0xff]
        %v2442 = vld [vmem:[%s633 + $0x150] sm:$0xff]
        %v2443 = vld [vmem:[%s633 + $0x158] sm:$0xff]
        %v2444 = vld [vmem:[%s633 + $0x168] sm:$0xff]
        %v2445 = vld [vmem:[%s633 + $0x170] sm:$0xff]
        %s2446 = scalar_lea.vmem %s5, 4
        %v2447 = vld [vmem:[%s2446] sm:$0x1]
        %v2448 = vlaneseq
        %v2449 = vshrl.u32 %v2448, 7
        %v2450 = vsub.s32 0, %v2449
        %v2451 = vrot.slane %v2447, %v2450
        %v2452 = vmul.f32 %v2414, %v2451
        %v2453 = vmul.f32 %v2415, %v2451
        %v2454 = vmul.f32 %v2416, %v2451
        %v2455 = vmul.f32 %v2417, %v2451
        %v2456 = vmul.f32 %v2418, %v2451
        %v2457 = vmul.f32 %v2419, %v2451
        %v2458 = vmul.f32 %v2420, %v2451
        %v2459 = vmul.f32 %v2421, %v2451
        %v2460 = vmul.f32 %v2422, %v2451
        %v2461 = vmul.f32 %v2423, %v2451
        %v2462 = vmul.f32 %v2424, %v2451
        %v2463 = vmul.f32 %v2425, %v2451
        %v2464 = vmul.f32 %v2426, %v2451
        %v2465 = vmul.f32 %v2427, %v2451
        %v2466 = vmul.f32 %v2428, %v2451
        %v2467 = vmul.f32 %v2429, %v2451
        %v2468 = vmul.f32 %v2430, %v2451
        %v2469 = vmul.f32 %v2431, %v2451
        %v2470 = vmul.f32 %v2432, %v2451
        %v2471 = vmul.f32 %v2433, %v2451
        %v2472 = vmul.f32 %v2434, %v2451
        %v2473 = vmul.f32 %v2435, %v2451
        %v2474 = vmul.f32 %v2436, %v2451
        %v2475 = vmul.f32 %v2437, %v2451
        %v2476 = vmul.f32 %v2438, %v2451
        %v2477 = vmul.f32 %v2439, %v2451
        %v2478 = vmul.f32 %v2440, %v2451
        %v2479 = vmul.f32 %v2441, %v2451
        %v2480 = vmul.f32 %v2442, %v2451
        %v2481 = vmul.f32 %v2443, %v2451
        %v2482 = vmul.f32 %v2444, %v2451
        %v2483 = vmul.f32 %v2445, %v2451
        %v2484 = vadd.f32 %v2382, %v2452
        %v2485 = vadd.f32 %v2383, %v2453
        %v2486 = vadd.f32 %v2384, %v2454
        %v2487 = vadd.f32 %v2385, %v2455
        %v2488 = vadd.f32 %v2386, %v2456
        %v2489 = vadd.f32 %v2387, %v2457
        %v2490 = vadd.f32 %v2388, %v2458
        %v2491 = vadd.f32 %v2389, %v2459
        %v2492 = vadd.f32 %v2390, %v2460
        %v2493 = vadd.f32 %v2391, %v2461
        %v2494 = vadd.f32 %v2392, %v2462
        %v2495 = vadd.f32 %v2393, %v2463
        %v2496 = vadd.f32 %v2394, %v2464
        %v2497 = vadd.f32 %v2395, %v2465
        %v2498 = vadd.f32 %v2396, %v2466
        %v2499 = vadd.f32 %v2397, %v2467
        %v2500 = vadd.f32 %v2398, %v2468
        %v2501 = vadd.f32 %v2399, %v2469
        %v2502 = vadd.f32 %v2400, %v2470
        %v2503 = vadd.f32 %v2401, %v2471
        %v2504 = vadd.f32 %v2402, %v2472
        %v2505 = vadd.f32 %v2403, %v2473
        %v2506 = vadd.f32 %v2404, %v2474
        %v2507 = vadd.f32 %v2405, %v2475
        %v2508 = vadd.f32 %v2406, %v2476
        %v2509 = vadd.f32 %v2407, %v2477
        %v2510 = vadd.f32 %v2408, %v2478
        %v2511 = vadd.f32 %v2409, %v2479
        %v2512 = vadd.f32 %v2410, %v2480
        %v2513 = vadd.f32 %v2411, %v2481
        %v2514 = vadd.f32 %v2412, %v2482
        %v2515 = vadd.f32 %v2413, %v2483
        %v2516 = vld [vmem:[%s633 + $0x1] sm:$0xff]
        %v2517 = vld [vmem:[%s633 + $0x9] sm:$0xff]
        %v2518 = vld [vmem:[%s633 + $0x19] sm:$0xff]
        %v2519 = vld [vmem:[%s633 + $0x21] sm:$0xff]
        %v2520 = vld [vmem:[%s633 + $0x31] sm:$0xff]
        %v2521 = vld [vmem:[%s633 + $0x39] sm:$0xff]
        %v2522 = vld [vmem:[%s633 + $0x49] sm:$0xff]
        %v2523 = vld [vmem:[%s633 + $0x51] sm:$0xff]
        %v2524 = vld [vmem:[%s633 + $0x61] sm:$0xff]
        %v2525 = vld [vmem:[%s633 + $0x69] sm:$0xff]
        %v2526 = vld [vmem:[%s633 + $0x79] sm:$0xff]
        %v2527 = vld [vmem:[%s633 + $0x81] sm:$0xff]
        %v2528 = vld [vmem:[%s633 + $0x91] sm:$0xff]
        %v2529 = vld [vmem:[%s633 + $0x99] sm:$0xff]
        %v2530 = vld [vmem:[%s633 + $0xa9] sm:$0xff]
        %v2531 = vld [vmem:[%s633 + $0xb1] sm:$0xff]
        %v2532 = vld [vmem:[%s633 + $0xc1] sm:$0xff]
        %v2533 = vld [vmem:[%s633 + $0xc9] sm:$0xff]
        %v2534 = vld [vmem:[%s633 + $0xd9] sm:$0xff]
        %v2535 = vld [vmem:[%s633 + $0xe1] sm:$0xff]
        %v2536 = vld [vmem:[%s633 + $0xf1] sm:$0xff]
        %v2537 = vld [vmem:[%s633 + $0xf9] sm:$0xff]
        %v2538 = vld [vmem:[%s633 + $0x109] sm:$0xff]
        %v2539 = vld [vmem:[%s633 + $0x111] sm:$0xff]
        %v2540 = vld [vmem:[%s633 + $0x121] sm:$0xff]
        %v2541 = vld [vmem:[%s633 + $0x129] sm:$0xff]
        %v2542 = vld [vmem:[%s633 + $0x139] sm:$0xff]
        %v2543 = vld [vmem:[%s633 + $0x141] sm:$0xff]
        %v2544 = vld [vmem:[%s633 + $0x151] sm:$0xff]
        %v2545 = vld [vmem:[%s633 + $0x159] sm:$0xff]
        %v2546 = vld [vmem:[%s633 + $0x169] sm:$0xff]
        %v2547 = vld [vmem:[%s633 + $0x171] sm:$0xff]
        %v2548 = vld [vmem:[%s2446 + $0x1] sm:$0x1]
        %v2549 = vlaneseq
        %v2550 = vshrl.u32 %v2549, 7
        %v2551 = vsub.s32 0, %v2550
        %v2552 = vrot.slane %v2548, %v2551
        %v2553 = vmul.f32 %v2516, %v2552
        %v2554 = vmul.f32 %v2517, %v2552
        %v2555 = vmul.f32 %v2518, %v2552
        %v2556 = vmul.f32 %v2519, %v2552
        %v2557 = vmul.f32 %v2520, %v2552
        %v2558 = vmul.f32 %v2521, %v2552
        %v2559 = vmul.f32 %v2522, %v2552
        %v2560 = vmul.f32 %v2523, %v2552
        %v2561 = vmul.f32 %v2524, %v2552
        %v2562 = vmul.f32 %v2525, %v2552
        %v2563 = vmul.f32 %v2526, %v2552
        %v2564 = vmul.f32 %v2527, %v2552
        %v2565 = vmul.f32 %v2528, %v2552
        %v2566 = vmul.f32 %v2529, %v2552
        %v2567 = vmul.f32 %v2530, %v2552
        %v2568 = vmul.f32 %v2531, %v2552
        %v2569 = vmul.f32 %v2532, %v2552
        %v2570 = vmul.f32 %v2533, %v2552
        %v2571 = vmul.f32 %v2534, %v2552
        %v2572 = vmul.f32 %v2535, %v2552
        %v2573 = vmul.f32 %v2536, %v2552
        %v2574 = vmul.f32 %v2537, %v2552
        %v2575 = vmul.f32 %v2538, %v2552
        %v2576 = vmul.f32 %v2539, %v2552
        %v2577 = vmul.f32 %v2540, %v2552
        %v2578 = vmul.f32 %v2541, %v2552
        %v2579 = vmul.f32 %v2542, %v2552
        %v2580 = vmul.f32 %v2543, %v2552
        %v2581 = vmul.f32 %v2544, %v2552
        %v2582 = vmul.f32 %v2545, %v2552
        %v2583 = vmul.f32 %v2546, %v2552
        %v2584 = vmul.f32 %v2547, %v2552
        %v2585 = vadd.f32 %v2484, %v2553
        %v2586 = vadd.f32 %v2485, %v2554
        %v2587 = vadd.f32 %v2486, %v2555
        %v2588 = vadd.f32 %v2487, %v2556
        %v2589 = vadd.f32 %v2488, %v2557
        %v2590 = vadd.f32 %v2489, %v2558
        %v2591 = vadd.f32 %v2490, %v2559
        %v2592 = vadd.f32 %v2491, %v2560
        %v2593 = vadd.f32 %v2492, %v2561
        %v2594 = vadd.f32 %v2493, %v2562
        %v2595 = vadd.f32 %v2494, %v2563
        %v2596 = vadd.f32 %v2495, %v2564
        %v2597 = vadd.f32 %v2496, %v2565
        %v2598 = vadd.f32 %v2497, %v2566
        %v2599 = vadd.f32 %v2498, %v2567
        %v2600 = vadd.f32 %v2499, %v2568
        %v2601 = vadd.f32 %v2500, %v2569
        %v2602 = vadd.f32 %v2501, %v2570
        %v2603 = vadd.f32 %v2502, %v2571
        %v2604 = vadd.f32 %v2503, %v2572
        %v2605 = vadd.f32 %v2504, %v2573
        %v2606 = vadd.f32 %v2505, %v2574
        %v2607 = vadd.f32 %v2506, %v2575
        %v2608 = vadd.f32 %v2507, %v2576
        %v2609 = vadd.f32 %v2508, %v2577
        %v2610 = vadd.f32 %v2509, %v2578
        %v2611 = vadd.f32 %v2510, %v2579
        %v2612 = vadd.f32 %v2511, %v2580
        %v2613 = vadd.f32 %v2512, %v2581
        %v2614 = vadd.f32 %v2513, %v2582
        %v2615 = vadd.f32 %v2514, %v2583
        %v2616 = vadd.f32 %v2515, %v2584
        %v2617 = vld [vmem:[%s633 + $0x2] sm:$0xff]
        %v2618 = vld [vmem:[%s633 + $0xa] sm:$0xff]
        %v2619 = vld [vmem:[%s633 + $0x1a] sm:$0xff]
        %v2620 = vld [vmem:[%s633 + $0x22] sm:$0xff]
        %v2621 = vld [vmem:[%s633 + $0x32] sm:$0xff]
        %v2622 = vld [vmem:[%s633 + $0x3a] sm:$0xff]
        %v2623 = vld [vmem:[%s633 + $0x4a] sm:$0xff]
        %v2624 = vld [vmem:[%s633 + $0x52] sm:$0xff]
        %v2625 = vld [vmem:[%s633 + $0x62] sm:$0xff]
        %v2626 = vld [vmem:[%s633 + $0x6a] sm:$0xff]
        %v2627 = vld [vmem:[%s633 + $0x7a] sm:$0xff]
        %v2628 = vld [vmem:[%s633 + $0x82] sm:$0xff]
        %v2629 = vld [vmem:[%s633 + $0x92] sm:$0xff]
        %v2630 = vld [vmem:[%s633 + $0x9a] sm:$0xff]
        %v2631 = vld [vmem:[%s633 + $0xaa] sm:$0xff]
        %v2632 = vld [vmem:[%s633 + $0xb2] sm:$0xff]
        %v2633 = vld [vmem:[%s633 + $0xc2] sm:$0xff]
        %v2634 = vld [vmem:[%s633 + $0xca] sm:$0xff]
        %v2635 = vld [vmem:[%s633 + $0xda] sm:$0xff]
        %v2636 = vld [vmem:[%s633 + $0xe2] sm:$0xff]
        %v2637 = vld [vmem:[%s633 + $0xf2] sm:$0xff]
        %v2638 = vld [vmem:[%s633 + $0xfa] sm:$0xff]
        %v2639 = vld [vmem:[%s633 + $0x10a] sm:$0xff]
        %v2640 = vld [vmem:[%s633 + $0x112] sm:$0xff]
        %v2641 = vld [vmem:[%s633 + $0x122] sm:$0xff]
        %v2642 = vld [vmem:[%s633 + $0x12a] sm:$0xff]
        %v2643 = vld [vmem:[%s633 + $0x13a] sm:$0xff]
        %v2644 = vld [vmem:[%s633 + $0x142] sm:$0xff]
        %v2645 = vld [vmem:[%s633 + $0x152] sm:$0xff]
        %v2646 = vld [vmem:[%s633 + $0x15a] sm:$0xff]
        %v2647 = vld [vmem:[%s633 + $0x16a] sm:$0xff]
        %v2648 = vld [vmem:[%s633 + $0x172] sm:$0xff]
        %v2649 = vld [vmem:[%s2446 + $0x2] sm:$0x1]
        %v2650 = vlaneseq
        %v2651 = vshrl.u32 %v2650, 7
        %v2652 = vsub.s32 0, %v2651
        %v2653 = vrot.slane %v2649, %v2652
        %v2654 = vmul.f32 %v2617, %v2653
        %v2655 = vmul.f32 %v2618, %v2653
        %v2656 = vmul.f32 %v2619, %v2653
        %v2657 = vmul.f32 %v2620, %v2653
        %v2658 = vmul.f32 %v2621, %v2653
        %v2659 = vmul.f32 %v2622, %v2653
        %v2660 = vmul.f32 %v2623, %v2653
        %v2661 = vmul.f32 %v2624, %v2653
        %v2662 = vmul.f32 %v2625, %v2653
        %v2663 = vmul.f32 %v2626, %v2653
        %v2664 = vmul.f32 %v2627, %v2653
        %v2665 = vmul.f32 %v2628, %v2653
        %v2666 = vmul.f32 %v2629, %v2653
        %v2667 = vmul.f32 %v2630, %v2653
        %v2668 = vmul.f32 %v2631, %v2653
        %v2669 = vmul.f32 %v2632, %v2653
        %v2670 = vmul.f32 %v2633, %v2653
        %v2671 = vmul.f32 %v2634, %v2653
        %v2672 = vmul.f32 %v2635, %v2653
        %v2673 = vmul.f32 %v2636, %v2653
        %v2674 = vmul.f32 %v2637, %v2653
        %v2675 = vmul.f32 %v2638, %v2653
        %v2676 = vmul.f32 %v2639, %v2653
        %v2677 = vmul.f32 %v2640, %v2653
        %v2678 = vmul.f32 %v2641, %v2653
        %v2679 = vmul.f32 %v2642, %v2653
        %v2680 = vmul.f32 %v2643, %v2653
        %v2681 = vmul.f32 %v2644, %v2653
        %v2682 = vmul.f32 %v2645, %v2653
        %v2683 = vmul.f32 %v2646, %v2653
        %v2684 = vmul.f32 %v2647, %v2653
        %v2685 = vmul.f32 %v2648, %v2653
        %v2686 = vadd.f32 %v2585, %v2654
        %v2687 = vadd.f32 %v2586, %v2655
        %v2688 = vadd.f32 %v2587, %v2656
        %v2689 = vadd.f32 %v2588, %v2657
        %v2690 = vadd.f32 %v2589, %v2658
        %v2691 = vadd.f32 %v2590, %v2659
        %v2692 = vadd.f32 %v2591, %v2660
        %v2693 = vadd.f32 %v2592, %v2661
        %v2694 = vadd.f32 %v2593, %v2662
        %v2695 = vadd.f32 %v2594, %v2663
        %v2696 = vadd.f32 %v2595, %v2664
        %v2697 = vadd.f32 %v2596, %v2665
        %v2698 = vadd.f32 %v2597, %v2666
        %v2699 = vadd.f32 %v2598, %v2667
        %v2700 = vadd.f32 %v2599, %v2668
        %v2701 = vadd.f32 %v2600, %v2669
        %v2702 = vadd.f32 %v2601, %v2670
        %v2703 = vadd.f32 %v2602, %v2671
        %v2704 = vadd.f32 %v2603, %v2672
        %v2705 = vadd.f32 %v2604, %v2673
        %v2706 = vadd.f32 %v2605, %v2674
        %v2707 = vadd.f32 %v2606, %v2675
        %v2708 = vadd.f32 %v2607, %v2676
        %v2709 = vadd.f32 %v2608, %v2677
        %v2710 = vadd.f32 %v2609, %v2678
        %v2711 = vadd.f32 %v2610, %v2679
        %v2712 = vadd.f32 %v2611, %v2680
        %v2713 = vadd.f32 %v2612, %v2681
        %v2714 = vadd.f32 %v2613, %v2682
        %v2715 = vadd.f32 %v2614, %v2683
        %v2716 = vadd.f32 %v2615, %v2684
        %v2717 = vadd.f32 %v2616, %v2685
        %v2718 = vld [vmem:[%s1273] sm:$0xff]
        %v2719 = vld [vmem:[%s1273 + $0x8] sm:$0xff]
        %v2720 = vld [vmem:[%s1273 + $0x18] sm:$0xff]
        %v2721 = vld [vmem:[%s1273 + $0x20] sm:$0xff]
        %v2722 = vld [vmem:[%s1273 + $0x30] sm:$0xff]
        %v2723 = vld [vmem:[%s1273 + $0x38] sm:$0xff]
        %v2724 = vld [vmem:[%s1273 + $0x48] sm:$0xff]
        %v2725 = vld [vmem:[%s1273 + $0x50] sm:$0xff]
        %v2726 = vld [vmem:[%s1273 + $0x60] sm:$0xff]
        %v2727 = vld [vmem:[%s1273 + $0x68] sm:$0xff]
        %v2728 = vld [vmem:[%s1273 + $0x78] sm:$0xff]
        %v2729 = vld [vmem:[%s1273 + $0x80] sm:$0xff]
        %v2730 = vld [vmem:[%s1273 + $0x90] sm:$0xff]
        %v2731 = vld [vmem:[%s1273 + $0x98] sm:$0xff]
        %v2732 = vld [vmem:[%s1273 + $0xa8] sm:$0xff]
        %v2733 = vld [vmem:[%s1273 + $0xb0] sm:$0xff]
        %v2734 = vld [vmem:[%s1273 + $0xc0] sm:$0xff]
        %v2735 = vld [vmem:[%s1273 + $0xc8] sm:$0xff]
        %v2736 = vld [vmem:[%s1273 + $0xd8] sm:$0xff]
        %v2737 = vld [vmem:[%s1273 + $0xe0] sm:$0xff]
        %v2738 = vld [vmem:[%s1273 + $0xf0] sm:$0xff]
        %v2739 = vld [vmem:[%s1273 + $0xf8] sm:$0xff]
        %v2740 = vld [vmem:[%s1273 + $0x108] sm:$0xff]
        %v2741 = vld [vmem:[%s1273 + $0x110] sm:$0xff]
        %v2742 = vld [vmem:[%s1273 + $0x120] sm:$0xff]
        %v2743 = vld [vmem:[%s1273 + $0x128] sm:$0xff]
        %v2744 = vld [vmem:[%s1273 + $0x138] sm:$0xff]
        %v2745 = vld [vmem:[%s1273 + $0x140] sm:$0xff]
        %v2746 = vld [vmem:[%s1273 + $0x150] sm:$0xff]
        %v2747 = vld [vmem:[%s1273 + $0x158] sm:$0xff]
        %v2748 = vld [vmem:[%s1273 + $0x168] sm:$0xff]
        %v2749 = vld [vmem:[%s1273 + $0x170] sm:$0xff]
        %s2750 = scalar_lea.vmem %s5, 8
        %v2751 = vld [vmem:[%s2750] sm:$0x1]
        %v2752 = vlaneseq
        %v2753 = vshrl.u32 %v2752, 7
        %v2754 = vsub.s32 0, %v2753
        %v2755 = vrot.slane %v2751, %v2754
        %v2756 = vmul.f32 %v2718, %v2755
        %v2757 = vmul.f32 %v2719, %v2755
        %v2758 = vmul.f32 %v2720, %v2755
        %v2759 = vmul.f32 %v2721, %v2755
        %v2760 = vmul.f32 %v2722, %v2755
        %v2761 = vmul.f32 %v2723, %v2755
        %v2762 = vmul.f32 %v2724, %v2755
        %v2763 = vmul.f32 %v2725, %v2755
        %v2764 = vmul.f32 %v2726, %v2755
        %v2765 = vmul.f32 %v2727, %v2755
        %v2766 = vmul.f32 %v2728, %v2755
        %v2767 = vmul.f32 %v2729, %v2755
        %v2768 = vmul.f32 %v2730, %v2755
        %v2769 = vmul.f32 %v2731, %v2755
        %v2770 = vmul.f32 %v2732, %v2755
        %v2771 = vmul.f32 %v2733, %v2755
        %v2772 = vmul.f32 %v2734, %v2755
        %v2773 = vmul.f32 %v2735, %v2755
        %v2774 = vmul.f32 %v2736, %v2755
        %v2775 = vmul.f32 %v2737, %v2755
        %v2776 = vmul.f32 %v2738, %v2755
        %v2777 = vmul.f32 %v2739, %v2755
        %v2778 = vmul.f32 %v2740, %v2755
        %v2779 = vmul.f32 %v2741, %v2755
        %v2780 = vmul.f32 %v2742, %v2755
        %v2781 = vmul.f32 %v2743, %v2755
        %v2782 = vmul.f32 %v2744, %v2755
        %v2783 = vmul.f32 %v2745, %v2755
        %v2784 = vmul.f32 %v2746, %v2755
        %v2785 = vmul.f32 %v2747, %v2755
        %v2786 = vmul.f32 %v2748, %v2755
        %v2787 = vmul.f32 %v2749, %v2755
        %v2788 = vadd.f32 %v2686, %v2756
        %v2789 = vadd.f32 %v2687, %v2757
        %v2790 = vadd.f32 %v2688, %v2758
        %v2791 = vadd.f32 %v2689, %v2759
        %v2792 = vadd.f32 %v2690, %v2760
        %v2793 = vadd.f32 %v2691, %v2761
        %v2794 = vadd.f32 %v2692, %v2762
        %v2795 = vadd.f32 %v2693, %v2763
        %v2796 = vadd.f32 %v2694, %v2764
        %v2797 = vadd.f32 %v2695, %v2765
        %v2798 = vadd.f32 %v2696, %v2766
        %v2799 = vadd.f32 %v2697, %v2767
        %v2800 = vadd.f32 %v2698, %v2768
        %v2801 = vadd.f32 %v2699, %v2769
        %v2802 = vadd.f32 %v2700, %v2770
        %v2803 = vadd.f32 %v2701, %v2771
        %v2804 = vadd.f32 %v2702, %v2772
        %v2805 = vadd.f32 %v2703, %v2773
        %v2806 = vadd.f32 %v2704, %v2774
        %v2807 = vadd.f32 %v2705, %v2775
        %v2808 = vadd.f32 %v2706, %v2776
        %v2809 = vadd.f32 %v2707, %v2777
        %v2810 = vadd.f32 %v2708, %v2778
        %v2811 = vadd.f32 %v2709, %v2779
        %v2812 = vadd.f32 %v2710, %v2780
        %v2813 = vadd.f32 %v2711, %v2781
        %v2814 = vadd.f32 %v2712, %v2782
        %v2815 = vadd.f32 %v2713, %v2783
        %v2816 = vadd.f32 %v2714, %v2784
        %v2817 = vadd.f32 %v2715, %v2785
        %v2818 = vadd.f32 %v2716, %v2786
        %v2819 = vadd.f32 %v2717, %v2787
        %v2820 = vld [vmem:[%s1273 + $0x1] sm:$0xff]
        %v2821 = vld [vmem:[%s1273 + $0x9] sm:$0xff]
        %v2822 = vld [vmem:[%s1273 + $0x19] sm:$0xff]
        %v2823 = vld [vmem:[%s1273 + $0x21] sm:$0xff]
        %v2824 = vld [vmem:[%s1273 + $0x31] sm:$0xff]
        %v2825 = vld [vmem:[%s1273 + $0x39] sm:$0xff]
        %v2826 = vld [vmem:[%s1273 + $0x49] sm:$0xff]
        %v2827 = vld [vmem:[%s1273 + $0x51] sm:$0xff]
        %v2828 = vld [vmem:[%s1273 + $0x61] sm:$0xff]
        %v2829 = vld [vmem:[%s1273 + $0x69] sm:$0xff]
        %v2830 = vld [vmem:[%s1273 + $0x79] sm:$0xff]
        %v2831 = vld [vmem:[%s1273 + $0x81] sm:$0xff]
        %v2832 = vld [vmem:[%s1273 + $0x91] sm:$0xff]
        %v2833 = vld [vmem:[%s1273 + $0x99] sm:$0xff]
        %v2834 = vld [vmem:[%s1273 + $0xa9] sm:$0xff]
        %v2835 = vld [vmem:[%s1273 + $0xb1] sm:$0xff]
        %v2836 = vld [vmem:[%s1273 + $0xc1] sm:$0xff]
        %v2837 = vld [vmem:[%s1273 + $0xc9] sm:$0xff]
        %v2838 = vld [vmem:[%s1273 + $0xd9] sm:$0xff]
        %v2839 = vld [vmem:[%s1273 + $0xe1] sm:$0xff]
        %v2840 = vld [vmem:[%s1273 + $0xf1] sm:$0xff]
        %v2841 = vld [vmem:[%s1273 + $0xf9] sm:$0xff]
        %v2842 = vld [vmem:[%s1273 + $0x109] sm:$0xff]
        %v2843 = vld [vmem:[%s1273 + $0x111] sm:$0xff]
        %v2844 = vld [vmem:[%s1273 + $0x121] sm:$0xff]
        %v2845 = vld [vmem:[%s1273 + $0x129] sm:$0xff]
        %v2846 = vld [vmem:[%s1273 + $0x139] sm:$0xff]
        %v2847 = vld [vmem:[%s1273 + $0x141] sm:$0xff]
        %v2848 = vld [vmem:[%s1273 + $0x151] sm:$0xff]
        %v2849 = vld [vmem:[%s1273 + $0x159] sm:$0xff]
        %v2850 = vld [vmem:[%s1273 + $0x169] sm:$0xff]
        %v2851 = vld [vmem:[%s1273 + $0x171] sm:$0xff]
        %v2852 = vld [vmem:[%s2750 + $0x1] sm:$0x1]
        %v2853 = vlaneseq
        %v2854 = vshrl.u32 %v2853, 7
        %v2855 = vsub.s32 0, %v2854
        %v2856 = vrot.slane %v2852, %v2855
        %v2857 = vmul.f32 %v2820, %v2856
        %v2858 = vmul.f32 %v2821, %v2856
        %v2859 = vmul.f32 %v2822, %v2856
        %v2860 = vmul.f32 %v2823, %v2856
        %v2861 = vmul.f32 %v2824, %v2856
        %v2862 = vmul.f32 %v2825, %v2856
        %v2863 = vmul.f32 %v2826, %v2856
        %v2864 = vmul.f32 %v2827, %v2856
        %v2865 = vmul.f32 %v2828, %v2856
        %v2866 = vmul.f32 %v2829, %v2856
        %v2867 = vmul.f32 %v2830, %v2856
        %v2868 = vmul.f32 %v2831, %v2856
        %v2869 = vmul.f32 %v2832, %v2856
        %v2870 = vmul.f32 %v2833, %v2856
        %v2871 = vmul.f32 %v2834, %v2856
        %v2872 = vmul.f32 %v2835, %v2856
        %v2873 = vmul.f32 %v2836, %v2856
        %v2874 = vmul.f32 %v2837, %v2856
        %v2875 = vmul.f32 %v2838, %v2856
        %v2876 = vmul.f32 %v2839, %v2856
        %v2877 = vmul.f32 %v2840, %v2856
        %v2878 = vmul.f32 %v2841, %v2856
        %v2879 = vmul.f32 %v2842, %v2856
        %v2880 = vmul.f32 %v2843, %v2856
        %v2881 = vmul.f32 %v2844, %v2856
        %v2882 = vmul.f32 %v2845, %v2856
        %v2883 = vmul.f32 %v2846, %v2856
        %v2884 = vmul.f32 %v2847, %v2856
        %v2885 = vmul.f32 %v2848, %v2856
        %v2886 = vmul.f32 %v2849, %v2856
        %v2887 = vmul.f32 %v2850, %v2856
        %v2888 = vmul.f32 %v2851, %v2856
        %v2889 = vadd.f32 %v2788, %v2857
        %v2890 = vadd.f32 %v2789, %v2858
        %v2891 = vadd.f32 %v2790, %v2859
        %v2892 = vadd.f32 %v2791, %v2860
        %v2893 = vadd.f32 %v2792, %v2861
        %v2894 = vadd.f32 %v2793, %v2862
        %v2895 = vadd.f32 %v2794, %v2863
        %v2896 = vadd.f32 %v2795, %v2864
        %v2897 = vadd.f32 %v2796, %v2865
        %v2898 = vadd.f32 %v2797, %v2866
        %v2899 = vadd.f32 %v2798, %v2867
        %v2900 = vadd.f32 %v2799, %v2868
        %v2901 = vadd.f32 %v2800, %v2869
        %v2902 = vadd.f32 %v2801, %v2870
        %v2903 = vadd.f32 %v2802, %v2871
        %v2904 = vadd.f32 %v2803, %v2872
        %v2905 = vadd.f32 %v2804, %v2873
        %v2906 = vadd.f32 %v2805, %v2874
        %v2907 = vadd.f32 %v2806, %v2875
        %v2908 = vadd.f32 %v2807, %v2876
        %v2909 = vadd.f32 %v2808, %v2877
        %v2910 = vadd.f32 %v2809, %v2878
        %v2911 = vadd.f32 %v2810, %v2879
        %v2912 = vadd.f32 %v2811, %v2880
        %v2913 = vadd.f32 %v2812, %v2881
        %v2914 = vadd.f32 %v2813, %v2882
        %v2915 = vadd.f32 %v2814, %v2883
        %v2916 = vadd.f32 %v2815, %v2884
        %v2917 = vadd.f32 %v2816, %v2885
        %v2918 = vadd.f32 %v2817, %v2886
        %v2919 = vadd.f32 %v2818, %v2887
        %v2920 = vadd.f32 %v2819, %v2888
        %v2921 = vld [vmem:[%s1273 + $0x2] sm:$0xff]
        %v2922 = vld [vmem:[%s1273 + $0xa] sm:$0xff]
        %v2923 = vld [vmem:[%s1273 + $0x1a] sm:$0xff]
        %v2924 = vld [vmem:[%s1273 + $0x22] sm:$0xff]
        %v2925 = vld [vmem:[%s1273 + $0x32] sm:$0xff]
        %v2926 = vld [vmem:[%s1273 + $0x3a] sm:$0xff]
        %v2927 = vld [vmem:[%s1273 + $0x4a] sm:$0xff]
        %v2928 = vld [vmem:[%s1273 + $0x52] sm:$0xff]
        %v2929 = vld [vmem:[%s1273 + $0x62] sm:$0xff]
        %v2930 = vld [vmem:[%s1273 + $0x6a] sm:$0xff]
        %v2931 = vld [vmem:[%s1273 + $0x7a] sm:$0xff]
        %v2932 = vld [vmem:[%s1273 + $0x82] sm:$0xff]
        %v2933 = vld [vmem:[%s1273 + $0x92] sm:$0xff]
        %v2934 = vld [vmem:[%s1273 + $0x9a] sm:$0xff]
        %v2935 = vld [vmem:[%s1273 + $0xaa] sm:$0xff]
        %v2936 = vld [vmem:[%s1273 + $0xb2] sm:$0xff]
        %v2937 = vld [vmem:[%s1273 + $0xc2] sm:$0xff]
        %v2938 = vld [vmem:[%s1273 + $0xca] sm:$0xff]
        %v2939 = vld [vmem:[%s1273 + $0xda] sm:$0xff]
        %v2940 = vld [vmem:[%s1273 + $0xe2] sm:$0xff]
        %v2941 = vld [vmem:[%s1273 + $0xf2] sm:$0xff]
        %v2942 = vld [vmem:[%s1273 + $0xfa] sm:$0xff]
        %v2943 = vld [vmem:[%s1273 + $0x10a] sm:$0xff]
        %v2944 = vld [vmem:[%s1273 + $0x112] sm:$0xff]
        %v2945 = vld [vmem:[%s1273 + $0x122] sm:$0xff]
        %v2946 = vld [vmem:[%s1273 + $0x12a] sm:$0xff]
        %v2947 = vld [vmem:[%s1273 + $0x13a] sm:$0xff]
        %v2948 = vld [vmem:[%s1273 + $0x142] sm:$0xff]
        %v2949 = vld [vmem:[%s1273 + $0x152] sm:$0xff]
        %v2950 = vld [vmem:[%s1273 + $0x15a] sm:$0xff]
        %v2951 = vld [vmem:[%s1273 + $0x16a] sm:$0xff]
        %v2952 = vld [vmem:[%s1273 + $0x172] sm:$0xff]
        %v2953 = vld [vmem:[%s2750 + $0x2] sm:$0x1]
        %v2954 = vlaneseq
        %v2955 = vshrl.u32 %v2954, 7
        %v2956 = vsub.s32 0, %v2955
        %v2957 = vrot.slane %v2953, %v2956
        %v2958 = vmul.f32 %v2921, %v2957
        %v2959 = vmul.f32 %v2922, %v2957
        %v2960 = vmul.f32 %v2923, %v2957
        %v2961 = vmul.f32 %v2924, %v2957
        %v2962 = vmul.f32 %v2925, %v2957
        %v2963 = vmul.f32 %v2926, %v2957
        %v2964 = vmul.f32 %v2927, %v2957
        %v2965 = vmul.f32 %v2928, %v2957
        %v2966 = vmul.f32 %v2929, %v2957
        %v2967 = vmul.f32 %v2930, %v2957
        %v2968 = vmul.f32 %v2931, %v2957
        %v2969 = vmul.f32 %v2932, %v2957
        %v2970 = vmul.f32 %v2933, %v2957
        %v2971 = vmul.f32 %v2934, %v2957
        %v2972 = vmul.f32 %v2935, %v2957
        %v2973 = vmul.f32 %v2936, %v2957
        %v2974 = vmul.f32 %v2937, %v2957
        %v2975 = vmul.f32 %v2938, %v2957
        %v2976 = vmul.f32 %v2939, %v2957
        %v2977 = vmul.f32 %v2940, %v2957
        %v2978 = vmul.f32 %v2941, %v2957
        %v2979 = vmul.f32 %v2942, %v2957
        %v2980 = vmul.f32 %v2943, %v2957
        %v2981 = vmul.f32 %v2944, %v2957
        %v2982 = vmul.f32 %v2945, %v2957
        %v2983 = vmul.f32 %v2946, %v2957
        %v2984 = vmul.f32 %v2947, %v2957
        %v2985 = vmul.f32 %v2948, %v2957
        %v2986 = vmul.f32 %v2949, %v2957
        %v2987 = vmul.f32 %v2950, %v2957
        %v2988 = vmul.f32 %v2951, %v2957
        %v2989 = vmul.f32 %v2952, %v2957
        %v2990 = vadd.f32 %v2889, %v2958
        %v2991 = vadd.f32 %v2890, %v2959
        %v2992 = vadd.f32 %v2891, %v2960
        %v2993 = vadd.f32 %v2892, %v2961
        %v2994 = vadd.f32 %v2893, %v2962
        %v2995 = vadd.f32 %v2894, %v2963
        %v2996 = vadd.f32 %v2895, %v2964
        %v2997 = vadd.f32 %v2896, %v2965
        %v2998 = vadd.f32 %v2897, %v2966
        %v2999 = vadd.f32 %v2898, %v2967
        %v3000 = vadd.f32 %v2899, %v2968
        %v3001 = vadd.f32 %v2900, %v2969
        %v3002 = vadd.f32 %v2901, %v2970
        %v3003 = vadd.f32 %v2902, %v2971
        %v3004 = vadd.f32 %v2903, %v2972
        %v3005 = vadd.f32 %v2904, %v2973
        %v3006 = vadd.f32 %v2905, %v2974
        %v3007 = vadd.f32 %v2906, %v2975
        %v3008 = vadd.f32 %v2907, %v2976
        %v3009 = vadd.f32 %v2908, %v2977
        %v3010 = vadd.f32 %v2909, %v2978
        %v3011 = vadd.f32 %v2910, %v2979
        %v3012 = vadd.f32 %v2911, %v2980
        %v3013 = vadd.f32 %v2912, %v2981
        %v3014 = vadd.f32 %v2913, %v2982
        %v3015 = vadd.f32 %v2914, %v2983
        %v3016 = vadd.f32 %v2915, %v2984
        %v3017 = vadd.f32 %v2916, %v2985
        %v3018 = vadd.f32 %v2917, %v2986
        %v3019 = vadd.f32 %v2918, %v2987
        %v3020 = vadd.f32 %v2919, %v2988
        %v3021 = vadd.f32 %v2920, %v2989
        %v3022 = vld [vmem:[%s6] sm:$0x1]
        %v3024 = vlaneseq
        %v3025 = vshrl.u32 %v3024, 7
        %v3026 = vsub.s32 0, %v3025
        %v3027 = vrot.slane %v3022, %v3026
        %v3029 = vadd.f32 %v2990, %v3027
        %v3030 = vadd.f32 %v2991, %v3027
        %v3031 = vadd.f32 %v2992, %v3027
        %v3032 = vadd.f32 %v2993, %v3027
        %v3033 = vadd.f32 %v2994, %v3027
        %v3034 = vadd.f32 %v2995, %v3027
        %v3035 = vadd.f32 %v2996, %v3027
        %v3036 = vadd.f32 %v2997, %v3027
        %v3037 = vadd.f32 %v2998, %v3027
        %v3038 = vadd.f32 %v2999, %v3027
        %v3039 = vadd.f32 %v3000, %v3027
        %v3040 = vadd.f32 %v3001, %v3027
        %v3041 = vadd.f32 %v3002, %v3027
        %v3042 = vadd.f32 %v3003, %v3027
        %v3043 = vadd.f32 %v3004, %v3027
        %v3044 = vadd.f32 %v3005, %v3027
        %v3045 = vadd.f32 %v3006, %v3027
        %v3046 = vadd.f32 %v3007, %v3027
        %v3047 = vadd.f32 %v3008, %v3027
        %v3048 = vadd.f32 %v3009, %v3027
        %v3049 = vadd.f32 %v3010, %v3027
        %v3050 = vadd.f32 %v3011, %v3027
        %v3051 = vadd.f32 %v3012, %v3027
        %v3052 = vadd.f32 %v3013, %v3027
        %v3053 = vadd.f32 %v3014, %v3027
        %v3054 = vadd.f32 %v3015, %v3027
        %v3055 = vadd.f32 %v3016, %v3027
        %v3056 = vadd.f32 %v3017, %v3027
        %v3057 = vadd.f32 %v3018, %v3027
        %v3058 = vadd.f32 %v3019, %v3027
        %v3059 = vadd.f32 %v3020, %v3027
        %v3060 = vadd.f32 %v3021, %v3027
        %v3061 = vmax.f32 %v3029, 0.0
        %v3062 = vmax.f32 %v3030, 0.0
        %v3063 = vmax.f32 %v3031, 0.0
        %v3064 = vmax.f32 %v3032, 0.0
        %v3065 = vmax.f32 %v3033, 0.0
        %v3066 = vmax.f32 %v3034, 0.0
        %v3067 = vmax.f32 %v3035, 0.0
        %v3068 = vmax.f32 %v3036, 0.0
        %v3069 = vmax.f32 %v3037, 0.0
        %v3070 = vmax.f32 %v3038, 0.0
        %v3071 = vmax.f32 %v3039, 0.0
        %v3072 = vmax.f32 %v3040, 0.0
        %v3073 = vmax.f32 %v3041, 0.0
        %v3074 = vmax.f32 %v3042, 0.0
        %v3075 = vmax.f32 %v3043, 0.0
        %v3076 = vmax.f32 %v3044, 0.0
        %v3077 = vmax.f32 %v3045, 0.0
        %v3078 = vmax.f32 %v3046, 0.0
        %v3079 = vmax.f32 %v3047, 0.0
        %v3080 = vmax.f32 %v3048, 0.0
        %v3081 = vmax.f32 %v3049, 0.0
        %v3082 = vmax.f32 %v3050, 0.0
        %v3083 = vmax.f32 %v3051, 0.0
        %v3084 = vmax.f32 %v3052, 0.0
        %v3085 = vmax.f32 %v3053, 0.0
        %v3086 = vmax.f32 %v3054, 0.0
        %v3087 = vmax.f32 %v3055, 0.0
        %v3088 = vmax.f32 %v3056, 0.0
        %v3089 = vmax.f32 %v3057, 0.0
        %v3090 = vmax.f32 %v3058, 0.0
        %v3091 = vmax.f32 %v3059, 0.0
        %v3092 = vmax.f32 %v3060, 0.0
        %v3093 = vmin.f32 %v3061, 6.0
        %v3094 = vmin.f32 %v3062, 6.0
        %v3095 = vmin.f32 %v3063, 6.0
        %v3096 = vmin.f32 %v3064, 6.0
        %v3097 = vmin.f32 %v3065, 6.0
        %v3098 = vmin.f32 %v3066, 6.0
        %v3099 = vmin.f32 %v3067, 6.0
        %v3100 = vmin.f32 %v3068, 6.0
        %v3101 = vmin.f32 %v3069, 6.0
        %v3102 = vmin.f32 %v3070, 6.0
        %v3103 = vmin.f32 %v3071, 6.0
        %v3104 = vmin.f32 %v3072, 6.0
        %v3105 = vmin.f32 %v3073, 6.0
        %v3106 = vmin.f32 %v3074, 6.0
        %v3107 = vmin.f32 %v3075, 6.0
        %v3108 = vmin.f32 %v3076, 6.0
        %v3109 = vmin.f32 %v3077, 6.0
        %v3110 = vmin.f32 %v3078, 6.0
        %v3111 = vmin.f32 %v3079, 6.0
        %v3112 = vmin.f32 %v3080, 6.0
        %v3113 = vmin.f32 %v3081, 6.0
        %v3114 = vmin.f32 %v3082, 6.0
        %v3115 = vmin.f32 %v3083, 6.0
        %v3116 = vmin.f32 %v3084, 6.0
        %v3117 = vmin.f32 %v3085, 6.0
        %v3118 = vmin.f32 %v3086, 6.0
        %v3119 = vmin.f32 %v3087, 6.0
        %v3120 = vmin.f32 %v3088, 6.0
        %v3121 = vmin.f32 %v3089, 6.0
        %v3122 = vmin.f32 %v3090, 6.0
        %v3123 = vmin.f32 %v3091, 6.0
        %v3124 = vmin.f32 %v3092, 6.0
        %v3125 = vld [vmem:[#allocation3] sm:$0xff]
        %v3126 = vld [vmem:[#allocation3 + $0x8] sm:$0xff]
        %v3127 = vld [vmem:[#allocation3 + $0x18] sm:$0xff]
        %v3128 = vld [vmem:[#allocation3 + $0x20] sm:$0xff]
        %v3129 = vld [vmem:[#allocation3 + $0x30] sm:$0xff]
        %v3130 = vld [vmem:[#allocation3 + $0x38] sm:$0xff]
        %v3131 = vld [vmem:[#allocation3 + $0x48] sm:$0xff]
        %v3132 = vld [vmem:[#allocation3 + $0x50] sm:$0xff]
        %v3133 = vld [vmem:[#allocation3 + $0x60] sm:$0xff]
        %v3134 = vld [vmem:[#allocation3 + $0x68] sm:$0xff]
        %v3135 = vld [vmem:[#allocation3 + $0x78] sm:$0xff]
        %v3136 = vld [vmem:[#allocation3 + $0x80] sm:$0xff]
        %v3137 = vld [vmem:[#allocation3 + $0x90] sm:$0xff]
        %v3138 = vld [vmem:[#allocation3 + $0x98] sm:$0xff]
        %v3139 = vld [vmem:[#allocation3 + $0xa8] sm:$0xff]
        %v3140 = vld [vmem:[#allocation3 + $0xb0] sm:$0xff]
        %v3141 = vld [vmem:[#allocation3 + $0xc0] sm:$0xff]
        %v3142 = vld [vmem:[#allocation3 + $0xc8] sm:$0xff]
        %v3143 = vld [vmem:[#allocation3 + $0xd8] sm:$0xff]
        %v3144 = vld [vmem:[#allocation3 + $0xe0] sm:$0xff]
        %v3145 = vld [vmem:[#allocation3 + $0xf0] sm:$0xff]
        %v3146 = vld [vmem:[#allocation3 + $0xf8] sm:$0xff]
        %v3147 = vld [vmem:[#allocation3 + $0x108] sm:$0xff]
        %v3148 = vld [vmem:[#allocation3 + $0x110] sm:$0xff]
        %v3149 = vld [vmem:[#allocation3 + $0x120] sm:$0xff]
        %v3150 = vld [vmem:[#allocation3 + $0x128] sm:$0xff]
        %v3151 = vld [vmem:[#allocation3 + $0x138] sm:$0xff]
        %v3152 = vld [vmem:[#allocation3 + $0x140] sm:$0xff]
        %v3153 = vld [vmem:[#allocation3 + $0x150] sm:$0xff]
        %v3154 = vld [vmem:[#allocation3 + $0x158] sm:$0xff]
        %v3155 = vld [vmem:[#allocation3 + $0x168] sm:$0xff]
        %v3156 = vld [vmem:[#allocation3 + $0x170] sm:$0xff]
        %v3157 = vld [vmem:[%s7] sm:$0x1]
        %v3158 = vlaneseq
        %v3159 = vshrl.u32 %v3158, 7
        %v3160 = vsub.s32 0, %v3159
        %v3161 = vrot.slane %v3157, %v3160
        %v3162 = vmul.f32 %v3125, %v3161
        %v3163 = vmul.f32 %v3126, %v3161
        %v3164 = vmul.f32 %v3127, %v3161
        %v3165 = vmul.f32 %v3128, %v3161
        %v3166 = vmul.f32 %v3129, %v3161
        %v3167 = vmul.f32 %v3130, %v3161
        %v3168 = vmul.f32 %v3131, %v3161
        %v3169 = vmul.f32 %v3132, %v3161
        %v3170 = vmul.f32 %v3133, %v3161
        %v3171 = vmul.f32 %v3134, %v3161
        %v3172 = vmul.f32 %v3135, %v3161
        %v3173 = vmul.f32 %v3136, %v3161
        %v3174 = vmul.f32 %v3137, %v3161
        %v3175 = vmul.f32 %v3138, %v3161
        %v3176 = vmul.f32 %v3139, %v3161
        %v3177 = vmul.f32 %v3140, %v3161
        %v3178 = vmul.f32 %v3141, %v3161
        %v3179 = vmul.f32 %v3142, %v3161
        %v3180 = vmul.f32 %v3143, %v3161
        %v3181 = vmul.f32 %v3144, %v3161
        %v3182 = vmul.f32 %v3145, %v3161
        %v3183 = vmul.f32 %v3146, %v3161
        %v3184 = vmul.f32 %v3147, %v3161
        %v3185 = vmul.f32 %v3148, %v3161
        %v3186 = vmul.f32 %v3149, %v3161
        %v3187 = vmul.f32 %v3150, %v3161
        %v3188 = vmul.f32 %v3151, %v3161
        %v3189 = vmul.f32 %v3152, %v3161
        %v3190 = vmul.f32 %v3153, %v3161
        %v3191 = vmul.f32 %v3154, %v3161
        %v3192 = vmul.f32 %v3155, %v3161
        %v3193 = vmul.f32 %v3156, %v3161
        %v3194 = vadd.f32 %v3162, 0.0
        %v3195 = vadd.f32 %v3163, 0.0
        %v3196 = vadd.f32 %v3164, 0.0
        %v3197 = vadd.f32 %v3165, 0.0
        %v3198 = vadd.f32 %v3166, 0.0
        %v3199 = vadd.f32 %v3167, 0.0
        %v3200 = vadd.f32 %v3168, 0.0
        %v3201 = vadd.f32 %v3169, 0.0
        %v3202 = vadd.f32 %v3170, 0.0
        %v3203 = vadd.f32 %v3171, 0.0
        %v3204 = vadd.f32 %v3172, 0.0
        %v3205 = vadd.f32 %v3173, 0.0
        %v3206 = vadd.f32 %v3174, 0.0
        %v3207 = vadd.f32 %v3175, 0.0
        %v3208 = vadd.f32 %v3176, 0.0
        %v3209 = vadd.f32 %v3177, 0.0
        %v3210 = vadd.f32 %v3178, 0.0
        %v3211 = vadd.f32 %v3179, 0.0
        %v3212 = vadd.f32 %v3180, 0.0
        %v3213 = vadd.f32 %v3181, 0.0
        %v3214 = vadd.f32 %v3182, 0.0
        %v3215 = vadd.f32 %v3183, 0.0
        %v3216 = vadd.f32 %v3184, 0.0
        %v3217 = vadd.f32 %v3185, 0.0
        %v3218 = vadd.f32 %v3186, 0.0
        %v3219 = vadd.f32 %v3187, 0.0
        %v3220 = vadd.f32 %v3188, 0.0
        %v3221 = vadd.f32 %v3189, 0.0
        %v3222 = vadd.f32 %v3190, 0.0
        %v3223 = vadd.f32 %v3191, 0.0
        %v3224 = vadd.f32 %v3192, 0.0
        %v3225 = vadd.f32 %v3193, 0.0
        %v3226 = vld [vmem:[#allocation3 + $0x1] sm:$0xff]
        %v3227 = vld [vmem:[#allocation3 + $0x9] sm:$0xff]
        %v3228 = vld [vmem:[#allocation3 + $0x19] sm:$0xff]
        %v3229 = vld [vmem:[#allocation3 + $0x21] sm:$0xff]
        %v3230 = vld [vmem:[#allocation3 + $0x31] sm:$0xff]
        %v3231 = vld [vmem:[#allocation3 + $0x39] sm:$0xff]
        %v3232 = vld [vmem:[#allocation3 + $0x49] sm:$0xff]
        %v3233 = vld [vmem:[#allocation3 + $0x51] sm:$0xff]
        %v3234 = vld [vmem:[#allocation3 + $0x61] sm:$0xff]
        %v3235 = vld [vmem:[#allocation3 + $0x69] sm:$0xff]
        %v3236 = vld [vmem:[#allocation3 + $0x79] sm:$0xff]
        %v3237 = vld [vmem:[#allocation3 + $0x81] sm:$0xff]
        %v3238 = vld [vmem:[#allocation3 + $0x91] sm:$0xff]
        %v3239 = vld [vmem:[#allocation3 + $0x99] sm:$0xff]
        %v3240 = vld [vmem:[#allocation3 + $0xa9] sm:$0xff]
        %v3241 = vld [vmem:[#allocation3 + $0xb1] sm:$0xff]
        %v3242 = vld [vmem:[#allocation3 + $0xc1] sm:$0xff]
        %v3243 = vld [vmem:[#allocation3 + $0xc9] sm:$0xff]
        %v3244 = vld [vmem:[#allocation3 + $0xd9] sm:$0xff]
        %v3245 = vld [vmem:[#allocation3 + $0xe1] sm:$0xff]
        %v3246 = vld [vmem:[#allocation3 + $0xf1] sm:$0xff]
        %v3247 = vld [vmem:[#allocation3 + $0xf9] sm:$0xff]
        %v3248 = vld [vmem:[#allocation3 + $0x109] sm:$0xff]
        %v3249 = vld [vmem:[#allocation3 + $0x111] sm:$0xff]
        %v3250 = vld [vmem:[#allocation3 + $0x121] sm:$0xff]
        %v3251 = vld [vmem:[#allocation3 + $0x129] sm:$0xff]
        %v3252 = vld [vmem:[#allocation3 + $0x139] sm:$0xff]
        %v3253 = vld [vmem:[#allocation3 + $0x141] sm:$0xff]
        %v3254 = vld [vmem:[#allocation3 + $0x151] sm:$0xff]
        %v3255 = vld [vmem:[#allocation3 + $0x159] sm:$0xff]
        %v3256 = vld [vmem:[#allocation3 + $0x169] sm:$0xff]
        %v3257 = vld [vmem:[#allocation3 + $0x171] sm:$0xff]
        %v3258 = vld [vmem:[%s7 + $0x1] sm:$0x1]
        %v3259 = vlaneseq
        %v3260 = vshrl.u32 %v3259, 7
        %v3261 = vsub.s32 0, %v3260
        %v3262 = vrot.slane %v3258, %v3261
        %v3263 = vmul.f32 %v3226, %v3262
        %v3264 = vmul.f32 %v3227, %v3262
        %v3265 = vmul.f32 %v3228, %v3262
        %v3266 = vmul.f32 %v3229, %v3262
        %v3267 = vmul.f32 %v3230, %v3262
        %v3268 = vmul.f32 %v3231, %v3262
        %v3269 = vmul.f32 %v3232, %v3262
        %v3270 = vmul.f32 %v3233, %v3262
        %v3271 = vmul.f32 %v3234, %v3262
        %v3272 = vmul.f32 %v3235, %v3262
        %v3273 = vmul.f32 %v3236, %v3262
        %v3274 = vmul.f32 %v3237, %v3262
        %v3275 = vmul.f32 %v3238, %v3262
        %v3276 = vmul.f32 %v3239, %v3262
        %v3277 = vmul.f32 %v3240, %v3262
        %v3278 = vmul.f32 %v3241, %v3262
        %v3279 = vmul.f32 %v3242, %v3262
        %v3280 = vmul.f32 %v3243, %v3262
        %v3281 = vmul.f32 %v3244, %v3262
        %v3282 = vmul.f32 %v3245, %v3262
        %v3283 = vmul.f32 %v3246, %v3262
        %v3284 = vmul.f32 %v3247, %v3262
        %v3285 = vmul.f32 %v3248, %v3262
        %v3286 = vmul.f32 %v3249, %v3262
        %v3287 = vmul.f32 %v3250, %v3262
        %v3288 = vmul.f32 %v3251, %v3262
        %v3289 = vmul.f32 %v3252, %v3262
        %v3290 = vmul.f32 %v3253, %v3262
        %v3291 = vmul.f32 %v3254, %v3262
        %v3292 = vmul.f32 %v3255, %v3262
        %v3293 = vmul.f32 %v3256, %v3262
        %v3294 = vmul.f32 %v3257, %v3262
        %v3295 = vadd.f32 %v3194, %v3263
        %v3296 = vadd.f32 %v3195, %v3264
        %v3297 = vadd.f32 %v3196, %v3265
        %v3298 = vadd.f32 %v3197, %v3266
        %v3299 = vadd.f32 %v3198, %v3267
        %v3300 = vadd.f32 %v3199, %v3268
        %v3301 = vadd.f32 %v3200, %v3269
        %v3302 = vadd.f32 %v3201, %v3270
        %v3303 = vadd.f32 %v3202, %v3271
        %v3304 = vadd.f32 %v3203, %v3272
        %v3305 = vadd.f32 %v3204, %v3273
        %v3306 = vadd.f32 %v3205, %v3274
        %v3307 = vadd.f32 %v3206, %v3275
        %v3308 = vadd.f32 %v3207, %v3276
        %v3309 = vadd.f32 %v3208, %v3277
        %v3310 = vadd.f32 %v3209, %v3278
        %v3311 = vadd.f32 %v3210, %v3279
        %v3312 = vadd.f32 %v3211, %v3280
        %v3313 = vadd.f32 %v3212, %v3281
        %v3314 = vadd.f32 %v3213, %v3282
        %v3315 = vadd.f32 %v3214, %v3283
        %v3316 = vadd.f32 %v3215, %v3284
        %v3317 = vadd.f32 %v3216, %v3285
        %v3318 = vadd.f32 %v3217, %v3286
        %v3319 = vadd.f32 %v3218, %v3287
        %v3320 = vadd.f32 %v3219, %v3288
        %v3321 = vadd.f32 %v3220, %v3289
        %v3322 = vadd.f32 %v3221, %v3290
        %v3323 = vadd.f32 %v3222, %v3291
        %v3324 = vadd.f32 %v3223, %v3292
        %v3325 = vadd.f32 %v3224, %v3293
        %v3326 = vadd.f32 %v3225, %v3294
        %v3327 = vld [vmem:[#allocation3 + $0x2] sm:$0xff]
        %v3328 = vld [vmem:[#allocation3 + $0xa] sm:$0xff]
        %v3329 = vld [vmem:[#allocation3 + $0x1a] sm:$0xff]
        %v3330 = vld [vmem:[#allocation3 + $0x22] sm:$0xff]
        %v3331 = vld [vmem:[#allocation3 + $0x32] sm:$0xff]
        %v3332 = vld [vmem:[#allocation3 + $0x3a] sm:$0xff]
        %v3333 = vld [vmem:[#allocation3 + $0x4a] sm:$0xff]
        %v3334 = vld [vmem:[#allocation3 + $0x52] sm:$0xff]
        %v3335 = vld [vmem:[#allocation3 + $0x62] sm:$0xff]
        %v3336 = vld [vmem:[#allocation3 + $0x6a] sm:$0xff]
        %v3337 = vld [vmem:[#allocation3 + $0x7a] sm:$0xff]
        %v3338 = vld [vmem:[#allocation3 + $0x82] sm:$0xff]
        %v3339 = vld [vmem:[#allocation3 + $0x92] sm:$0xff]
        %v3340 = vld [vmem:[#allocation3 + $0x9a] sm:$0xff]
        %v3341 = vld [vmem:[#allocation3 + $0xaa] sm:$0xff]
        %v3342 = vld [vmem:[#allocation3 + $0xb2] sm:$0xff]
        %v3343 = vld [vmem:[#allocation3 + $0xc2] sm:$0xff]
        %v3344 = vld [vmem:[#allocation3 + $0xca] sm:$0xff]
        %v3345 = vld [vmem:[#allocation3 + $0xda] sm:$0xff]
        %v3346 = vld [vmem:[#allocation3 + $0xe2] sm:$0xff]
        %v3347 = vld [vmem:[#allocation3 + $0xf2] sm:$0xff]
        %v3348 = vld [vmem:[#allocation3 + $0xfa] sm:$0xff]
        %v3349 = vld [vmem:[#allocation3 + $0x10a] sm:$0xff]
        %v3350 = vld [vmem:[#allocation3 + $0x112] sm:$0xff]
        %v3351 = vld [vmem:[#allocation3 + $0x122] sm:$0xff]
        %v3352 = vld [vmem:[#allocation3 + $0x12a] sm:$0xff]
        %v3353 = vld [vmem:[#allocation3 + $0x13a] sm:$0xff]
        %v3354 = vld [vmem:[#allocation3 + $0x142] sm:$0xff]
        %v3355 = vld [vmem:[#allocation3 + $0x152] sm:$0xff]
        %v3356 = vld [vmem:[#allocation3 + $0x15a] sm:$0xff]
        %v3357 = vld [vmem:[#allocation3 + $0x16a] sm:$0xff]
        %v3358 = vld [vmem:[#allocation3 + $0x172] sm:$0xff]
        %v3359 = vld [vmem:[%s7 + $0x2] sm:$0x1]
        %v3360 = vlaneseq
        %v3361 = vshrl.u32 %v3360, 7
        %v3362 = vsub.s32 0, %v3361
        %v3363 = vrot.slane %v3359, %v3362
        %v3364 = vmul.f32 %v3327, %v3363
        %v3365 = vmul.f32 %v3328, %v3363
        %v3366 = vmul.f32 %v3329, %v3363
        %v3367 = vmul.f32 %v3330, %v3363
        %v3368 = vmul.f32 %v3331, %v3363
        %v3369 = vmul.f32 %v3332, %v3363
        %v3370 = vmul.f32 %v3333, %v3363
        %v3371 = vmul.f32 %v3334, %v3363
        %v3372 = vmul.f32 %v3335, %v3363
        %v3373 = vmul.f32 %v3336, %v3363
        %v3374 = vmul.f32 %v3337, %v3363
        %v3375 = vmul.f32 %v3338, %v3363
        %v3376 = vmul.f32 %v3339, %v3363
        %v3377 = vmul.f32 %v3340, %v3363
        %v3378 = vmul.f32 %v3341, %v3363
        %v3379 = vmul.f32 %v3342, %v3363
        %v3380 = vmul.f32 %v3343, %v3363
        %v3381 = vmul.f32 %v3344, %v3363
        %v3382 = vmul.f32 %v3345, %v3363
        %v3383 = vmul.f32 %v3346, %v3363
        %v3384 = vmul.f32 %v3347, %v3363
        %v3385 = vmul.f32 %v3348, %v3363
        %v3386 = vmul.f32 %v3349, %v3363
        %v3387 = vmul.f32 %v3350, %v3363
        %v3388 = vmul.f32 %v3351, %v3363
        %v3389 = vmul.f32 %v3352, %v3363
        %v3390 = vmul.f32 %v3353, %v3363
        %v3391 = vmul.f32 %v3354, %v3363
        %v3392 = vmul.f32 %v3355, %v3363
        %v3393 = vmul.f32 %v3356, %v3363
        %v3394 = vmul.f32 %v3357, %v3363
        %v3395 = vmul.f32 %v3358, %v3363
        %v3396 = vadd.f32 %v3295, %v3364
        %v3397 = vadd.f32 %v3296, %v3365
        %v3398 = vadd.f32 %v3297, %v3366
        %v3399 = vadd.f32 %v3298, %v3367
        %v3400 = vadd.f32 %v3299, %v3368
        %v3401 = vadd.f32 %v3300, %v3369
        %v3402 = vadd.f32 %v3301, %v3370
        %v3403 = vadd.f32 %v3302, %v3371
        %v3404 = vadd.f32 %v3303, %v3372
        %v3405 = vadd.f32 %v3304, %v3373
        %v3406 = vadd.f32 %v3305, %v3374
        %v3407 = vadd.f32 %v3306, %v3375
        %v3408 = vadd.f32 %v3307, %v3376
        %v3409 = vadd.f32 %v3308, %v3377
        %v3410 = vadd.f32 %v3309, %v3378
        %v3411 = vadd.f32 %v3310, %v3379
        %v3412 = vadd.f32 %v3311, %v3380
        %v3413 = vadd.f32 %v3312, %v3381
        %v3414 = vadd.f32 %v3313, %v3382
        %v3415 = vadd.f32 %v3314, %v3383
        %v3416 = vadd.f32 %v3315, %v3384
        %v3417 = vadd.f32 %v3316, %v3385
        %v3418 = vadd.f32 %v3317, %v3386
        %v3419 = vadd.f32 %v3318, %v3387
        %v3420 = vadd.f32 %v3319, %v3388
        %v3421 = vadd.f32 %v3320, %v3389
        %v3422 = vadd.f32 %v3321, %v3390
        %v3423 = vadd.f32 %v3322, %v3391
        %v3424 = vadd.f32 %v3323, %v3392
        %v3425 = vadd.f32 %v3324, %v3393
        %v3426 = vadd.f32 %v3325, %v3394
        %v3427 = vadd.f32 %v3326, %v3395
        %v3428 = vld [vmem:[%s2078] sm:$0xff]
        %v3429 = vld [vmem:[%s2078 + $0x8] sm:$0xff]
        %v3430 = vld [vmem:[%s2078 + $0x18] sm:$0xff]
        %v3431 = vld [vmem:[%s2078 + $0x20] sm:$0xff]
        %v3432 = vld [vmem:[%s2078 + $0x30] sm:$0xff]
        %v3433 = vld [vmem:[%s2078 + $0x38] sm:$0xff]
        %v3434 = vld [vmem:[%s2078 + $0x48] sm:$0xff]
        %v3435 = vld [vmem:[%s2078 + $0x50] sm:$0xff]
        %v3436 = vld [vmem:[%s2078 + $0x60] sm:$0xff]
        %v3437 = vld [vmem:[%s2078 + $0x68] sm:$0xff]
        %v3438 = vld [vmem:[%s2078 + $0x78] sm:$0xff]
        %v3439 = vld [vmem:[%s2078 + $0x80] sm:$0xff]
        %v3440 = vld [vmem:[%s2078 + $0x90] sm:$0xff]
        %v3441 = vld [vmem:[%s2078 + $0x98] sm:$0xff]
        %v3442 = vld [vmem:[%s2078 + $0xa8] sm:$0xff]
        %v3443 = vld [vmem:[%s2078 + $0xb0] sm:$0xff]
        %v3444 = vld [vmem:[%s2078 + $0xc0] sm:$0xff]
        %v3445 = vld [vmem:[%s2078 + $0xc8] sm:$0xff]
        %v3446 = vld [vmem:[%s2078 + $0xd8] sm:$0xff]
        %v3447 = vld [vmem:[%s2078 + $0xe0] sm:$0xff]
        %v3448 = vld [vmem:[%s2078 + $0xf0] sm:$0xff]
        %v3449 = vld [vmem:[%s2078 + $0xf8] sm:$0xff]
        %v3450 = vld [vmem:[%s2078 + $0x108] sm:$0xff]
        %v3451 = vld [vmem:[%s2078 + $0x110] sm:$0xff]
        %v3452 = vld [vmem:[%s2078 + $0x120] sm:$0xff]
        %v3453 = vld [vmem:[%s2078 + $0x128] sm:$0xff]
        %v3454 = vld [vmem:[%s2078 + $0x138] sm:$0xff]
        %v3455 = vld [vmem:[%s2078 + $0x140] sm:$0xff]
        %v3456 = vld [vmem:[%s2078 + $0x150] sm:$0xff]
        %v3457 = vld [vmem:[%s2078 + $0x158] sm:$0xff]
        %v3458 = vld [vmem:[%s2078 + $0x168] sm:$0xff]
        %v3459 = vld [vmem:[%s2078 + $0x170] sm:$0xff]
        %s3460 = scalar_lea.vmem %s7, 4
        %v3461 = vld [vmem:[%s3460] sm:$0x1]
        %v3462 = vlaneseq
        %v3463 = vshrl.u32 %v3462, 7
        %v3464 = vsub.s32 0, %v3463
        %v3465 = vrot.slane %v3461, %v3464
        %v3466 = vmul.f32 %v3428, %v3465
        %v3467 = vmul.f32 %v3429, %v3465
        %v3468 = vmul.f32 %v3430, %v3465
        %v3469 = vmul.f32 %v3431, %v3465
        %v3470 = vmul.f32 %v3432, %v3465
        %v3471 = vmul.f32 %v3433, %v3465
        %v3472 = vmul.f32 %v3434, %v3465
        %v3473 = vmul.f32 %v3435, %v3465
        %v3474 = vmul.f32 %v3436, %v3465
        %v3475 = vmul.f32 %v3437, %v3465
        %v3476 = vmul.f32 %v3438, %v3465
        %v3477 = vmul.f32 %v3439, %v3465
        %v3478 = vmul.f32 %v3440, %v3465
        %v3479 = vmul.f32 %v3441, %v3465
        %v3480 = vmul.f32 %v3442, %v3465
        %v3481 = vmul.f32 %v3443, %v3465
        %v3482 = vmul.f32 %v3444, %v3465
        %v3483 = vmul.f32 %v3445, %v3465
        %v3484 = vmul.f32 %v3446, %v3465
        %v3485 = vmul.f32 %v3447, %v3465
        %v3486 = vmul.f32 %v3448, %v3465
        %v3487 = vmul.f32 %v3449, %v3465
        %v3488 = vmul.f32 %v3450, %v3465
        %v3489 = vmul.f32 %v3451, %v3465
        %v3490 = vmul.f32 %v3452, %v3465
        %v3491 = vmul.f32 %v3453, %v3465
        %v3492 = vmul.f32 %v3454, %v3465
        %v3493 = vmul.f32 %v3455, %v3465
        %v3494 = vmul.f32 %v3456, %v3465
        %v3495 = vmul.f32 %v3457, %v3465
        %v3496 = vmul.f32 %v3458, %v3465
        %v3497 = vmul.f32 %v3459, %v3465
        %v3498 = vadd.f32 %v3396, %v3466
        %v3499 = vadd.f32 %v3397, %v3467
        %v3500 = vadd.f32 %v3398, %v3468
        %v3501 = vadd.f32 %v3399, %v3469
        %v3502 = vadd.f32 %v3400, %v3470
        %v3503 = vadd.f32 %v3401, %v3471
        %v3504 = vadd.f32 %v3402, %v3472
        %v3505 = vadd.f32 %v3403, %v3473
        %v3506 = vadd.f32 %v3404, %v3474
        %v3507 = vadd.f32 %v3405, %v3475
        %v3508 = vadd.f32 %v3406, %v3476
        %v3509 = vadd.f32 %v3407, %v3477
        %v3510 = vadd.f32 %v3408, %v3478
        %v3511 = vadd.f32 %v3409, %v3479
        %v3512 = vadd.f32 %v3410, %v3480
        %v3513 = vadd.f32 %v3411, %v3481
        %v3514 = vadd.f32 %v3412, %v3482
        %v3515 = vadd.f32 %v3413, %v3483
        %v3516 = vadd.f32 %v3414, %v3484
        %v3517 = vadd.f32 %v3415, %v3485
        %v3518 = vadd.f32 %v3416, %v3486
        %v3519 = vadd.f32 %v3417, %v3487
        %v3520 = vadd.f32 %v3418, %v3488
        %v3521 = vadd.f32 %v3419, %v3489
        %v3522 = vadd.f32 %v3420, %v3490
        %v3523 = vadd.f32 %v3421, %v3491
        %v3524 = vadd.f32 %v3422, %v3492
        %v3525 = vadd.f32 %v3423, %v3493
        %v3526 = vadd.f32 %v3424, %v3494
        %v3527 = vadd.f32 %v3425, %v3495
        %v3528 = vadd.f32 %v3426, %v3496
        %v3529 = vadd.f32 %v3427, %v3497
        %v3530 = vld [vmem:[%s2078 + $0x1] sm:$0xff]
        %v3531 = vld [vmem:[%s2078 + $0x9] sm:$0xff]
        %v3532 = vld [vmem:[%s2078 + $0x19] sm:$0xff]
        %v3533 = vld [vmem:[%s2078 + $0x21] sm:$0xff]
        %v3534 = vld [vmem:[%s2078 + $0x31] sm:$0xff]
        %v3535 = vld [vmem:[%s2078 + $0x39] sm:$0xff]
        %v3536 = vld [vmem:[%s2078 + $0x49] sm:$0xff]
        %v3537 = vld [vmem:[%s2078 + $0x51] sm:$0xff]
        %v3538 = vld [vmem:[%s2078 + $0x61] sm:$0xff]
        %v3539 = vld [vmem:[%s2078 + $0x69] sm:$0xff]
        %v3540 = vld [vmem:[%s2078 + $0x79] sm:$0xff]
        %v3541 = vld [vmem:[%s2078 + $0x81] sm:$0xff]
        %v3542 = vld [vmem:[%s2078 + $0x91] sm:$0xff]
        %v3543 = vld [vmem:[%s2078 + $0x99] sm:$0xff]
        %v3544 = vld [vmem:[%s2078 + $0xa9] sm:$0xff]
        %v3545 = vld [vmem:[%s2078 + $0xb1] sm:$0xff]
        %v3546 = vld [vmem:[%s2078 + $0xc1] sm:$0xff]
        %v3547 = vld [vmem:[%s2078 + $0xc9] sm:$0xff]
        %v3548 = vld [vmem:[%s2078 + $0xd9] sm:$0xff]
        %v3549 = vld [vmem:[%s2078 + $0xe1] sm:$0xff]
        %v3550 = vld [vmem:[%s2078 + $0xf1] sm:$0xff]
        %v3551 = vld [vmem:[%s2078 + $0xf9] sm:$0xff]
        %v3552 = vld [vmem:[%s2078 + $0x109] sm:$0xff]
        %v3553 = vld [vmem:[%s2078 + $0x111] sm:$0xff]
        %v3554 = vld [vmem:[%s2078 + $0x121] sm:$0xff]
        %v3555 = vld [vmem:[%s2078 + $0x129] sm:$0xff]
        %v3556 = vld [vmem:[%s2078 + $0x139] sm:$0xff]
        %v3557 = vld [vmem:[%s2078 + $0x141] sm:$0xff]
        %v3558 = vld [vmem:[%s2078 + $0x151] sm:$0xff]
        %v3559 = vld [vmem:[%s2078 + $0x159] sm:$0xff]
        %v3560 = vld [vmem:[%s2078 + $0x169] sm:$0xff]
        %v3561 = vld [vmem:[%s2078 + $0x171] sm:$0xff]
        %v3562 = vld [vmem:[%s3460 + $0x1] sm:$0x1]
        %v3563 = vlaneseq
        %v3564 = vshrl.u32 %v3563, 7
        %v3565 = vsub.s32 0, %v3564
        %v3566 = vrot.slane %v3562, %v3565
        %v3567 = vmul.f32 %v3530, %v3566
        %v3568 = vmul.f32 %v3531, %v3566
        %v3569 = vmul.f32 %v3532, %v3566
        %v3570 = vmul.f32 %v3533, %v3566
        %v3571 = vmul.f32 %v3534, %v3566
        %v3572 = vmul.f32 %v3535, %v3566
        %v3573 = vmul.f32 %v3536, %v3566
        %v3574 = vmul.f32 %v3537, %v3566
        %v3575 = vmul.f32 %v3538, %v3566
        %v3576 = vmul.f32 %v3539, %v3566
        %v3577 = vmul.f32 %v3540, %v3566
        %v3578 = vmul.f32 %v3541, %v3566
        %v3579 = vmul.f32 %v3542, %v3566
        %v3580 = vmul.f32 %v3543, %v3566
        %v3581 = vmul.f32 %v3544, %v3566
        %v3582 = vmul.f32 %v3545, %v3566
        %v3583 = vmul.f32 %v3546, %v3566
        %v3584 = vmul.f32 %v3547, %v3566
        %v3585 = vmul.f32 %v3548, %v3566
        %v3586 = vmul.f32 %v3549, %v3566
        %v3587 = vmul.f32 %v3550, %v3566
        %v3588 = vmul.f32 %v3551, %v3566
        %v3589 = vmul.f32 %v3552, %v3566
        %v3590 = vmul.f32 %v3553, %v3566
        %v3591 = vmul.f32 %v3554, %v3566
        %v3592 = vmul.f32 %v3555, %v3566
        %v3593 = vmul.f32 %v3556, %v3566
        %v3594 = vmul.f32 %v3557, %v3566
        %v3595 = vmul.f32 %v3558, %v3566
        %v3596 = vmul.f32 %v3559, %v3566
        %v3597 = vmul.f32 %v3560, %v3566
        %v3598 = vmul.f32 %v3561, %v3566
        %v3599 = vadd.f32 %v3498, %v3567
        %v3600 = vadd.f32 %v3499, %v3568
        %v3601 = vadd.f32 %v3500, %v3569
        %v3602 = vadd.f32 %v3501, %v3570
        %v3603 = vadd.f32 %v3502, %v3571
        %v3604 = vadd.f32 %v3503, %v3572
        %v3605 = vadd.f32 %v3504, %v3573
        %v3606 = vadd.f32 %v3505, %v3574
        %v3607 = vadd.f32 %v3506, %v3575
        %v3608 = vadd.f32 %v3507, %v3576
        %v3609 = vadd.f32 %v3508, %v3577
        %v3610 = vadd.f32 %v3509, %v3578
        %v3611 = vadd.f32 %v3510, %v3579
        %v3612 = vadd.f32 %v3511, %v3580
        %v3613 = vadd.f32 %v3512, %v3581
        %v3614 = vadd.f32 %v3513, %v3582
        %v3615 = vadd.f32 %v3514, %v3583
        %v3616 = vadd.f32 %v3515, %v3584
        %v3617 = vadd.f32 %v3516, %v3585
        %v3618 = vadd.f32 %v3517, %v3586
        %v3619 = vadd.f32 %v3518, %v3587
        %v3620 = vadd.f32 %v3519, %v3588
        %v3621 = vadd.f32 %v3520, %v3589
        %v3622 = vadd.f32 %v3521, %v3590
        %v3623 = vadd.f32 %v3522, %v3591
        %v3624 = vadd.f32 %v3523, %v3592
        %v3625 = vadd.f32 %v3524, %v3593
        %v3626 = vadd.f32 %v3525, %v3594
        %v3627 = vadd.f32 %v3526, %v3595
        %v3628 = vadd.f32 %v3527, %v3596
        %v3629 = vadd.f32 %v3528, %v3597
        %v3630 = vadd.f32 %v3529, %v3598
        %v3631 = vld [vmem:[%s2078 + $0x2] sm:$0xff]
        %v3632 = vld [vmem:[%s2078 + $0xa] sm:$0xff]
        %v3633 = vld [vmem:[%s2078 + $0x1a] sm:$0xff]
        %v3634 = vld [vmem:[%s2078 + $0x22] sm:$0xff]
        %v3635 = vld [vmem:[%s2078 + $0x32] sm:$0xff]
        %v3636 = vld [vmem:[%s2078 + $0x3a] sm:$0xff]
        %v3637 = vld [vmem:[%s2078 + $0x4a] sm:$0xff]
        %v3638 = vld [vmem:[%s2078 + $0x52] sm:$0xff]
        %v3639 = vld [vmem:[%s2078 + $0x62] sm:$0xff]
        %v3640 = vld [vmem:[%s2078 + $0x6a] sm:$0xff]
        %v3641 = vld [vmem:[%s2078 + $0x7a] sm:$0xff]
        %v3642 = vld [vmem:[%s2078 + $0x82] sm:$0xff]
        %v3643 = vld [vmem:[%s2078 + $0x92] sm:$0xff]
        %v3644 = vld [vmem:[%s2078 + $0x9a] sm:$0xff]
        %v3645 = vld [vmem:[%s2078 + $0xaa] sm:$0xff]
        %v3646 = vld [vmem:[%s2078 + $0xb2] sm:$0xff]
        %v3647 = vld [vmem:[%s2078 + $0xc2] sm:$0xff]
        %v3648 = vld [vmem:[%s2078 + $0xca] sm:$0xff]
        %v3649 = vld [vmem:[%s2078 + $0xda] sm:$0xff]
        %v3650 = vld [vmem:[%s2078 + $0xe2] sm:$0xff]
        %v3651 = vld [vmem:[%s2078 + $0xf2] sm:$0xff]
        %v3652 = vld [vmem:[%s2078 + $0xfa] sm:$0xff]
        %v3653 = vld [vmem:[%s2078 + $0x10a] sm:$0xff]
        %v3654 = vld [vmem:[%s2078 + $0x112] sm:$0xff]
        %v3655 = vld [vmem:[%s2078 + $0x122] sm:$0xff]
        %v3656 = vld [vmem:[%s2078 + $0x12a] sm:$0xff]
        %v3657 = vld [vmem:[%s2078 + $0x13a] sm:$0xff]
        %v3658 = vld [vmem:[%s2078 + $0x142] sm:$0xff]
        %v3659 = vld [vmem:[%s2078 + $0x152] sm:$0xff]
        %v3660 = vld [vmem:[%s2078 + $0x15a] sm:$0xff]
        %v3661 = vld [vmem:[%s2078 + $0x16a] sm:$0xff]
        %v3662 = vld [vmem:[%s2078 + $0x172] sm:$0xff]
        %v3663 = vld [vmem:[%s3460 + $0x2] sm:$0x1]
        %v3664 = vlaneseq
        %v3665 = vshrl.u32 %v3664, 7
        %v3666 = vsub.s32 0, %v3665
        %v3667 = vrot.slane %v3663, %v3666
        %v3668 = vmul.f32 %v3631, %v3667
        %v3669 = vmul.f32 %v3632, %v3667
        %v3670 = vmul.f32 %v3633, %v3667
        %v3671 = vmul.f32 %v3634, %v3667
        %v3672 = vmul.f32 %v3635, %v3667
        %v3673 = vmul.f32 %v3636, %v3667
        %v3674 = vmul.f32 %v3637, %v3667
        %v3675 = vmul.f32 %v3638, %v3667
        %v3676 = vmul.f32 %v3639, %v3667
        %v3677 = vmul.f32 %v3640, %v3667
        %v3678 = vmul.f32 %v3641, %v3667
        %v3679 = vmul.f32 %v3642, %v3667
        %v3680 = vmul.f32 %v3643, %v3667
        %v3681 = vmul.f32 %v3644, %v3667
        %v3682 = vmul.f32 %v3645, %v3667
        %v3683 = vmul.f32 %v3646, %v3667
        %v3684 = vmul.f32 %v3647, %v3667
        %v3685 = vmul.f32 %v3648, %v3667
        %v3686 = vmul.f32 %v3649, %v3667
        %v3687 = vmul.f32 %v3650, %v3667
        %v3688 = vmul.f32 %v3651, %v3667
        %v3689 = vmul.f32 %v3652, %v3667
        %v3690 = vmul.f32 %v3653, %v3667
        %v3691 = vmul.f32 %v3654, %v3667
        %v3692 = vmul.f32 %v3655, %v3667
        %v3693 = vmul.f32 %v3656, %v3667
        %v3694 = vmul.f32 %v3657, %v3667
        %v3695 = vmul.f32 %v3658, %v3667
        %v3696 = vmul.f32 %v3659, %v3667
        %v3697 = vmul.f32 %v3660, %v3667
        %v3698 = vmul.f32 %v3661, %v3667
        %v3699 = vmul.f32 %v3662, %v3667
        %v3700 = vadd.f32 %v3599, %v3668
        %v3701 = vadd.f32 %v3600, %v3669
        %v3702 = vadd.f32 %v3601, %v3670
        %v3703 = vadd.f32 %v3602, %v3671
        %v3704 = vadd.f32 %v3603, %v3672
        %v3705 = vadd.f32 %v3604, %v3673
        %v3706 = vadd.f32 %v3605, %v3674
        %v3707 = vadd.f32 %v3606, %v3675
        %v3708 = vadd.f32 %v3607, %v3676
        %v3709 = vadd.f32 %v3608, %v3677
        %v3710 = vadd.f32 %v3609, %v3678
        %v3711 = vadd.f32 %v3610, %v3679
        %v3712 = vadd.f32 %v3611, %v3680
        %v3713 = vadd.f32 %v3612, %v3681
        %v3714 = vadd.f32 %v3613, %v3682
        %v3715 = vadd.f32 %v3614, %v3683
        %v3716 = vadd.f32 %v3615, %v3684
        %v3717 = vadd.f32 %v3616, %v3685
        %v3718 = vadd.f32 %v3617, %v3686
        %v3719 = vadd.f32 %v3618, %v3687
        %v3720 = vadd.f32 %v3619, %v3688
        %v3721 = vadd.f32 %v3620, %v3689
        %v3722 = vadd.f32 %v3621, %v3690
        %v3723 = vadd.f32 %v3622, %v3691
        %v3724 = vadd.f32 %v3623, %v3692
        %v3725 = vadd.f32 %v3624, %v3693
        %v3726 = vadd.f32 %v3625, %v3694
        %v3727 = vadd.f32 %v3626, %v3695
        %v3728 = vadd.f32 %v3627, %v3696
        %v3729 = vadd.f32 %v3628, %v3697
        %v3730 = vadd.f32 %v3629, %v3698
        %v3731 = vadd.f32 %v3630, %v3699
        %s3732 = scalar_lea.vmem [#allocation3], 48
        %v3733 = vld [vmem:[%s3732] sm:$0xff]
        %v3734 = vld [vmem:[%s3732 + $0x8] sm:$0xff]
        %v3735 = vld [vmem:[%s3732 + $0x18] sm:$0xff]
        %v3736 = vld [vmem:[%s3732 + $0x20] sm:$0xff]
        %v3737 = vld [vmem:[%s3732 + $0x30] sm:$0xff]
        %v3738 = vld [vmem:[%s3732 + $0x38] sm:$0xff]
        %v3739 = vld [vmem:[%s3732 + $0x48] sm:$0xff]
        %v3740 = vld [vmem:[%s3732 + $0x50] sm:$0xff]
        %v3741 = vld [vmem:[%s3732 + $0x60] sm:$0xff]
        %v3742 = vld [vmem:[%s3732 + $0x68] sm:$0xff]
        %v3743 = vld [vmem:[%s3732 + $0x78] sm:$0xff]
        %v3744 = vld [vmem:[%s3732 + $0x80] sm:$0xff]
        %v3745 = vld [vmem:[%s3732 + $0x90] sm:$0xff]
        %v3746 = vld [vmem:[%s3732 + $0x98] sm:$0xff]
        %v3747 = vld [vmem:[%s3732 + $0xa8] sm:$0xff]
        %v3748 = vld [vmem:[%s3732 + $0xb0] sm:$0xff]
        %v3749 = vld [vmem:[%s3732 + $0xc0] sm:$0xff]
        %v3750 = vld [vmem:[%s3732 + $0xc8] sm:$0xff]
        %v3751 = vld [vmem:[%s3732 + $0xd8] sm:$0xff]
        %v3752 = vld [vmem:[%s3732 + $0xe0] sm:$0xff]
        %v3753 = vld [vmem:[%s3732 + $0xf0] sm:$0xff]
        %v3754 = vld [vmem:[%s3732 + $0xf8] sm:$0xff]
        %v3755 = vld [vmem:[%s3732 + $0x108] sm:$0xff]
        %v3756 = vld [vmem:[%s3732 + $0x110] sm:$0xff]
        %v3757 = vld [vmem:[%s3732 + $0x120] sm:$0xff]
        %v3758 = vld [vmem:[%s3732 + $0x128] sm:$0xff]
        %v3759 = vld [vmem:[%s3732 + $0x138] sm:$0xff]
        %v3760 = vld [vmem:[%s3732 + $0x140] sm:$0xff]
        %v3761 = vld [vmem:[%s3732 + $0x150] sm:$0xff]
        %v3762 = vld [vmem:[%s3732 + $0x158] sm:$0xff]
        %v3763 = vld [vmem:[%s3732 + $0x168] sm:$0xff]
        %v3764 = vld [vmem:[%s3732 + $0x170] sm:$0xff]
        %s3765 = scalar_lea.vmem %s7, 8
        %v3766 = vld [vmem:[%s3765] sm:$0x1]
        %v3767 = vlaneseq
        %v3768 = vshrl.u32 %v3767, 7
        %v3769 = vsub.s32 0, %v3768
        %v3770 = vrot.slane %v3766, %v3769
        %v3771 = vmul.f32 %v3733, %v3770
        %v3772 = vmul.f32 %v3734, %v3770
        %v3773 = vmul.f32 %v3735, %v3770
        %v3774 = vmul.f32 %v3736, %v3770
        %v3775 = vmul.f32 %v3737, %v3770
        %v3776 = vmul.f32 %v3738, %v3770
        %v3777 = vmul.f32 %v3739, %v3770
        %v3778 = vmul.f32 %v3740, %v3770
        %v3779 = vmul.f32 %v3741, %v3770
        %v3780 = vmul.f32 %v3742, %v3770
        %v3781 = vmul.f32 %v3743, %v3770
        %v3782 = vmul.f32 %v3744, %v3770
        %v3783 = vmul.f32 %v3745, %v3770
        %v3784 = vmul.f32 %v3746, %v3770
        %v3785 = vmul.f32 %v3747, %v3770
        %v3786 = vmul.f32 %v3748, %v3770
        %v3787 = vmul.f32 %v3749, %v3770
        %v3788 = vmul.f32 %v3750, %v3770
        %v3789 = vmul.f32 %v3751, %v3770
        %v3790 = vmul.f32 %v3752, %v3770
        %v3791 = vmul.f32 %v3753, %v3770
        %v3792 = vmul.f32 %v3754, %v3770
        %v3793 = vmul.f32 %v3755, %v3770
        %v3794 = vmul.f32 %v3756, %v3770
        %v3795 = vmul.f32 %v3757, %v3770
        %v3796 = vmul.f32 %v3758, %v3770
        %v3797 = vmul.f32 %v3759, %v3770
        %v3798 = vmul.f32 %v3760, %v3770
        %v3799 = vmul.f32 %v3761, %v3770
        %v3800 = vmul.f32 %v3762, %v3770
        %v3801 = vmul.f32 %v3763, %v3770
        %v3802 = vmul.f32 %v3764, %v3770
        %v3803 = vadd.f32 %v3700, %v3771
        %v3804 = vadd.f32 %v3701, %v3772
        %v3805 = vadd.f32 %v3702, %v3773
        %v3806 = vadd.f32 %v3703, %v3774
        %v3807 = vadd.f32 %v3704, %v3775
        %v3808 = vadd.f32 %v3705, %v3776
        %v3809 = vadd.f32 %v3706, %v3777
        %v3810 = vadd.f32 %v3707, %v3778
        %v3811 = vadd.f32 %v3708, %v3779
        %v3812 = vadd.f32 %v3709, %v3780
        %v3813 = vadd.f32 %v3710, %v3781
        %v3814 = vadd.f32 %v3711, %v3782
        %v3815 = vadd.f32 %v3712, %v3783
        %v3816 = vadd.f32 %v3713, %v3784
        %v3817 = vadd.f32 %v3714, %v3785
        %v3818 = vadd.f32 %v3715, %v3786
        %v3819 = vadd.f32 %v3716, %v3787
        %v3820 = vadd.f32 %v3717, %v3788
        %v3821 = vadd.f32 %v3718, %v3789
        %v3822 = vadd.f32 %v3719, %v3790
        %v3823 = vadd.f32 %v3720, %v3791
        %v3824 = vadd.f32 %v3721, %v3792
        %v3825 = vadd.f32 %v3722, %v3793
        %v3826 = vadd.f32 %v3723, %v3794
        %v3827 = vadd.f32 %v3724, %v3795
        %v3828 = vadd.f32 %v3725, %v3796
        %v3829 = vadd.f32 %v3726, %v3797
        %v3830 = vadd.f32 %v3727, %v3798
        %v3831 = vadd.f32 %v3728, %v3799
        %v3832 = vadd.f32 %v3729, %v3800
        %v3833 = vadd.f32 %v3730, %v3801
        %v3834 = vadd.f32 %v3731, %v3802
        %v3835 = vld [vmem:[%s3732 + $0x1] sm:$0xff]
        %v3836 = vld [vmem:[%s3732 + $0x9] sm:$0xff]
        %v3837 = vld [vmem:[%s3732 + $0x19] sm:$0xff]
        %v3838 = vld [vmem:[%s3732 + $0x21] sm:$0xff]
        %v3839 = vld [vmem:[%s3732 + $0x31] sm:$0xff]
        %v3840 = vld [vmem:[%s3732 + $0x39] sm:$0xff]
        %v3841 = vld [vmem:[%s3732 + $0x49] sm:$0xff]
        %v3842 = vld [vmem:[%s3732 + $0x51] sm:$0xff]
        %v3843 = vld [vmem:[%s3732 + $0x61] sm:$0xff]
        %v3844 = vld [vmem:[%s3732 + $0x69] sm:$0xff]
        %v3845 = vld [vmem:[%s3732 + $0x79] sm:$0xff]
        %v3846 = vld [vmem:[%s3732 + $0x81] sm:$0xff]
        %v3847 = vld [vmem:[%s3732 + $0x91] sm:$0xff]
        %v3848 = vld [vmem:[%s3732 + $0x99] sm:$0xff]
        %v3849 = vld [vmem:[%s3732 + $0xa9] sm:$0xff]
        %v3850 = vld [vmem:[%s3732 + $0xb1] sm:$0xff]
        %v3851 = vld [vmem:[%s3732 + $0xc1] sm:$0xff]
        %v3852 = vld [vmem:[%s3732 + $0xc9] sm:$0xff]
        %v3853 = vld [vmem:[%s3732 + $0xd9] sm:$0xff]
        %v3854 = vld [vmem:[%s3732 + $0xe1] sm:$0xff]
        %v3855 = vld [vmem:[%s3732 + $0xf1] sm:$0xff]
        %v3856 = vld [vmem:[%s3732 + $0xf9] sm:$0xff]
        %v3857 = vld [vmem:[%s3732 + $0x109] sm:$0xff]
        %v3858 = vld [vmem:[%s3732 + $0x111] sm:$0xff]
        %v3859 = vld [vmem:[%s3732 + $0x121] sm:$0xff]
        %v3860 = vld [vmem:[%s3732 + $0x129] sm:$0xff]
        %v3861 = vld [vmem:[%s3732 + $0x139] sm:$0xff]
        %v3862 = vld [vmem:[%s3732 + $0x141] sm:$0xff]
        %v3863 = vld [vmem:[%s3732 + $0x151] sm:$0xff]
        %v3864 = vld [vmem:[%s3732 + $0x159] sm:$0xff]
        %v3865 = vld [vmem:[%s3732 + $0x169] sm:$0xff]
        %v3866 = vld [vmem:[%s3732 + $0x171] sm:$0xff]
        %v3867 = vld [vmem:[%s3765 + $0x1] sm:$0x1]
        %v3868 = vlaneseq
        %v3869 = vshrl.u32 %v3868, 7
        %v3870 = vsub.s32 0, %v3869
        %v3871 = vrot.slane %v3867, %v3870
        %v3872 = vmul.f32 %v3835, %v3871
        %v3873 = vmul.f32 %v3836, %v3871
        %v3874 = vmul.f32 %v3837, %v3871
        %v3875 = vmul.f32 %v3838, %v3871
        %v3876 = vmul.f32 %v3839, %v3871
        %v3877 = vmul.f32 %v3840, %v3871
        %v3878 = vmul.f32 %v3841, %v3871
        %v3879 = vmul.f32 %v3842, %v3871
        %v3880 = vmul.f32 %v3843, %v3871
        %v3881 = vmul.f32 %v3844, %v3871
        %v3882 = vmul.f32 %v3845, %v3871
        %v3883 = vmul.f32 %v3846, %v3871
        %v3884 = vmul.f32 %v3847, %v3871
        %v3885 = vmul.f32 %v3848, %v3871
        %v3886 = vmul.f32 %v3849, %v3871
        %v3887 = vmul.f32 %v3850, %v3871
        %v3888 = vmul.f32 %v3851, %v3871
        %v3889 = vmul.f32 %v3852, %v3871
        %v3890 = vmul.f32 %v3853, %v3871
        %v3891 = vmul.f32 %v3854, %v3871
        %v3892 = vmul.f32 %v3855, %v3871
        %v3893 = vmul.f32 %v3856, %v3871
        %v3894 = vmul.f32 %v3857, %v3871
        %v3895 = vmul.f32 %v3858, %v3871
        %v3896 = vmul.f32 %v3859, %v3871
        %v3897 = vmul.f32 %v3860, %v3871
        %v3898 = vmul.f32 %v3861, %v3871
        %v3899 = vmul.f32 %v3862, %v3871
        %v3900 = vmul.f32 %v3863, %v3871
        %v3901 = vmul.f32 %v3864, %v3871
        %v3902 = vmul.f32 %v3865, %v3871
        %v3903 = vmul.f32 %v3866, %v3871
        %v3904 = vadd.f32 %v3803, %v3872
        %v3905 = vadd.f32 %v3804, %v3873
        %v3906 = vadd.f32 %v3805, %v3874
        %v3907 = vadd.f32 %v3806, %v3875
        %v3908 = vadd.f32 %v3807, %v3876
        %v3909 = vadd.f32 %v3808, %v3877
        %v3910 = vadd.f32 %v3809, %v3878
        %v3911 = vadd.f32 %v3810, %v3879
        %v3912 = vadd.f32 %v3811, %v3880
        %v3913 = vadd.f32 %v3812, %v3881
        %v3914 = vadd.f32 %v3813, %v3882
        %v3915 = vadd.f32 %v3814, %v3883
        %v3916 = vadd.f32 %v3815, %v3884
        %v3917 = vadd.f32 %v3816, %v3885
        %v3918 = vadd.f32 %v3817, %v3886
        %v3919 = vadd.f32 %v3818, %v3887
        %v3920 = vadd.f32 %v3819, %v3888
        %v3921 = vadd.f32 %v3820, %v3889
        %v3922 = vadd.f32 %v3821, %v3890
        %v3923 = vadd.f32 %v3822, %v3891
        %v3924 = vadd.f32 %v3823, %v3892
        %v3925 = vadd.f32 %v3824, %v3893
        %v3926 = vadd.f32 %v3825, %v3894
        %v3927 = vadd.f32 %v3826, %v3895
        %v3928 = vadd.f32 %v3827, %v3896
        %v3929 = vadd.f32 %v3828, %v3897
        %v3930 = vadd.f32 %v3829, %v3898
        %v3931 = vadd.f32 %v3830, %v3899
        %v3932 = vadd.f32 %v3831, %v3900
        %v3933 = vadd.f32 %v3832, %v3901
        %v3934 = vadd.f32 %v3833, %v3902
        %v3935 = vadd.f32 %v3834, %v3903
        %v3936 = vld [vmem:[%s3732 + $0x2] sm:$0xff]
        %v3937 = vld [vmem:[%s3732 + $0xa] sm:$0xff]
        %v3938 = vld [vmem:[%s3732 + $0x1a] sm:$0xff]
        %v3939 = vld [vmem:[%s3732 + $0x22] sm:$0xff]
        %v3940 = vld [vmem:[%s3732 + $0x32] sm:$0xff]
        %v3941 = vld [vmem:[%s3732 + $0x3a] sm:$0xff]
        %v3942 = vld [vmem:[%s3732 + $0x4a] sm:$0xff]
        %v3943 = vld [vmem:[%s3732 + $0x52] sm:$0xff]
        %v3944 = vld [vmem:[%s3732 + $0x62] sm:$0xff]
        %v3945 = vld [vmem:[%s3732 + $0x6a] sm:$0xff]
        %v3946 = vld [vmem:[%s3732 + $0x7a] sm:$0xff]
        %v3947 = vld [vmem:[%s3732 + $0x82] sm:$0xff]
        %v3948 = vld [vmem:[%s3732 + $0x92] sm:$0xff]
        %v3949 = vld [vmem:[%s3732 + $0x9a] sm:$0xff]
        %v3950 = vld [vmem:[%s3732 + $0xaa] sm:$0xff]
        %v3951 = vld [vmem:[%s3732 + $0xb2] sm:$0xff]
        %v3952 = vld [vmem:[%s3732 + $0xc2] sm:$0xff]
        %v3953 = vld [vmem:[%s3732 + $0xca] sm:$0xff]
        %v3954 = vld [vmem:[%s3732 + $0xda] sm:$0xff]
        %v3955 = vld [vmem:[%s3732 + $0xe2] sm:$0xff]
        %v3956 = vld [vmem:[%s3732 + $0xf2] sm:$0xff]
        %v3957 = vld [vmem:[%s3732 + $0xfa] sm:$0xff]
        %v3958 = vld [vmem:[%s3732 + $0x10a] sm:$0xff]
        %v3959 = vld [vmem:[%s3732 + $0x112] sm:$0xff]
        %v3960 = vld [vmem:[%s3732 + $0x122] sm:$0xff]
        %v3961 = vld [vmem:[%s3732 + $0x12a] sm:$0xff]
        %v3962 = vld [vmem:[%s3732 + $0x13a] sm:$0xff]
        %v3963 = vld [vmem:[%s3732 + $0x142] sm:$0xff]
        %v3964 = vld [vmem:[%s3732 + $0x152] sm:$0xff]
        %v3965 = vld [vmem:[%s3732 + $0x15a] sm:$0xff]
        %v3966 = vld [vmem:[%s3732 + $0x16a] sm:$0xff]
        %v3967 = vld [vmem:[%s3732 + $0x172] sm:$0xff]
        %v3968 = vld [vmem:[%s3765 + $0x2] sm:$0x1]
        %v3969 = vlaneseq
        %v3970 = vshrl.u32 %v3969, 7
        %v3971 = vsub.s32 0, %v3970
        %v3972 = vrot.slane %v3968, %v3971
        %v3973 = vmul.f32 %v3936, %v3972
        %v3974 = vmul.f32 %v3937, %v3972
        %v3975 = vmul.f32 %v3938, %v3972
        %v3976 = vmul.f32 %v3939, %v3972
        %v3977 = vmul.f32 %v3940, %v3972
        %v3978 = vmul.f32 %v3941, %v3972
        %v3979 = vmul.f32 %v3942, %v3972
        %v3980 = vmul.f32 %v3943, %v3972
        %v3981 = vmul.f32 %v3944, %v3972
        %v3982 = vmul.f32 %v3945, %v3972
        %v3983 = vmul.f32 %v3946, %v3972
        %v3984 = vmul.f32 %v3947, %v3972
        %v3985 = vmul.f32 %v3948, %v3972
        %v3986 = vmul.f32 %v3949, %v3972
        %v3987 = vmul.f32 %v3950, %v3972
        %v3988 = vmul.f32 %v3951, %v3972
        %v3989 = vmul.f32 %v3952, %v3972
        %v3990 = vmul.f32 %v3953, %v3972
        %v3991 = vmul.f32 %v3954, %v3972
        %v3992 = vmul.f32 %v3955, %v3972
        %v3993 = vmul.f32 %v3956, %v3972
        %v3994 = vmul.f32 %v3957, %v3972
        %v3995 = vmul.f32 %v3958, %v3972
        %v3996 = vmul.f32 %v3959, %v3972
        %v3997 = vmul.f32 %v3960, %v3972
        %v3998 = vmul.f32 %v3961, %v3972
        %v3999 = vmul.f32 %v3962, %v3972
        %v4000 = vmul.f32 %v3963, %v3972
        %v4001 = vmul.f32 %v3964, %v3972
        %v4002 = vmul.f32 %v3965, %v3972
        %v4003 = vmul.f32 %v3966, %v3972
        %v4004 = vmul.f32 %v3967, %v3972
        %v4005 = vadd.f32 %v3904, %v3973
        %v4006 = vadd.f32 %v3905, %v3974
        %v4007 = vadd.f32 %v3906, %v3975
        %v4008 = vadd.f32 %v3907, %v3976
        %v4009 = vadd.f32 %v3908, %v3977
        %v4010 = vadd.f32 %v3909, %v3978
        %v4011 = vadd.f32 %v3910, %v3979
        %v4012 = vadd.f32 %v3911, %v3980
        %v4013 = vadd.f32 %v3912, %v3981
        %v4014 = vadd.f32 %v3913, %v3982
        %v4015 = vadd.f32 %v3914, %v3983
        %v4016 = vadd.f32 %v3915, %v3984
        %v4017 = vadd.f32 %v3916, %v3985
        %v4018 = vadd.f32 %v3917, %v3986
        %v4019 = vadd.f32 %v3918, %v3987
        %v4020 = vadd.f32 %v3919, %v3988
        %v4021 = vadd.f32 %v3920, %v3989
        %v4022 = vadd.f32 %v3921, %v3990
        %v4023 = vadd.f32 %v3922, %v3991
        %v4024 = vadd.f32 %v3923, %v3992
        %v4025 = vadd.f32 %v3924, %v3993
        %v4026 = vadd.f32 %v3925, %v3994
        %v4027 = vadd.f32 %v3926, %v3995
        %v4028 = vadd.f32 %v3927, %v3996
        %v4029 = vadd.f32 %v3928, %v3997
        %v4030 = vadd.f32 %v3929, %v3998
        %v4031 = vadd.f32 %v3930, %v3999
        %v4032 = vadd.f32 %v3931, %v4000
        %v4033 = vadd.f32 %v3932, %v4001
        %v4034 = vadd.f32 %v3933, %v4002
        %v4035 = vadd.f32 %v3934, %v4003
        %v4036 = vadd.f32 %v3935, %v4004
        %v4037 = vld [vmem:[%s8] sm:$0x1]
        %v4039 = vlaneseq
        %v4040 = vshrl.u32 %v4039, 7
        %v4041 = vsub.s32 0, %v4040
        %v4042 = vrot.slane %v4037, %v4041
        %v4044 = vadd.f32 %v4005, %v4042
        %v4045 = vadd.f32 %v4006, %v4042
        %v4046 = vadd.f32 %v4007, %v4042
        %v4047 = vadd.f32 %v4008, %v4042
        %v4048 = vadd.f32 %v4009, %v4042
        %v4049 = vadd.f32 %v4010, %v4042
        %v4050 = vadd.f32 %v4011, %v4042
        %v4051 = vadd.f32 %v4012, %v4042
        %v4052 = vadd.f32 %v4013, %v4042
        %v4053 = vadd.f32 %v4014, %v4042
        %v4054 = vadd.f32 %v4015, %v4042
        %v4055 = vadd.f32 %v4016, %v4042
        %v4056 = vadd.f32 %v4017, %v4042
        %v4057 = vadd.f32 %v4018, %v4042
        %v4058 = vadd.f32 %v4019, %v4042
        %v4059 = vadd.f32 %v4020, %v4042
        %v4060 = vadd.f32 %v4021, %v4042
        %v4061 = vadd.f32 %v4022, %v4042
        %v4062 = vadd.f32 %v4023, %v4042
        %v4063 = vadd.f32 %v4024, %v4042
        %v4064 = vadd.f32 %v4025, %v4042
        %v4065 = vadd.f32 %v4026, %v4042
        %v4066 = vadd.f32 %v4027, %v4042
        %v4067 = vadd.f32 %v4028, %v4042
        %v4068 = vadd.f32 %v4029, %v4042
        %v4069 = vadd.f32 %v4030, %v4042
        %v4070 = vadd.f32 %v4031, %v4042
        %v4071 = vadd.f32 %v4032, %v4042
        %v4072 = vadd.f32 %v4033, %v4042
        %v4073 = vadd.f32 %v4034, %v4042
        %v4074 = vadd.f32 %v4035, %v4042
        %v4075 = vadd.f32 %v4036, %v4042
        %v4076 = vmax.f32 %v4044, 0.0
        %v4077 = vmax.f32 %v4045, 0.0
        %v4078 = vmax.f32 %v4046, 0.0
        %v4079 = vmax.f32 %v4047, 0.0
        %v4080 = vmax.f32 %v4048, 0.0
        %v4081 = vmax.f32 %v4049, 0.0
        %v4082 = vmax.f32 %v4050, 0.0
        %v4083 = vmax.f32 %v4051, 0.0
        %v4084 = vmax.f32 %v4052, 0.0
        %v4085 = vmax.f32 %v4053, 0.0
        %v4086 = vmax.f32 %v4054, 0.0
        %v4087 = vmax.f32 %v4055, 0.0
        %v4088 = vmax.f32 %v4056, 0.0
        %v4089 = vmax.f32 %v4057, 0.0
        %v4090 = vmax.f32 %v4058, 0.0
        %v4091 = vmax.f32 %v4059, 0.0
        %v4092 = vmax.f32 %v4060, 0.0
        %v4093 = vmax.f32 %v4061, 0.0
        %v4094 = vmax.f32 %v4062, 0.0
        %v4095 = vmax.f32 %v4063, 0.0
        %v4096 = vmax.f32 %v4064, 0.0
        %v4097 = vmax.f32 %v4065, 0.0
        %v4098 = vmax.f32 %v4066, 0.0
        %v4099 = vmax.f32 %v4067, 0.0
        %v4100 = vmax.f32 %v4068, 0.0
        %v4101 = vmax.f32 %v4069, 0.0
        %v4102 = vmax.f32 %v4070, 0.0
        %v4103 = vmax.f32 %v4071, 0.0
        %v4104 = vmax.f32 %v4072, 0.0
        %v4105 = vmax.f32 %v4073, 0.0
        %v4106 = vmax.f32 %v4074, 0.0
        %v4107 = vmax.f32 %v4075, 0.0
        %v4108 = vmin.f32 %v4076, 6.0
        %v4109 = vmin.f32 %v4077, 6.0
        %v4110 = vmin.f32 %v4078, 6.0
        %v4111 = vmin.f32 %v4079, 6.0
        %v4112 = vmin.f32 %v4080, 6.0
        %v4113 = vmin.f32 %v4081, 6.0
        %v4114 = vmin.f32 %v4082, 6.0
        %v4115 = vmin.f32 %v4083, 6.0
        %v4116 = vmin.f32 %v4084, 6.0
        %v4117 = vmin.f32 %v4085, 6.0
        %v4118 = vmin.f32 %v4086, 6.0
        %v4119 = vmin.f32 %v4087, 6.0
        %v4120 = vmin.f32 %v4088, 6.0
        %v4121 = vmin.f32 %v4089, 6.0
        %v4122 = vmin.f32 %v4090, 6.0
        %v4123 = vmin.f32 %v4091, 6.0
        %v4124 = vmin.f32 %v4092, 6.0
        %v4125 = vmin.f32 %v4093, 6.0
        %v4126 = vmin.f32 %v4094, 6.0
        %v4127 = vmin.f32 %v4095, 6.0
        %v4128 = vmin.f32 %v4096, 6.0
        %v4129 = vmin.f32 %v4097, 6.0
        %v4130 = vmin.f32 %v4098, 6.0
        %v4131 = vmin.f32 %v4099, 6.0
        %v4132 = vmin.f32 %v4100, 6.0
        %v4133 = vmin.f32 %v4101, 6.0
        %v4134 = vmin.f32 %v4102, 6.0
        %v4135 = vmin.f32 %v4103, 6.0
        %v4136 = vmin.f32 %v4104, 6.0
        %v4137 = vmin.f32 %v4105, 6.0
        %v4138 = vmin.f32 %v4106, 6.0
        %v4139 = vmin.f32 %v4107, 6.0
        %v4140 = vld [vmem:[%s9] sm:$0xf]
        %v4141 = vld [vmem:[%s10] sm:$0xff]
        %v4143 = vsel %vm512, %v4108, 0
        %v4146 = vsel %vm512, %v4109, 0
        %v4149 = vsel %vm512, %v4110, 0
        %v4152 = vsel %vm512, %v4111, 0
        %v4155 = vsel %vm512, %v4112, 0
        %v4158 = vsel %vm512, %v4113, 0
        %v4161 = vsel %vm512, %v4114, 0
        %v4164 = vsel %vm512, %v4115, 0
        %v4167 = vsel %vm512, %v4116, 0
        %v4170 = vsel %vm512, %v4117, 0
        %v4173 = vsel %vm512, %v4118, 0
        %v4176 = vsel %vm512, %v4119, 0
        %v4179 = vsel %vm512, %v4120, 0
        %v4182 = vsel %vm512, %v4121, 0
        %v4185 = vsel %vm512, %v4122, 0
        %v4188 = vsel %vm512, %v4123, 0
        %v4191 = vsel %vm512, %v4124, 0
        %v4194 = vsel %vm512, %v4125, 0
        %v4197 = vsel %vm512, %v4126, 0
        %v4200 = vsel %vm512, %v4127, 0
        %v4203 = vsel %vm512, %v4128, 0
        %v4206 = vsel %vm512, %v4129, 0
        %v4209 = vsel %vm512, %v4130, 0
        %v4212 = vsel %vm512, %v4131, 0
        %v4215 = vsel %vm512, %v4132, 0
        %v4218 = vsel %vm512, %v4133, 0
        %v4221 = vsel %vm512, %v4134, 0
        %v4224 = vsel %vm512, %v4135, 0
        %v4227 = vsel %vm512, %v4136, 0
        %v4230 = vsel %vm512, %v4137, 0
        %v4233 = vsel %vm512, %v4138, 0
        %v4236 = vsel %vm512, %v4139, 0
        %4238 = vmatprep.subr.mxu0 0.0
        %4239 = vmatpush1.msra.mxu0 %v4141
        %4240 = vmatprep.subr.mxu0 0.0
        %4241 = vmatpush1.msra.mxu0 0.0
        %4242 = vmatprep.subr.mxu0 0.0
        %4243 = vmatpush1.msra.mxu0 0.0
        %4244 = vmatprep.subr.mxu0 0.0
        %4245 = vmatpush1.msra.mxu0 0.0
        %4246 = vmatprep.subr.mxu0 0.0
        %4247 = vmatpush1.msra.mxu0 0.0
        %4248 = vmatprep.subr.mxu0 0.0
        %4249 = vmatpush1.msra.mxu0 0.0
        %4250 = vmatprep.subr.mxu0 0.0
        %4251 = vmatpush1.msra.mxu0 0.0
        %4252 = vmatprep.subr.mxu0 0.0
        %4253 = vmatpush1.msra.mxu0 0.0
        %4254 = vmatprep.subr.mxu0 0.0
        %4255 = vmatpush1.msra.mxu0 0.0
        %4256 = vmatprep.subr.mxu0 0.0
        %4257 = vmatpush1.msra.mxu0 0.0
        %4258 = vmatprep.subr.mxu0 0.0
        %4259 = vmatpush1.msra.mxu0 0.0
        %4260 = vmatprep.subr.mxu0 0.0
        %4261 = vmatpush1.msra.mxu0 0.0
        %4262 = vmatprep.subr.mxu0 0.0
        %4263 = vmatpush1.msra.mxu0 0.0
        %4264 = vmatprep.subr.mxu0 0.0
        %4265 = vmatpush1.msra.mxu0 0.0
        %4266 = vmatprep.subr.mxu0 0.0
        %4267 = vmatpush1.msra.mxu0 0.0
        %4268 = vmatprep.subr.mxu0 0.0
        %4269 = vmatpush1.msra.mxu0 0.0
        %4270 = vmatprep.subr.mxu0 0.0
        %4271 = vmatpush1.msra.mxu0 0.0
        %4272 = vmatprep.subr.mxu0 0.0
        %4273 = vmatpush1.msra.mxu0 0.0
        %4274 = vmatprep.subr.mxu0 0.0
        %4275 = vmatpush1.msra.mxu0 0.0
        %4276 = vmatprep.subr.mxu0 0.0
        %4277 = vmatpush1.msra.mxu0 0.0
        %4278 = vmatprep.subr.mxu0 0.0
        %4279 = vmatpush1.msra.mxu0 0.0
        %4280 = vmatprep.subr.mxu0 0.0
        %4281 = vmatpush1.msra.mxu0 0.0
        %4282 = vmatprep.subr.mxu0 0.0
        %4283 = vmatpush1.msra.mxu0 0.0
        %4284 = vmatprep.subr.mxu0 0.0
        %4285 = vmatpush1.msra.mxu0 0.0
        %4286 = vmatprep.subr.mxu0 0.0
        %4287 = vmatpush1.msra.mxu0 0.0
        %4288 = vmatprep.subr.mxu0 0.0
        %4289 = vmatpush1.msra.mxu0 0.0
        %4290 = vmatprep.subr.mxu0 0.0
        %4291 = vmatpush1.msra.mxu0 0.0
        %4292 = vmatprep.subr.mxu0 0.0
        %4293 = vmatpush1.msra.mxu0 0.0
        %4294 = vmatprep.subr.mxu0 0.0
        %4295 = vmatpush1.msra.mxu0 0.0
        %4296 = vmatprep.subr.mxu0 0.0
        %4297 = vmatpush1.msra.mxu0 0.0
        %4298 = vmatprep.subr.mxu0 0.0
        %4299 = vmatpush1.msra.mxu0 0.0
        %4300 = vmatprep.subr.mxu0 0.0
        %4301 = vmatpush1.msra.mxu0 0.0
        %4302 = vmatprep.mubr.f32.mxu0 0.0
        %4303 = vmatmul.mubr.f32.gmra.mrb[0].mxu0 %v4143
        %v4304 = vpop.f32.mrb[0].mxu0
        %v4305 = vadd.f32 0.0, %v4304
        %v4306 = vpop.f32.mrb[0].mxu0
        %4307 = vmatprep.mubr.f32.mxu0 0.0
        %4308 = vmatmul.mubr.f32.gmra.mrb[0].mxu0 %v4146
        %v4309 = vpop.f32.mrb[0].mxu0
        %v4310 = vadd.f32 0.0, %v4309
        %v4311 = vpop.f32.mrb[0].mxu0
        %4312 = vmatprep.mubr.f32.mxu0 0.0
        %4313 = vmatmul.mubr.f32.gmra.mrb[0].mxu0 %v4149
        %v4314 = vpop.f32.mrb[0].mxu0
        %v4315 = vadd.f32 0.0, %v4314
        %v4316 = vpop.f32.mrb[0].mxu0
        %4317 = vmatprep.mubr.f32.mxu0 0.0
        %4318 = vmatmul.mubr.f32.gmra.mrb[0].mxu0 %v4152
        %v4319 = vpop.f32.mrb[0].mxu0
        %v4320 = vadd.f32 0.0, %v4319
        %v4321 = vpop.f32.mrb[0].mxu0
        %4322 = vmatprep.mubr.f32.mxu0 0.0
        %4323 = vmatmul.mubr.f32.gmra.mrb[0].mxu0 %v4155
        %v4324 = vpop.f32.mrb[0].mxu0
        %v4325 = vadd.f32 0.0, %v4324
        %v4326 = vpop.f32.mrb[0].mxu0
        %4327 = vmatprep.mubr.f32.mxu0 0.0
        %4328 = vmatmul.mubr.f32.gmra.mrb[0].mxu0 %v4158
        %v4329 = vpop.f32.mrb[0].mxu0
        %v4330 = vadd.f32 0.0, %v4329
        %v4331 = vpop.f32.mrb[0].mxu0
        %4332 = vmatprep.mubr.f32.mxu0 0.0
        %4333 = vmatmul.mubr.f32.gmra.mrb[0].mxu0 %v4161
        %v4334 = vpop.f32.mrb[0].mxu0
        %v4335 = vadd.f32 0.0, %v4334
        %v4336 = vpop.f32.mrb[0].mxu0
        %4337 = vmatprep.mubr.f32.mxu0 0.0
        %4338 = vmatmul.mubr.f32.gmra.mrb[0].mxu0 %v4164
        %v4339 = vpop.f32.mrb[0].mxu0
        %v4340 = vadd.f32 0.0, %v4339
        %v4341 = vpop.f32.mrb[0].mxu0
        %4342 = vmatprep.mubr.f32.mxu0 0.0
        %4343 = vmatmul.mubr.f32.gmra.mrb[0].mxu0 %v4167
        %v4344 = vpop.f32.mrb[0].mxu0
        %v4345 = vadd.f32 0.0, %v4344
        %v4346 = vpop.f32.mrb[0].mxu0
        %4347 = vmatprep.mubr.f32.mxu0 0.0
        %4348 = vmatmul.mubr.f32.gmra.mrb[0].mxu0 %v4170
        %v4349 = vpop.f32.mrb[0].mxu0
        %v4350 = vadd.f32 0.0, %v4349
        %v4351 = vpop.f32.mrb[0].mxu0
        %4352 = vmatprep.mubr.f32.mxu0 0.0
        %4353 = vmatmul.mubr.f32.gmra.mrb[0].mxu0 %v4173
        %v4354 = vpop.f32.mrb[0].mxu0
        %v4355 = vadd.f32 0.0, %v4354
        %v4356 = vpop.f32.mrb[0].mxu0
        %4357 = vmatprep.mubr.f32.mxu0 0.0
        %4358 = vmatmul.mubr.f32.gmra.mrb[0].mxu0 %v4176
        %v4359 = vpop.f32.mrb[0].mxu0
        %v4360 = vadd.f32 0.0, %v4359
        %v4361 = vpop.f32.mrb[0].mxu0
        %4362 = vmatprep.mubr.f32.mxu0 0.0
        %4363 = vmatmul.mubr.f32.gmra.mrb[0].mxu0 %v4179
        %v4364 = vpop.f32.mrb[0].mxu0
        %v4365 = vadd.f32 0.0, %v4364
        %v4366 = vpop.f32.mrb[0].mxu0
        %4367 = vmatprep.mubr.f32.mxu0 0.0
        %4368 = vmatmul.mubr.f32.gmra.mrb[0].mxu0 %v4182
        %v4369 = vpop.f32.mrb[0].mxu0
        %v4370 = vadd.f32 0.0, %v4369
        %v4371 = vpop.f32.mrb[0].mxu0
        %4372 = vmatprep.mubr.f32.mxu0 0.0
        %4373 = vmatmul.mubr.f32.gmra.mrb[0].mxu0 %v4185
        %v4374 = vpop.f32.mrb[0].mxu0
        %v4375 = vadd.f32 0.0, %v4374
        %v4376 = vpop.f32.mrb[0].mxu0
        %4377 = vmatprep.mubr.f32.mxu0 0.0
        %4378 = vmatmul.mubr.f32.gmra.mrb[0].mxu0 %v4188
        %v4379 = vpop.f32.mrb[0].mxu0
        %v4380 = vadd.f32 0.0, %v4379
        %v4381 = vpop.f32.mrb[0].mxu0
        %4382 = vmatprep.mubr.f32.mxu0 0.0
        %4383 = vmatmul.mubr.f32.gmra.mrb[0].mxu0 %v4191
        %v4384 = vpop.f32.mrb[0].mxu0
        %v4385 = vadd.f32 0.0, %v4384
        %v4386 = vpop.f32.mrb[0].mxu0
        %4387 = vmatprep.mubr.f32.mxu0 0.0
        %4388 = vmatmul.mubr.f32.gmra.mrb[0].mxu0 %v4194
        %v4389 = vpop.f32.mrb[0].mxu0
        %v4390 = vadd.f32 0.0, %v4389
        %v4391 = vpop.f32.mrb[0].mxu0
        %4392 = vmatprep.mubr.f32.mxu0 0.0
        %4393 = vmatmul.mubr.f32.gmra.mrb[0].mxu0 %v4197
        %v4394 = vpop.f32.mrb[0].mxu0
        %v4395 = vadd.f32 0.0, %v4394
        %v4396 = vpop.f32.mrb[0].mxu0
        %4397 = vmatprep.mubr.f32.mxu0 0.0
        %4398 = vmatmul.mubr.f32.gmra.mrb[0].mxu0 %v4200
        %v4399 = vpop.f32.mrb[0].mxu0
        %v4400 = vadd.f32 0.0, %v4399
        %v4401 = vpop.f32.mrb[0].mxu0
        %4402 = vmatprep.mubr.f32.mxu0 0.0
        %4403 = vmatmul.mubr.f32.gmra.mrb[0].mxu0 %v4203
        %v4404 = vpop.f32.mrb[0].mxu0
        %v4405 = vadd.f32 0.0, %v4404
        %v4406 = vpop.f32.mrb[0].mxu0
        %4407 = vmatprep.mubr.f32.mxu0 0.0
        %4408 = vmatmul.mubr.f32.gmra.mrb[0].mxu0 %v4206
        %v4409 = vpop.f32.mrb[0].mxu0
        %v4410 = vadd.f32 0.0, %v4409
        %v4411 = vpop.f32.mrb[0].mxu0
        %4412 = vmatprep.mubr.f32.mxu0 0.0
        %4413 = vmatmul.mubr.f32.gmra.mrb[0].mxu0 %v4209
        %v4414 = vpop.f32.mrb[0].mxu0
        %v4415 = vadd.f32 0.0, %v4414
        %v4416 = vpop.f32.mrb[0].mxu0
        %4417 = vmatprep.mubr.f32.mxu0 0.0
        %4418 = vmatmul.mubr.f32.gmra.mrb[0].mxu0 %v4212
        %v4419 = vpop.f32.mrb[0].mxu0
        %v4420 = vadd.f32 0.0, %v4419
        %v4421 = vpop.f32.mrb[0].mxu0
        %4422 = vmatprep.mubr.f32.mxu0 0.0
        %4423 = vmatmul.mubr.f32.gmra.mrb[0].mxu0 %v4215
        %v4424 = vpop.f32.mrb[0].mxu0
        %v4425 = vadd.f32 0.0, %v4424
        %v4426 = vpop.f32.mrb[0].mxu0
        %4427 = vmatprep.mubr.f32.mxu0 0.0
        %4428 = vmatmul.mubr.f32.gmra.mrb[0].mxu0 %v4218
        %v4429 = vpop.f32.mrb[0].mxu0
        %v4430 = vadd.f32 0.0, %v4429
        %v4431 = vpop.f32.mrb[0].mxu0
        %4432 = vmatprep.mubr.f32.mxu0 0.0
        %4433 = vmatmul.mubr.f32.gmra.mrb[0].mxu0 %v4221
        %v4434 = vpop.f32.mrb[0].mxu0
        %v4435 = vadd.f32 0.0, %v4434
        %v4436 = vpop.f32.mrb[0].mxu0
        %4437 = vmatprep.mubr.f32.mxu0 0.0
        %4438 = vmatmul.mubr.f32.gmra.mrb[0].mxu0 %v4224
        %v4439 = vpop.f32.mrb[0].mxu0
        %v4440 = vadd.f32 0.0, %v4439
        %v4441 = vpop.f32.mrb[0].mxu0
        %4442 = vmatprep.mubr.f32.mxu0 0.0
        %4443 = vmatmul.mubr.f32.gmra.mrb[0].mxu0 %v4227
        %v4444 = vpop.f32.mrb[0].mxu0
        %v4445 = vadd.f32 0.0, %v4444
        %v4446 = vpop.f32.mrb[0].mxu0
        %4447 = vmatprep.mubr.f32.mxu0 0.0
        %4448 = vmatmul.mubr.f32.gmra.mrb[0].mxu0 %v4230
        %v4449 = vpop.f32.mrb[0].mxu0
        %v4450 = vadd.f32 0.0, %v4449
        %v4451 = vpop.f32.mrb[0].mxu0
        %4452 = vmatprep.mubr.f32.mxu0 0.0
        %4453 = vmatmul.mubr.f32.gmra.mrb[0].mxu0 %v4233
        %v4454 = vpop.f32.mrb[0].mxu0
        %v4455 = vadd.f32 0.0, %v4454
        %v4456 = vpop.f32.mrb[0].mxu0
        %4457 = vmatprep.mubr.f32.mxu0 0.0
        %4458 = vmatmul.mubr.f32.gmra.mrb[0].mxu0 %v4236
        %v4459 = vpop.f32.mrb[0].mxu0
        %v4460 = vadd.f32 0.0, %v4459
        %v4461 = vpop.f32.mrb[0].mxu0
        %4462 = vdwg.mxu0
        %v4464 = vsel %vm466, %v3093, 0
        %v4467 = vsel %vm466, %v3094, 0
        %v4470 = vsel %vm466, %v3095, 0
        %v4473 = vsel %vm466, %v3096, 0
        %v4476 = vsel %vm466, %v3097, 0
        %v4479 = vsel %vm466, %v3098, 0
        %v4482 = vsel %vm466, %v3099, 0
        %v4485 = vsel %vm466, %v3100, 0
        %v4488 = vsel %vm466, %v3101, 0
        %v4491 = vsel %vm466, %v3102, 0
        %v4494 = vsel %vm466, %v3103, 0
        %v4497 = vsel %vm466, %v3104, 0
        %v4500 = vsel %vm466, %v3105, 0
        %v4503 = vsel %vm466, %v3106, 0
        %v4506 = vsel %vm466, %v3107, 0
        %v4509 = vsel %vm466, %v3108, 0
        %v4512 = vsel %vm466, %v3109, 0
        %v4515 = vsel %vm466, %v3110, 0
        %v4518 = vsel %vm466, %v3111, 0
        %v4521 = vsel %vm466, %v3112, 0
        %v4524 = vsel %vm466, %v3113, 0
        %v4527 = vsel %vm466, %v3114, 0
        %v4530 = vsel %vm466, %v3115, 0
        %v4533 = vsel %vm466, %v3116, 0
        %v4536 = vsel %vm466, %v3117, 0
        %v4539 = vsel %vm466, %v3118, 0
        %v4542 = vsel %vm466, %v3119, 0
        %v4545 = vsel %vm466, %v3120, 0
        %v4548 = vsel %vm466, %v3121, 0
        %v4551 = vsel %vm466, %v3122, 0
        %v4554 = vsel %vm466, %v3123, 0
        %v4557 = vsel %vm466, %v3124, 0
        %v4560 = vsel %vm1785, %v4140, 0
        %4562 = vmatprep.subr.mxu0 0.0
        %4563 = vmatpush1.msra.mxu0 %v4560
        %4564 = vmatprep.subr.mxu0 0.0
        %4565 = vmatpush1.msra.mxu0 0.0
        %4566 = vmatprep.subr.mxu0 0.0
        %4567 = vmatpush1.msra.mxu0 0.0
        %4568 = vmatprep.subr.mxu0 0.0
        %4569 = vmatpush1.msra.mxu0 0.0
        %4570 = vmatprep.subr.mxu0 0.0
        %4571 = vmatpush1.msra.mxu0 0.0
        %4572 = vmatprep.subr.mxu0 0.0
        %4573 = vmatpush1.msra.mxu0 0.0
        %4574 = vmatprep.subr.mxu0 0.0
        %4575 = vmatpush1.msra.mxu0 0.0
        %4576 = vmatprep.subr.mxu0 0.0
        %4577 = vmatpush1.msra.mxu0 0.0
        %4578 = vmatprep.subr.mxu0 0.0
        %4579 = vmatpush1.msra.mxu0 0.0
        %4580 = vmatprep.subr.mxu0 0.0
        %4581 = vmatpush1.msra.mxu0 0.0
        %4582 = vmatprep.subr.mxu0 0.0
        %4583 = vmatpush1.msra.mxu0 0.0
        %4584 = vmatprep.subr.mxu0 0.0
        %4585 = vmatpush1.msra.mxu0 0.0
        %4586 = vmatprep.subr.mxu0 0.0
        %4587 = vmatpush1.msra.mxu0 0.0
        %4588 = vmatprep.subr.mxu0 0.0
        %4589 = vmatpush1.msra.mxu0 0.0
        %4590 = vmatprep.subr.mxu0 0.0
        %4591 = vmatpush1.msra.mxu0 0.0
        %4592 = vmatprep.subr.mxu0 0.0
        %4593 = vmatpush1.msra.mxu0 0.0
        %4594 = vmatprep.subr.mxu0 0.0
        %4595 = vmatpush1.msra.mxu0 0.0
        %4596 = vmatprep.subr.mxu0 0.0
        %4597 = vmatpush1.msra.mxu0 0.0
        %4598 = vmatprep.subr.mxu0 0.0
        %4599 = vmatpush1.msra.mxu0 0.0
        %4600 = vmatprep.subr.mxu0 0.0
        %4601 = vmatpush1.msra.mxu0 0.0
        %4602 = vmatprep.subr.mxu0 0.0
        %4603 = vmatpush1.msra.mxu0 0.0
        %4604 = vmatprep.subr.mxu0 0.0
        %4605 = vmatpush1.msra.mxu0 0.0
        %4606 = vmatprep.subr.mxu0 0.0
        %4607 = vmatpush1.msra.mxu0 0.0
        %4608 = vmatprep.subr.mxu0 0.0
        %4609 = vmatpush1.msra.mxu0 0.0
        %4610 = vmatprep.subr.mxu0 0.0
        %4611 = vmatpush1.msra.mxu0 0.0
        %4612 = vmatprep.subr.mxu0 0.0
        %4613 = vmatpush1.msra.mxu0 0.0
        %4614 = vmatprep.subr.mxu0 0.0
        %4615 = vmatpush1.msra.mxu0 0.0
        %4616 = vmatprep.subr.mxu0 0.0
        %4617 = vmatpush1.msra.mxu0 0.0
        %4618 = vmatprep.subr.mxu0 0.0
        %4619 = vmatpush1.msra.mxu0 0.0
        %4620 = vmatprep.subr.mxu0 0.0
        %4621 = vmatpush1.msra.mxu0 0.0
        %4622 = vmatprep.subr.mxu0 0.0
        %4623 = vmatpush1.msra.mxu0 0.0
        %4624 = vmatprep.subr.mxu0 0.0
        %4625 = vmatpush1.msra.mxu0 0.0
        %4626 = vmatprep.mubr.f32.mxu0 0.0
        %4627 = vmatmul.mubr.f32.gmra.mrb[0].mxu0 %v4464
        %v4628 = vpop.f32.mrb[0].mxu0
        %v4629 = vadd.f32 %v4305, %v4628
        %v4630 = vpop.f32.mrb[0].mxu0
        %4631 = vmatprep.mubr.f32.mxu0 0.0
        %4632 = vmatmul.mubr.f32.gmra.mrb[0].mxu0 %v4467
        %v4633 = vpop.f32.mrb[0].mxu0
        %v4634 = vadd.f32 %v4310, %v4633
        %v4635 = vpop.f32.mrb[0].mxu0
        %4636 = vmatprep.mubr.f32.mxu0 0.0
        %4637 = vmatmul.mubr.f32.gmra.mrb[0].mxu0 %v4470
        %v4638 = vpop.f32.mrb[0].mxu0
        %v4639 = vadd.f32 %v4315, %v4638
        %v4640 = vpop.f32.mrb[0].mxu0
        %4641 = vmatprep.mubr.f32.mxu0 0.0
        %4642 = vmatmul.mubr.f32.gmra.mrb[0].mxu0 %v4473
        %v4643 = vpop.f32.mrb[0].mxu0
        %v4644 = vadd.f32 %v4320, %v4643
        %v4645 = vpop.f32.mrb[0].mxu0
        %4646 = vmatprep.mubr.f32.mxu0 0.0
        %4647 = vmatmul.mubr.f32.gmra.mrb[0].mxu0 %v4476
        %v4648 = vpop.f32.mrb[0].mxu0
        %v4649 = vadd.f32 %v4325, %v4648
        %v4650 = vpop.f32.mrb[0].mxu0
        %4651 = vmatprep.mubr.f32.mxu0 0.0
        %4652 = vmatmul.mubr.f32.gmra.mrb[0].mxu0 %v4479
        %v4653 = vpop.f32.mrb[0].mxu0
        %v4654 = vadd.f32 %v4330, %v4653
        %v4655 = vpop.f32.mrb[0].mxu0
        %4656 = vmatprep.mubr.f32.mxu0 0.0
        %4657 = vmatmul.mubr.f32.gmra.mrb[0].mxu0 %v4482
        %v4658 = vpop.f32.mrb[0].mxu0
        %v4659 = vadd.f32 %v4335, %v4658
        %v4660 = vpop.f32.mrb[0].mxu0
        %4661 = vmatprep.mubr.f32.mxu0 0.0
        %4662 = vmatmul.mubr.f32.gmra.mrb[0].mxu0 %v4485
        %v4663 = vpop.f32.mrb[0].mxu0
        %v4664 = vadd.f32 %v4340, %v4663
        %v4665 = vpop.f32.mrb[0].mxu0
        %4666 = vmatprep.mubr.f32.mxu0 0.0
        %4667 = vmatmul.mubr.f32.gmra.mrb[0].mxu0 %v4488
        %v4668 = vpop.f32.mrb[0].mxu0
        %v4669 = vadd.f32 %v4345, %v4668
        %v4670 = vpop.f32.mrb[0].mxu0
        %4671 = vmatprep.mubr.f32.mxu0 0.0
        %4672 = vmatmul.mubr.f32.gmra.mrb[0].mxu0 %v4491
        %v4673 = vpop.f32.mrb[0].mxu0
        %v4674 = vadd.f32 %v4350, %v4673
        %v4675 = vpop.f32.mrb[0].mxu0
        %4676 = vmatprep.mubr.f32.mxu0 0.0
        %4677 = vmatmul.mubr.f32.gmra.mrb[0].mxu0 %v4494
        %v4678 = vpop.f32.mrb[0].mxu0
        %v4679 = vadd.f32 %v4355, %v4678
        %v4680 = vpop.f32.mrb[0].mxu0
        %4681 = vmatprep.mubr.f32.mxu0 0.0
        %4682 = vmatmul.mubr.f32.gmra.mrb[0].mxu0 %v4497
        %v4683 = vpop.f32.mrb[0].mxu0
        %v4684 = vadd.f32 %v4360, %v4683
        %v4685 = vpop.f32.mrb[0].mxu0
        %4686 = vmatprep.mubr.f32.mxu0 0.0
        %4687 = vmatmul.mubr.f32.gmra.mrb[0].mxu0 %v4500
        %v4688 = vpop.f32.mrb[0].mxu0
        %v4689 = vadd.f32 %v4365, %v4688
        %v4690 = vpop.f32.mrb[0].mxu0
        %4691 = vmatprep.mubr.f32.mxu0 0.0
        %4692 = vmatmul.mubr.f32.gmra.mrb[0].mxu0 %v4503
        %v4693 = vpop.f32.mrb[0].mxu0
        %v4694 = vadd.f32 %v4370, %v4693
        %v4695 = vpop.f32.mrb[0].mxu0
        %4696 = vmatprep.mubr.f32.mxu0 0.0
        %4697 = vmatmul.mubr.f32.gmra.mrb[0].mxu0 %v4506
        %v4698 = vpop.f32.mrb[0].mxu0
        %v4699 = vadd.f32 %v4375, %v4698
        %v4700 = vpop.f32.mrb[0].mxu0
        %4701 = vmatprep.mubr.f32.mxu0 0.0
        %4702 = vmatmul.mubr.f32.gmra.mrb[0].mxu0 %v4509
        %v4703 = vpop.f32.mrb[0].mxu0
        %v4704 = vadd.f32 %v4380, %v4703
        %v4705 = vpop.f32.mrb[0].mxu0
        %4706 = vmatprep.mubr.f32.mxu0 0.0
        %4707 = vmatmul.mubr.f32.gmra.mrb[0].mxu0 %v4512
        %v4708 = vpop.f32.mrb[0].mxu0
        %v4709 = vadd.f32 %v4385, %v4708
        %v4710 = vpop.f32.mrb[0].mxu0
        %4711 = vmatprep.mubr.f32.mxu0 0.0
        %4712 = vmatmul.mubr.f32.gmra.mrb[0].mxu0 %v4515
        %v4713 = vpop.f32.mrb[0].mxu0
        %v4714 = vadd.f32 %v4390, %v4713
        %v4715 = vpop.f32.mrb[0].mxu0
        %4716 = vmatprep.mubr.f32.mxu0 0.0
        %4717 = vmatmul.mubr.f32.gmra.mrb[0].mxu0 %v4518
        %v4718 = vpop.f32.mrb[0].mxu0
        %v4719 = vadd.f32 %v4395, %v4718
        %v4720 = vpop.f32.mrb[0].mxu0
        %4721 = vmatprep.mubr.f32.mxu0 0.0
        %4722 = vmatmul.mubr.f32.gmra.mrb[0].mxu0 %v4521
        %v4723 = vpop.f32.mrb[0].mxu0
        %v4724 = vadd.f32 %v4400, %v4723
        %v4725 = vpop.f32.mrb[0].mxu0
        %4726 = vmatprep.mubr.f32.mxu0 0.0
        %4727 = vmatmul.mubr.f32.gmra.mrb[0].mxu0 %v4524
        %v4728 = vpop.f32.mrb[0].mxu0
        %v4729 = vadd.f32 %v4405, %v4728
        %v4730 = vpop.f32.mrb[0].mxu0
        %4731 = vmatprep.mubr.f32.mxu0 0.0
        %4732 = vmatmul.mubr.f32.gmra.mrb[0].mxu0 %v4527
        %v4733 = vpop.f32.mrb[0].mxu0
        %v4734 = vadd.f32 %v4410, %v4733
        %v4735 = vpop.f32.mrb[0].mxu0
        %4736 = vmatprep.mubr.f32.mxu0 0.0
        %4737 = vmatmul.mubr.f32.gmra.mrb[0].mxu0 %v4530
        %v4738 = vpop.f32.mrb[0].mxu0
        %v4739 = vadd.f32 %v4415, %v4738
        %v4740 = vpop.f32.mrb[0].mxu0
        %4741 = vmatprep.mubr.f32.mxu0 0.0
        %4742 = vmatmul.mubr.f32.gmra.mrb[0].mxu0 %v4533
        %v4743 = vpop.f32.mrb[0].mxu0
        %v4744 = vadd.f32 %v4420, %v4743
        %v4745 = vpop.f32.mrb[0].mxu0
        %4746 = vmatprep.mubr.f32.mxu0 0.0
        %4747 = vmatmul.mubr.f32.gmra.mrb[0].mxu0 %v4536
        %v4748 = vpop.f32.mrb[0].mxu0
        %v4749 = vadd.f32 %v4425, %v4748
        %v4750 = vpop.f32.mrb[0].mxu0
        %4751 = vmatprep.mubr.f32.mxu0 0.0
        %4752 = vmatmul.mubr.f32.gmra.mrb[0].mxu0 %v4539
        %v4753 = vpop.f32.mrb[0].mxu0
        %v4754 = vadd.f32 %v4430, %v4753
        %v4755 = vpop.f32.mrb[0].mxu0
        %4756 = vmatprep.mubr.f32.mxu0 0.0
        %4757 = vmatmul.mubr.f32.gmra.mrb[0].mxu0 %v4542
        %v4758 = vpop.f32.mrb[0].mxu0
        %v4759 = vadd.f32 %v4435, %v4758
        %v4760 = vpop.f32.mrb[0].mxu0
        %4761 = vmatprep.mubr.f32.mxu0 0.0
        %4762 = vmatmul.mubr.f32.gmra.mrb[0].mxu0 %v4545
        %v4763 = vpop.f32.mrb[0].mxu0
        %v4764 = vadd.f32 %v4440, %v4763
        %v4765 = vpop.f32.mrb[0].mxu0
        %4766 = vmatprep.mubr.f32.mxu0 0.0
        %4767 = vmatmul.mubr.f32.gmra.mrb[0].mxu0 %v4548
        %v4768 = vpop.f32.mrb[0].mxu0
        %v4769 = vadd.f32 %v4445, %v4768
        %v4770 = vpop.f32.mrb[0].mxu0
        %4771 = vmatprep.mubr.f32.mxu0 0.0
        %4772 = vmatmul.mubr.f32.gmra.mrb[0].mxu0 %v4551
        %v4773 = vpop.f32.mrb[0].mxu0
        %v4774 = vadd.f32 %v4450, %v4773
        %v4775 = vpop.f32.mrb[0].mxu0
        %4776 = vmatprep.mubr.f32.mxu0 0.0
        %4777 = vmatmul.mubr.f32.gmra.mrb[0].mxu0 %v4554
        %v4778 = vpop.f32.mrb[0].mxu0
        %v4779 = vadd.f32 %v4455, %v4778
        %v4780 = vpop.f32.mrb[0].mxu0
        %4781 = vmatprep.mubr.f32.mxu0 0.0
        %4782 = vmatmul.mubr.f32.gmra.mrb[0].mxu0 %v4557
        %v4783 = vpop.f32.mrb[0].mxu0
        %v4784 = vadd.f32 %v4460, %v4783
        %v4785 = vpop.f32.mrb[0].mxu0
        %4786 = vdwg.mxu0
        %v4787 = vld [vmem:[%s11] sm:$0x1]
        %v4789 = vlaneseq
        %v4790 = vshrl.u32 %v4789, 7
        %v4791 = vsub.s32 0, %v4790
        %v4792 = vrot.slane %v4787, %v4791
        %v4794 = vadd.f32 %v4629, %v4792
        %v4795 = vadd.f32 %v4634, %v4792
        %v4796 = vadd.f32 %v4639, %v4792
        %v4797 = vadd.f32 %v4644, %v4792
        %v4798 = vadd.f32 %v4649, %v4792
        %v4799 = vadd.f32 %v4654, %v4792
        %v4800 = vadd.f32 %v4659, %v4792
        %v4801 = vadd.f32 %v4664, %v4792
        %v4802 = vadd.f32 %v4669, %v4792
        %v4803 = vadd.f32 %v4674, %v4792
        %v4804 = vadd.f32 %v4679, %v4792
        %v4805 = vadd.f32 %v4684, %v4792
        %v4806 = vadd.f32 %v4689, %v4792
        %v4807 = vadd.f32 %v4694, %v4792
        %v4808 = vadd.f32 %v4699, %v4792
        %v4809 = vadd.f32 %v4704, %v4792
        %v4810 = vadd.f32 %v4709, %v4792
        %v4811 = vadd.f32 %v4714, %v4792
        %v4812 = vadd.f32 %v4719, %v4792
        %v4813 = vadd.f32 %v4724, %v4792
        %v4814 = vadd.f32 %v4729, %v4792
        %v4815 = vadd.f32 %v4734, %v4792
        %v4816 = vadd.f32 %v4739, %v4792
        %v4817 = vadd.f32 %v4744, %v4792
        %v4818 = vadd.f32 %v4749, %v4792
        %v4819 = vadd.f32 %v4754, %v4792
        %v4820 = vadd.f32 %v4759, %v4792
        %v4821 = vadd.f32 %v4764, %v4792
        %v4822 = vadd.f32 %v4769, %v4792
        %v4823 = vadd.f32 %v4774, %v4792
        %v4824 = vadd.f32 %v4779, %v4792
        %v4825 = vadd.f32 %v4784, %v4792
        %v4826 = vmax.f32 %v4794, 0.0
        %v4827 = vmax.f32 %v4795, 0.0
        %v4828 = vmax.f32 %v4796, 0.0
        %v4829 = vmax.f32 %v4797, 0.0
        %v4830 = vmax.f32 %v4798, 0.0
        %v4831 = vmax.f32 %v4799, 0.0
        %v4832 = vmax.f32 %v4800, 0.0
        %v4833 = vmax.f32 %v4801, 0.0
        %v4834 = vmax.f32 %v4802, 0.0
        %v4835 = vmax.f32 %v4803, 0.0
        %v4836 = vmax.f32 %v4804, 0.0
        %v4837 = vmax.f32 %v4805, 0.0
        %v4838 = vmax.f32 %v4806, 0.0
        %v4839 = vmax.f32 %v4807, 0.0
        %v4840 = vmax.f32 %v4808, 0.0
        %v4841 = vmax.f32 %v4809, 0.0
        %v4842 = vmax.f32 %v4810, 0.0
        %v4843 = vmax.f32 %v4811, 0.0
        %v4844 = vmax.f32 %v4812, 0.0
        %v4845 = vmax.f32 %v4813, 0.0
        %v4846 = vmax.f32 %v4814, 0.0
        %v4847 = vmax.f32 %v4815, 0.0
        %v4848 = vmax.f32 %v4816, 0.0
        %v4849 = vmax.f32 %v4817, 0.0
        %v4850 = vmax.f32 %v4818, 0.0
        %v4851 = vmax.f32 %v4819, 0.0
        %v4852 = vmax.f32 %v4820, 0.0
        %v4853 = vmax.f32 %v4821, 0.0
        %v4854 = vmax.f32 %v4822, 0.0
        %v4855 = vmax.f32 %v4823, 0.0
        %v4856 = vmax.f32 %v4824, 0.0
        %v4857 = vmax.f32 %v4825, 0.0
        %v4858 = vmin.f32 %v4826, 6.0
        %v4859 = vmin.f32 %v4827, 6.0
        %v4860 = vmin.f32 %v4828, 6.0
        %v4861 = vmin.f32 %v4829, 6.0
        %v4862 = vmin.f32 %v4830, 6.0
        %v4863 = vmin.f32 %v4831, 6.0
        %v4864 = vmin.f32 %v4832, 6.0
        %v4865 = vmin.f32 %v4833, 6.0
        %v4866 = vmin.f32 %v4834, 6.0
        %v4867 = vmin.f32 %v4835, 6.0
        %v4868 = vmin.f32 %v4836, 6.0
        %v4869 = vmin.f32 %v4837, 6.0
        %v4870 = vmin.f32 %v4838, 6.0
        %v4871 = vmin.f32 %v4839, 6.0
        %v4872 = vmin.f32 %v4840, 6.0
        %v4873 = vmin.f32 %v4841, 6.0
        %v4874 = vmin.f32 %v4842, 6.0
        %v4875 = vmin.f32 %v4843, 6.0
        %v4876 = vmin.f32 %v4844, 6.0
        %v4877 = vmin.f32 %v4845, 6.0
        %v4878 = vmin.f32 %v4846, 6.0
        %v4879 = vmin.f32 %v4847, 6.0
        %v4880 = vmin.f32 %v4848, 6.0
        %v4881 = vmin.f32 %v4849, 6.0
        %v4882 = vmin.f32 %v4850, 6.0
        %v4883 = vmin.f32 %v4851, 6.0
        %v4884 = vmin.f32 %v4852, 6.0
        %v4885 = vmin.f32 %v4853, 6.0
        %v4886 = vmin.f32 %v4854, 6.0
        %v4887 = vmin.f32 %v4855, 6.0
        %v4888 = vmin.f32 %v4856, 6.0
        %v4889 = vmin.f32 %v4857, 6.0
        %s4890 = scalar_lea.vmem [#allocation4], 24
        %4891 = vst.msk [vmem:[%s4890 + $0x1] sm:$0xff] %vm512, %v4858
        %4892 = vst.msk [vmem:[%s4890 + $0x9] sm:$0xff] %vm512, %v4859
        %4893 = vst.msk [vmem:[%s4890 + $0x19] sm:$0xff] %vm512, %v4860
        %4894 = vst.msk [vmem:[%s4890 + $0x21] sm:$0xff] %vm512, %v4861
        %4895 = vst.msk [vmem:[%s4890 + $0x31] sm:$0xff] %vm512, %v4862
        %4896 = vst.msk [vmem:[%s4890 + $0x39] sm:$0xff] %vm512, %v4863
        %4897 = vst.msk [vmem:[%s4890 + $0x49] sm:$0xff] %vm512, %v4864
        %4898 = vst.msk [vmem:[%s4890 + $0x51] sm:$0xff] %vm512, %v4865
        %4899 = vst.msk [vmem:[%s4890 + $0x61] sm:$0xff] %vm512, %v4866
        %4900 = vst.msk [vmem:[%s4890 + $0x69] sm:$0xff] %vm512, %v4867
        %4901 = vst.msk [vmem:[%s4890 + $0x79] sm:$0xff] %vm512, %v4868
        %4902 = vst.msk [vmem:[%s4890 + $0x81] sm:$0xff] %vm512, %v4869
        %4903 = vst.msk [vmem:[%s4890 + $0x91] sm:$0xff] %vm512, %v4870
        %4904 = vst.msk [vmem:[%s4890 + $0x99] sm:$0xff] %vm512, %v4871
        %4905 = vst.msk [vmem:[%s4890 + $0xa9] sm:$0xff] %vm512, %v4872
        %4906 = vst.msk [vmem:[%s4890 + $0xb1] sm:$0xff] %vm512, %v4873
        %4907 = vst.msk [vmem:[%s4890 + $0xc1] sm:$0xff] %vm512, %v4874
        %4908 = vst.msk [vmem:[%s4890 + $0xc9] sm:$0xff] %vm512, %v4875
        %4909 = vst.msk [vmem:[%s4890 + $0xd9] sm:$0xff] %vm512, %v4876
        %4910 = vst.msk [vmem:[%s4890 + $0xe1] sm:$0xff] %vm512, %v4877
        %4911 = vst.msk [vmem:[%s4890 + $0xf1] sm:$0xff] %vm512, %v4878
        %4912 = vst.msk [vmem:[%s4890 + $0xf9] sm:$0xff] %vm512, %v4879
        %4913 = vst.msk [vmem:[%s4890 + $0x109] sm:$0xff] %vm512, %v4880
        %4914 = vst.msk [vmem:[%s4890 + $0x111] sm:$0xff] %vm512, %v4881
        %4915 = vst.msk [vmem:[%s4890 + $0x121] sm:$0xff] %vm512, %v4882
        %4916 = vst.msk [vmem:[%s4890 + $0x129] sm:$0xff] %vm512, %v4883
        %4917 = vst.msk [vmem:[%s4890 + $0x139] sm:$0xff] %vm512, %v4884
        %4918 = vst.msk [vmem:[%s4890 + $0x141] sm:$0xff] %vm512, %v4885
        %4919 = vst.msk [vmem:[%s4890 + $0x151] sm:$0xff] %vm512, %v4886
        %4920 = vst.msk [vmem:[%s4890 + $0x159] sm:$0xff] %vm512, %v4887
        %4921 = vst.msk [vmem:[%s4890 + $0x169] sm:$0xff] %vm512, %v4888
        %4922 = vst.msk [vmem:[%s4890 + $0x171] sm:$0xff] %vm512, %v4889
        %v4923 = vld [vmem:[#allocation2] sm:$0xff]
        %v4924 = vld [vmem:[#allocation2 + $0x8] sm:$0xff]
        %v4925 = vld [vmem:[#allocation2 + $0x18] sm:$0xff]
        %v4926 = vld [vmem:[#allocation2 + $0x20] sm:$0xff]
        %v4927 = vld [vmem:[#allocation2 + $0x30] sm:$0xff]
        %v4928 = vld [vmem:[#allocation2 + $0x38] sm:$0xff]
        %v4929 = vld [vmem:[#allocation2 + $0x48] sm:$0xff]
        %v4930 = vld [vmem:[#allocation2 + $0x50] sm:$0xff]
        %v4931 = vld [vmem:[#allocation2 + $0x60] sm:$0xff]
        %v4932 = vld [vmem:[#allocation2 + $0x68] sm:$0xff]
        %v4933 = vld [vmem:[#allocation2 + $0x78] sm:$0xff]
        %v4934 = vld [vmem:[#allocation2 + $0x80] sm:$0xff]
        %v4935 = vld [vmem:[#allocation2 + $0x90] sm:$0xff]
        %v4936 = vld [vmem:[#allocation2 + $0x98] sm:$0xff]
        %v4937 = vld [vmem:[#allocation2 + $0xa8] sm:$0xff]
        %v4938 = vld [vmem:[#allocation2 + $0xb0] sm:$0xff]
        %v4939 = vld [vmem:[#allocation2 + $0xc0] sm:$0xff]
        %v4940 = vld [vmem:[#allocation2 + $0xc8] sm:$0xff]
        %v4941 = vld [vmem:[#allocation2 + $0xd8] sm:$0xff]
        %v4942 = vld [vmem:[#allocation2 + $0xe0] sm:$0xff]
        %v4943 = vld [vmem:[#allocation2 + $0xf0] sm:$0xff]
        %v4944 = vld [vmem:[#allocation2 + $0xf8] sm:$0xff]
        %v4945 = vld [vmem:[#allocation2 + $0x108] sm:$0xff]
        %v4946 = vld [vmem:[#allocation2 + $0x110] sm:$0xff]
        %v4947 = vld [vmem:[#allocation2 + $0x120] sm:$0xff]
        %v4948 = vld [vmem:[#allocation2 + $0x128] sm:$0xff]
        %v4949 = vld [vmem:[#allocation2 + $0x138] sm:$0xff]
        %v4950 = vld [vmem:[#allocation2 + $0x140] sm:$0xff]
        %v4951 = vld [vmem:[#allocation2 + $0x150] sm:$0xff]
        %v4952 = vld [vmem:[#allocation2 + $0x158] sm:$0xff]
        %v4953 = vld [vmem:[#allocation2 + $0x168] sm:$0xff]
        %v4954 = vld [vmem:[#allocation2 + $0x170] sm:$0xff]
        %v4955 = vld [vmem:[#allocation3] sm:$0xff]
        %v4956 = vld [vmem:[#allocation3 + $0x8] sm:$0xff]
        %v4957 = vld [vmem:[#allocation3 + $0x18] sm:$0xff]
        %v4958 = vld [vmem:[#allocation3 + $0x20] sm:$0xff]
        %v4959 = vld [vmem:[#allocation3 + $0x30] sm:$0xff]
        %v4960 = vld [vmem:[#allocation3 + $0x38] sm:$0xff]
        %v4961 = vld [vmem:[#allocation3 + $0x48] sm:$0xff]
        %v4962 = vld [vmem:[#allocation3 + $0x50] sm:$0xff]
        %v4963 = vld [vmem:[#allocation3 + $0x60] sm:$0xff]
        %v4964 = vld [vmem:[#allocation3 + $0x68] sm:$0xff]
        %v4965 = vld [vmem:[#allocation3 + $0x78] sm:$0xff]
        %v4966 = vld [vmem:[#allocation3 + $0x80] sm:$0xff]
        %v4967 = vld [vmem:[#allocation3 + $0x90] sm:$0xff]
        %v4968 = vld [vmem:[#allocation3 + $0x98] sm:$0xff]
        %v4969 = vld [vmem:[#allocation3 + $0xa8] sm:$0xff]
        %v4970 = vld [vmem:[#allocation3 + $0xb0] sm:$0xff]
        %v4971 = vld [vmem:[#allocation3 + $0xc0] sm:$0xff]
        %v4972 = vld [vmem:[#allocation3 + $0xc8] sm:$0xff]
        %v4973 = vld [vmem:[#allocation3 + $0xd8] sm:$0xff]
        %v4974 = vld [vmem:[#allocation3 + $0xe0] sm:$0xff]
        %v4975 = vld [vmem:[#allocation3 + $0xf0] sm:$0xff]
        %v4976 = vld [vmem:[#allocation3 + $0xf8] sm:$0xff]
        %v4977 = vld [vmem:[#allocation3 + $0x108] sm:$0xff]
        %v4978 = vld [vmem:[#allocation3 + $0x110] sm:$0xff]
        %v4979 = vld [vmem:[#allocation3 + $0x120] sm:$0xff]
        %v4980 = vld [vmem:[#allocation3 + $0x128] sm:$0xff]
        %v4981 = vld [vmem:[#allocation3 + $0x138] sm:$0xff]
        %v4982 = vld [vmem:[#allocation3 + $0x140] sm:$0xff]
        %v4983 = vld [vmem:[#allocation3 + $0x150] sm:$0xff]
        %v4984 = vld [vmem:[#allocation3 + $0x158] sm:$0xff]
        %v4985 = vld [vmem:[#allocation3 + $0x168] sm:$0xff]
        %v4986 = vld [vmem:[#allocation3 + $0x170] sm:$0xff]
        %v4987 = vld [vmem:[#allocation4] sm:$0xff]
        %v4988 = vld [vmem:[#allocation4 + $0x8] sm:$0xff]
        %v4989 = vld [vmem:[#allocation4 + $0x18] sm:$0xff]
        %v4990 = vld [vmem:[#allocation4 + $0x20] sm:$0xff]
        %v4991 = vld [vmem:[#allocation4 + $0x30] sm:$0xff]
        %v4992 = vld [vmem:[#allocation4 + $0x38] sm:$0xff]
        %v4993 = vld [vmem:[#allocation4 + $0x48] sm:$0xff]
        %v4994 = vld [vmem:[#allocation4 + $0x50] sm:$0xff]
        %v4995 = vld [vmem:[#allocation4 + $0x60] sm:$0xff]
        %v4996 = vld [vmem:[#allocation4 + $0x68] sm:$0xff]
        %v4997 = vld [vmem:[#allocation4 + $0x78] sm:$0xff]
        %v4998 = vld [vmem:[#allocation4 + $0x80] sm:$0xff]
        %v4999 = vld [vmem:[#allocation4 + $0x90] sm:$0xff]
        %v5000 = vld [vmem:[#allocation4 + $0x98] sm:$0xff]
        %v5001 = vld [vmem:[#allocation4 + $0xa8] sm:$0xff]
        %v5002 = vld [vmem:[#allocation4 + $0xb0] sm:$0xff]
        %v5003 = vld [vmem:[#allocation4 + $0xc0] sm:$0xff]
        %v5004 = vld [vmem:[#allocation4 + $0xc8] sm:$0xff]
        %v5005 = vld [vmem:[#allocation4 + $0xd8] sm:$0xff]
        %v5006 = vld [vmem:[#allocation4 + $0xe0] sm:$0xff]
        %v5007 = vld [vmem:[#allocation4 + $0xf0] sm:$0xff]
        %v5008 = vld [vmem:[#allocation4 + $0xf8] sm:$0xff]
        %v5009 = vld [vmem:[#allocation4 + $0x108] sm:$0xff]
        %v5010 = vld [vmem:[#allocation4 + $0x110] sm:$0xff]
        %v5011 = vld [vmem:[#allocation4 + $0x120] sm:$0xff]
        %v5012 = vld [vmem:[#allocation4 + $0x128] sm:$0xff]
        %v5013 = vld [vmem:[#allocation4 + $0x138] sm:$0xff]
        %v5014 = vld [vmem:[#allocation4 + $0x140] sm:$0xff]
        %v5015 = vld [vmem:[#allocation4 + $0x150] sm:$0xff]
        %v5016 = vld [vmem:[#allocation4 + $0x158] sm:$0xff]
        %v5017 = vld [vmem:[#allocation4 + $0x168] sm:$0xff]
        %v5018 = vld [vmem:[#allocation4 + $0x170] sm:$0xff]
        %v5019 = vld [vmem:[#allocation2 + $0x1] sm:$0xff]
        %v5020 = vld [vmem:[#allocation2 + $0x9] sm:$0xff]
        %v5021 = vld [vmem:[#allocation2 + $0x19] sm:$0xff]
        %v5022 = vld [vmem:[#allocation2 + $0x21] sm:$0xff]
        %v5023 = vld [vmem:[#allocation2 + $0x31] sm:$0xff]
        %v5024 = vld [vmem:[#allocation2 + $0x39] sm:$0xff]
        %v5025 = vld [vmem:[#allocation2 + $0x49] sm:$0xff]
        %v5026 = vld [vmem:[#allocation2 + $0x51] sm:$0xff]
        %v5027 = vld [vmem:[#allocation2 + $0x61] sm:$0xff]
        %v5028 = vld [vmem:[#allocation2 + $0x69] sm:$0xff]
        %v5029 = vld [vmem:[#allocation2 + $0x79] sm:$0xff]
        %v5030 = vld [vmem:[#allocation2 + $0x81] sm:$0xff]
        %v5031 = vld [vmem:[#allocation2 + $0x91] sm:$0xff]
        %v5032 = vld [vmem:[#allocation2 + $0x99] sm:$0xff]
        %v5033 = vld [vmem:[#allocation2 + $0xa9] sm:$0xff]
        %v5034 = vld [vmem:[#allocation2 + $0xb1] sm:$0xff]
        %v5035 = vld [vmem:[#allocation2 + $0xc1] sm:$0xff]
        %v5036 = vld [vmem:[#allocation2 + $0xc9] sm:$0xff]
        %v5037 = vld [vmem:[#allocation2 + $0xd9] sm:$0xff]
        %v5038 = vld [vmem:[#allocation2 + $0xe1] sm:$0xff]
        %v5039 = vld [vmem:[#allocation2 + $0xf1] sm:$0xff]
        %v5040 = vld [vmem:[#allocation2 + $0xf9] sm:$0xff]
        %v5041 = vld [vmem:[#allocation2 + $0x109] sm:$0xff]
        %v5042 = vld [vmem:[#allocation2 + $0x111] sm:$0xff]
        %v5043 = vld [vmem:[#allocation2 + $0x121] sm:$0xff]
        %v5044 = vld [vmem:[#allocation2 + $0x129] sm:$0xff]
        %v5045 = vld [vmem:[#allocation2 + $0x139] sm:$0xff]
        %v5046 = vld [vmem:[#allocation2 + $0x141] sm:$0xff]
        %v5047 = vld [vmem:[#allocation2 + $0x151] sm:$0xff]
        %v5048 = vld [vmem:[#allocation2 + $0x159] sm:$0xff]
        %v5049 = vld [vmem:[#allocation2 + $0x169] sm:$0xff]
        %v5050 = vld [vmem:[#allocation2 + $0x171] sm:$0xff]
        %v5051 = vld [vmem:[#allocation3 + $0x1] sm:$0xff]
        %v5052 = vld [vmem:[#allocation3 + $0x9] sm:$0xff]
        %v5053 = vld [vmem:[#allocation3 + $0x19] sm:$0xff]
        %v5054 = vld [vmem:[#allocation3 + $0x21] sm:$0xff]
        %v5055 = vld [vmem:[#allocation3 + $0x31] sm:$0xff]
        %v5056 = vld [vmem:[#allocation3 + $0x39] sm:$0xff]
        %v5057 = vld [vmem:[#allocation3 + $0x49] sm:$0xff]
        %v5058 = vld [vmem:[#allocation3 + $0x51] sm:$0xff]
        %v5059 = vld [vmem:[#allocation3 + $0x61] sm:$0xff]
        %v5060 = vld [vmem:[#allocation3 + $0x69] sm:$0xff]
        %v5061 = vld [vmem:[#allocation3 + $0x79] sm:$0xff]
        %v5062 = vld [vmem:[#allocation3 + $0x81] sm:$0xff]
        %v5063 = vld [vmem:[#allocation3 + $0x91] sm:$0xff]
        %v5064 = vld [vmem:[#allocation3 + $0x99] sm:$0xff]
        %v5065 = vld [vmem:[#allocation3 + $0xa9] sm:$0xff]
        %v5066 = vld [vmem:[#allocation3 + $0xb1] sm:$0xff]
        %v5067 = vld [vmem:[#allocation3 + $0xc1] sm:$0xff]
        %v5068 = vld [vmem:[#allocation3 + $0xc9] sm:$0xff]
        %v5069 = vld [vmem:[#allocation3 + $0xd9] sm:$0xff]
        %v5070 = vld [vmem:[#allocation3 + $0xe1] sm:$0xff]
        %v5071 = vld [vmem:[#allocation3 + $0xf1] sm:$0xff]
        %v5072 = vld [vmem:[#allocation3 + $0xf9] sm:$0xff]
        %v5073 = vld [vmem:[#allocation3 + $0x109] sm:$0xff]
        %v5074 = vld [vmem:[#allocation3 + $0x111] sm:$0xff]
        %v5075 = vld [vmem:[#allocation3 + $0x121] sm:$0xff]
        %v5076 = vld [vmem:[#allocation3 + $0x129] sm:$0xff]
        %v5077 = vld [vmem:[#allocation3 + $0x139] sm:$0xff]
        %v5078 = vld [vmem:[#allocation3 + $0x141] sm:$0xff]
        %v5079 = vld [vmem:[#allocation3 + $0x151] sm:$0xff]
        %v5080 = vld [vmem:[#allocation3 + $0x159] sm:$0xff]
        %v5081 = vld [vmem:[#allocation3 + $0x169] sm:$0xff]
        %v5082 = vld [vmem:[#allocation3 + $0x171] sm:$0xff]
        %v5083 = vld [vmem:[#allocation4 + $0x1] sm:$0xff]
        %v5084 = vld [vmem:[#allocation4 + $0x9] sm:$0xff]
        %v5085 = vld [vmem:[#allocation4 + $0x19] sm:$0xff]
        %v5086 = vld [vmem:[#allocation4 + $0x21] sm:$0xff]
        %v5087 = vld [vmem:[#allocation4 + $0x31] sm:$0xff]
        %v5088 = vld [vmem:[#allocation4 + $0x39] sm:$0xff]
        %v5089 = vld [vmem:[#allocation4 + $0x49] sm:$0xff]
        %v5090 = vld [vmem:[#allocation4 + $0x51] sm:$0xff]
        %v5091 = vld [vmem:[#allocation4 + $0x61] sm:$0xff]
        %v5092 = vld [vmem:[#allocation4 + $0x69] sm:$0xff]
        %v5093 = vld [vmem:[#allocation4 + $0x79] sm:$0xff]
        %v5094 = vld [vmem:[#allocation4 + $0x81] sm:$0xff]
        %v5095 = vld [vmem:[#allocation4 + $0x91] sm:$0xff]
        %v5096 = vld [vmem:[#allocation4 + $0x99] sm:$0xff]
        %v5097 = vld [vmem:[#allocation4 + $0xa9] sm:$0xff]
        %v5098 = vld [vmem:[#allocation4 + $0xb1] sm:$0xff]
        %v5099 = vld [vmem:[#allocation4 + $0xc1] sm:$0xff]
        %v5100 = vld [vmem:[#allocation4 + $0xc9] sm:$0xff]
        %v5101 = vld [vmem:[#allocation4 + $0xd9] sm:$0xff]
        %v5102 = vld [vmem:[#allocation4 + $0xe1] sm:$0xff]
        %v5103 = vld [vmem:[#allocation4 + $0xf1] sm:$0xff]
        %v5104 = vld [vmem:[#allocation4 + $0xf9] sm:$0xff]
        %v5105 = vld [vmem:[#allocation4 + $0x109] sm:$0xff]
        %v5106 = vld [vmem:[#allocation4 + $0x111] sm:$0xff]
        %v5107 = vld [vmem:[#allocation4 + $0x121] sm:$0xff]
        %v5108 = vld [vmem:[#allocation4 + $0x129] sm:$0xff]
        %v5109 = vld [vmem:[#allocation4 + $0x139] sm:$0xff]
        %v5110 = vld [vmem:[#allocation4 + $0x141] sm:$0xff]
        %v5111 = vld [vmem:[#allocation4 + $0x151] sm:$0xff]
        %v5112 = vld [vmem:[#allocation4 + $0x159] sm:$0xff]
        %v5113 = vld [vmem:[#allocation4 + $0x169] sm:$0xff]
        %v5114 = vld [vmem:[#allocation4 + $0x171] sm:$0xff]
        %v5115 = vld [vmem:[#allocation2 + $0x2] sm:$0xff]
        %v5116 = vld [vmem:[#allocation2 + $0xa] sm:$0xff]
        %v5117 = vld [vmem:[#allocation2 + $0x1a] sm:$0xff]
        %v5118 = vld [vmem:[#allocation2 + $0x22] sm:$0xff]
        %v5119 = vld [vmem:[#allocation2 + $0x32] sm:$0xff]
        %v5120 = vld [vmem:[#allocation2 + $0x3a] sm:$0xff]
        %v5121 = vld [vmem:[#allocation2 + $0x4a] sm:$0xff]
        %v5122 = vld [vmem:[#allocation2 + $0x52] sm:$0xff]
        %v5123 = vld [vmem:[#allocation2 + $0x62] sm:$0xff]
        %v5124 = vld [vmem:[#allocation2 + $0x6a] sm:$0xff]
        %v5125 = vld [vmem:[#allocation2 + $0x7a] sm:$0xff]
        %v5126 = vld [vmem:[#allocation2 + $0x82] sm:$0xff]
        %v5127 = vld [vmem:[#allocation2 + $0x92] sm:$0xff]
        %v5128 = vld [vmem:[#allocation2 + $0x9a] sm:$0xff]
        %v5129 = vld [vmem:[#allocation2 + $0xaa] sm:$0xff]
        %v5130 = vld [vmem:[#allocation2 + $0xb2] sm:$0xff]
        %v5131 = vld [vmem:[#allocation2 + $0xc2] sm:$0xff]
        %v5132 = vld [vmem:[#allocation2 + $0xca] sm:$0xff]
        %v5133 = vld [vmem:[#allocation2 + $0xda] sm:$0xff]
        %v5134 = vld [vmem:[#allocation2 + $0xe2] sm:$0xff]
        %v5135 = vld [vmem:[#allocation2 + $0xf2] sm:$0xff]
        %v5136 = vld [vmem:[#allocation2 + $0xfa] sm:$0xff]
        %v5137 = vld [vmem:[#allocation2 + $0x10a] sm:$0xff]
        %v5138 = vld [vmem:[#allocation2 + $0x112] sm:$0xff]
        %v5139 = vld [vmem:[#allocation2 + $0x122] sm:$0xff]
        %v5140 = vld [vmem:[#allocation2 + $0x12a] sm:$0xff]
        %v5141 = vld [vmem:[#allocation2 + $0x13a] sm:$0xff]
        %v5142 = vld [vmem:[#allocation2 + $0x142] sm:$0xff]
        %v5143 = vld [vmem:[#allocation2 + $0x152] sm:$0xff]
        %v5144 = vld [vmem:[#allocation2 + $0x15a] sm:$0xff]
        %v5145 = vld [vmem:[#allocation2 + $0x16a] sm:$0xff]
        %v5146 = vld [vmem:[#allocation2 + $0x172] sm:$0xff]
        %v5147 = vld [vmem:[#allocation3 + $0x2] sm:$0xff]
        %v5148 = vld [vmem:[#allocation3 + $0xa] sm:$0xff]
        %v5149 = vld [vmem:[#allocation3 + $0x1a] sm:$0xff]
        %v5150 = vld [vmem:[#allocation3 + $0x22] sm:$0xff]
        %v5151 = vld [vmem:[#allocation3 + $0x32] sm:$0xff]
        %v5152 = vld [vmem:[#allocation3 + $0x3a] sm:$0xff]
        %v5153 = vld [vmem:[#allocation3 + $0x4a] sm:$0xff]
        %v5154 = vld [vmem:[#allocation3 + $0x52] sm:$0xff]
        %v5155 = vld [vmem:[#allocation3 + $0x62] sm:$0xff]
        %v5156 = vld [vmem:[#allocation3 + $0x6a] sm:$0xff]
        %v5157 = vld [vmem:[#allocation3 + $0x7a] sm:$0xff]
        %v5158 = vld [vmem:[#allocation3 + $0x82] sm:$0xff]
        %v5159 = vld [vmem:[#allocation3 + $0x92] sm:$0xff]
        %v5160 = vld [vmem:[#allocation3 + $0x9a] sm:$0xff]
        %v5161 = vld [vmem:[#allocation3 + $0xaa] sm:$0xff]
        %v5162 = vld [vmem:[#allocation3 + $0xb2] sm:$0xff]
        %v5163 = vld [vmem:[#allocation3 + $0xc2] sm:$0xff]
        %v5164 = vld [vmem:[#allocation3 + $0xca] sm:$0xff]
        %v5165 = vld [vmem:[#allocation3 + $0xda] sm:$0xff]
        %v5166 = vld [vmem:[#allocation3 + $0xe2] sm:$0xff]
        %v5167 = vld [vmem:[#allocation3 + $0xf2] sm:$0xff]
        %v5168 = vld [vmem:[#allocation3 + $0xfa] sm:$0xff]
        %v5169 = vld [vmem:[#allocation3 + $0x10a] sm:$0xff]
        %v5170 = vld [vmem:[#allocation3 + $0x112] sm:$0xff]
        %v5171 = vld [vmem:[#allocation3 + $0x122] sm:$0xff]
        %v5172 = vld [vmem:[#allocation3 + $0x12a] sm:$0xff]
        %v5173 = vld [vmem:[#allocation3 + $0x13a] sm:$0xff]
        %v5174 = vld [vmem:[#allocation3 + $0x142] sm:$0xff]
        %v5175 = vld [vmem:[#allocation3 + $0x152] sm:$0xff]
        %v5176 = vld [vmem:[#allocation3 + $0x15a] sm:$0xff]
        %v5177 = vld [vmem:[#allocation3 + $0x16a] sm:$0xff]
        %v5178 = vld [vmem:[#allocation3 + $0x172] sm:$0xff]
        %v5179 = vld [vmem:[#allocation4 + $0x2] sm:$0xff]
        %v5180 = vld [vmem:[#allocation4 + $0xa] sm:$0xff]
        %v5181 = vld [vmem:[#allocation4 + $0x1a] sm:$0xff]
        %v5182 = vld [vmem:[#allocation4 + $0x22] sm:$0xff]
        %v5183 = vld [vmem:[#allocation4 + $0x32] sm:$0xff]
        %v5184 = vld [vmem:[#allocation4 + $0x3a] sm:$0xff]
        %v5185 = vld [vmem:[#allocation4 + $0x4a] sm:$0xff]
        %v5186 = vld [vmem:[#allocation4 + $0x52] sm:$0xff]
        %v5187 = vld [vmem:[#allocation4 + $0x62] sm:$0xff]
        %v5188 = vld [vmem:[#allocation4 + $0x6a] sm:$0xff]
        %v5189 = vld [vmem:[#allocation4 + $0x7a] sm:$0xff]
        %v5190 = vld [vmem:[#allocation4 + $0x82] sm:$0xff]
        %v5191 = vld [vmem:[#allocation4 + $0x92] sm:$0xff]
        %v5192 = vld [vmem:[#allocation4 + $0x9a] sm:$0xff]
        %v5193 = vld [vmem:[#allocation4 + $0xaa] sm:$0xff]
        %v5194 = vld [vmem:[#allocation4 + $0xb2] sm:$0xff]
        %v5195 = vld [vmem:[#allocation4 + $0xc2] sm:$0xff]
        %v5196 = vld [vmem:[#allocation4 + $0xca] sm:$0xff]
        %v5197 = vld [vmem:[#allocation4 + $0xda] sm:$0xff]
        %v5198 = vld [vmem:[#allocation4 + $0xe2] sm:$0xff]
        %v5199 = vld [vmem:[#allocation4 + $0xf2] sm:$0xff]
        %v5200 = vld [vmem:[#allocation4 + $0xfa] sm:$0xff]
        %v5201 = vld [vmem:[#allocation4 + $0x10a] sm:$0xff]
        %v5202 = vld [vmem:[#allocation4 + $0x112] sm:$0xff]
        %v5203 = vld [vmem:[#allocation4 + $0x122] sm:$0xff]
        %v5204 = vld [vmem:[#allocation4 + $0x12a] sm:$0xff]
        %v5205 = vld [vmem:[#allocation4 + $0x13a] sm:$0xff]
        %v5206 = vld [vmem:[#allocation4 + $0x142] sm:$0xff]
        %v5207 = vld [vmem:[#allocation4 + $0x152] sm:$0xff]
        %v5208 = vld [vmem:[#allocation4 + $0x15a] sm:$0xff]
        %v5209 = vld [vmem:[#allocation4 + $0x16a] sm:$0xff]
        %v5210 = vld [vmem:[#allocation4 + $0x172] sm:$0xff]
        %v5211 = vld [vmem:[%s633] sm:$0xff]
        %v5212 = vld [vmem:[%s633 + $0x8] sm:$0xff]
        %v5213 = vld [vmem:[%s633 + $0x18] sm:$0xff]
        %v5214 = vld [vmem:[%s633 + $0x20] sm:$0xff]
        %v5215 = vld [vmem:[%s633 + $0x30] sm:$0xff]
        %v5216 = vld [vmem:[%s633 + $0x38] sm:$0xff]
        %v5217 = vld [vmem:[%s633 + $0x48] sm:$0xff]
        %v5218 = vld [vmem:[%s633 + $0x50] sm:$0xff]
        %v5219 = vld [vmem:[%s633 + $0x60] sm:$0xff]
        %v5220 = vld [vmem:[%s633 + $0x68] sm:$0xff]
        %v5221 = vld [vmem:[%s633 + $0x78] sm:$0xff]
        %v5222 = vld [vmem:[%s633 + $0x80] sm:$0xff]
        %v5223 = vld [vmem:[%s633 + $0x90] sm:$0xff]
        %v5224 = vld [vmem:[%s633 + $0x98] sm:$0xff]
        %v5225 = vld [vmem:[%s633 + $0xa8] sm:$0xff]
        %v5226 = vld [vmem:[%s633 + $0xb0] sm:$0xff]
        %v5227 = vld [vmem:[%s633 + $0xc0] sm:$0xff]
        %v5228 = vld [vmem:[%s633 + $0xc8] sm:$0xff]
        %v5229 = vld [vmem:[%s633 + $0xd8] sm:$0xff]
        %v5230 = vld [vmem:[%s633 + $0xe0] sm:$0xff]
        %v5231 = vld [vmem:[%s633 + $0xf0] sm:$0xff]
        %v5232 = vld [vmem:[%s633 + $0xf8] sm:$0xff]
        %v5233 = vld [vmem:[%s633 + $0x108] sm:$0xff]
        %v5234 = vld [vmem:[%s633 + $0x110] sm:$0xff]
        %v5235 = vld [vmem:[%s633 + $0x120] sm:$0xff]
        %v5236 = vld [vmem:[%s633 + $0x128] sm:$0xff]
        %v5237 = vld [vmem:[%s633 + $0x138] sm:$0xff]
        %v5238 = vld [vmem:[%s633 + $0x140] sm:$0xff]
        %v5239 = vld [vmem:[%s633 + $0x150] sm:$0xff]
        %v5240 = vld [vmem:[%s633 + $0x158] sm:$0xff]
        %v5241 = vld [vmem:[%s633 + $0x168] sm:$0xff]
        %v5242 = vld [vmem:[%s633 + $0x170] sm:$0xff]
        %v5243 = vld [vmem:[%s2078] sm:$0xff]
        %v5244 = vld [vmem:[%s2078 + $0x8] sm:$0xff]
        %v5245 = vld [vmem:[%s2078 + $0x18] sm:$0xff]
        %v5246 = vld [vmem:[%s2078 + $0x20] sm:$0xff]
        %v5247 = vld [vmem:[%s2078 + $0x30] sm:$0xff]
        %v5248 = vld [vmem:[%s2078 + $0x38] sm:$0xff]
        %v5249 = vld [vmem:[%s2078 + $0x48] sm:$0xff]
        %v5250 = vld [vmem:[%s2078 + $0x50] sm:$0xff]
        %v5251 = vld [vmem:[%s2078 + $0x60] sm:$0xff]
        %v5252 = vld [vmem:[%s2078 + $0x68] sm:$0xff]
        %v5253 = vld [vmem:[%s2078 + $0x78] sm:$0xff]
        %v5254 = vld [vmem:[%s2078 + $0x80] sm:$0xff]
        %v5255 = vld [vmem:[%s2078 + $0x90] sm:$0xff]
        %v5256 = vld [vmem:[%s2078 + $0x98] sm:$0xff]
        %v5257 = vld [vmem:[%s2078 + $0xa8] sm:$0xff]
        %v5258 = vld [vmem:[%s2078 + $0xb0] sm:$0xff]
        %v5259 = vld [vmem:[%s2078 + $0xc0] sm:$0xff]
        %v5260 = vld [vmem:[%s2078 + $0xc8] sm:$0xff]
        %v5261 = vld [vmem:[%s2078 + $0xd8] sm:$0xff]
        %v5262 = vld [vmem:[%s2078 + $0xe0] sm:$0xff]
        %v5263 = vld [vmem:[%s2078 + $0xf0] sm:$0xff]
        %v5264 = vld [vmem:[%s2078 + $0xf8] sm:$0xff]
        %v5265 = vld [vmem:[%s2078 + $0x108] sm:$0xff]
        %v5266 = vld [vmem:[%s2078 + $0x110] sm:$0xff]
        %v5267 = vld [vmem:[%s2078 + $0x120] sm:$0xff]
        %v5268 = vld [vmem:[%s2078 + $0x128] sm:$0xff]
        %v5269 = vld [vmem:[%s2078 + $0x138] sm:$0xff]
        %v5270 = vld [vmem:[%s2078 + $0x140] sm:$0xff]
        %v5271 = vld [vmem:[%s2078 + $0x150] sm:$0xff]
        %v5272 = vld [vmem:[%s2078 + $0x158] sm:$0xff]
        %v5273 = vld [vmem:[%s2078 + $0x168] sm:$0xff]
        %v5274 = vld [vmem:[%s2078 + $0x170] sm:$0xff]
        %v5275 = vld [vmem:[%s4890] sm:$0xff]
        %v5276 = vld [vmem:[%s4890 + $0x8] sm:$0xff]
        %v5277 = vld [vmem:[%s4890 + $0x18] sm:$0xff]
        %v5278 = vld [vmem:[%s4890 + $0x20] sm:$0xff]
        %v5279 = vld [vmem:[%s4890 + $0x30] sm:$0xff]
        %v5280 = vld [vmem:[%s4890 + $0x38] sm:$0xff]
        %v5281 = vld [vmem:[%s4890 + $0x48] sm:$0xff]
        %v5282 = vld [vmem:[%s4890 + $0x50] sm:$0xff]
        %v5283 = vld [vmem:[%s4890 + $0x60] sm:$0xff]
        %v5284 = vld [vmem:[%s4890 + $0x68] sm:$0xff]
        %v5285 = vld [vmem:[%s4890 + $0x78] sm:$0xff]
        %v5286 = vld [vmem:[%s4890 + $0x80] sm:$0xff]
        %v5287 = vld [vmem:[%s4890 + $0x90] sm:$0xff]
        %v5288 = vld [vmem:[%s4890 + $0x98] sm:$0xff]
        %v5289 = vld [vmem:[%s4890 + $0xa8] sm:$0xff]
        %v5290 = vld [vmem:[%s4890 + $0xb0] sm:$0xff]
        %v5291 = vld [vmem:[%s4890 + $0xc0] sm:$0xff]
        %v5292 = vld [vmem:[%s4890 + $0xc8] sm:$0xff]
        %v5293 = vld [vmem:[%s4890 + $0xd8] sm:$0xff]
        %v5294 = vld [vmem:[%s4890 + $0xe0] sm:$0xff]
        %v5295 = vld [vmem:[%s4890 + $0xf0] sm:$0xff]
        %v5296 = vld [vmem:[%s4890 + $0xf8] sm:$0xff]
        %v5297 = vld [vmem:[%s4890 + $0x108] sm:$0xff]
        %v5298 = vld [vmem:[%s4890 + $0x110] sm:$0xff]
        %v5299 = vld [vmem:[%s4890 + $0x120] sm:$0xff]
        %v5300 = vld [vmem:[%s4890 + $0x128] sm:$0xff]
        %v5301 = vld [vmem:[%s4890 + $0x138] sm:$0xff]
        %v5302 = vld [vmem:[%s4890 + $0x140] sm:$0xff]
        %v5303 = vld [vmem:[%s4890 + $0x150] sm:$0xff]
        %v5304 = vld [vmem:[%s4890 + $0x158] sm:$0xff]
        %v5305 = vld [vmem:[%s4890 + $0x168] sm:$0xff]
        %v5306 = vld [vmem:[%s4890 + $0x170] sm:$0xff]
        %v5307 = vld [vmem:[%s633 + $0x1] sm:$0xff]
        %v5308 = vld [vmem:[%s633 + $0x9] sm:$0xff]
        %v5309 = vld [vmem:[%s633 + $0x19] sm:$0xff]
        %v5310 = vld [vmem:[%s633 + $0x21] sm:$0xff]
        %v5311 = vld [vmem:[%s633 + $0x31] sm:$0xff]
        %v5312 = vld [vmem:[%s633 + $0x39] sm:$0xff]
        %v5313 = vld [vmem:[%s633 + $0x49] sm:$0xff]
        %v5314 = vld [vmem:[%s633 + $0x51] sm:$0xff]
        %v5315 = vld [vmem:[%s633 + $0x61] sm:$0xff]
        %v5316 = vld [vmem:[%s633 + $0x69] sm:$0xff]
        %v5317 = vld [vmem:[%s633 + $0x79] sm:$0xff]
        %v5318 = vld [vmem:[%s633 + $0x81] sm:$0xff]
        %v5319 = vld [vmem:[%s633 + $0x91] sm:$0xff]
        %v5320 = vld [vmem:[%s633 + $0x99] sm:$0xff]
        %v5321 = vld [vmem:[%s633 + $0xa9] sm:$0xff]
        %v5322 = vld [vmem:[%s633 + $0xb1] sm:$0xff]
        %v5323 = vld [vmem:[%s633 + $0xc1] sm:$0xff]
        %v5324 = vld [vmem:[%s633 + $0xc9] sm:$0xff]
        %v5325 = vld [vmem:[%s633 + $0xd9] sm:$0xff]
        %v5326 = vld [vmem:[%s633 + $0xe1] sm:$0xff]
        %v5327 = vld [vmem:[%s633 + $0xf1] sm:$0xff]
        %v5328 = vld [vmem:[%s633 + $0xf9] sm:$0xff]
        %v5329 = vld [vmem:[%s633 + $0x109] sm:$0xff]
        %v5330 = vld [vmem:[%s633 + $0x111] sm:$0xff]
        %v5331 = vld [vmem:[%s633 + $0x121] sm:$0xff]
        %v5332 = vld [vmem:[%s633 + $0x129] sm:$0xff]
        %v5333 = vld [vmem:[%s633 + $0x139] sm:$0xff]
        %v5334 = vld [vmem:[%s633 + $0x141] sm:$0xff]
        %v5335 = vld [vmem:[%s633 + $0x151] sm:$0xff]
        %v5336 = vld [vmem:[%s633 + $0x159] sm:$0xff]
        %v5337 = vld [vmem:[%s633 + $0x169] sm:$0xff]
        %v5338 = vld [vmem:[%s633 + $0x171] sm:$0xff]
        %v5339 = vld [vmem:[%s2078 + $0x1] sm:$0xff]
        %v5340 = vld [vmem:[%s2078 + $0x9] sm:$0xff]
        %v5341 = vld [vmem:[%s2078 + $0x19] sm:$0xff]
        %v5342 = vld [vmem:[%s2078 + $0x21] sm:$0xff]
        %v5343 = vld [vmem:[%s2078 + $0x31] sm:$0xff]
        %v5344 = vld [vmem:[%s2078 + $0x39] sm:$0xff]
        %v5345 = vld [vmem:[%s2078 + $0x49] sm:$0xff]
        %v5346 = vld [vmem:[%s2078 + $0x51] sm:$0xff]
        %v5347 = vld [vmem:[%s2078 + $0x61] sm:$0xff]
        %v5348 = vld [vmem:[%s2078 + $0x69] sm:$0xff]
        %v5349 = vld [vmem:[%s2078 + $0x79] sm:$0xff]
        %v5350 = vld [vmem:[%s2078 + $0x81] sm:$0xff]
        %v5351 = vld [vmem:[%s2078 + $0x91] sm:$0xff]
        %v5352 = vld [vmem:[%s2078 + $0x99] sm:$0xff]
        %v5353 = vld [vmem:[%s2078 + $0xa9] sm:$0xff]
        %v5354 = vld [vmem:[%s2078 + $0xb1] sm:$0xff]
        %v5355 = vld [vmem:[%s2078 + $0xc1] sm:$0xff]
        %v5356 = vld [vmem:[%s2078 + $0xc9] sm:$0xff]
        %v5357 = vld [vmem:[%s2078 + $0xd9] sm:$0xff]
        %v5358 = vld [vmem:[%s2078 + $0xe1] sm:$0xff]
        %v5359 = vld [vmem:[%s2078 + $0xf1] sm:$0xff]
        %v5360 = vld [vmem:[%s2078 + $0xf9] sm:$0xff]
        %v5361 = vld [vmem:[%s2078 + $0x109] sm:$0xff]
        %v5362 = vld [vmem:[%s2078 + $0x111] sm:$0xff]
        %v5363 = vld [vmem:[%s2078 + $0x121] sm:$0xff]
        %v5364 = vld [vmem:[%s2078 + $0x129] sm:$0xff]
        %v5365 = vld [vmem:[%s2078 + $0x139] sm:$0xff]
        %v5366 = vld [vmem:[%s2078 + $0x141] sm:$0xff]
        %v5367 = vld [vmem:[%s2078 + $0x151] sm:$0xff]
        %v5368 = vld [vmem:[%s2078 + $0x159] sm:$0xff]
        %v5369 = vld [vmem:[%s2078 + $0x169] sm:$0xff]
        %v5370 = vld [vmem:[%s2078 + $0x171] sm:$0xff]
        %v5371 = vld [vmem:[%s4890 + $0x1] sm:$0xff]
        %v5372 = vld [vmem:[%s4890 + $0x9] sm:$0xff]
        %v5373 = vld [vmem:[%s4890 + $0x19] sm:$0xff]
        %v5374 = vld [vmem:[%s4890 + $0x21] sm:$0xff]
        %v5375 = vld [vmem:[%s4890 + $0x31] sm:$0xff]
        %v5376 = vld [vmem:[%s4890 + $0x39] sm:$0xff]
        %v5377 = vld [vmem:[%s4890 + $0x49] sm:$0xff]
        %v5378 = vld [vmem:[%s4890 + $0x51] sm:$0xff]
        %v5379 = vld [vmem:[%s4890 + $0x61] sm:$0xff]
        %v5380 = vld [vmem:[%s4890 + $0x69] sm:$0xff]
        %v5381 = vld [vmem:[%s4890 + $0x79] sm:$0xff]
        %v5382 = vld [vmem:[%s4890 + $0x81] sm:$0xff]
        %v5383 = vld [vmem:[%s4890 + $0x91] sm:$0xff]
        %v5384 = vld [vmem:[%s4890 + $0x99] sm:$0xff]
        %v5385 = vld [vmem:[%s4890 + $0xa9] sm:$0xff]
        %v5386 = vld [vmem:[%s4890 + $0xb1] sm:$0xff]
        %v5387 = vld [vmem:[%s4890 + $0xc1] sm:$0xff]
        %v5388 = vld [vmem:[%s4890 + $0xc9] sm:$0xff]
        %v5389 = vld [vmem:[%s4890 + $0xd9] sm:$0xff]
        %v5390 = vld [vmem:[%s4890 + $0xe1] sm:$0xff]
        %v5391 = vld [vmem:[%s4890 + $0xf1] sm:$0xff]
        %v5392 = vld [vmem:[%s4890 + $0xf9] sm:$0xff]
        %v5393 = vld [vmem:[%s4890 + $0x109] sm:$0xff]
        %v5394 = vld [vmem:[%s4890 + $0x111] sm:$0xff]
        %v5395 = vld [vmem:[%s4890 + $0x121] sm:$0xff]
        %v5396 = vld [vmem:[%s4890 + $0x129] sm:$0xff]
        %v5397 = vld [vmem:[%s4890 + $0x139] sm:$0xff]
        %v5398 = vld [vmem:[%s4890 + $0x141] sm:$0xff]
        %v5399 = vld [vmem:[%s4890 + $0x151] sm:$0xff]
        %v5400 = vld [vmem:[%s4890 + $0x159] sm:$0xff]
        %v5401 = vld [vmem:[%s4890 + $0x169] sm:$0xff]
        %v5402 = vld [vmem:[%s4890 + $0x171] sm:$0xff]
        %v5403 = vld [vmem:[%s633 + $0x2] sm:$0xff]
        %v5404 = vld [vmem:[%s633 + $0xa] sm:$0xff]
        %v5405 = vld [vmem:[%s633 + $0x1a] sm:$0xff]
        %v5406 = vld [vmem:[%s633 + $0x22] sm:$0xff]
        %v5407 = vld [vmem:[%s633 + $0x32] sm:$0xff]
        %v5408 = vld [vmem:[%s633 + $0x3a] sm:$0xff]
        %v5409 = vld [vmem:[%s633 + $0x4a] sm:$0xff]
        %v5410 = vld [vmem:[%s633 + $0x52] sm:$0xff]
        %v5411 = vld [vmem:[%s633 + $0x62] sm:$0xff]
        %v5412 = vld [vmem:[%s633 + $0x6a] sm:$0xff]
        %v5413 = vld [vmem:[%s633 + $0x7a] sm:$0xff]
        %v5414 = vld [vmem:[%s633 + $0x82] sm:$0xff]
        %v5415 = vld [vmem:[%s633 + $0x92] sm:$0xff]
        %v5416 = vld [vmem:[%s633 + $0x9a] sm:$0xff]
        %v5417 = vld [vmem:[%s633 + $0xaa] sm:$0xff]
        %v5418 = vld [vmem:[%s633 + $0xb2] sm:$0xff]
        %v5419 = vld [vmem:[%s633 + $0xc2] sm:$0xff]
        %v5420 = vld [vmem:[%s633 + $0xca] sm:$0xff]
        %v5421 = vld [vmem:[%s633 + $0xda] sm:$0xff]
        %v5422 = vld [vmem:[%s633 + $0xe2] sm:$0xff]
        %v5423 = vld [vmem:[%s633 + $0xf2] sm:$0xff]
        %v5424 = vld [vmem:[%s633 + $0xfa] sm:$0xff]
        %v5425 = vld [vmem:[%s633 + $0x10a] sm:$0xff]
        %v5426 = vld [vmem:[%s633 + $0x112] sm:$0xff]
        %v5427 = vld [vmem:[%s633 + $0x122] sm:$0xff]
        %v5428 = vld [vmem:[%s633 + $0x12a] sm:$0xff]
        %v5429 = vld [vmem:[%s633 + $0x13a] sm:$0xff]
        %v5430 = vld [vmem:[%s633 + $0x142] sm:$0xff]
        %v5431 = vld [vmem:[%s633 + $0x152] sm:$0xff]
        %v5432 = vld [vmem:[%s633 + $0x15a] sm:$0xff]
        %v5433 = vld [vmem:[%s633 + $0x16a] sm:$0xff]
        %v5434 = vld [vmem:[%s633 + $0x172] sm:$0xff]
        %v5435 = vld [vmem:[%s2078 + $0x2] sm:$0xff]
        %v5436 = vld [vmem:[%s2078 + $0xa] sm:$0xff]
        %v5437 = vld [vmem:[%s2078 + $0x1a] sm:$0xff]
        %v5438 = vld [vmem:[%s2078 + $0x22] sm:$0xff]
        %v5439 = vld [vmem:[%s2078 + $0x32] sm:$0xff]
        %v5440 = vld [vmem:[%s2078 + $0x3a] sm:$0xff]
        %v5441 = vld [vmem:[%s2078 + $0x4a] sm:$0xff]
        %v5442 = vld [vmem:[%s2078 + $0x52] sm:$0xff]
        %v5443 = vld [vmem:[%s2078 + $0x62] sm:$0xff]
        %v5444 = vld [vmem:[%s2078 + $0x6a] sm:$0xff]
        %v5445 = vld [vmem:[%s2078 + $0x7a] sm:$0xff]
        %v5446 = vld [vmem:[%s2078 + $0x82] sm:$0xff]
        %v5447 = vld [vmem:[%s2078 + $0x92] sm:$0xff]
        %v5448 = vld [vmem:[%s2078 + $0x9a] sm:$0xff]
        %v5449 = vld [vmem:[%s2078 + $0xaa] sm:$0xff]
        %v5450 = vld [vmem:[%s2078 + $0xb2] sm:$0xff]
        %v5451 = vld [vmem:[%s2078 + $0xc2] sm:$0xff]
        %v5452 = vld [vmem:[%s2078 + $0xca] sm:$0xff]
        %v5453 = vld [vmem:[%s2078 + $0xda] sm:$0xff]
        %v5454 = vld [vmem:[%s2078 + $0xe2] sm:$0xff]
        %v5455 = vld [vmem:[%s2078 + $0xf2] sm:$0xff]
        %v5456 = vld [vmem:[%s2078 + $0xfa] sm:$0xff]
        %v5457 = vld [vmem:[%s2078 + $0x10a] sm:$0xff]
        %v5458 = vld [vmem:[%s2078 + $0x112] sm:$0xff]
        %v5459 = vld [vmem:[%s2078 + $0x122] sm:$0xff]
        %v5460 = vld [vmem:[%s2078 + $0x12a] sm:$0xff]
        %v5461 = vld [vmem:[%s2078 + $0x13a] sm:$0xff]
        %v5462 = vld [vmem:[%s2078 + $0x142] sm:$0xff]
        %v5463 = vld [vmem:[%s2078 + $0x152] sm:$0xff]
        %v5464 = vld [vmem:[%s2078 + $0x15a] sm:$0xff]
        %v5465 = vld [vmem:[%s2078 + $0x16a] sm:$0xff]
        %v5466 = vld [vmem:[%s2078 + $0x172] sm:$0xff]
        %v5467 = vld [vmem:[%s4890 + $0x2] sm:$0xff]
        %v5468 = vld [vmem:[%s4890 + $0xa] sm:$0xff]
        %v5469 = vld [vmem:[%s4890 + $0x1a] sm:$0xff]
        %v5470 = vld [vmem:[%s4890 + $0x22] sm:$0xff]
        %v5471 = vld [vmem:[%s4890 + $0x32] sm:$0xff]
        %v5472 = vld [vmem:[%s4890 + $0x3a] sm:$0xff]
        %v5473 = vld [vmem:[%s4890 + $0x4a] sm:$0xff]
        %v5474 = vld [vmem:[%s4890 + $0x52] sm:$0xff]
        %v5475 = vld [vmem:[%s4890 + $0x62] sm:$0xff]
        %v5476 = vld [vmem:[%s4890 + $0x6a] sm:$0xff]
        %v5477 = vld [vmem:[%s4890 + $0x7a] sm:$0xff]
        %v5478 = vld [vmem:[%s4890 + $0x82] sm:$0xff]
        %v5479 = vld [vmem:[%s4890 + $0x92] sm:$0xff]
        %v5480 = vld [vmem:[%s4890 + $0x9a] sm:$0xff]
        %v5481 = vld [vmem:[%s4890 + $0xaa] sm:$0xff]
        %v5482 = vld [vmem:[%s4890 + $0xb2] sm:$0xff]
        %v5483 = vld [vmem:[%s4890 + $0xc2] sm:$0xff]
        %v5484 = vld [vmem:[%s4890 + $0xca] sm:$0xff]
        %v5485 = vld [vmem:[%s4890 + $0xda] sm:$0xff]
        %v5486 = vld [vmem:[%s4890 + $0xe2] sm:$0xff]
        %v5487 = vld [vmem:[%s4890 + $0xf2] sm:$0xff]
        %v5488 = vld [vmem:[%s4890 + $0xfa] sm:$0xff]
        %v5489 = vld [vmem:[%s4890 + $0x10a] sm:$0xff]
        %v5490 = vld [vmem:[%s4890 + $0x112] sm:$0xff]
        %v5491 = vld [vmem:[%s4890 + $0x122] sm:$0xff]
        %v5492 = vld [vmem:[%s4890 + $0x12a] sm:$0xff]
        %v5493 = vld [vmem:[%s4890 + $0x13a] sm:$0xff]
        %v5494 = vld [vmem:[%s4890 + $0x142] sm:$0xff]
        %v5495 = vld [vmem:[%s4890 + $0x152] sm:$0xff]
        %v5496 = vld [vmem:[%s4890 + $0x15a] sm:$0xff]
        %v5497 = vld [vmem:[%s4890 + $0x16a] sm:$0xff]
        %v5498 = vld [vmem:[%s4890 + $0x172] sm:$0xff]
        %v5499 = vld [vmem:[%s1273] sm:$0xff]
        %v5500 = vld [vmem:[%s1273 + $0x8] sm:$0xff]
        %v5501 = vld [vmem:[%s1273 + $0x18] sm:$0xff]
        %v5502 = vld [vmem:[%s1273 + $0x20] sm:$0xff]
        %v5503 = vld [vmem:[%s1273 + $0x30] sm:$0xff]
        %v5504 = vld [vmem:[%s1273 + $0x38] sm:$0xff]
        %v5505 = vld [vmem:[%s1273 + $0x48] sm:$0xff]
        %v5506 = vld [vmem:[%s1273 + $0x50] sm:$0xff]
        %v5507 = vld [vmem:[%s1273 + $0x60] sm:$0xff]
        %v5508 = vld [vmem:[%s1273 + $0x68] sm:$0xff]
        %v5509 = vld [vmem:[%s1273 + $0x78] sm:$0xff]
        %v5510 = vld [vmem:[%s1273 + $0x80] sm:$0xff]
        %v5511 = vld [vmem:[%s1273 + $0x90] sm:$0xff]
        %v5512 = vld [vmem:[%s1273 + $0x98] sm:$0xff]
        %v5513 = vld [vmem:[%s1273 + $0xa8] sm:$0xff]
        %v5514 = vld [vmem:[%s1273 + $0xb0] sm:$0xff]
        %v5515 = vld [vmem:[%s1273 + $0xc0] sm:$0xff]
        %v5516 = vld [vmem:[%s1273 + $0xc8] sm:$0xff]
        %v5517 = vld [vmem:[%s1273 + $0xd8] sm:$0xff]
        %v5518 = vld [vmem:[%s1273 + $0xe0] sm:$0xff]
        %v5519 = vld [vmem:[%s1273 + $0xf0] sm:$0xff]
        %v5520 = vld [vmem:[%s1273 + $0xf8] sm:$0xff]
        %v5521 = vld [vmem:[%s1273 + $0x108] sm:$0xff]
        %v5522 = vld [vmem:[%s1273 + $0x110] sm:$0xff]
        %v5523 = vld [vmem:[%s1273 + $0x120] sm:$0xff]
        %v5524 = vld [vmem:[%s1273 + $0x128] sm:$0xff]
        %v5525 = vld [vmem:[%s1273 + $0x138] sm:$0xff]
        %v5526 = vld [vmem:[%s1273 + $0x140] sm:$0xff]
        %v5527 = vld [vmem:[%s1273 + $0x150] sm:$0xff]
        %v5528 = vld [vmem:[%s1273 + $0x158] sm:$0xff]
        %v5529 = vld [vmem:[%s1273 + $0x168] sm:$0xff]
        %v5530 = vld [vmem:[%s1273 + $0x170] sm:$0xff]
        %v5531 = vld [vmem:[%s3732] sm:$0xff]
        %v5532 = vld [vmem:[%s3732 + $0x8] sm:$0xff]
        %v5533 = vld [vmem:[%s3732 + $0x18] sm:$0xff]
        %v5534 = vld [vmem:[%s3732 + $0x20] sm:$0xff]
        %v5535 = vld [vmem:[%s3732 + $0x30] sm:$0xff]
        %v5536 = vld [vmem:[%s3732 + $0x38] sm:$0xff]
        %v5537 = vld [vmem:[%s3732 + $0x48] sm:$0xff]
        %v5538 = vld [vmem:[%s3732 + $0x50] sm:$0xff]
        %v5539 = vld [vmem:[%s3732 + $0x60] sm:$0xff]
        %v5540 = vld [vmem:[%s3732 + $0x68] sm:$0xff]
        %v5541 = vld [vmem:[%s3732 + $0x78] sm:$0xff]
        %v5542 = vld [vmem:[%s3732 + $0x80] sm:$0xff]
        %v5543 = vld [vmem:[%s3732 + $0x90] sm:$0xff]
        %v5544 = vld [vmem:[%s3732 + $0x98] sm:$0xff]
        %v5545 = vld [vmem:[%s3732 + $0xa8] sm:$0xff]
        %v5546 = vld [vmem:[%s3732 + $0xb0] sm:$0xff]
        %v5547 = vld [vmem:[%s3732 + $0xc0] sm:$0xff]
        %v5548 = vld [vmem:[%s3732 + $0xc8] sm:$0xff]
        %v5549 = vld [vmem:[%s3732 + $0xd8] sm:$0xff]
        %v5550 = vld [vmem:[%s3732 + $0xe0] sm:$0xff]
        %v5551 = vld [vmem:[%s3732 + $0xf0] sm:$0xff]
        %v5552 = vld [vmem:[%s3732 + $0xf8] sm:$0xff]
        %v5553 = vld [vmem:[%s3732 + $0x108] sm:$0xff]
        %v5554 = vld [vmem:[%s3732 + $0x110] sm:$0xff]
        %v5555 = vld [vmem:[%s3732 + $0x120] sm:$0xff]
        %v5556 = vld [vmem:[%s3732 + $0x128] sm:$0xff]
        %v5557 = vld [vmem:[%s3732 + $0x138] sm:$0xff]
        %v5558 = vld [vmem:[%s3732 + $0x140] sm:$0xff]
        %v5559 = vld [vmem:[%s3732 + $0x150] sm:$0xff]
        %v5560 = vld [vmem:[%s3732 + $0x158] sm:$0xff]
        %v5561 = vld [vmem:[%s3732 + $0x168] sm:$0xff]
        %v5562 = vld [vmem:[%s3732 + $0x170] sm:$0xff]
        %s5563 = scalar_lea.vmem [#allocation4], 48
        %v5564 = vld [vmem:[%s5563] sm:$0xff]
        %v5565 = vld [vmem:[%s5563 + $0x8] sm:$0xff]
        %v5566 = vld [vmem:[%s5563 + $0x18] sm:$0xff]
        %v5567 = vld [vmem:[%s5563 + $0x20] sm:$0xff]
        %v5568 = vld [vmem:[%s5563 + $0x30] sm:$0xff]
        %v5569 = vld [vmem:[%s5563 + $0x38] sm:$0xff]
        %v5570 = vld [vmem:[%s5563 + $0x48] sm:$0xff]
        %v5571 = vld [vmem:[%s5563 + $0x50] sm:$0xff]
        %v5572 = vld [vmem:[%s5563 + $0x60] sm:$0xff]
        %v5573 = vld [vmem:[%s5563 + $0x68] sm:$0xff]
        %v5574 = vld [vmem:[%s5563 + $0x78] sm:$0xff]
        %v5575 = vld [vmem:[%s5563 + $0x80] sm:$0xff]
        %v5576 = vld [vmem:[%s5563 + $0x90] sm:$0xff]
        %v5577 = vld [vmem:[%s5563 + $0x98] sm:$0xff]
        %v5578 = vld [vmem:[%s5563 + $0xa8] sm:$0xff]
        %v5579 = vld [vmem:[%s5563 + $0xb0] sm:$0xff]
        %v5580 = vld [vmem:[%s5563 + $0xc0] sm:$0xff]
        %v5581 = vld [vmem:[%s5563 + $0xc8] sm:$0xff]
        %v5582 = vld [vmem:[%s5563 + $0xd8] sm:$0xff]
        %v5583 = vld [vmem:[%s5563 + $0xe0] sm:$0xff]
        %v5584 = vld [vmem:[%s5563 + $0xf0] sm:$0xff]
        %v5585 = vld [vmem:[%s5563 + $0xf8] sm:$0xff]
        %v5586 = vld [vmem:[%s5563 + $0x108] sm:$0xff]
        %v5587 = vld [vmem:[%s5563 + $0x110] sm:$0xff]
        %v5588 = vld [vmem:[%s5563 + $0x120] sm:$0xff]
        %v5589 = vld [vmem:[%s5563 + $0x128] sm:$0xff]
        %v5590 = vld [vmem:[%s5563 + $0x138] sm:$0xff]
        %v5591 = vld [vmem:[%s5563 + $0x140] sm:$0xff]
        %v5592 = vld [vmem:[%s5563 + $0x150] sm:$0xff]
        %v5593 = vld [vmem:[%s5563 + $0x158] sm:$0xff]
        %v5594 = vld [vmem:[%s5563 + $0x168] sm:$0xff]
        %v5595 = vld [vmem:[%s5563 + $0x170] sm:$0xff]
        %v5596 = vld [vmem:[%s1273 + $0x1] sm:$0xff]
        %v5597 = vld [vmem:[%s1273 + $0x9] sm:$0xff]
        %v5598 = vld [vmem:[%s1273 + $0x19] sm:$0xff]
        %v5599 = vld [vmem:[%s1273 + $0x21] sm:$0xff]
        %v5600 = vld [vmem:[%s1273 + $0x31] sm:$0xff]
        %v5601 = vld [vmem:[%s1273 + $0x39] sm:$0xff]
        %v5602 = vld [vmem:[%s1273 + $0x49] sm:$0xff]
        %v5603 = vld [vmem:[%s1273 + $0x51] sm:$0xff]
        %v5604 = vld [vmem:[%s1273 + $0x61] sm:$0xff]
        %v5605 = vld [vmem:[%s1273 + $0x69] sm:$0xff]
        %v5606 = vld [vmem:[%s1273 + $0x79] sm:$0xff]
        %v5607 = vld [vmem:[%s1273 + $0x81] sm:$0xff]
        %v5608 = vld [vmem:[%s1273 + $0x91] sm:$0xff]
        %v5609 = vld [vmem:[%s1273 + $0x99] sm:$0xff]
        %v5610 = vld [vmem:[%s1273 + $0xa9] sm:$0xff]
        %v5611 = vld [vmem:[%s1273 + $0xb1] sm:$0xff]
        %v5612 = vld [vmem:[%s1273 + $0xc1] sm:$0xff]
        %v5613 = vld [vmem:[%s1273 + $0xc9] sm:$0xff]
        %v5614 = vld [vmem:[%s1273 + $0xd9] sm:$0xff]
        %v5615 = vld [vmem:[%s1273 + $0xe1] sm:$0xff]
        %v5616 = vld [vmem:[%s1273 + $0xf1] sm:$0xff]
        %v5617 = vld [vmem:[%s1273 + $0xf9] sm:$0xff]
        %v5618 = vld [vmem:[%s1273 + $0x109] sm:$0xff]
        %v5619 = vld [vmem:[%s1273 + $0x111] sm:$0xff]
        %v5620 = vld [vmem:[%s1273 + $0x121] sm:$0xff]
        %v5621 = vld [vmem:[%s1273 + $0x129] sm:$0xff]
        %v5622 = vld [vmem:[%s1273 + $0x139] sm:$0xff]
        %v5623 = vld [vmem:[%s1273 + $0x141] sm:$0xff]
        %v5624 = vld [vmem:[%s1273 + $0x151] sm:$0xff]
        %v5625 = vld [vmem:[%s1273 + $0x159] sm:$0xff]
        %v5626 = vld [vmem:[%s1273 + $0x169] sm:$0xff]
        %v5627 = vld [vmem:[%s1273 + $0x171] sm:$0xff]
        %v5628 = vld [vmem:[%s3732 + $0x1] sm:$0xff]
        %v5629 = vld [vmem:[%s3732 + $0x9] sm:$0xff]
        %v5630 = vld [vmem:[%s3732 + $0x19] sm:$0xff]
        %v5631 = vld [vmem:[%s3732 + $0x21] sm:$0xff]
        %v5632 = vld [vmem:[%s3732 + $0x31] sm:$0xff]
        %v5633 = vld [vmem:[%s3732 + $0x39] sm:$0xff]
        %v5634 = vld [vmem:[%s3732 + $0x49] sm:$0xff]
        %v5635 = vld [vmem:[%s3732 + $0x51] sm:$0xff]
        %v5636 = vld [vmem:[%s3732 + $0x61] sm:$0xff]
        %v5637 = vld [vmem:[%s3732 + $0x69] sm:$0xff]
        %v5638 = vld [vmem:[%s3732 + $0x79] sm:$0xff]
        %v5639 = vld [vmem:[%s3732 + $0x81] sm:$0xff]
        %v5640 = vld [vmem:[%s3732 + $0x91] sm:$0xff]
        %v5641 = vld [vmem:[%s3732 + $0x99] sm:$0xff]
        %v5642 = vld [vmem:[%s3732 + $0xa9] sm:$0xff]
        %v5643 = vld [vmem:[%s3732 + $0xb1] sm:$0xff]
        %v5644 = vld [vmem:[%s3732 + $0xc1] sm:$0xff]
        %v5645 = vld [vmem:[%s3732 + $0xc9] sm:$0xff]
        %v5646 = vld [vmem:[%s3732 + $0xd9] sm:$0xff]
        %v5647 = vld [vmem:[%s3732 + $0xe1] sm:$0xff]
        %v5648 = vld [vmem:[%s3732 + $0xf1] sm:$0xff]
        %v5649 = vld [vmem:[%s3732 + $0xf9] sm:$0xff]
        %v5650 = vld [vmem:[%s3732 + $0x109] sm:$0xff]
        %v5651 = vld [vmem:[%s3732 + $0x111] sm:$0xff]
        %v5652 = vld [vmem:[%s3732 + $0x121] sm:$0xff]
        %v5653 = vld [vmem:[%s3732 + $0x129] sm:$0xff]
        %v5654 = vld [vmem:[%s3732 + $0x139] sm:$0xff]
        %v5655 = vld [vmem:[%s3732 + $0x141] sm:$0xff]
        %v5656 = vld [vmem:[%s3732 + $0x151] sm:$0xff]
        %v5657 = vld [vmem:[%s3732 + $0x159] sm:$0xff]
        %v5658 = vld [vmem:[%s3732 + $0x169] sm:$0xff]
        %v5659 = vld [vmem:[%s3732 + $0x171] sm:$0xff]
        %v5660 = vld [vmem:[%s5563 + $0x1] sm:$0xff]
        %v5661 = vld [vmem:[%s5563 + $0x9] sm:$0xff]
        %v5662 = vld [vmem:[%s5563 + $0x19] sm:$0xff]
        %v5663 = vld [vmem:[%s5563 + $0x21] sm:$0xff]
        %v5664 = vld [vmem:[%s5563 + $0x31] sm:$0xff]
        %v5665 = vld [vmem:[%s5563 + $0x39] sm:$0xff]
        %v5666 = vld [vmem:[%s5563 + $0x49] sm:$0xff]
        %v5667 = vld [vmem:[%s5563 + $0x51] sm:$0xff]
        %v5668 = vld [vmem:[%s5563 + $0x61] sm:$0xff]
        %v5669 = vld [vmem:[%s5563 + $0x69] sm:$0xff]
        %v5670 = vld [vmem:[%s5563 + $0x79] sm:$0xff]
        %v5671 = vld [vmem:[%s5563 + $0x81] sm:$0xff]
        %v5672 = vld [vmem:[%s5563 + $0x91] sm:$0xff]
        %v5673 = vld [vmem:[%s5563 + $0x99] sm:$0xff]
        %v5674 = vld [vmem:[%s5563 + $0xa9] sm:$0xff]
        %v5675 = vld [vmem:[%s5563 + $0xb1] sm:$0xff]
        %v5676 = vld [vmem:[%s5563 + $0xc1] sm:$0xff]
        %v5677 = vld [vmem:[%s5563 + $0xc9] sm:$0xff]
        %v5678 = vld [vmem:[%s5563 + $0xd9] sm:$0xff]
        %v5679 = vld [vmem:[%s5563 + $0xe1] sm:$0xff]
        %v5680 = vld [vmem:[%s5563 + $0xf1] sm:$0xff]
        %v5681 = vld [vmem:[%s5563 + $0xf9] sm:$0xff]
        %v5682 = vld [vmem:[%s5563 + $0x109] sm:$0xff]
        %v5683 = vld [vmem:[%s5563 + $0x111] sm:$0xff]
        %v5684 = vld [vmem:[%s5563 + $0x121] sm:$0xff]
        %v5685 = vld [vmem:[%s5563 + $0x129] sm:$0xff]
        %v5686 = vld [vmem:[%s5563 + $0x139] sm:$0xff]
        %v5687 = vld [vmem:[%s5563 + $0x141] sm:$0xff]
        %v5688 = vld [vmem:[%s5563 + $0x151] sm:$0xff]
        %v5689 = vld [vmem:[%s5563 + $0x159] sm:$0xff]
        %v5690 = vld [vmem:[%s5563 + $0x169] sm:$0xff]
        %v5691 = vld [vmem:[%s5563 + $0x171] sm:$0xff]
        %v5692 = vld [vmem:[%s1273 + $0x2] sm:$0xff]
        %v5693 = vld [vmem:[%s1273 + $0xa] sm:$0xff]
        %v5694 = vld [vmem:[%s1273 + $0x1a] sm:$0xff]
        %v5695 = vld [vmem:[%s1273 + $0x22] sm:$0xff]
        %v5696 = vld [vmem:[%s1273 + $0x32] sm:$0xff]
        %v5697 = vld [vmem:[%s1273 + $0x3a] sm:$0xff]
        %v5698 = vld [vmem:[%s1273 + $0x4a] sm:$0xff]
        %v5699 = vld [vmem:[%s1273 + $0x52] sm:$0xff]
        %v5700 = vld [vmem:[%s1273 + $0x62] sm:$0xff]
        %v5701 = vld [vmem:[%s1273 + $0x6a] sm:$0xff]
        %v5702 = vld [vmem:[%s1273 + $0x7a] sm:$0xff]
        %v5703 = vld [vmem:[%s1273 + $0x82] sm:$0xff]
        %v5704 = vld [vmem:[%s1273 + $0x92] sm:$0xff]
        %v5705 = vld [vmem:[%s1273 + $0x9a] sm:$0xff]
        %v5706 = vld [vmem:[%s1273 + $0xaa] sm:$0xff]
        %v5707 = vld [vmem:[%s1273 + $0xb2] sm:$0xff]
        %v5708 = vld [vmem:[%s1273 + $0xc2] sm:$0xff]
        %v5709 = vld [vmem:[%s1273 + $0xca] sm:$0xff]
        %v5710 = vld [vmem:[%s1273 + $0xda] sm:$0xff]
        %v5711 = vld [vmem:[%s1273 + $0xe2] sm:$0xff]
        %v5712 = vld [vmem:[%s1273 + $0xf2] sm:$0xff]
        %v5713 = vld [vmem:[%s1273 + $0xfa] sm:$0xff]
        %v5714 = vld [vmem:[%s1273 + $0x10a] sm:$0xff]
        %v5715 = vld [vmem:[%s1273 + $0x112] sm:$0xff]
        %v5716 = vld [vmem:[%s1273 + $0x122] sm:$0xff]
        %v5717 = vld [vmem:[%s1273 + $0x12a] sm:$0xff]
        %v5718 = vld [vmem:[%s1273 + $0x13a] sm:$0xff]
        %v5719 = vld [vmem:[%s1273 + $0x142] sm:$0xff]
        %v5720 = vld [vmem:[%s1273 + $0x152] sm:$0xff]
        %v5721 = vld [vmem:[%s1273 + $0x15a] sm:$0xff]
        %v5722 = vld [vmem:[%s1273 + $0x16a] sm:$0xff]
        %v5723 = vld [vmem:[%s1273 + $0x172] sm:$0xff]
        %v5724 = vld [vmem:[%s3732 + $0x2] sm:$0xff]
        %v5725 = vld [vmem:[%s3732 + $0xa] sm:$0xff]
        %v5726 = vld [vmem:[%s3732 + $0x1a] sm:$0xff]
        %v5727 = vld [vmem:[%s3732 + $0x22] sm:$0xff]
        %v5728 = vld [vmem:[%s3732 + $0x32] sm:$0xff]
        %v5729 = vld [vmem:[%s3732 + $0x3a] sm:$0xff]
        %v5730 = vld [vmem:[%s3732 + $0x4a] sm:$0xff]
        %v5731 = vld [vmem:[%s3732 + $0x52] sm:$0xff]
        %v5732 = vld [vmem:[%s3732 + $0x62] sm:$0xff]
        %v5733 = vld [vmem:[%s3732 + $0x6a] sm:$0xff]
        %v5734 = vld [vmem:[%s3732 + $0x7a] sm:$0xff]
        %v5735 = vld [vmem:[%s3732 + $0x82] sm:$0xff]
        %v5736 = vld [vmem:[%s3732 + $0x92] sm:$0xff]
        %v5737 = vld [vmem:[%s3732 + $0x9a] sm:$0xff]
        %v5738 = vld [vmem:[%s3732 + $0xaa] sm:$0xff]
        %v5739 = vld [vmem:[%s3732 + $0xb2] sm:$0xff]
        %v5740 = vld [vmem:[%s3732 + $0xc2] sm:$0xff]
        %v5741 = vld [vmem:[%s3732 + $0xca] sm:$0xff]
        %v5742 = vld [vmem:[%s3732 + $0xda] sm:$0xff]
        %v5743 = vld [vmem:[%s3732 + $0xe2] sm:$0xff]
        %v5744 = vld [vmem:[%s3732 + $0xf2] sm:$0xff]
        %v5745 = vld [vmem:[%s3732 + $0xfa] sm:$0xff]
        %v5746 = vld [vmem:[%s3732 + $0x10a] sm:$0xff]
        %v5747 = vld [vmem:[%s3732 + $0x112] sm:$0xff]
        %v5748 = vld [vmem:[%s3732 + $0x122] sm:$0xff]
        %v5749 = vld [vmem:[%s3732 + $0x12a] sm:$0xff]
        %v5750 = vld [vmem:[%s3732 + $0x13a] sm:$0xff]
        %v5751 = vld [vmem:[%s3732 + $0x142] sm:$0xff]
        %v5752 = vld [vmem:[%s3732 + $0x152] sm:$0xff]
        %v5753 = vld [vmem:[%s3732 + $0x15a] sm:$0xff]
        %v5754 = vld [vmem:[%s3732 + $0x16a] sm:$0xff]
        %v5755 = vld [vmem:[%s3732 + $0x172] sm:$0xff]
        %v5756 = vld [vmem:[%s5563 + $0x2] sm:$0xff]
        %v5757 = vld [vmem:[%s5563 + $0xa] sm:$0xff]
        %v5758 = vld [vmem:[%s5563 + $0x1a] sm:$0xff]
        %v5759 = vld [vmem:[%s5563 + $0x22] sm:$0xff]
        %v5760 = vld [vmem:[%s5563 + $0x32] sm:$0xff]
        %v5761 = vld [vmem:[%s5563 + $0x3a] sm:$0xff]
        %v5762 = vld [vmem:[%s5563 + $0x4a] sm:$0xff]
        %v5763 = vld [vmem:[%s5563 + $0x52] sm:$0xff]
        %v5764 = vld [vmem:[%s5563 + $0x62] sm:$0xff]
        %v5765 = vld [vmem:[%s5563 + $0x6a] sm:$0xff]
        %v5766 = vld [vmem:[%s5563 + $0x7a] sm:$0xff]
        %v5767 = vld [vmem:[%s5563 + $0x82] sm:$0xff]
        %v5768 = vld [vmem:[%s5563 + $0x92] sm:$0xff]
        %v5769 = vld [vmem:[%s5563 + $0x9a] sm:$0xff]
        %v5770 = vld [vmem:[%s5563 + $0xaa] sm:$0xff]
        %v5771 = vld [vmem:[%s5563 + $0xb2] sm:$0xff]
        %v5772 = vld [vmem:[%s5563 + $0xc2] sm:$0xff]
        %v5773 = vld [vmem:[%s5563 + $0xca] sm:$0xff]
        %v5774 = vld [vmem:[%s5563 + $0xda] sm:$0xff]
        %v5775 = vld [vmem:[%s5563 + $0xe2] sm:$0xff]
        %v5776 = vld [vmem:[%s5563 + $0xf2] sm:$0xff]
        %v5777 = vld [vmem:[%s5563 + $0xfa] sm:$0xff]
        %v5778 = vld [vmem:[%s5563 + $0x10a] sm:$0xff]
        %v5779 = vld [vmem:[%s5563 + $0x112] sm:$0xff]
        %v5780 = vld [vmem:[%s5563 + $0x122] sm:$0xff]
        %v5781 = vld [vmem:[%s5563 + $0x12a] sm:$0xff]
        %v5782 = vld [vmem:[%s5563 + $0x13a] sm:$0xff]
        %v5783 = vld [vmem:[%s5563 + $0x142] sm:$0xff]
        %v5784 = vld [vmem:[%s5563 + $0x152] sm:$0xff]
        %v5785 = vld [vmem:[%s5563 + $0x15a] sm:$0xff]
        %v5786 = vld [vmem:[%s5563 + $0x16a] sm:$0xff]
        %v5787 = vld [vmem:[%s5563 + $0x172] sm:$0xff]
        %5820 = vrot.lane.b32.xlu0 %v4955, 4
        %v5821 = vpop.permute.xlu0 %5820
        %5822 = vrot.lane.b32.xlu0 %v4956, 4
        %v5823 = vpop.permute.xlu0 %5822
        %5824 = vrot.lane.b32.xlu0 %v4957, 4
        %v5825 = vpop.permute.xlu0 %5824
        %5826 = vrot.lane.b32.xlu0 %v4958, 4
        %v5827 = vpop.permute.xlu0 %5826
        %5828 = vrot.lane.b32.xlu0 %v4959, 4
        %v5829 = vpop.permute.xlu0 %5828
        %5830 = vrot.lane.b32.xlu0 %v4960, 4
        %v5831 = vpop.permute.xlu0 %5830
        %5832 = vrot.lane.b32.xlu0 %v4961, 4
        %v5833 = vpop.permute.xlu0 %5832
        %5834 = vrot.lane.b32.xlu0 %v4962, 4
        %v5835 = vpop.permute.xlu0 %5834
        %5836 = vrot.lane.b32.xlu0 %v4963, 4
        %v5837 = vpop.permute.xlu0 %5836
        %5838 = vrot.lane.b32.xlu0 %v4964, 4
        %v5839 = vpop.permute.xlu0 %5838
        %5840 = vrot.lane.b32.xlu0 %v4965, 4
        %v5841 = vpop.permute.xlu0 %5840
        %5842 = vrot.lane.b32.xlu0 %v4966, 4
        %v5843 = vpop.permute.xlu0 %5842
        %5844 = vrot.lane.b32.xlu0 %v4967, 4
        %v5845 = vpop.permute.xlu0 %5844
        %5846 = vrot.lane.b32.xlu0 %v4968, 4
        %v5847 = vpop.permute.xlu0 %5846
        %5848 = vrot.lane.b32.xlu0 %v4969, 4
        %v5849 = vpop.permute.xlu0 %5848
        %5850 = vrot.lane.b32.xlu0 %v4970, 4
        %v5851 = vpop.permute.xlu0 %5850
        %5852 = vrot.lane.b32.xlu0 %v4971, 4
        %v5853 = vpop.permute.xlu0 %5852
        %5854 = vrot.lane.b32.xlu0 %v4972, 4
        %v5855 = vpop.permute.xlu0 %5854
        %5856 = vrot.lane.b32.xlu0 %v4973, 4
        %v5857 = vpop.permute.xlu0 %5856
        %5858 = vrot.lane.b32.xlu0 %v4974, 4
        %v5859 = vpop.permute.xlu0 %5858
        %5860 = vrot.lane.b32.xlu0 %v4975, 4
        %v5861 = vpop.permute.xlu0 %5860
        %5862 = vrot.lane.b32.xlu0 %v4976, 4
        %v5863 = vpop.permute.xlu0 %5862
        %5864 = vrot.lane.b32.xlu0 %v4977, 4
        %v5865 = vpop.permute.xlu0 %5864
        %5866 = vrot.lane.b32.xlu0 %v4978, 4
        %v5867 = vpop.permute.xlu0 %5866
        %5868 = vrot.lane.b32.xlu0 %v4979, 4
        %v5869 = vpop.permute.xlu0 %5868
        %5870 = vrot.lane.b32.xlu0 %v4980, 4
        %v5871 = vpop.permute.xlu0 %5870
        %5872 = vrot.lane.b32.xlu0 %v4981, 4
        %v5873 = vpop.permute.xlu0 %5872
        %5874 = vrot.lane.b32.xlu0 %v4982, 4
        %v5875 = vpop.permute.xlu0 %5874
        %5876 = vrot.lane.b32.xlu0 %v4983, 4
        %v5877 = vpop.permute.xlu0 %5876
        %5878 = vrot.lane.b32.xlu0 %v4984, 4
        %v5879 = vpop.permute.xlu0 %5878
        %5880 = vrot.lane.b32.xlu0 %v4985, 4
        %v5881 = vpop.permute.xlu0 %5880
        %5882 = vrot.lane.b32.xlu0 %v4986, 4
        %v5883 = vpop.permute.xlu0 %5882
        %5948 = vrot.lane.b32.xlu0 %v4987, 12
        %v5949 = vpop.permute.xlu0 %5948
        %5950 = vrot.lane.b32.xlu0 %v4988, 12
        %v5951 = vpop.permute.xlu0 %5950
        %5952 = vrot.lane.b32.xlu0 %v4989, 12
        %v5953 = vpop.permute.xlu0 %5952
        %5954 = vrot.lane.b32.xlu0 %v4990, 12
        %v5955 = vpop.permute.xlu0 %5954
        %5956 = vrot.lane.b32.xlu0 %v4991, 12
        %v5957 = vpop.permute.xlu0 %5956
        %5958 = vrot.lane.b32.xlu0 %v4992, 12
        %v5959 = vpop.permute.xlu0 %5958
        %5960 = vrot.lane.b32.xlu0 %v4993, 12
        %v5961 = vpop.permute.xlu0 %5960
        %5962 = vrot.lane.b32.xlu0 %v4994, 12
        %v5963 = vpop.permute.xlu0 %5962
        %5964 = vrot.lane.b32.xlu0 %v4995, 12
        %v5965 = vpop.permute.xlu0 %5964
        %5966 = vrot.lane.b32.xlu0 %v4996, 12
        %v5967 = vpop.permute.xlu0 %5966
        %5968 = vrot.lane.b32.xlu0 %v4997, 12
        %v5969 = vpop.permute.xlu0 %5968
        %5970 = vrot.lane.b32.xlu0 %v4998, 12
        %v5971 = vpop.permute.xlu0 %5970
        %5972 = vrot.lane.b32.xlu0 %v4999, 12
        %v5973 = vpop.permute.xlu0 %5972
        %5974 = vrot.lane.b32.xlu0 %v5000, 12
        %v5975 = vpop.permute.xlu0 %5974
        %5976 = vrot.lane.b32.xlu0 %v5001, 12
        %v5977 = vpop.permute.xlu0 %5976
        %5978 = vrot.lane.b32.xlu0 %v5002, 12
        %v5979 = vpop.permute.xlu0 %5978
        %5980 = vrot.lane.b32.xlu0 %v5003, 12
        %v5981 = vpop.permute.xlu0 %5980
        %5982 = vrot.lane.b32.xlu0 %v5004, 12
        %v5983 = vpop.permute.xlu0 %5982
        %5984 = vrot.lane.b32.xlu0 %v5005, 12
        %v5985 = vpop.permute.xlu0 %5984
        %5986 = vrot.lane.b32.xlu0 %v5006, 12
        %v5987 = vpop.permute.xlu0 %5986
        %5988 = vrot.lane.b32.xlu0 %v5007, 12
        %v5989 = vpop.permute.xlu0 %5988
        %5990 = vrot.lane.b32.xlu0 %v5008, 12
        %v5991 = vpop.permute.xlu0 %5990
        %5992 = vrot.lane.b32.xlu0 %v5009, 12
        %v5993 = vpop.permute.xlu0 %5992
        %5994 = vrot.lane.b32.xlu0 %v5010, 12
        %v5995 = vpop.permute.xlu0 %5994
        %5996 = vrot.lane.b32.xlu0 %v5011, 12
        %v5997 = vpop.permute.xlu0 %5996
        %5998 = vrot.lane.b32.xlu0 %v5012, 12
        %v5999 = vpop.permute.xlu0 %5998
        %6000 = vrot.lane.b32.xlu0 %v5013, 12
        %v6001 = vpop.permute.xlu0 %6000
        %6002 = vrot.lane.b32.xlu0 %v5014, 12
        %v6003 = vpop.permute.xlu0 %6002
        %6004 = vrot.lane.b32.xlu0 %v5015, 12
        %v6005 = vpop.permute.xlu0 %6004
        %6006 = vrot.lane.b32.xlu0 %v5016, 12
        %v6007 = vpop.permute.xlu0 %6006
        %6008 = vrot.lane.b32.xlu0 %v5017, 12
        %v6009 = vpop.permute.xlu0 %6008
        %6010 = vrot.lane.b32.xlu0 %v5018, 12
        %v6011 = vpop.permute.xlu0 %6010
        %6076 = vrot.lane.b32.xlu0 %v5019, 20
        %v6077 = vpop.permute.xlu0 %6076
        %6078 = vrot.lane.b32.xlu0 %v5020, 20
        %v6079 = vpop.permute.xlu0 %6078
        %6080 = vrot.lane.b32.xlu0 %v5021, 20
        %v6081 = vpop.permute.xlu0 %6080
        %6082 = vrot.lane.b32.xlu0 %v5022, 20
        %v6083 = vpop.permute.xlu0 %6082
        %6084 = vrot.lane.b32.xlu0 %v5023, 20
        %v6085 = vpop.permute.xlu0 %6084
        %6086 = vrot.lane.b32.xlu0 %v5024, 20
        %v6087 = vpop.permute.xlu0 %6086
        %6088 = vrot.lane.b32.xlu0 %v5025, 20
        %v6089 = vpop.permute.xlu0 %6088
        %6090 = vrot.lane.b32.xlu0 %v5026, 20
        %v6091 = vpop.permute.xlu0 %6090
        %6092 = vrot.lane.b32.xlu0 %v5027, 20
        %v6093 = vpop.permute.xlu0 %6092
        %6094 = vrot.lane.b32.xlu0 %v5028, 20
        %v6095 = vpop.permute.xlu0 %6094
        %6096 = vrot.lane.b32.xlu0 %v5029, 20
        %v6097 = vpop.permute.xlu0 %6096
        %6098 = vrot.lane.b32.xlu0 %v5030, 20
        %v6099 = vpop.permute.xlu0 %6098
        %6100 = vrot.lane.b32.xlu0 %v5031, 20
        %v6101 = vpop.permute.xlu0 %6100
        %6102 = vrot.lane.b32.xlu0 %v5032, 20
        %v6103 = vpop.permute.xlu0 %6102
        %6104 = vrot.lane.b32.xlu0 %v5033, 20
        %v6105 = vpop.permute.xlu0 %6104
        %6106 = vrot.lane.b32.xlu0 %v5034, 20
        %v6107 = vpop.permute.xlu0 %6106
        %6108 = vrot.lane.b32.xlu0 %v5035, 20
        %v6109 = vpop.permute.xlu0 %6108
        %6110 = vrot.lane.b32.xlu0 %v5036, 20
        %v6111 = vpop.permute.xlu0 %6110
        %6112 = vrot.lane.b32.xlu0 %v5037, 20
        %v6113 = vpop.permute.xlu0 %6112
        %6114 = vrot.lane.b32.xlu0 %v5038, 20
        %v6115 = vpop.permute.xlu0 %6114
        %6116 = vrot.lane.b32.xlu0 %v5039, 20
        %v6117 = vpop.permute.xlu0 %6116
        %6118 = vrot.lane.b32.xlu0 %v5040, 20
        %v6119 = vpop.permute.xlu0 %6118
        %6120 = vrot.lane.b32.xlu0 %v5041, 20
        %v6121 = vpop.permute.xlu0 %6120
        %6122 = vrot.lane.b32.xlu0 %v5042, 20
        %v6123 = vpop.permute.xlu0 %6122
        %6124 = vrot.lane.b32.xlu0 %v5043, 20
        %v6125 = vpop.permute.xlu0 %6124
        %6126 = vrot.lane.b32.xlu0 %v5044, 20
        %v6127 = vpop.permute.xlu0 %6126
        %6128 = vrot.lane.b32.xlu0 %v5045, 20
        %v6129 = vpop.permute.xlu0 %6128
        %6130 = vrot.lane.b32.xlu0 %v5046, 20
        %v6131 = vpop.permute.xlu0 %6130
        %6132 = vrot.lane.b32.xlu0 %v5047, 20
        %v6133 = vpop.permute.xlu0 %6132
        %6134 = vrot.lane.b32.xlu0 %v5048, 20
        %v6135 = vpop.permute.xlu0 %6134
        %6136 = vrot.lane.b32.xlu0 %v5049, 20
        %v6137 = vpop.permute.xlu0 %6136
        %6138 = vrot.lane.b32.xlu0 %v5050, 20
        %v6139 = vpop.permute.xlu0 %6138
        %6204 = vrot.lane.b32.xlu0 %v5051, 24
        %v6205 = vpop.permute.xlu0 %6204
        %6206 = vrot.lane.b32.xlu0 %v5052, 24
        %v6207 = vpop.permute.xlu0 %6206
        %6208 = vrot.lane.b32.xlu0 %v5053, 24
        %v6209 = vpop.permute.xlu0 %6208
        %6210 = vrot.lane.b32.xlu0 %v5054, 24
        %v6211 = vpop.permute.xlu0 %6210
        %6212 = vrot.lane.b32.xlu0 %v5055, 24
        %v6213 = vpop.permute.xlu0 %6212
        %6214 = vrot.lane.b32.xlu0 %v5056, 24
        %v6215 = vpop.permute.xlu0 %6214
        %6216 = vrot.lane.b32.xlu0 %v5057, 24
        %v6217 = vpop.permute.xlu0 %6216
        %6218 = vrot.lane.b32.xlu0 %v5058, 24
        %v6219 = vpop.permute.xlu0 %6218
        %6220 = vrot.lane.b32.xlu0 %v5059, 24
        %v6221 = vpop.permute.xlu0 %6220
        %6222 = vrot.lane.b32.xlu0 %v5060, 24
        %v6223 = vpop.permute.xlu0 %6222
        %6224 = vrot.lane.b32.xlu0 %v5061, 24
        %v6225 = vpop.permute.xlu0 %6224
        %6226 = vrot.lane.b32.xlu0 %v5062, 24
        %v6227 = vpop.permute.xlu0 %6226
        %6228 = vrot.lane.b32.xlu0 %v5063, 24
        %v6229 = vpop.permute.xlu0 %6228
        %6230 = vrot.lane.b32.xlu0 %v5064, 24
        %v6231 = vpop.permute.xlu0 %6230
        %6232 = vrot.lane.b32.xlu0 %v5065, 24
        %v6233 = vpop.permute.xlu0 %6232
        %6234 = vrot.lane.b32.xlu0 %v5066, 24
        %v6235 = vpop.permute.xlu0 %6234
        %6236 = vrot.lane.b32.xlu0 %v5067, 24
        %v6237 = vpop.permute.xlu0 %6236
        %6238 = vrot.lane.b32.xlu0 %v5068, 24
        %v6239 = vpop.permute.xlu0 %6238
        %6240 = vrot.lane.b32.xlu0 %v5069, 24
        %v6241 = vpop.permute.xlu0 %6240
        %6242 = vrot.lane.b32.xlu0 %v5070, 24
        %v6243 = vpop.permute.xlu0 %6242
        %6244 = vrot.lane.b32.xlu0 %v5071, 24
        %v6245 = vpop.permute.xlu0 %6244
        %6246 = vrot.lane.b32.xlu0 %v5072, 24
        %v6247 = vpop.permute.xlu0 %6246
        %6248 = vrot.lane.b32.xlu0 %v5073, 24
        %v6249 = vpop.permute.xlu0 %6248
        %6250 = vrot.lane.b32.xlu0 %v5074, 24
        %v6251 = vpop.permute.xlu0 %6250
        %6252 = vrot.lane.b32.xlu0 %v5075, 24
        %v6253 = vpop.permute.xlu0 %6252
        %6254 = vrot.lane.b32.xlu0 %v5076, 24
        %v6255 = vpop.permute.xlu0 %6254
        %6256 = vrot.lane.b32.xlu0 %v5077, 24
        %v6257 = vpop.permute.xlu0 %6256
        %6258 = vrot.lane.b32.xlu0 %v5078, 24
        %v6259 = vpop.permute.xlu0 %6258
        %6260 = vrot.lane.b32.xlu0 %v5079, 24
        %v6261 = vpop.permute.xlu0 %6260
        %6262 = vrot.lane.b32.xlu0 %v5080, 24
        %v6263 = vpop.permute.xlu0 %6262
        %6264 = vrot.lane.b32.xlu0 %v5081, 24
        %v6265 = vpop.permute.xlu0 %6264
        %6266 = vrot.lane.b32.xlu0 %v5082, 24
        %v6267 = vpop.permute.xlu0 %6266
        %6332 = vrot.lane.b32.xlu0 %v5083, 32
        %v6333 = vpop.permute.xlu0 %6332
        %6334 = vrot.lane.b32.xlu0 %v5084, 32
        %v6335 = vpop.permute.xlu0 %6334
        %6336 = vrot.lane.b32.xlu0 %v5085, 32
        %v6337 = vpop.permute.xlu0 %6336
        %6338 = vrot.lane.b32.xlu0 %v5086, 32
        %v6339 = vpop.permute.xlu0 %6338
        %6340 = vrot.lane.b32.xlu0 %v5087, 32
        %v6341 = vpop.permute.xlu0 %6340
        %6342 = vrot.lane.b32.xlu0 %v5088, 32
        %v6343 = vpop.permute.xlu0 %6342
        %6344 = vrot.lane.b32.xlu0 %v5089, 32
        %v6345 = vpop.permute.xlu0 %6344
        %6346 = vrot.lane.b32.xlu0 %v5090, 32
        %v6347 = vpop.permute.xlu0 %6346
        %6348 = vrot.lane.b32.xlu0 %v5091, 32
        %v6349 = vpop.permute.xlu0 %6348
        %6350 = vrot.lane.b32.xlu0 %v5092, 32
        %v6351 = vpop.permute.xlu0 %6350
        %6352 = vrot.lane.b32.xlu0 %v5093, 32
        %v6353 = vpop.permute.xlu0 %6352
        %6354 = vrot.lane.b32.xlu0 %v5094, 32
        %v6355 = vpop.permute.xlu0 %6354
        %6356 = vrot.lane.b32.xlu0 %v5095, 32
        %v6357 = vpop.permute.xlu0 %6356
        %6358 = vrot.lane.b32.xlu0 %v5096, 32
        %v6359 = vpop.permute.xlu0 %6358
        %6360 = vrot.lane.b32.xlu0 %v5097, 32
        %v6361 = vpop.permute.xlu0 %6360
        %6362 = vrot.lane.b32.xlu0 %v5098, 32
        %v6363 = vpop.permute.xlu0 %6362
        %6364 = vrot.lane.b32.xlu0 %v5099, 32
        %v6365 = vpop.permute.xlu0 %6364
        %6366 = vrot.lane.b32.xlu0 %v5100, 32
        %v6367 = vpop.permute.xlu0 %6366
        %6368 = vrot.lane.b32.xlu0 %v5101, 32
        %v6369 = vpop.permute.xlu0 %6368
        %6370 = vrot.lane.b32.xlu0 %v5102, 32
        %v6371 = vpop.permute.xlu0 %6370
        %6372 = vrot.lane.b32.xlu0 %v5103, 32
        %v6373 = vpop.permute.xlu0 %6372
        %6374 = vrot.lane.b32.xlu0 %v5104, 32
        %v6375 = vpop.permute.xlu0 %6374
        %6376 = vrot.lane.b32.xlu0 %v5105, 32
        %v6377 = vpop.permute.xlu0 %6376
        %6378 = vrot.lane.b32.xlu0 %v5106, 32
        %v6379 = vpop.permute.xlu0 %6378
        %6380 = vrot.lane.b32.xlu0 %v5107, 32
        %v6381 = vpop.permute.xlu0 %6380
        %6382 = vrot.lane.b32.xlu0 %v5108, 32
        %v6383 = vpop.permute.xlu0 %6382
        %6384 = vrot.lane.b32.xlu0 %v5109, 32
        %v6385 = vpop.permute.xlu0 %6384
        %6386 = vrot.lane.b32.xlu0 %v5110, 32
        %v6387 = vpop.permute.xlu0 %6386
        %6388 = vrot.lane.b32.xlu0 %v5111, 32
        %v6389 = vpop.permute.xlu0 %6388
        %6390 = vrot.lane.b32.xlu0 %v5112, 32
        %v6391 = vpop.permute.xlu0 %6390
        %6392 = vrot.lane.b32.xlu0 %v5113, 32
        %v6393 = vpop.permute.xlu0 %6392
        %6394 = vrot.lane.b32.xlu0 %v5114, 32
        %v6395 = vpop.permute.xlu0 %6394
        %6460 = vrot.lane.b32.xlu0 %v5115, 40
        %v6461 = vpop.permute.xlu0 %6460
        %6462 = vrot.lane.b32.xlu0 %v5116, 40
        %v6463 = vpop.permute.xlu0 %6462
        %6464 = vrot.lane.b32.xlu0 %v5117, 40
        %v6465 = vpop.permute.xlu0 %6464
        %6466 = vrot.lane.b32.xlu0 %v5118, 40
        %v6467 = vpop.permute.xlu0 %6466
        %6468 = vrot.lane.b32.xlu0 %v5119, 40
        %v6469 = vpop.permute.xlu0 %6468
        %6470 = vrot.lane.b32.xlu0 %v5120, 40
        %v6471 = vpop.permute.xlu0 %6470
        %6472 = vrot.lane.b32.xlu0 %v5121, 40
        %v6473 = vpop.permute.xlu0 %6472
        %6474 = vrot.lane.b32.xlu0 %v5122, 40
        %v6475 = vpop.permute.xlu0 %6474
        %6476 = vrot.lane.b32.xlu0 %v5123, 40
        %v6477 = vpop.permute.xlu0 %6476
        %6478 = vrot.lane.b32.xlu0 %v5124, 40
        %v6479 = vpop.permute.xlu0 %6478
        %6480 = vrot.lane.b32.xlu0 %v5125, 40
        %v6481 = vpop.permute.xlu0 %6480
        %6482 = vrot.lane.b32.xlu0 %v5126, 40
        %v6483 = vpop.permute.xlu0 %6482
        %6484 = vrot.lane.b32.xlu0 %v5127, 40
        %v6485 = vpop.permute.xlu0 %6484
        %6486 = vrot.lane.b32.xlu0 %v5128, 40
        %v6487 = vpop.permute.xlu0 %6486
        %6488 = vrot.lane.b32.xlu0 %v5129, 40
        %v6489 = vpop.permute.xlu0 %6488
        %6490 = vrot.lane.b32.xlu0 %v5130, 40
        %v6491 = vpop.permute.xlu0 %6490
        %6492 = vrot.lane.b32.xlu0 %v5131, 40
        %v6493 = vpop.permute.xlu0 %6492
        %6494 = vrot.lane.b32.xlu0 %v5132, 40
        %v6495 = vpop.permute.xlu0 %6494
        %6496 = vrot.lane.b32.xlu0 %v5133, 40
        %v6497 = vpop.permute.xlu0 %6496
        %6498 = vrot.lane.b32.xlu0 %v5134, 40
        %v6499 = vpop.permute.xlu0 %6498
        %6500 = vrot.lane.b32.xlu0 %v5135, 40
        %v6501 = vpop.permute.xlu0 %6500
        %6502 = vrot.lane.b32.xlu0 %v5136, 40
        %v6503 = vpop.permute.xlu0 %6502
        %6504 = vrot.lane.b32.xlu0 %v5137, 40
        %v6505 = vpop.permute.xlu0 %6504
        %6506 = vrot.lane.b32.xlu0 %v5138, 40
        %v6507 = vpop.permute.xlu0 %6506
        %6508 = vrot.lane.b32.xlu0 %v5139, 40
        %v6509 = vpop.permute.xlu0 %6508
        %6510 = vrot.lane.b32.xlu0 %v5140, 40
        %v6511 = vpop.permute.xlu0 %6510
        %6512 = vrot.lane.b32.xlu0 %v5141, 40
        %v6513 = vpop.permute.xlu0 %6512
        %6514 = vrot.lane.b32.xlu0 %v5142, 40
        %v6515 = vpop.permute.xlu0 %6514
        %6516 = vrot.lane.b32.xlu0 %v5143, 40
        %v6517 = vpop.permute.xlu0 %6516
        %6518 = vrot.lane.b32.xlu0 %v5144, 40
        %v6519 = vpop.permute.xlu0 %6518
        %6520 = vrot.lane.b32.xlu0 %v5145, 40
        %v6521 = vpop.permute.xlu0 %6520
        %6522 = vrot.lane.b32.xlu0 %v5146, 40
        %v6523 = vpop.permute.xlu0 %6522
        %6588 = vrot.lane.b32.xlu0 %v5147, 44
        %v6589 = vpop.permute.xlu0 %6588
        %6590 = vrot.lane.b32.xlu0 %v5148, 44
        %v6591 = vpop.permute.xlu0 %6590
        %6592 = vrot.lane.b32.xlu0 %v5149, 44
        %v6593 = vpop.permute.xlu0 %6592
        %6594 = vrot.lane.b32.xlu0 %v5150, 44
        %v6595 = vpop.permute.xlu0 %6594
        %6596 = vrot.lane.b32.xlu0 %v5151, 44
        %v6597 = vpop.permute.xlu0 %6596
        %6598 = vrot.lane.b32.xlu0 %v5152, 44
        %v6599 = vpop.permute.xlu0 %6598
        %6600 = vrot.lane.b32.xlu0 %v5153, 44
        %v6601 = vpop.permute.xlu0 %6600
        %6602 = vrot.lane.b32.xlu0 %v5154, 44
        %v6603 = vpop.permute.xlu0 %6602
        %6604 = vrot.lane.b32.xlu0 %v5155, 44
        %v6605 = vpop.permute.xlu0 %6604
        %6606 = vrot.lane.b32.xlu0 %v5156, 44
        %v6607 = vpop.permute.xlu0 %6606
        %6608 = vrot.lane.b32.xlu0 %v5157, 44
        %v6609 = vpop.permute.xlu0 %6608
        %6610 = vrot.lane.b32.xlu0 %v5158, 44
        %v6611 = vpop.permute.xlu0 %6610
        %6612 = vrot.lane.b32.xlu0 %v5159, 44
        %v6613 = vpop.permute.xlu0 %6612
        %6614 = vrot.lane.b32.xlu0 %v5160, 44
        %v6615 = vpop.permute.xlu0 %6614
        %6616 = vrot.lane.b32.xlu0 %v5161, 44
        %v6617 = vpop.permute.xlu0 %6616
        %6618 = vrot.lane.b32.xlu0 %v5162, 44
        %v6619 = vpop.permute.xlu0 %6618
        %6620 = vrot.lane.b32.xlu0 %v5163, 44
        %v6621 = vpop.permute.xlu0 %6620
        %6622 = vrot.lane.b32.xlu0 %v5164, 44
        %v6623 = vpop.permute.xlu0 %6622
        %6624 = vrot.lane.b32.xlu0 %v5165, 44
        %v6625 = vpop.permute.xlu0 %6624
        %6626 = vrot.lane.b32.xlu0 %v5166, 44
        %v6627 = vpop.permute.xlu0 %6626
        %6628 = vrot.lane.b32.xlu0 %v5167, 44
        %v6629 = vpop.permute.xlu0 %6628
        %6630 = vrot.lane.b32.xlu0 %v5168, 44
        %v6631 = vpop.permute.xlu0 %6630
        %6632 = vrot.lane.b32.xlu0 %v5169, 44
        %v6633 = vpop.permute.xlu0 %6632
        %6634 = vrot.lane.b32.xlu0 %v5170, 44
        %v6635 = vpop.permute.xlu0 %6634
        %6636 = vrot.lane.b32.xlu0 %v5171, 44
        %v6637 = vpop.permute.xlu0 %6636
        %6638 = vrot.lane.b32.xlu0 %v5172, 44
        %v6639 = vpop.permute.xlu0 %6638
        %6640 = vrot.lane.b32.xlu0 %v5173, 44
        %v6641 = vpop.permute.xlu0 %6640
        %6642 = vrot.lane.b32.xlu0 %v5174, 44
        %v6643 = vpop.permute.xlu0 %6642
        %6644 = vrot.lane.b32.xlu0 %v5175, 44
        %v6645 = vpop.permute.xlu0 %6644
        %6646 = vrot.lane.b32.xlu0 %v5176, 44
        %v6647 = vpop.permute.xlu0 %6646
        %6648 = vrot.lane.b32.xlu0 %v5177, 44
        %v6649 = vpop.permute.xlu0 %6648
        %6650 = vrot.lane.b32.xlu0 %v5178, 44
        %v6651 = vpop.permute.xlu0 %6650
        %6716 = vrot.lane.b32.xlu0 %v5179, 52
        %v6717 = vpop.permute.xlu0 %6716
        %6718 = vrot.lane.b32.xlu0 %v5180, 52
        %v6719 = vpop.permute.xlu0 %6718
        %6720 = vrot.lane.b32.xlu0 %v5181, 52
        %v6721 = vpop.permute.xlu0 %6720
        %6722 = vrot.lane.b32.xlu0 %v5182, 52
        %v6723 = vpop.permute.xlu0 %6722
        %6724 = vrot.lane.b32.xlu0 %v5183, 52
        %v6725 = vpop.permute.xlu0 %6724
        %6726 = vrot.lane.b32.xlu0 %v5184, 52
        %v6727 = vpop.permute.xlu0 %6726
        %6728 = vrot.lane.b32.xlu0 %v5185, 52
        %v6729 = vpop.permute.xlu0 %6728
        %6730 = vrot.lane.b32.xlu0 %v5186, 52
        %v6731 = vpop.permute.xlu0 %6730
        %6732 = vrot.lane.b32.xlu0 %v5187, 52
        %v6733 = vpop.permute.xlu0 %6732
        %6734 = vrot.lane.b32.xlu0 %v5188, 52
        %v6735 = vpop.permute.xlu0 %6734
        %6736 = vrot.lane.b32.xlu0 %v5189, 52
        %v6737 = vpop.permute.xlu0 %6736
        %6738 = vrot.lane.b32.xlu0 %v5190, 52
        %v6739 = vpop.permute.xlu0 %6738
        %6740 = vrot.lane.b32.xlu0 %v5191, 52
        %v6741 = vpop.permute.xlu0 %6740
        %6742 = vrot.lane.b32.xlu0 %v5192, 52
        %v6743 = vpop.permute.xlu0 %6742
        %6744 = vrot.lane.b32.xlu0 %v5193, 52
        %v6745 = vpop.permute.xlu0 %6744
        %6746 = vrot.lane.b32.xlu0 %v5194, 52
        %v6747 = vpop.permute.xlu0 %6746
        %6748 = vrot.lane.b32.xlu0 %v5195, 52
        %v6749 = vpop.permute.xlu0 %6748
        %6750 = vrot.lane.b32.xlu0 %v5196, 52
        %v6751 = vpop.permute.xlu0 %6750
        %6752 = vrot.lane.b32.xlu0 %v5197, 52
        %v6753 = vpop.permute.xlu0 %6752
        %6754 = vrot.lane.b32.xlu0 %v5198, 52
        %v6755 = vpop.permute.xlu0 %6754
        %6756 = vrot.lane.b32.xlu0 %v5199, 52
        %v6757 = vpop.permute.xlu0 %6756
        %6758 = vrot.lane.b32.xlu0 %v5200, 52
        %v6759 = vpop.permute.xlu0 %6758
        %6760 = vrot.lane.b32.xlu0 %v5201, 52
        %v6761 = vpop.permute.xlu0 %6760
        %6762 = vrot.lane.b32.xlu0 %v5202, 52
        %v6763 = vpop.permute.xlu0 %6762
        %6764 = vrot.lane.b32.xlu0 %v5203, 52
        %v6765 = vpop.permute.xlu0 %6764
        %6766 = vrot.lane.b32.xlu0 %v5204, 52
        %v6767 = vpop.permute.xlu0 %6766
        %6768 = vrot.lane.b32.xlu0 %v5205, 52
        %v6769 = vpop.permute.xlu0 %6768
        %6770 = vrot.lane.b32.xlu0 %v5206, 52
        %v6771 = vpop.permute.xlu0 %6770
        %6772 = vrot.lane.b32.xlu0 %v5207, 52
        %v6773 = vpop.permute.xlu0 %6772
        %6774 = vrot.lane.b32.xlu0 %v5208, 52
        %v6775 = vpop.permute.xlu0 %6774
        %6776 = vrot.lane.b32.xlu0 %v5209, 52
        %v6777 = vpop.permute.xlu0 %6776
        %6778 = vrot.lane.b32.xlu0 %v5210, 52
        %v6779 = vpop.permute.xlu0 %6778
        %6844 = vrot.lane.b32.xlu0 %v5211, 60
        %v6845 = vpop.permute.xlu0 %6844
        %6846 = vrot.lane.b32.xlu0 %v5212, 60
        %v6847 = vpop.permute.xlu0 %6846
        %6848 = vrot.lane.b32.xlu0 %v5213, 60
        %v6849 = vpop.permute.xlu0 %6848
        %6850 = vrot.lane.b32.xlu0 %v5214, 60
        %v6851 = vpop.permute.xlu0 %6850
        %6852 = vrot.lane.b32.xlu0 %v5215, 60
        %v6853 = vpop.permute.xlu0 %6852
        %6854 = vrot.lane.b32.xlu0 %v5216, 60
        %v6855 = vpop.permute.xlu0 %6854
        %6856 = vrot.lane.b32.xlu0 %v5217, 60
        %v6857 = vpop.permute.xlu0 %6856
        %6858 = vrot.lane.b32.xlu0 %v5218, 60
        %v6859 = vpop.permute.xlu0 %6858
        %6860 = vrot.lane.b32.xlu0 %v5219, 60
        %v6861 = vpop.permute.xlu0 %6860
        %6862 = vrot.lane.b32.xlu0 %v5220, 60
        %v6863 = vpop.permute.xlu0 %6862
        %6864 = vrot.lane.b32.xlu0 %v5221, 60
        %v6865 = vpop.permute.xlu0 %6864
        %6866 = vrot.lane.b32.xlu0 %v5222, 60
        %v6867 = vpop.permute.xlu0 %6866
        %6868 = vrot.lane.b32.xlu0 %v5223, 60
        %v6869 = vpop.permute.xlu0 %6868
        %6870 = vrot.lane.b32.xlu0 %v5224, 60
        %v6871 = vpop.permute.xlu0 %6870
        %6872 = vrot.lane.b32.xlu0 %v5225, 60
        %v6873 = vpop.permute.xlu0 %6872
        %6874 = vrot.lane.b32.xlu0 %v5226, 60
        %v6875 = vpop.permute.xlu0 %6874
        %6876 = vrot.lane.b32.xlu0 %v5227, 60
        %v6877 = vpop.permute.xlu0 %6876
        %6878 = vrot.lane.b32.xlu0 %v5228, 60
        %v6879 = vpop.permute.xlu0 %6878
        %6880 = vrot.lane.b32.xlu0 %v5229, 60
        %v6881 = vpop.permute.xlu0 %6880
        %6882 = vrot.lane.b32.xlu0 %v5230, 60
        %v6883 = vpop.permute.xlu0 %6882
        %6884 = vrot.lane.b32.xlu0 %v5231, 60
        %v6885 = vpop.permute.xlu0 %6884
        %6886 = vrot.lane.b32.xlu0 %v5232, 60
        %v6887 = vpop.permute.xlu0 %6886
        %6888 = vrot.lane.b32.xlu0 %v5233, 60
        %v6889 = vpop.permute.xlu0 %6888
        %6890 = vrot.lane.b32.xlu0 %v5234, 60
        %v6891 = vpop.permute.xlu0 %6890
        %6892 = vrot.lane.b32.xlu0 %v5235, 60
        %v6893 = vpop.permute.xlu0 %6892
        %6894 = vrot.lane.b32.xlu0 %v5236, 60
        %v6895 = vpop.permute.xlu0 %6894
        %6896 = vrot.lane.b32.xlu0 %v5237, 60
        %v6897 = vpop.permute.xlu0 %6896
        %6898 = vrot.lane.b32.xlu0 %v5238, 60
        %v6899 = vpop.permute.xlu0 %6898
        %6900 = vrot.lane.b32.xlu0 %v5239, 60
        %v6901 = vpop.permute.xlu0 %6900
        %6902 = vrot.lane.b32.xlu0 %v5240, 60
        %v6903 = vpop.permute.xlu0 %6902
        %6904 = vrot.lane.b32.xlu0 %v5241, 60
        %v6905 = vpop.permute.xlu0 %6904
        %6906 = vrot.lane.b32.xlu0 %v5242, 60
        %v6907 = vpop.permute.xlu0 %6906
        %6972 = vrot.lane.b32.xlu0 %v5243, 64
        %v6973 = vpop.permute.xlu0 %6972
        %6974 = vrot.lane.b32.xlu0 %v5244, 64
        %v6975 = vpop.permute.xlu0 %6974
        %6976 = vrot.lane.b32.xlu0 %v5245, 64
        %v6977 = vpop.permute.xlu0 %6976
        %6978 = vrot.lane.b32.xlu0 %v5246, 64
        %v6979 = vpop.permute.xlu0 %6978
        %6980 = vrot.lane.b32.xlu0 %v5247, 64
        %v6981 = vpop.permute.xlu0 %6980
        %6982 = vrot.lane.b32.xlu0 %v5248, 64
        %v6983 = vpop.permute.xlu0 %6982
        %6984 = vrot.lane.b32.xlu0 %v5249, 64
        %v6985 = vpop.permute.xlu0 %6984
        %6986 = vrot.lane.b32.xlu0 %v5250, 64
        %v6987 = vpop.permute.xlu0 %6986
        %6988 = vrot.lane.b32.xlu0 %v5251, 64
        %v6989 = vpop.permute.xlu0 %6988
        %6990 = vrot.lane.b32.xlu0 %v5252, 64
        %v6991 = vpop.permute.xlu0 %6990
        %6992 = vrot.lane.b32.xlu0 %v5253, 64
        %v6993 = vpop.permute.xlu0 %6992
        %6994 = vrot.lane.b32.xlu0 %v5254, 64
        %v6995 = vpop.permute.xlu0 %6994
        %6996 = vrot.lane.b32.xlu0 %v5255, 64
        %v6997 = vpop.permute.xlu0 %6996
        %6998 = vrot.lane.b32.xlu0 %v5256, 64
        %v6999 = vpop.permute.xlu0 %6998
        %7000 = vrot.lane.b32.xlu0 %v5257, 64
        %v7001 = vpop.permute.xlu0 %7000
        %7002 = vrot.lane.b32.xlu0 %v5258, 64
        %v7003 = vpop.permute.xlu0 %7002
        %7004 = vrot.lane.b32.xlu0 %v5259, 64
        %v7005 = vpop.permute.xlu0 %7004
        %7006 = vrot.lane.b32.xlu0 %v5260, 64
        %v7007 = vpop.permute.xlu0 %7006
        %7008 = vrot.lane.b32.xlu0 %v5261, 64
        %v7009 = vpop.permute.xlu0 %7008
        %7010 = vrot.lane.b32.xlu0 %v5262, 64
        %v7011 = vpop.permute.xlu0 %7010
        %7012 = vrot.lane.b32.xlu0 %v5263, 64
        %v7013 = vpop.permute.xlu0 %7012
        %7014 = vrot.lane.b32.xlu0 %v5264, 64
        %v7015 = vpop.permute.xlu0 %7014
        %7016 = vrot.lane.b32.xlu0 %v5265, 64
        %v7017 = vpop.permute.xlu0 %7016
        %7018 = vrot.lane.b32.xlu0 %v5266, 64
        %v7019 = vpop.permute.xlu0 %7018
        %7020 = vrot.lane.b32.xlu0 %v5267, 64
        %v7021 = vpop.permute.xlu0 %7020
        %7022 = vrot.lane.b32.xlu0 %v5268, 64
        %v7023 = vpop.permute.xlu0 %7022
        %7024 = vrot.lane.b32.xlu0 %v5269, 64
        %v7025 = vpop.permute.xlu0 %7024
        %7026 = vrot.lane.b32.xlu0 %v5270, 64
        %v7027 = vpop.permute.xlu0 %7026
        %7028 = vrot.lane.b32.xlu0 %v5271, 64
        %v7029 = vpop.permute.xlu0 %7028
        %7030 = vrot.lane.b32.xlu0 %v5272, 64
        %v7031 = vpop.permute.xlu0 %7030
        %7032 = vrot.lane.b32.xlu0 %v5273, 64
        %v7033 = vpop.permute.xlu0 %7032
        %7034 = vrot.lane.b32.xlu0 %v5274, 64
        %v7035 = vpop.permute.xlu0 %7034
        %7100 = vrot.lane.b32.xlu0 %v5275, 72
        %v7101 = vpop.permute.xlu0 %7100
        %7102 = vrot.lane.b32.xlu0 %v5276, 72
        %v7103 = vpop.permute.xlu0 %7102
        %7104 = vrot.lane.b32.xlu0 %v5277, 72
        %v7105 = vpop.permute.xlu0 %7104
        %7106 = vrot.lane.b32.xlu0 %v5278, 72
        %v7107 = vpop.permute.xlu0 %7106
        %7108 = vrot.lane.b32.xlu0 %v5279, 72
        %v7109 = vpop.permute.xlu0 %7108
        %7110 = vrot.lane.b32.xlu0 %v5280, 72
        %v7111 = vpop.permute.xlu0 %7110
        %7112 = vrot.lane.b32.xlu0 %v5281, 72
        %v7113 = vpop.permute.xlu0 %7112
        %7114 = vrot.lane.b32.xlu0 %v5282, 72
        %v7115 = vpop.permute.xlu0 %7114
        %7116 = vrot.lane.b32.xlu0 %v5283, 72
        %v7117 = vpop.permute.xlu0 %7116
        %7118 = vrot.lane.b32.xlu0 %v5284, 72
        %v7119 = vpop.permute.xlu0 %7118
        %7120 = vrot.lane.b32.xlu0 %v5285, 72
        %v7121 = vpop.permute.xlu0 %7120
        %7122 = vrot.lane.b32.xlu0 %v5286, 72
        %v7123 = vpop.permute.xlu0 %7122
        %7124 = vrot.lane.b32.xlu0 %v5287, 72
        %v7125 = vpop.permute.xlu0 %7124
        %7126 = vrot.lane.b32.xlu0 %v5288, 72
        %v7127 = vpop.permute.xlu0 %7126
        %7128 = vrot.lane.b32.xlu0 %v5289, 72
        %v7129 = vpop.permute.xlu0 %7128
        %7130 = vrot.lane.b32.xlu0 %v5290, 72
        %v7131 = vpop.permute.xlu0 %7130
        %7132 = vrot.lane.b32.xlu0 %v5291, 72
        %v7133 = vpop.permute.xlu0 %7132
        %7134 = vrot.lane.b32.xlu0 %v5292, 72
        %v7135 = vpop.permute.xlu0 %7134
        %7136 = vrot.lane.b32.xlu0 %v5293, 72
        %v7137 = vpop.permute.xlu0 %7136
        %7138 = vrot.lane.b32.xlu0 %v5294, 72
        %v7139 = vpop.permute.xlu0 %7138
        %7140 = vrot.lane.b32.xlu0 %v5295, 72
        %v7141 = vpop.permute.xlu0 %7140
        %7142 = vrot.lane.b32.xlu0 %v5296, 72
        %v7143 = vpop.permute.xlu0 %7142
        %7144 = vrot.lane.b32.xlu0 %v5297, 72
        %v7145 = vpop.permute.xlu0 %7144
        %7146 = vrot.lane.b32.xlu0 %v5298, 72
        %v7147 = vpop.permute.xlu0 %7146
        %7148 = vrot.lane.b32.xlu0 %v5299, 72
        %v7149 = vpop.permute.xlu0 %7148
        %7150 = vrot.lane.b32.xlu0 %v5300, 72
        %v7151 = vpop.permute.xlu0 %7150
        %7152 = vrot.lane.b32.xlu0 %v5301, 72
        %v7153 = vpop.permute.xlu0 %7152
        %7154 = vrot.lane.b32.xlu0 %v5302, 72
        %v7155 = vpop.permute.xlu0 %7154
        %7156 = vrot.lane.b32.xlu0 %v5303, 72
        %v7157 = vpop.permute.xlu0 %7156
        %7158 = vrot.lane.b32.xlu0 %v5304, 72
        %v7159 = vpop.permute.xlu0 %7158
        %7160 = vrot.lane.b32.xlu0 %v5305, 72
        %v7161 = vpop.permute.xlu0 %7160
        %7162 = vrot.lane.b32.xlu0 %v5306, 72
        %v7163 = vpop.permute.xlu0 %7162
        %7228 = vrot.lane.b32.xlu0 %v5307, 80
        %v7229 = vpop.permute.xlu0 %7228
        %7230 = vrot.lane.b32.xlu0 %v5308, 80
        %v7231 = vpop.permute.xlu0 %7230
        %7232 = vrot.lane.b32.xlu0 %v5309, 80
        %v7233 = vpop.permute.xlu0 %7232
        %7234 = vrot.lane.b32.xlu0 %v5310, 80
        %v7235 = vpop.permute.xlu0 %7234
        %7236 = vrot.lane.b32.xlu0 %v5311, 80
        %v7237 = vpop.permute.xlu0 %7236
        %7238 = vrot.lane.b32.xlu0 %v5312, 80
        %v7239 = vpop.permute.xlu0 %7238
        %7240 = vrot.lane.b32.xlu0 %v5313, 80
        %v7241 = vpop.permute.xlu0 %7240
        %7242 = vrot.lane.b32.xlu0 %v5314, 80
        %v7243 = vpop.permute.xlu0 %7242
        %7244 = vrot.lane.b32.xlu0 %v5315, 80
        %v7245 = vpop.permute.xlu0 %7244
        %7246 = vrot.lane.b32.xlu0 %v5316, 80
        %v7247 = vpop.permute.xlu0 %7246
        %7248 = vrot.lane.b32.xlu0 %v5317, 80
        %v7249 = vpop.permute.xlu0 %7248
        %7250 = vrot.lane.b32.xlu0 %v5318, 80
        %v7251 = vpop.permute.xlu0 %7250
        %7252 = vrot.lane.b32.xlu0 %v5319, 80
        %v7253 = vpop.permute.xlu0 %7252
        %7254 = vrot.lane.b32.xlu0 %v5320, 80
        %v7255 = vpop.permute.xlu0 %7254
        %7256 = vrot.lane.b32.xlu0 %v5321, 80
        %v7257 = vpop.permute.xlu0 %7256
        %7258 = vrot.lane.b32.xlu0 %v5322, 80
        %v7259 = vpop.permute.xlu0 %7258
        %7260 = vrot.lane.b32.xlu0 %v5323, 80
        %v7261 = vpop.permute.xlu0 %7260
        %7262 = vrot.lane.b32.xlu0 %v5324, 80
        %v7263 = vpop.permute.xlu0 %7262
        %7264 = vrot.lane.b32.xlu0 %v5325, 80
        %v7265 = vpop.permute.xlu0 %7264
        %7266 = vrot.lane.b32.xlu0 %v5326, 80
        %v7267 = vpop.permute.xlu0 %7266
        %7268 = vrot.lane.b32.xlu0 %v5327, 80
        %v7269 = vpop.permute.xlu0 %7268
        %7270 = vrot.lane.b32.xlu0 %v5328, 80
        %v7271 = vpop.permute.xlu0 %7270
        %7272 = vrot.lane.b32.xlu0 %v5329, 80
        %v7273 = vpop.permute.xlu0 %7272
        %7274 = vrot.lane.b32.xlu0 %v5330, 80
        %v7275 = vpop.permute.xlu0 %7274
        %7276 = vrot.lane.b32.xlu0 %v5331, 80
        %v7277 = vpop.permute.xlu0 %7276
        %7278 = vrot.lane.b32.xlu0 %v5332, 80
        %v7279 = vpop.permute.xlu0 %7278
        %7280 = vrot.lane.b32.xlu0 %v5333, 80
        %v7281 = vpop.permute.xlu0 %7280
        %7282 = vrot.lane.b32.xlu0 %v5334, 80
        %v7283 = vpop.permute.xlu0 %7282
        %7284 = vrot.lane.b32.xlu0 %v5335, 80
        %v7285 = vpop.permute.xlu0 %7284
        %7286 = vrot.lane.b32.xlu0 %v5336, 80
        %v7287 = vpop.permute.xlu0 %7286
        %7288 = vrot.lane.b32.xlu0 %v5337, 80
        %v7289 = vpop.permute.xlu0 %7288
        %7290 = vrot.lane.b32.xlu0 %v5338, 80
        %v7291 = vpop.permute.xlu0 %7290
        %7356 = vrot.lane.b32.xlu0 %v5339, 84
        %v7357 = vpop.permute.xlu0 %7356
        %7358 = vrot.lane.b32.xlu0 %v5340, 84
        %v7359 = vpop.permute.xlu0 %7358
        %7360 = vrot.lane.b32.xlu0 %v5341, 84
        %v7361 = vpop.permute.xlu0 %7360
        %7362 = vrot.lane.b32.xlu0 %v5342, 84
        %v7363 = vpop.permute.xlu0 %7362
        %7364 = vrot.lane.b32.xlu0 %v5343, 84
        %v7365 = vpop.permute.xlu0 %7364
        %7366 = vrot.lane.b32.xlu0 %v5344, 84
        %v7367 = vpop.permute.xlu0 %7366
        %7368 = vrot.lane.b32.xlu0 %v5345, 84
        %v7369 = vpop.permute.xlu0 %7368
        %7370 = vrot.lane.b32.xlu0 %v5346, 84
        %v7371 = vpop.permute.xlu0 %7370
        %7372 = vrot.lane.b32.xlu0 %v5347, 84
        %v7373 = vpop.permute.xlu0 %7372
        %7374 = vrot.lane.b32.xlu0 %v5348, 84
        %v7375 = vpop.permute.xlu0 %7374
        %7376 = vrot.lane.b32.xlu0 %v5349, 84
        %v7377 = vpop.permute.xlu0 %7376
        %7378 = vrot.lane.b32.xlu0 %v5350, 84
        %v7379 = vpop.permute.xlu0 %7378
        %7380 = vrot.lane.b32.xlu0 %v5351, 84
        %v7381 = vpop.permute.xlu0 %7380
        %7382 = vrot.lane.b32.xlu0 %v5352, 84
        %v7383 = vpop.permute.xlu0 %7382
        %7384 = vrot.lane.b32.xlu0 %v5353, 84
        %v7385 = vpop.permute.xlu0 %7384
        %7386 = vrot.lane.b32.xlu0 %v5354, 84
        %v7387 = vpop.permute.xlu0 %7386
        %7388 = vrot.lane.b32.xlu0 %v5355, 84
        %v7389 = vpop.permute.xlu0 %7388
        %7390 = vrot.lane.b32.xlu0 %v5356, 84
        %v7391 = vpop.permute.xlu0 %7390
        %7392 = vrot.lane.b32.xlu0 %v5357, 84
        %v7393 = vpop.permute.xlu0 %7392
        %7394 = vrot.lane.b32.xlu0 %v5358, 84
        %v7395 = vpop.permute.xlu0 %7394
        %7396 = vrot.lane.b32.xlu0 %v5359, 84
        %v7397 = vpop.permute.xlu0 %7396
        %7398 = vrot.lane.b32.xlu0 %v5360, 84
        %v7399 = vpop.permute.xlu0 %7398
        %7400 = vrot.lane.b32.xlu0 %v5361, 84
        %v7401 = vpop.permute.xlu0 %7400
        %7402 = vrot.lane.b32.xlu0 %v5362, 84
        %v7403 = vpop.permute.xlu0 %7402
        %7404 = vrot.lane.b32.xlu0 %v5363, 84
        %v7405 = vpop.permute.xlu0 %7404
        %7406 = vrot.lane.b32.xlu0 %v5364, 84
        %v7407 = vpop.permute.xlu0 %7406
        %7408 = vrot.lane.b32.xlu0 %v5365, 84
        %v7409 = vpop.permute.xlu0 %7408
        %7410 = vrot.lane.b32.xlu0 %v5366, 84
        %v7411 = vpop.permute.xlu0 %7410
        %7412 = vrot.lane.b32.xlu0 %v5367, 84
        %v7413 = vpop.permute.xlu0 %7412
        %7414 = vrot.lane.b32.xlu0 %v5368, 84
        %v7415 = vpop.permute.xlu0 %7414
        %7416 = vrot.lane.b32.xlu0 %v5369, 84
        %v7417 = vpop.permute.xlu0 %7416
        %7418 = vrot.lane.b32.xlu0 %v5370, 84
        %v7419 = vpop.permute.xlu0 %7418
        %7484 = vrot.lane.b32.xlu0 %v5371, 92
        %v7485 = vpop.permute.xlu0 %7484
        %7486 = vrot.lane.b32.xlu0 %v5372, 92
        %v7487 = vpop.permute.xlu0 %7486
        %7488 = vrot.lane.b32.xlu0 %v5373, 92
        %v7489 = vpop.permute.xlu0 %7488
        %7490 = vrot.lane.b32.xlu0 %v5374, 92
        %v7491 = vpop.permute.xlu0 %7490
        %7492 = vrot.lane.b32.xlu0 %v5375, 92
        %v7493 = vpop.permute.xlu0 %7492
        %7494 = vrot.lane.b32.xlu0 %v5376, 92
        %v7495 = vpop.permute.xlu0 %7494
        %7496 = vrot.lane.b32.xlu0 %v5377, 92
        %v7497 = vpop.permute.xlu0 %7496
        %7498 = vrot.lane.b32.xlu0 %v5378, 92
        %v7499 = vpop.permute.xlu0 %7498
        %7500 = vrot.lane.b32.xlu0 %v5379, 92
        %v7501 = vpop.permute.xlu0 %7500
        %7502 = vrot.lane.b32.xlu0 %v5380, 92
        %v7503 = vpop.permute.xlu0 %7502
        %7504 = vrot.lane.b32.xlu0 %v5381, 92
        %v7505 = vpop.permute.xlu0 %7504
        %7506 = vrot.lane.b32.xlu0 %v5382, 92
        %v7507 = vpop.permute.xlu0 %7506
        %7508 = vrot.lane.b32.xlu0 %v5383, 92
        %v7509 = vpop.permute.xlu0 %7508
        %7510 = vrot.lane.b32.xlu0 %v5384, 92
        %v7511 = vpop.permute.xlu0 %7510
        %7512 = vrot.lane.b32.xlu0 %v5385, 92
        %v7513 = vpop.permute.xlu0 %7512
        %7514 = vrot.lane.b32.xlu0 %v5386, 92
        %v7515 = vpop.permute.xlu0 %7514
        %7516 = vrot.lane.b32.xlu0 %v5387, 92
        %v7517 = vpop.permute.xlu0 %7516
        %7518 = vrot.lane.b32.xlu0 %v5388, 92
        %v7519 = vpop.permute.xlu0 %7518
        %7520 = vrot.lane.b32.xlu0 %v5389, 92
        %v7521 = vpop.permute.xlu0 %7520
        %7522 = vrot.lane.b32.xlu0 %v5390, 92
        %v7523 = vpop.permute.xlu0 %7522
        %7524 = vrot.lane.b32.xlu0 %v5391, 92
        %v7525 = vpop.permute.xlu0 %7524
        %7526 = vrot.lane.b32.xlu0 %v5392, 92
        %v7527 = vpop.permute.xlu0 %7526
        %7528 = vrot.lane.b32.xlu0 %v5393, 92
        %v7529 = vpop.permute.xlu0 %7528
        %7530 = vrot.lane.b32.xlu0 %v5394, 92
        %v7531 = vpop.permute.xlu0 %7530
        %7532 = vrot.lane.b32.xlu0 %v5395, 92
        %v7533 = vpop.permute.xlu0 %7532
        %7534 = vrot.lane.b32.xlu0 %v5396, 92
        %v7535 = vpop.permute.xlu0 %7534
        %7536 = vrot.lane.b32.xlu0 %v5397, 92
        %v7537 = vpop.permute.xlu0 %7536
        %7538 = vrot.lane.b32.xlu0 %v5398, 92
        %v7539 = vpop.permute.xlu0 %7538
        %7540 = vrot.lane.b32.xlu0 %v5399, 92
        %v7541 = vpop.permute.xlu0 %7540
        %7542 = vrot.lane.b32.xlu0 %v5400, 92
        %v7543 = vpop.permute.xlu0 %7542
        %7544 = vrot.lane.b32.xlu0 %v5401, 92
        %v7545 = vpop.permute.xlu0 %7544
        %7546 = vrot.lane.b32.xlu0 %v5402, 92
        %v7547 = vpop.permute.xlu0 %7546
        %7612 = vrot.lane.b32.xlu0 %v5403, 100
        %v7613 = vpop.permute.xlu0 %7612
        %7614 = vrot.lane.b32.xlu0 %v5404, 100
        %v7615 = vpop.permute.xlu0 %7614
        %7616 = vrot.lane.b32.xlu0 %v5405, 100
        %v7617 = vpop.permute.xlu0 %7616
        %7618 = vrot.lane.b32.xlu0 %v5406, 100
        %v7619 = vpop.permute.xlu0 %7618
        %7620 = vrot.lane.b32.xlu0 %v5407, 100
        %v7621 = vpop.permute.xlu0 %7620
        %7622 = vrot.lane.b32.xlu0 %v5408, 100
        %v7623 = vpop.permute.xlu0 %7622
        %7624 = vrot.lane.b32.xlu0 %v5409, 100
        %v7625 = vpop.permute.xlu0 %7624
        %7626 = vrot.lane.b32.xlu0 %v5410, 100
        %v7627 = vpop.permute.xlu0 %7626
        %7628 = vrot.lane.b32.xlu0 %v5411, 100
        %v7629 = vpop.permute.xlu0 %7628
        %7630 = vrot.lane.b32.xlu0 %v5412, 100
        %v7631 = vpop.permute.xlu0 %7630
        %7632 = vrot.lane.b32.xlu0 %v5413, 100
        %v7633 = vpop.permute.xlu0 %7632
        %7634 = vrot.lane.b32.xlu0 %v5414, 100
        %v7635 = vpop.permute.xlu0 %7634
        %7636 = vrot.lane.b32.xlu0 %v5415, 100
        %v7637 = vpop.permute.xlu0 %7636
        %7638 = vrot.lane.b32.xlu0 %v5416, 100
        %v7639 = vpop.permute.xlu0 %7638
        %7640 = vrot.lane.b32.xlu0 %v5417, 100
        %v7641 = vpop.permute.xlu0 %7640
        %7642 = vrot.lane.b32.xlu0 %v5418, 100
        %v7643 = vpop.permute.xlu0 %7642
        %7644 = vrot.lane.b32.xlu0 %v5419, 100
        %v7645 = vpop.permute.xlu0 %7644
        %7646 = vrot.lane.b32.xlu0 %v5420, 100
        %v7647 = vpop.permute.xlu0 %7646
        %7648 = vrot.lane.b32.xlu0 %v5421, 100
        %v7649 = vpop.permute.xlu0 %7648
        %7650 = vrot.lane.b32.xlu0 %v5422, 100
        %v7651 = vpop.permute.xlu0 %7650
        %7652 = vrot.lane.b32.xlu0 %v5423, 100
        %v7653 = vpop.permute.xlu0 %7652
        %7654 = vrot.lane.b32.xlu0 %v5424, 100
        %v7655 = vpop.permute.xlu0 %7654
        %7656 = vrot.lane.b32.xlu0 %v5425, 100
        %v7657 = vpop.permute.xlu0 %7656
        %7658 = vrot.lane.b32.xlu0 %v5426, 100
        %v7659 = vpop.permute.xlu0 %7658
        %7660 = vrot.lane.b32.xlu0 %v5427, 100
        %v7661 = vpop.permute.xlu0 %7660
        %7662 = vrot.lane.b32.xlu0 %v5428, 100
        %v7663 = vpop.permute.xlu0 %7662
        %7664 = vrot.lane.b32.xlu0 %v5429, 100
        %v7665 = vpop.permute.xlu0 %7664
        %7666 = vrot.lane.b32.xlu0 %v5430, 100
        %v7667 = vpop.permute.xlu0 %7666
        %7668 = vrot.lane.b32.xlu0 %v5431, 100
        %v7669 = vpop.permute.xlu0 %7668
        %7670 = vrot.lane.b32.xlu0 %v5432, 100
        %v7671 = vpop.permute.xlu0 %7670
        %7672 = vrot.lane.b32.xlu0 %v5433, 100
        %v7673 = vpop.permute.xlu0 %7672
        %7674 = vrot.lane.b32.xlu0 %v5434, 100
        %v7675 = vpop.permute.xlu0 %7674
        %v7708 = vsel %vm466, %v4923, %v5821
        %v7709 = vsel %vm466, %v4924, %v5823
        %v7710 = vsel %vm466, %v4925, %v5825
        %v7711 = vsel %vm466, %v4926, %v5827
        %v7712 = vsel %vm466, %v4927, %v5829
        %v7713 = vsel %vm466, %v4928, %v5831
        %v7714 = vsel %vm466, %v4929, %v5833
        %v7715 = vsel %vm466, %v4930, %v5835
        %v7716 = vsel %vm466, %v4931, %v5837
        %v7717 = vsel %vm466, %v4932, %v5839
        %v7718 = vsel %vm466, %v4933, %v5841
        %v7719 = vsel %vm466, %v4934, %v5843
        %v7720 = vsel %vm466, %v4935, %v5845
        %v7721 = vsel %vm466, %v4936, %v5847
        %v7722 = vsel %vm466, %v4937, %v5849
        %v7723 = vsel %vm466, %v4938, %v5851
        %v7724 = vsel %vm466, %v4939, %v5853
        %v7725 = vsel %vm466, %v4940, %v5855
        %v7726 = vsel %vm466, %v4941, %v5857
        %v7727 = vsel %vm466, %v4942, %v5859
        %v7728 = vsel %vm466, %v4943, %v5861
        %v7729 = vsel %vm466, %v4944, %v5863
        %v7730 = vsel %vm466, %v4945, %v5865
        %v7731 = vsel %vm466, %v4946, %v5867
        %v7732 = vsel %vm466, %v4947, %v5869
        %v7733 = vsel %vm466, %v4948, %v5871
        %v7734 = vsel %vm466, %v4949, %v5873
        %v7735 = vsel %vm466, %v4950, %v5875
        %v7736 = vsel %vm466, %v4951, %v5877
        %v7737 = vsel %vm466, %v4952, %v5879
        %v7738 = vsel %vm466, %v4953, %v5881
        %v7739 = vsel %vm466, %v4954, %v5883
        %vm7740 = vcmask 97280
        %v7741 = vsel %vm7740, %v7708, %v5949
        %v7742 = vsel %vm7740, %v7709, %v5951
        %v7743 = vsel %vm7740, %v7710, %v5953
        %v7744 = vsel %vm7740, %v7711, %v5955
        %v7745 = vsel %vm7740, %v7712, %v5957
        %v7746 = vsel %vm7740, %v7713, %v5959
        %v7747 = vsel %vm7740, %v7714, %v5961
        %v7748 = vsel %vm7740, %v7715, %v5963
        %v7749 = vsel %vm7740, %v7716, %v5965
        %v7750 = vsel %vm7740, %v7717, %v5967
        %v7751 = vsel %vm7740, %v7718, %v5969
        %v7752 = vsel %vm7740, %v7719, %v5971
        %v7753 = vsel %vm7740, %v7720, %v5973
        %v7754 = vsel %vm7740, %v7721, %v5975
        %v7755 = vsel %vm7740, %v7722, %v5977
        %v7756 = vsel %vm7740, %v7723, %v5979
        %v7757 = vsel %vm7740, %v7724, %v5981
        %v7758 = vsel %vm7740, %v7725, %v5983
        %v7759 = vsel %vm7740, %v7726, %v5985
        %v7760 = vsel %vm7740, %v7727, %v5987
        %v7761 = vsel %vm7740, %v7728, %v5989
        %v7762 = vsel %vm7740, %v7729, %v5991
        %v7763 = vsel %vm7740, %v7730, %v5993
        %v7764 = vsel %vm7740, %v7731, %v5995
        %v7765 = vsel %vm7740, %v7732, %v5997
        %v7766 = vsel %vm7740, %v7733, %v5999
        %v7767 = vsel %vm7740, %v7734, %v6001
        %v7768 = vsel %vm7740, %v7735, %v6003
        %v7769 = vsel %vm7740, %v7736, %v6005
        %v7770 = vsel %vm7740, %v7737, %v6007
        %v7771 = vsel %vm7740, %v7738, %v6009
        %v7772 = vsel %vm7740, %v7739, %v6011
        %vm7773 = vcmask 162816
        %v7774 = vsel %vm7773, %v7741, %v6077
        %v7775 = vsel %vm7773, %v7742, %v6079
        %v7776 = vsel %vm7773, %v7743, %v6081
        %v7777 = vsel %vm7773, %v7744, %v6083
        %v7778 = vsel %vm7773, %v7745, %v6085
        %v7779 = vsel %vm7773, %v7746, %v6087
        %v7780 = vsel %vm7773, %v7747, %v6089
        %v7781 = vsel %vm7773, %v7748, %v6091
        %v7782 = vsel %vm7773, %v7749, %v6093
        %v7783 = vsel %vm7773, %v7750, %v6095
        %v7784 = vsel %vm7773, %v7751, %v6097
        %v7785 = vsel %vm7773, %v7752, %v6099
        %v7786 = vsel %vm7773, %v7753, %v6101
        %v7787 = vsel %vm7773, %v7754, %v6103
        %v7788 = vsel %vm7773, %v7755, %v6105
        %v7789 = vsel %vm7773, %v7756, %v6107
        %v7790 = vsel %vm7773, %v7757, %v6109
        %v7791 = vsel %vm7773, %v7758, %v6111
        %v7792 = vsel %vm7773, %v7759, %v6113
        %v7793 = vsel %vm7773, %v7760, %v6115
        %v7794 = vsel %vm7773, %v7761, %v6117
        %v7795 = vsel %vm7773, %v7762, %v6119
        %v7796 = vsel %vm7773, %v7763, %v6121
        %v7797 = vsel %vm7773, %v7764, %v6123
        %v7798 = vsel %vm7773, %v7765, %v6125
        %v7799 = vsel %vm7773, %v7766, %v6127
        %v7800 = vsel %vm7773, %v7767, %v6129
        %v7801 = vsel %vm7773, %v7768, %v6131
        %v7802 = vsel %vm7773, %v7769, %v6133
        %v7803 = vsel %vm7773, %v7770, %v6135
        %v7804 = vsel %vm7773, %v7771, %v6137
        %v7805 = vsel %vm7773, %v7772, %v6139
        %vm7806 = vcmask 195584
        %v7807 = vsel %vm7806, %v7774, %v6205
        %v7808 = vsel %vm7806, %v7775, %v6207
        %v7809 = vsel %vm7806, %v7776, %v6209
        %v7810 = vsel %vm7806, %v7777, %v6211
        %v7811 = vsel %vm7806, %v7778, %v6213
        %v7812 = vsel %vm7806, %v7779, %v6215
        %v7813 = vsel %vm7806, %v7780, %v6217
        %v7814 = vsel %vm7806, %v7781, %v6219
        %v7815 = vsel %vm7806, %v7782, %v6221
        %v7816 = vsel %vm7806, %v7783, %v6223
        %v7817 = vsel %vm7806, %v7784, %v6225
        %v7818 = vsel %vm7806, %v7785, %v6227
        %v7819 = vsel %vm7806, %v7786, %v6229
        %v7820 = vsel %vm7806, %v7787, %v6231
        %v7821 = vsel %vm7806, %v7788, %v6233
        %v7822 = vsel %vm7806, %v7789, %v6235
        %v7823 = vsel %vm7806, %v7790, %v6237
        %v7824 = vsel %vm7806, %v7791, %v6239
        %v7825 = vsel %vm7806, %v7792, %v6241
        %v7826 = vsel %vm7806, %v7793, %v6243
        %v7827 = vsel %vm7806, %v7794, %v6245
        %v7828 = vsel %vm7806, %v7795, %v6247
        %v7829 = vsel %vm7806, %v7796, %v6249
        %v7830 = vsel %vm7806, %v7797, %v6251
        %v7831 = vsel %vm7806, %v7798, %v6253
        %v7832 = vsel %vm7806, %v7799, %v6255
        %v7833 = vsel %vm7806, %v7800, %v6257
        %v7834 = vsel %vm7806, %v7801, %v6259
        %v7835 = vsel %vm7806, %v7802, %v6261
        %v7836 = vsel %vm7806, %v7803, %v6263
        %v7837 = vsel %vm7806, %v7804, %v6265
        %v7838 = vsel %vm7806, %v7805, %v6267
        %vm7839 = vcmask 261120
        %v7840 = vsel %vm7839, %v7807, %v6333
        %v7841 = vsel %vm7839, %v7808, %v6335
        %v7842 = vsel %vm7839, %v7809, %v6337
        %v7843 = vsel %vm7839, %v7810, %v6339
        %v7844 = vsel %vm7839, %v7811, %v6341
        %v7845 = vsel %vm7839, %v7812, %v6343
        %v7846 = vsel %vm7839, %v7813, %v6345
        %v7847 = vsel %vm7839, %v7814, %v6347
        %v7848 = vsel %vm7839, %v7815, %v6349
        %v7849 = vsel %vm7839, %v7816, %v6351
        %v7850 = vsel %vm7839, %v7817, %v6353
        %v7851 = vsel %vm7839, %v7818, %v6355
        %v7852 = vsel %vm7839, %v7819, %v6357
        %v7853 = vsel %vm7839, %v7820, %v6359
        %v7854 = vsel %vm7839, %v7821, %v6361
        %v7855 = vsel %vm7839, %v7822, %v6363
        %v7856 = vsel %vm7839, %v7823, %v6365
        %v7857 = vsel %vm7839, %v7824, %v6367
        %v7858 = vsel %vm7839, %v7825, %v6369
        %v7859 = vsel %vm7839, %v7826, %v6371
        %v7860 = vsel %vm7839, %v7827, %v6373
        %v7861 = vsel %vm7839, %v7828, %v6375
        %v7862 = vsel %vm7839, %v7829, %v6377
        %v7863 = vsel %vm7839, %v7830, %v6379
        %v7864 = vsel %vm7839, %v7831, %v6381
        %v7865 = vsel %vm7839, %v7832, %v6383
        %v7866 = vsel %vm7839, %v7833, %v6385
        %v7867 = vsel %vm7839, %v7834, %v6387
        %v7868 = vsel %vm7839, %v7835, %v6389
        %v7869 = vsel %vm7839, %v7836, %v6391
        %v7870 = vsel %vm7839, %v7837, %v6393
        %v7871 = vsel %vm7839, %v7838, %v6395
        %vm7872 = vcmask 326656
        %v7873 = vsel %vm7872, %v7840, %v6461
        %v7874 = vsel %vm7872, %v7841, %v6463
        %v7875 = vsel %vm7872, %v7842, %v6465
        %v7876 = vsel %vm7872, %v7843, %v6467
        %v7877 = vsel %vm7872, %v7844, %v6469
        %v7878 = vsel %vm7872, %v7845, %v6471
        %v7879 = vsel %vm7872, %v7846, %v6473
        %v7880 = vsel %vm7872, %v7847, %v6475
        %v7881 = vsel %vm7872, %v7848, %v6477
        %v7882 = vsel %vm7872, %v7849, %v6479
        %v7883 = vsel %vm7872, %v7850, %v6481
        %v7884 = vsel %vm7872, %v7851, %v6483
        %v7885 = vsel %vm7872, %v7852, %v6485
        %v7886 = vsel %vm7872, %v7853, %v6487
        %v7887 = vsel %vm7872, %v7854, %v6489
        %v7888 = vsel %vm7872, %v7855, %v6491
        %v7889 = vsel %vm7872, %v7856, %v6493
        %v7890 = vsel %vm7872, %v7857, %v6495
        %v7891 = vsel %vm7872, %v7858, %v6497
        %v7892 = vsel %vm7872, %v7859, %v6499
        %v7893 = vsel %vm7872, %v7860, %v6501
        %v7894 = vsel %vm7872, %v7861, %v6503
        %v7895 = vsel %vm7872, %v7862, %v6505
        %v7896 = vsel %vm7872, %v7863, %v6507
        %v7897 = vsel %vm7872, %v7864, %v6509
        %v7898 = vsel %vm7872, %v7865, %v6511
        %v7899 = vsel %vm7872, %v7866, %v6513
        %v7900 = vsel %vm7872, %v7867, %v6515
        %v7901 = vsel %vm7872, %v7868, %v6517
        %v7902 = vsel %vm7872, %v7869, %v6519
        %v7903 = vsel %vm7872, %v7870, %v6521
        %v7904 = vsel %vm7872, %v7871, %v6523
        %vm7905 = vcmask 359424
        %v7906 = vsel %vm7905, %v7873, %v6589
        %v7907 = vsel %vm7905, %v7874, %v6591
        %v7908 = vsel %vm7905, %v7875, %v6593
        %v7909 = vsel %vm7905, %v7876, %v6595
        %v7910 = vsel %vm7905, %v7877, %v6597
        %v7911 = vsel %vm7905, %v7878, %v6599
        %v7912 = vsel %vm7905, %v7879, %v6601
        %v7913 = vsel %vm7905, %v7880, %v6603
        %v7914 = vsel %vm7905, %v7881, %v6605
        %v7915 = vsel %vm7905, %v7882, %v6607
        %v7916 = vsel %vm7905, %v7883, %v6609
        %v7917 = vsel %vm7905, %v7884, %v6611
        %v7918 = vsel %vm7905, %v7885, %v6613
        %v7919 = vsel %vm7905, %v7886, %v6615
        %v7920 = vsel %vm7905, %v7887, %v6617
        %v7921 = vsel %vm7905, %v7888, %v6619
        %v7922 = vsel %vm7905, %v7889, %v6621
        %v7923 = vsel %vm7905, %v7890, %v6623
        %v7924 = vsel %vm7905, %v7891, %v6625
        %v7925 = vsel %vm7905, %v7892, %v6627
        %v7926 = vsel %vm7905, %v7893, %v6629
        %v7927 = vsel %vm7905, %v7894, %v6631
        %v7928 = vsel %vm7905, %v7895, %v6633
        %v7929 = vsel %vm7905, %v7896, %v6635
        %v7930 = vsel %vm7905, %v7897, %v6637
        %v7931 = vsel %vm7905, %v7898, %v6639
        %v7932 = vsel %vm7905, %v7899, %v6641
        %v7933 = vsel %vm7905, %v7900, %v6643
        %v7934 = vsel %vm7905, %v7901, %v6645
        %v7935 = vsel %vm7905, %v7902, %v6647
        %v7936 = vsel %vm7905, %v7903, %v6649
        %v7937 = vsel %vm7905, %v7904, %v6651
        %vm7938 = vcmask 424960
        %v7939 = vsel %vm7938, %v7906, %v6717
        %v7940 = vsel %vm7938, %v7907, %v6719
        %v7941 = vsel %vm7938, %v7908, %v6721
        %v7942 = vsel %vm7938, %v7909, %v6723
        %v7943 = vsel %vm7938, %v7910, %v6725
        %v7944 = vsel %vm7938, %v7911, %v6727
        %v7945 = vsel %vm7938, %v7912, %v6729
        %v7946 = vsel %vm7938, %v7913, %v6731
        %v7947 = vsel %vm7938, %v7914, %v6733
        %v7948 = vsel %vm7938, %v7915, %v6735
        %v7949 = vsel %vm7938, %v7916, %v6737
        %v7950 = vsel %vm7938, %v7917, %v6739
        %v7951 = vsel %vm7938, %v7918, %v6741
        %v7952 = vsel %vm7938, %v7919, %v6743
        %v7953 = vsel %vm7938, %v7920, %v6745
        %v7954 = vsel %vm7938, %v7921, %v6747
        %v7955 = vsel %vm7938, %v7922, %v6749
        %v7956 = vsel %vm7938, %v7923, %v6751
        %v7957 = vsel %vm7938, %v7924, %v6753
        %v7958 = vsel %vm7938, %v7925, %v6755
        %v7959 = vsel %vm7938, %v7926, %v6757
        %v7960 = vsel %vm7938, %v7927, %v6759
        %v7961 = vsel %vm7938, %v7928, %v6761
        %v7962 = vsel %vm7938, %v7929, %v6763
        %v7963 = vsel %vm7938, %v7930, %v6765
        %v7964 = vsel %vm7938, %v7931, %v6767
        %v7965 = vsel %vm7938, %v7932, %v6769
        %v7966 = vsel %vm7938, %v7933, %v6771
        %v7967 = vsel %vm7938, %v7934, %v6773
        %v7968 = vsel %vm7938, %v7935, %v6775
        %v7969 = vsel %vm7938, %v7936, %v6777
        %v7970 = vsel %vm7938, %v7937, %v6779
        %vm7971 = vcmask 490496
        %v7972 = vsel %vm7971, %v7939, %v6845
        %v7973 = vsel %vm7971, %v7940, %v6847
        %v7974 = vsel %vm7971, %v7941, %v6849
        %v7975 = vsel %vm7971, %v7942, %v6851
        %v7976 = vsel %vm7971, %v7943, %v6853
        %v7977 = vsel %vm7971, %v7944, %v6855
        %v7978 = vsel %vm7971, %v7945, %v6857
        %v7979 = vsel %vm7971, %v7946, %v6859
        %v7980 = vsel %vm7971, %v7947, %v6861
        %v7981 = vsel %vm7971, %v7948, %v6863
        %v7982 = vsel %vm7971, %v7949, %v6865
        %v7983 = vsel %vm7971, %v7950, %v6867
        %v7984 = vsel %vm7971, %v7951, %v6869
        %v7985 = vsel %vm7971, %v7952, %v6871
        %v7986 = vsel %vm7971, %v7953, %v6873
        %v7987 = vsel %vm7971, %v7954, %v6875
        %v7988 = vsel %vm7971, %v7955, %v6877
        %v7989 = vsel %vm7971, %v7956, %v6879
        %v7990 = vsel %vm7971, %v7957, %v6881
        %v7991 = vsel %vm7971, %v7958, %v6883
        %v7992 = vsel %vm7971, %v7959, %v6885
        %v7993 = vsel %vm7971, %v7960, %v6887
        %v7994 = vsel %vm7971, %v7961, %v6889
        %v7995 = vsel %vm7971, %v7962, %v6891
        %v7996 = vsel %vm7971, %v7963, %v6893
        %v7997 = vsel %vm7971, %v7964, %v6895
        %v7998 = vsel %vm7971, %v7965, %v6897
        %v7999 = vsel %vm7971, %v7966, %v6899
        %v8000 = vsel %vm7971, %v7967, %v6901
        %v8001 = vsel %vm7971, %v7968, %v6903
        %v8002 = vsel %vm7971, %v7969, %v6905
        %v8003 = vsel %vm7971, %v7970, %v6907
        %vm8004 = vcmask 523264
        %v8005 = vsel %vm8004, %v7972, %v6973
        %v8006 = vsel %vm8004, %v7973, %v6975
        %v8007 = vsel %vm8004, %v7974, %v6977
        %v8008 = vsel %vm8004, %v7975, %v6979
        %v8009 = vsel %vm8004, %v7976, %v6981
        %v8010 = vsel %vm8004, %v7977, %v6983
        %v8011 = vsel %vm8004, %v7978, %v6985
        %v8012 = vsel %vm8004, %v7979, %v6987
        %v8013 = vsel %vm8004, %v7980, %v6989
        %v8014 = vsel %vm8004, %v7981, %v6991
        %v8015 = vsel %vm8004, %v7982, %v6993
        %v8016 = vsel %vm8004, %v7983, %v6995
        %v8017 = vsel %vm8004, %v7984, %v6997
        %v8018 = vsel %vm8004, %v7985, %v6999
        %v8019 = vsel %vm8004, %v7986, %v7001
        %v8020 = vsel %vm8004, %v7987, %v7003
        %v8021 = vsel %vm8004, %v7988, %v7005
        %v8022 = vsel %vm8004, %v7989, %v7007
        %v8023 = vsel %vm8004, %v7990, %v7009
        %v8024 = vsel %vm8004, %v7991, %v7011
        %v8025 = vsel %vm8004, %v7992, %v7013
        %v8026 = vsel %vm8004, %v7993, %v7015
        %v8027 = vsel %vm8004, %v7994, %v7017
        %v8028 = vsel %vm8004, %v7995, %v7019
        %v8029 = vsel %vm8004, %v7996, %v7021
        %v8030 = vsel %vm8004, %v7997, %v7023
        %v8031 = vsel %vm8004, %v7998, %v7025
        %v8032 = vsel %vm8004, %v7999, %v7027
        %v8033 = vsel %vm8004, %v8000, %v7029
        %v8034 = vsel %vm8004, %v8001, %v7031
        %v8035 = vsel %vm8004, %v8002, %v7033
        %v8036 = vsel %vm8004, %v8003, %v7035
        %vm8037 = vcmask 588800
        %v8038 = vsel %vm8037, %v8005, %v7101
        %v8039 = vsel %vm8037, %v8006, %v7103
        %v8040 = vsel %vm8037, %v8007, %v7105
        %v8041 = vsel %vm8037, %v8008, %v7107
        %v8042 = vsel %vm8037, %v8009, %v7109
        %v8043 = vsel %vm8037, %v8010, %v7111
        %v8044 = vsel %vm8037, %v8011, %v7113
        %v8045 = vsel %vm8037, %v8012, %v7115
        %v8046 = vsel %vm8037, %v8013, %v7117
        %v8047 = vsel %vm8037, %v8014, %v7119
        %v8048 = vsel %vm8037, %v8015, %v7121
        %v8049 = vsel %vm8037, %v8016, %v7123
        %v8050 = vsel %vm8037, %v8017, %v7125
        %v8051 = vsel %vm8037, %v8018, %v7127
        %v8052 = vsel %vm8037, %v8019, %v7129
        %v8053 = vsel %vm8037, %v8020, %v7131
        %v8054 = vsel %vm8037, %v8021, %v7133
        %v8055 = vsel %vm8037, %v8022, %v7135
        %v8056 = vsel %vm8037, %v8023, %v7137
        %v8057 = vsel %vm8037, %v8024, %v7139
        %v8058 = vsel %vm8037, %v8025, %v7141
        %v8059 = vsel %vm8037, %v8026, %v7143
        %v8060 = vsel %vm8037, %v8027, %v7145
        %v8061 = vsel %vm8037, %v8028, %v7147
        %v8062 = vsel %vm8037, %v8029, %v7149
        %v8063 = vsel %vm8037, %v8030, %v7151
        %v8064 = vsel %vm8037, %v8031, %v7153
        %v8065 = vsel %vm8037, %v8032, %v7155
        %v8066 = vsel %vm8037, %v8033, %v7157
        %v8067 = vsel %vm8037, %v8034, %v7159
        %v8068 = vsel %vm8037, %v8035, %v7161
        %v8069 = vsel %vm8037, %v8036, %v7163
        %vm8070 = vcmask 654336
        %v8071 = vsel %vm8070, %v8038, %v7229
        %v8072 = vsel %vm8070, %v8039, %v7231
        %v8073 = vsel %vm8070, %v8040, %v7233
        %v8074 = vsel %vm8070, %v8041, %v7235
        %v8075 = vsel %vm8070, %v8042, %v7237
        %v8076 = vsel %vm8070, %v8043, %v7239
        %v8077 = vsel %vm8070, %v8044, %v7241
        %v8078 = vsel %vm8070, %v8045, %v7243
        %v8079 = vsel %vm8070, %v8046, %v7245
        %v8080 = vsel %vm8070, %v8047, %v7247
        %v8081 = vsel %vm8070, %v8048, %v7249
        %v8082 = vsel %vm8070, %v8049, %v7251
        %v8083 = vsel %vm8070, %v8050, %v7253
        %v8084 = vsel %vm8070, %v8051, %v7255
        %v8085 = vsel %vm8070, %v8052, %v7257
        %v8086 = vsel %vm8070, %v8053, %v7259
        %v8087 = vsel %vm8070, %v8054, %v7261
        %v8088 = vsel %vm8070, %v8055, %v7263
        %v8089 = vsel %vm8070, %v8056, %v7265
        %v8090 = vsel %vm8070, %v8057, %v7267
        %v8091 = vsel %vm8070, %v8058, %v7269
        %v8092 = vsel %vm8070, %v8059, %v7271
        %v8093 = vsel %vm8070, %v8060, %v7273
        %v8094 = vsel %vm8070, %v8061, %v7275
        %v8095 = vsel %vm8070, %v8062, %v7277
        %v8096 = vsel %vm8070, %v8063, %v7279
        %v8097 = vsel %vm8070, %v8064, %v7281
        %v8098 = vsel %vm8070, %v8065, %v7283
        %v8099 = vsel %vm8070, %v8066, %v7285
        %v8100 = vsel %vm8070, %v8067, %v7287
        %v8101 = vsel %vm8070, %v8068, %v7289
        %v8102 = vsel %vm8070, %v8069, %v7291
        %vm8103 = vcmask 687104
        %v8104 = vsel %vm8103, %v8071, %v7357
        %v8105 = vsel %vm8103, %v8072, %v7359
        %v8106 = vsel %vm8103, %v8073, %v7361
        %v8107 = vsel %vm8103, %v8074, %v7363
        %v8108 = vsel %vm8103, %v8075, %v7365
        %v8109 = vsel %vm8103, %v8076, %v7367
        %v8110 = vsel %vm8103, %v8077, %v7369
        %v8111 = vsel %vm8103, %v8078, %v7371
        %v8112 = vsel %vm8103, %v8079, %v7373
        %v8113 = vsel %vm8103, %v8080, %v7375
        %v8114 = vsel %vm8103, %v8081, %v7377
        %v8115 = vsel %vm8103, %v8082, %v7379
        %v8116 = vsel %vm8103, %v8083, %v7381
        %v8117 = vsel %vm8103, %v8084, %v7383
        %v8118 = vsel %vm8103, %v8085, %v7385
        %v8119 = vsel %vm8103, %v8086, %v7387
        %v8120 = vsel %vm8103, %v8087, %v7389
        %v8121 = vsel %vm8103, %v8088, %v7391
        %v8122 = vsel %vm8103, %v8089, %v7393
        %v8123 = vsel %vm8103, %v8090, %v7395
        %v8124 = vsel %vm8103, %v8091, %v7397
        %v8125 = vsel %vm8103, %v8092, %v7399
        %v8126 = vsel %vm8103, %v8093, %v7401
        %v8127 = vsel %vm8103, %v8094, %v7403
        %v8128 = vsel %vm8103, %v8095, %v7405
        %v8129 = vsel %vm8103, %v8096, %v7407
        %v8130 = vsel %vm8103, %v8097, %v7409
        %v8131 = vsel %vm8103, %v8098, %v7411
        %v8132 = vsel %vm8103, %v8099, %v7413
        %v8133 = vsel %vm8103, %v8100, %v7415
        %v8134 = vsel %vm8103, %v8101, %v7417
        %v8135 = vsel %vm8103, %v8102, %v7419
        %vm8136 = vcmask 752640
        %v8137 = vsel %vm8136, %v8104, %v7485
        %v8138 = vsel %vm8136, %v8105, %v7487
        %v8139 = vsel %vm8136, %v8106, %v7489
        %v8140 = vsel %vm8136, %v8107, %v7491
        %v8141 = vsel %vm8136, %v8108, %v7493
        %v8142 = vsel %vm8136, %v8109, %v7495
        %v8143 = vsel %vm8136, %v8110, %v7497
        %v8144 = vsel %vm8136, %v8111, %v7499
        %v8145 = vsel %vm8136, %v8112, %v7501
        %v8146 = vsel %vm8136, %v8113, %v7503
        %v8147 = vsel %vm8136, %v8114, %v7505
        %v8148 = vsel %vm8136, %v8115, %v7507
        %v8149 = vsel %vm8136, %v8116, %v7509
        %v8150 = vsel %vm8136, %v8117, %v7511
        %v8151 = vsel %vm8136, %v8118, %v7513
        %v8152 = vsel %vm8136, %v8119, %v7515
        %v8153 = vsel %vm8136, %v8120, %v7517
        %v8154 = vsel %vm8136, %v8121, %v7519
        %v8155 = vsel %vm8136, %v8122, %v7521
        %v8156 = vsel %vm8136, %v8123, %v7523
        %v8157 = vsel %vm8136, %v8124, %v7525
        %v8158 = vsel %vm8136, %v8125, %v7527
        %v8159 = vsel %vm8136, %v8126, %v7529
        %v8160 = vsel %vm8136, %v8127, %v7531
        %v8161 = vsel %vm8136, %v8128, %v7533
        %v8162 = vsel %vm8136, %v8129, %v7535
        %v8163 = vsel %vm8136, %v8130, %v7537
        %v8164 = vsel %vm8136, %v8131, %v7539
        %v8165 = vsel %vm8136, %v8132, %v7541
        %v8166 = vsel %vm8136, %v8133, %v7543
        %v8167 = vsel %vm8136, %v8134, %v7545
        %v8168 = vsel %vm8136, %v8135, %v7547
        %vm8169 = vcmask 818176
        %v8170 = vsel %vm8169, %v8137, %v7613
        %v8171 = vsel %vm8169, %v8138, %v7615
        %v8172 = vsel %vm8169, %v8139, %v7617
        %v8173 = vsel %vm8169, %v8140, %v7619
        %v8174 = vsel %vm8169, %v8141, %v7621
        %v8175 = vsel %vm8169, %v8142, %v7623
        %v8176 = vsel %vm8169, %v8143, %v7625
        %v8177 = vsel %vm8169, %v8144, %v7627
        %v8178 = vsel %vm8169, %v8145, %v7629
        %v8179 = vsel %vm8169, %v8146, %v7631
        %v8180 = vsel %vm8169, %v8147, %v7633
        %v8181 = vsel %vm8169, %v8148, %v7635
        %v8182 = vsel %vm8169, %v8149, %v7637
        %v8183 = vsel %vm8169, %v8150, %v7639
        %v8184 = vsel %vm8169, %v8151, %v7641
        %v8185 = vsel %vm8169, %v8152, %v7643
        %v8186 = vsel %vm8169, %v8153, %v7645
        %v8187 = vsel %vm8169, %v8154, %v7647
        %v8188 = vsel %vm8169, %v8155, %v7649
        %v8189 = vsel %vm8169, %v8156, %v7651
        %v8190 = vsel %vm8169, %v8157, %v7653
        %v8191 = vsel %vm8169, %v8158, %v7655
        %v8192 = vsel %vm8169, %v8159, %v7657
        %v8193 = vsel %vm8169, %v8160, %v7659
        %v8194 = vsel %vm8169, %v8161, %v7661
        %v8195 = vsel %vm8169, %v8162, %v7663
        %v8196 = vsel %vm8169, %v8163, %v7665
        %v8197 = vsel %vm8169, %v8164, %v7667
        %v8198 = vsel %vm8169, %v8165, %v7669
        %v8199 = vsel %vm8169, %v8166, %v7671
        %v8200 = vsel %vm8169, %v8167, %v7673
        %v8201 = vsel %vm8169, %v8168, %v7675
        %8234 = vrot.lane.b32.xlu0 %v5467, 8
        %v8235 = vpop.permute.xlu0 %8234
        %8236 = vrot.lane.b32.xlu0 %v5468, 8
        %v8237 = vpop.permute.xlu0 %8236
        %8238 = vrot.lane.b32.xlu0 %v5469, 8
        %v8239 = vpop.permute.xlu0 %8238
        %8240 = vrot.lane.b32.xlu0 %v5470, 8
        %v8241 = vpop.permute.xlu0 %8240
        %8242 = vrot.lane.b32.xlu0 %v5471, 8
        %v8243 = vpop.permute.xlu0 %8242
        %8244 = vrot.lane.b32.xlu0 %v5472, 8
        %v8245 = vpop.permute.xlu0 %8244
        %8246 = vrot.lane.b32.xlu0 %v5473, 8
        %v8247 = vpop.permute.xlu0 %8246
        %8248 = vrot.lane.b32.xlu0 %v5474, 8
        %v8249 = vpop.permute.xlu0 %8248
        %8250 = vrot.lane.b32.xlu0 %v5475, 8
        %v8251 = vpop.permute.xlu0 %8250
        %8252 = vrot.lane.b32.xlu0 %v5476, 8
        %v8253 = vpop.permute.xlu0 %8252
        %8254 = vrot.lane.b32.xlu0 %v5477, 8
        %v8255 = vpop.permute.xlu0 %8254
        %8256 = vrot.lane.b32.xlu0 %v5478, 8
        %v8257 = vpop.permute.xlu0 %8256
        %8258 = vrot.lane.b32.xlu0 %v5479, 8
        %v8259 = vpop.permute.xlu0 %8258
        %8260 = vrot.lane.b32.xlu0 %v5480, 8
        %v8261 = vpop.permute.xlu0 %8260
        %8262 = vrot.lane.b32.xlu0 %v5481, 8
        %v8263 = vpop.permute.xlu0 %8262
        %8264 = vrot.lane.b32.xlu0 %v5482, 8
        %v8265 = vpop.permute.xlu0 %8264
        %8266 = vrot.lane.b32.xlu0 %v5483, 8
        %v8267 = vpop.permute.xlu0 %8266
        %8268 = vrot.lane.b32.xlu0 %v5484, 8
        %v8269 = vpop.permute.xlu0 %8268
        %8270 = vrot.lane.b32.xlu0 %v5485, 8
        %v8271 = vpop.permute.xlu0 %8270
        %8272 = vrot.lane.b32.xlu0 %v5486, 8
        %v8273 = vpop.permute.xlu0 %8272
        %8274 = vrot.lane.b32.xlu0 %v5487, 8
        %v8275 = vpop.permute.xlu0 %8274
        %8276 = vrot.lane.b32.xlu0 %v5488, 8
        %v8277 = vpop.permute.xlu0 %8276
        %8278 = vrot.lane.b32.xlu0 %v5489, 8
        %v8279 = vpop.permute.xlu0 %8278
        %8280 = vrot.lane.b32.xlu0 %v5490, 8
        %v8281 = vpop.permute.xlu0 %8280
        %8282 = vrot.lane.b32.xlu0 %v5491, 8
        %v8283 = vpop.permute.xlu0 %8282
        %8284 = vrot.lane.b32.xlu0 %v5492, 8
        %v8285 = vpop.permute.xlu0 %8284
        %8286 = vrot.lane.b32.xlu0 %v5493, 8
        %v8287 = vpop.permute.xlu0 %8286
        %8288 = vrot.lane.b32.xlu0 %v5494, 8
        %v8289 = vpop.permute.xlu0 %8288
        %8290 = vrot.lane.b32.xlu0 %v5495, 8
        %v8291 = vpop.permute.xlu0 %8290
        %8292 = vrot.lane.b32.xlu0 %v5496, 8
        %v8293 = vpop.permute.xlu0 %8292
        %8294 = vrot.lane.b32.xlu0 %v5497, 8
        %v8295 = vpop.permute.xlu0 %8294
        %8296 = vrot.lane.b32.xlu0 %v5498, 8
        %v8297 = vpop.permute.xlu0 %8296
        %8362 = vrot.lane.b32.xlu0 %v5499, 16
        %v8363 = vpop.permute.xlu0 %8362
        %8364 = vrot.lane.b32.xlu0 %v5500, 16
        %v8365 = vpop.permute.xlu0 %8364
        %8366 = vrot.lane.b32.xlu0 %v5501, 16
        %v8367 = vpop.permute.xlu0 %8366
        %8368 = vrot.lane.b32.xlu0 %v5502, 16
        %v8369 = vpop.permute.xlu0 %8368
        %8370 = vrot.lane.b32.xlu0 %v5503, 16
        %v8371 = vpop.permute.xlu0 %8370
        %8372 = vrot.lane.b32.xlu0 %v5504, 16
        %v8373 = vpop.permute.xlu0 %8372
        %8374 = vrot.lane.b32.xlu0 %v5505, 16
        %v8375 = vpop.permute.xlu0 %8374
        %8376 = vrot.lane.b32.xlu0 %v5506, 16
        %v8377 = vpop.permute.xlu0 %8376
        %8378 = vrot.lane.b32.xlu0 %v5507, 16
        %v8379 = vpop.permute.xlu0 %8378
        %8380 = vrot.lane.b32.xlu0 %v5508, 16
        %v8381 = vpop.permute.xlu0 %8380
        %8382 = vrot.lane.b32.xlu0 %v5509, 16
        %v8383 = vpop.permute.xlu0 %8382
        %8384 = vrot.lane.b32.xlu0 %v5510, 16
        %v8385 = vpop.permute.xlu0 %8384
        %8386 = vrot.lane.b32.xlu0 %v5511, 16
        %v8387 = vpop.permute.xlu0 %8386
        %8388 = vrot.lane.b32.xlu0 %v5512, 16
        %v8389 = vpop.permute.xlu0 %8388
        %8390 = vrot.lane.b32.xlu0 %v5513, 16
        %v8391 = vpop.permute.xlu0 %8390
        %8392 = vrot.lane.b32.xlu0 %v5514, 16
        %v8393 = vpop.permute.xlu0 %8392
        %8394 = vrot.lane.b32.xlu0 %v5515, 16
        %v8395 = vpop.permute.xlu0 %8394
        %8396 = vrot.lane.b32.xlu0 %v5516, 16
        %v8397 = vpop.permute.xlu0 %8396
        %8398 = vrot.lane.b32.xlu0 %v5517, 16
        %v8399 = vpop.permute.xlu0 %8398
        %8400 = vrot.lane.b32.xlu0 %v5518, 16
        %v8401 = vpop.permute.xlu0 %8400
        %8402 = vrot.lane.b32.xlu0 %v5519, 16
        %v8403 = vpop.permute.xlu0 %8402
        %8404 = vrot.lane.b32.xlu0 %v5520, 16
        %v8405 = vpop.permute.xlu0 %8404
        %8406 = vrot.lane.b32.xlu0 %v5521, 16
        %v8407 = vpop.permute.xlu0 %8406
        %8408 = vrot.lane.b32.xlu0 %v5522, 16
        %v8409 = vpop.permute.xlu0 %8408
        %8410 = vrot.lane.b32.xlu0 %v5523, 16
        %v8411 = vpop.permute.xlu0 %8410
        %8412 = vrot.lane.b32.xlu0 %v5524, 16
        %v8413 = vpop.permute.xlu0 %8412
        %8414 = vrot.lane.b32.xlu0 %v5525, 16
        %v8415 = vpop.permute.xlu0 %8414
        %8416 = vrot.lane.b32.xlu0 %v5526, 16
        %v8417 = vpop.permute.xlu0 %8416
        %8418 = vrot.lane.b32.xlu0 %v5527, 16
        %v8419 = vpop.permute.xlu0 %8418
        %8420 = vrot.lane.b32.xlu0 %v5528, 16
        %v8421 = vpop.permute.xlu0 %8420
        %8422 = vrot.lane.b32.xlu0 %v5529, 16
        %v8423 = vpop.permute.xlu0 %8422
        %8424 = vrot.lane.b32.xlu0 %v5530, 16
        %v8425 = vpop.permute.xlu0 %8424
        %8490 = vrot.lane.b32.xlu0 %v5531, 20
        %v8491 = vpop.permute.xlu0 %8490
        %8492 = vrot.lane.b32.xlu0 %v5532, 20
        %v8493 = vpop.permute.xlu0 %8492
        %8494 = vrot.lane.b32.xlu0 %v5533, 20
        %v8495 = vpop.permute.xlu0 %8494
        %8496 = vrot.lane.b32.xlu0 %v5534, 20
        %v8497 = vpop.permute.xlu0 %8496
        %8498 = vrot.lane.b32.xlu0 %v5535, 20
        %v8499 = vpop.permute.xlu0 %8498
        %8500 = vrot.lane.b32.xlu0 %v5536, 20
        %v8501 = vpop.permute.xlu0 %8500
        %8502 = vrot.lane.b32.xlu0 %v5537, 20
        %v8503 = vpop.permute.xlu0 %8502
        %8504 = vrot.lane.b32.xlu0 %v5538, 20
        %v8505 = vpop.permute.xlu0 %8504
        %8506 = vrot.lane.b32.xlu0 %v5539, 20
        %v8507 = vpop.permute.xlu0 %8506
        %8508 = vrot.lane.b32.xlu0 %v5540, 20
        %v8509 = vpop.permute.xlu0 %8508
        %8510 = vrot.lane.b32.xlu0 %v5541, 20
        %v8511 = vpop.permute.xlu0 %8510
        %8512 = vrot.lane.b32.xlu0 %v5542, 20
        %v8513 = vpop.permute.xlu0 %8512
        %8514 = vrot.lane.b32.xlu0 %v5543, 20
        %v8515 = vpop.permute.xlu0 %8514
        %8516 = vrot.lane.b32.xlu0 %v5544, 20
        %v8517 = vpop.permute.xlu0 %8516
        %8518 = vrot.lane.b32.xlu0 %v5545, 20
        %v8519 = vpop.permute.xlu0 %8518
        %8520 = vrot.lane.b32.xlu0 %v5546, 20
        %v8521 = vpop.permute.xlu0 %8520
        %8522 = vrot.lane.b32.xlu0 %v5547, 20
        %v8523 = vpop.permute.xlu0 %8522
        %8524 = vrot.lane.b32.xlu0 %v5548, 20
        %v8525 = vpop.permute.xlu0 %8524
        %8526 = vrot.lane.b32.xlu0 %v5549, 20
        %v8527 = vpop.permute.xlu0 %8526
        %8528 = vrot.lane.b32.xlu0 %v5550, 20
        %v8529 = vpop.permute.xlu0 %8528
        %8530 = vrot.lane.b32.xlu0 %v5551, 20
        %v8531 = vpop.permute.xlu0 %8530
        %8532 = vrot.lane.b32.xlu0 %v5552, 20
        %v8533 = vpop.permute.xlu0 %8532
        %8534 = vrot.lane.b32.xlu0 %v5553, 20
        %v8535 = vpop.permute.xlu0 %8534
        %8536 = vrot.lane.b32.xlu0 %v5554, 20
        %v8537 = vpop.permute.xlu0 %8536
        %8538 = vrot.lane.b32.xlu0 %v5555, 20
        %v8539 = vpop.permute.xlu0 %8538
        %8540 = vrot.lane.b32.xlu0 %v5556, 20
        %v8541 = vpop.permute.xlu0 %8540
        %8542 = vrot.lane.b32.xlu0 %v5557, 20
        %v8543 = vpop.permute.xlu0 %8542
        %8544 = vrot.lane.b32.xlu0 %v5558, 20
        %v8545 = vpop.permute.xlu0 %8544
        %8546 = vrot.lane.b32.xlu0 %v5559, 20
        %v8547 = vpop.permute.xlu0 %8546
        %8548 = vrot.lane.b32.xlu0 %v5560, 20
        %v8549 = vpop.permute.xlu0 %8548
        %8550 = vrot.lane.b32.xlu0 %v5561, 20
        %v8551 = vpop.permute.xlu0 %8550
        %8552 = vrot.lane.b32.xlu0 %v5562, 20
        %v8553 = vpop.permute.xlu0 %8552
        %8618 = vrot.lane.b32.xlu0 %v5564, 28
        %v8619 = vpop.permute.xlu0 %8618
        %8620 = vrot.lane.b32.xlu0 %v5565, 28
        %v8621 = vpop.permute.xlu0 %8620
        %8622 = vrot.lane.b32.xlu0 %v5566, 28
        %v8623 = vpop.permute.xlu0 %8622
        %8624 = vrot.lane.b32.xlu0 %v5567, 28
        %v8625 = vpop.permute.xlu0 %8624
        %8626 = vrot.lane.b32.xlu0 %v5568, 28
        %v8627 = vpop.permute.xlu0 %8626
        %8628 = vrot.lane.b32.xlu0 %v5569, 28
        %v8629 = vpop.permute.xlu0 %8628
        %8630 = vrot.lane.b32.xlu0 %v5570, 28
        %v8631 = vpop.permute.xlu0 %8630
        %8632 = vrot.lane.b32.xlu0 %v5571, 28
        %v8633 = vpop.permute.xlu0 %8632
        %8634 = vrot.lane.b32.xlu0 %v5572, 28
        %v8635 = vpop.permute.xlu0 %8634
        %8636 = vrot.lane.b32.xlu0 %v5573, 28
        %v8637 = vpop.permute.xlu0 %8636
        %8638 = vrot.lane.b32.xlu0 %v5574, 28
        %v8639 = vpop.permute.xlu0 %8638
        %8640 = vrot.lane.b32.xlu0 %v5575, 28
        %v8641 = vpop.permute.xlu0 %8640
        %8642 = vrot.lane.b32.xlu0 %v5576, 28
        %v8643 = vpop.permute.xlu0 %8642
        %8644 = vrot.lane.b32.xlu0 %v5577, 28
        %v8645 = vpop.permute.xlu0 %8644
        %8646 = vrot.lane.b32.xlu0 %v5578, 28
        %v8647 = vpop.permute.xlu0 %8646
        %8648 = vrot.lane.b32.xlu0 %v5579, 28
        %v8649 = vpop.permute.xlu0 %8648
        %8650 = vrot.lane.b32.xlu0 %v5580, 28
        %v8651 = vpop.permute.xlu0 %8650
        %8652 = vrot.lane.b32.xlu0 %v5581, 28
        %v8653 = vpop.permute.xlu0 %8652
        %8654 = vrot.lane.b32.xlu0 %v5582, 28
        %v8655 = vpop.permute.xlu0 %8654
        %8656 = vrot.lane.b32.xlu0 %v5583, 28
        %v8657 = vpop.permute.xlu0 %8656
        %8658 = vrot.lane.b32.xlu0 %v5584, 28
        %v8659 = vpop.permute.xlu0 %8658
        %8660 = vrot.lane.b32.xlu0 %v5585, 28
        %v8661 = vpop.permute.xlu0 %8660
        %8662 = vrot.lane.b32.xlu0 %v5586, 28
        %v8663 = vpop.permute.xlu0 %8662
        %8664 = vrot.lane.b32.xlu0 %v5587, 28
        %v8665 = vpop.permute.xlu0 %8664
        %8666 = vrot.lane.b32.xlu0 %v5588, 28
        %v8667 = vpop.permute.xlu0 %8666
        %8668 = vrot.lane.b32.xlu0 %v5589, 28
        %v8669 = vpop.permute.xlu0 %8668
        %8670 = vrot.lane.b32.xlu0 %v5590, 28
        %v8671 = vpop.permute.xlu0 %8670
        %8672 = vrot.lane.b32.xlu0 %v5591, 28
        %v8673 = vpop.permute.xlu0 %8672
        %8674 = vrot.lane.b32.xlu0 %v5592, 28
        %v8675 = vpop.permute.xlu0 %8674
        %8676 = vrot.lane.b32.xlu0 %v5593, 28
        %v8677 = vpop.permute.xlu0 %8676
        %8678 = vrot.lane.b32.xlu0 %v5594, 28
        %v8679 = vpop.permute.xlu0 %8678
        %8680 = vrot.lane.b32.xlu0 %v5595, 28
        %v8681 = vpop.permute.xlu0 %8680
        %8746 = vrot.lane.b32.xlu0 %v5596, 36
        %v8747 = vpop.permute.xlu0 %8746
        %8748 = vrot.lane.b32.xlu0 %v5597, 36
        %v8749 = vpop.permute.xlu0 %8748
        %8750 = vrot.lane.b32.xlu0 %v5598, 36
        %v8751 = vpop.permute.xlu0 %8750
        %8752 = vrot.lane.b32.xlu0 %v5599, 36
        %v8753 = vpop.permute.xlu0 %8752
        %8754 = vrot.lane.b32.xlu0 %v5600, 36
        %v8755 = vpop.permute.xlu0 %8754
        %8756 = vrot.lane.b32.xlu0 %v5601, 36
        %v8757 = vpop.permute.xlu0 %8756
        %8758 = vrot.lane.b32.xlu0 %v5602, 36
        %v8759 = vpop.permute.xlu0 %8758
        %8760 = vrot.lane.b32.xlu0 %v5603, 36
        %v8761 = vpop.permute.xlu0 %8760
        %8762 = vrot.lane.b32.xlu0 %v5604, 36
        %v8763 = vpop.permute.xlu0 %8762
        %8764 = vrot.lane.b32.xlu0 %v5605, 36
        %v8765 = vpop.permute.xlu0 %8764
        %8766 = vrot.lane.b32.xlu0 %v5606, 36
        %v8767 = vpop.permute.xlu0 %8766
        %8768 = vrot.lane.b32.xlu0 %v5607, 36
        %v8769 = vpop.permute.xlu0 %8768
        %8770 = vrot.lane.b32.xlu0 %v5608, 36
        %v8771 = vpop.permute.xlu0 %8770
        %8772 = vrot.lane.b32.xlu0 %v5609, 36
        %v8773 = vpop.permute.xlu0 %8772
        %8774 = vrot.lane.b32.xlu0 %v5610, 36
        %v8775 = vpop.permute.xlu0 %8774
        %8776 = vrot.lane.b32.xlu0 %v5611, 36
        %v8777 = vpop.permute.xlu0 %8776
        %8778 = vrot.lane.b32.xlu0 %v5612, 36
        %v8779 = vpop.permute.xlu0 %8778
        %8780 = vrot.lane.b32.xlu0 %v5613, 36
        %v8781 = vpop.permute.xlu0 %8780
        %8782 = vrot.lane.b32.xlu0 %v5614, 36
        %v8783 = vpop.permute.xlu0 %8782
        %8784 = vrot.lane.b32.xlu0 %v5615, 36
        %v8785 = vpop.permute.xlu0 %8784
        %8786 = vrot.lane.b32.xlu0 %v5616, 36
        %v8787 = vpop.permute.xlu0 %8786
        %8788 = vrot.lane.b32.xlu0 %v5617, 36
        %v8789 = vpop.permute.xlu0 %8788
        %8790 = vrot.lane.b32.xlu0 %v5618, 36
        %v8791 = vpop.permute.xlu0 %8790
        %8792 = vrot.lane.b32.xlu0 %v5619, 36
        %v8793 = vpop.permute.xlu0 %8792
        %8794 = vrot.lane.b32.xlu0 %v5620, 36
        %v8795 = vpop.permute.xlu0 %8794
        %8796 = vrot.lane.b32.xlu0 %v5621, 36
        %v8797 = vpop.permute.xlu0 %8796
        %8798 = vrot.lane.b32.xlu0 %v5622, 36
        %v8799 = vpop.permute.xlu0 %8798
        %8800 = vrot.lane.b32.xlu0 %v5623, 36
        %v8801 = vpop.permute.xlu0 %8800
        %8802 = vrot.lane.b32.xlu0 %v5624, 36
        %v8803 = vpop.permute.xlu0 %8802
        %8804 = vrot.lane.b32.xlu0 %v5625, 36
        %v8805 = vpop.permute.xlu0 %8804
        %8806 = vrot.lane.b32.xlu0 %v5626, 36
        %v8807 = vpop.permute.xlu0 %8806
        %8808 = vrot.lane.b32.xlu0 %v5627, 36
        %v8809 = vpop.permute.xlu0 %8808
        %8874 = vrot.lane.b32.xlu0 %v5628, 40
        %v8875 = vpop.permute.xlu0 %8874
        %8876 = vrot.lane.b32.xlu0 %v5629, 40
        %v8877 = vpop.permute.xlu0 %8876
        %8878 = vrot.lane.b32.xlu0 %v5630, 40
        %v8879 = vpop.permute.xlu0 %8878
        %8880 = vrot.lane.b32.xlu0 %v5631, 40
        %v8881 = vpop.permute.xlu0 %8880
        %8882 = vrot.lane.b32.xlu0 %v5632, 40
        %v8883 = vpop.permute.xlu0 %8882
        %8884 = vrot.lane.b32.xlu0 %v5633, 40
        %v8885 = vpop.permute.xlu0 %8884
        %8886 = vrot.lane.b32.xlu0 %v5634, 40
        %v8887 = vpop.permute.xlu0 %8886
        %8888 = vrot.lane.b32.xlu0 %v5635, 40
        %v8889 = vpop.permute.xlu0 %8888
        %8890 = vrot.lane.b32.xlu0 %v5636, 40
        %v8891 = vpop.permute.xlu0 %8890
        %8892 = vrot.lane.b32.xlu0 %v5637, 40
        %v8893 = vpop.permute.xlu0 %8892
        %8894 = vrot.lane.b32.xlu0 %v5638, 40
        %v8895 = vpop.permute.xlu0 %8894
        %8896 = vrot.lane.b32.xlu0 %v5639, 40
        %v8897 = vpop.permute.xlu0 %8896
        %8898 = vrot.lane.b32.xlu0 %v5640, 40
        %v8899 = vpop.permute.xlu0 %8898
        %8900 = vrot.lane.b32.xlu0 %v5641, 40
        %v8901 = vpop.permute.xlu0 %8900
        %8902 = vrot.lane.b32.xlu0 %v5642, 40
        %v8903 = vpop.permute.xlu0 %8902
        %8904 = vrot.lane.b32.xlu0 %v5643, 40
        %v8905 = vpop.permute.xlu0 %8904
        %8906 = vrot.lane.b32.xlu0 %v5644, 40
        %v8907 = vpop.permute.xlu0 %8906
        %8908 = vrot.lane.b32.xlu0 %v5645, 40
        %v8909 = vpop.permute.xlu0 %8908
        %8910 = vrot.lane.b32.xlu0 %v5646, 40
        %v8911 = vpop.permute.xlu0 %8910
        %8912 = vrot.lane.b32.xlu0 %v5647, 40
        %v8913 = vpop.permute.xlu0 %8912
        %8914 = vrot.lane.b32.xlu0 %v5648, 40
        %v8915 = vpop.permute.xlu0 %8914
        %8916 = vrot.lane.b32.xlu0 %v5649, 40
        %v8917 = vpop.permute.xlu0 %8916
        %8918 = vrot.lane.b32.xlu0 %v5650, 40
        %v8919 = vpop.permute.xlu0 %8918
        %8920 = vrot.lane.b32.xlu0 %v5651, 40
        %v8921 = vpop.permute.xlu0 %8920
        %8922 = vrot.lane.b32.xlu0 %v5652, 40
        %v8923 = vpop.permute.xlu0 %8922
        %8924 = vrot.lane.b32.xlu0 %v5653, 40
        %v8925 = vpop.permute.xlu0 %8924
        %8926 = vrot.lane.b32.xlu0 %v5654, 40
        %v8927 = vpop.permute.xlu0 %8926
        %8928 = vrot.lane.b32.xlu0 %v5655, 40
        %v8929 = vpop.permute.xlu0 %8928
        %8930 = vrot.lane.b32.xlu0 %v5656, 40
        %v8931 = vpop.permute.xlu0 %8930
        %8932 = vrot.lane.b32.xlu0 %v5657, 40
        %v8933 = vpop.permute.xlu0 %8932
        %8934 = vrot.lane.b32.xlu0 %v5658, 40
        %v8935 = vpop.permute.xlu0 %8934
        %8936 = vrot.lane.b32.xlu0 %v5659, 40
        %v8937 = vpop.permute.xlu0 %8936
        %9002 = vrot.lane.b32.xlu0 %v5660, 48
        %v9003 = vpop.permute.xlu0 %9002
        %9004 = vrot.lane.b32.xlu0 %v5661, 48
        %v9005 = vpop.permute.xlu0 %9004
        %9006 = vrot.lane.b32.xlu0 %v5662, 48
        %v9007 = vpop.permute.xlu0 %9006
        %9008 = vrot.lane.b32.xlu0 %v5663, 48
        %v9009 = vpop.permute.xlu0 %9008
        %9010 = vrot.lane.b32.xlu0 %v5664, 48
        %v9011 = vpop.permute.xlu0 %9010
        %9012 = vrot.lane.b32.xlu0 %v5665, 48
        %v9013 = vpop.permute.xlu0 %9012
        %9014 = vrot.lane.b32.xlu0 %v5666, 48
        %v9015 = vpop.permute.xlu0 %9014
        %9016 = vrot.lane.b32.xlu0 %v5667, 48
        %v9017 = vpop.permute.xlu0 %9016
        %9018 = vrot.lane.b32.xlu0 %v5668, 48
        %v9019 = vpop.permute.xlu0 %9018
        %9020 = vrot.lane.b32.xlu0 %v5669, 48
        %v9021 = vpop.permute.xlu0 %9020
        %9022 = vrot.lane.b32.xlu0 %v5670, 48
        %v9023 = vpop.permute.xlu0 %9022
        %9024 = vrot.lane.b32.xlu0 %v5671, 48
        %v9025 = vpop.permute.xlu0 %9024
        %9026 = vrot.lane.b32.xlu0 %v5672, 48
        %v9027 = vpop.permute.xlu0 %9026
        %9028 = vrot.lane.b32.xlu0 %v5673, 48
        %v9029 = vpop.permute.xlu0 %9028
        %9030 = vrot.lane.b32.xlu0 %v5674, 48
        %v9031 = vpop.permute.xlu0 %9030
        %9032 = vrot.lane.b32.xlu0 %v5675, 48
        %v9033 = vpop.permute.xlu0 %9032
        %9034 = vrot.lane.b32.xlu0 %v5676, 48
        %v9035 = vpop.permute.xlu0 %9034
        %9036 = vrot.lane.b32.xlu0 %v5677, 48
        %v9037 = vpop.permute.xlu0 %9036
        %9038 = vrot.lane.b32.xlu0 %v5678, 48
        %v9039 = vpop.permute.xlu0 %9038
        %9040 = vrot.lane.b32.xlu0 %v5679, 48
        %v9041 = vpop.permute.xlu0 %9040
        %9042 = vrot.lane.b32.xlu0 %v5680, 48
        %v9043 = vpop.permute.xlu0 %9042
        %9044 = vrot.lane.b32.xlu0 %v5681, 48
        %v9045 = vpop.permute.xlu0 %9044
        %9046 = vrot.lane.b32.xlu0 %v5682, 48
        %v9047 = vpop.permute.xlu0 %9046
        %9048 = vrot.lane.b32.xlu0 %v5683, 48
        %v9049 = vpop.permute.xlu0 %9048
        %9050 = vrot.lane.b32.xlu0 %v5684, 48
        %v9051 = vpop.permute.xlu0 %9050
        %9052 = vrot.lane.b32.xlu0 %v5685, 48
        %v9053 = vpop.permute.xlu0 %9052
        %9054 = vrot.lane.b32.xlu0 %v5686, 48
        %v9055 = vpop.permute.xlu0 %9054
        %9056 = vrot.lane.b32.xlu0 %v5687, 48
        %v9057 = vpop.permute.xlu0 %9056
        %9058 = vrot.lane.b32.xlu0 %v5688, 48
        %v9059 = vpop.permute.xlu0 %9058
        %9060 = vrot.lane.b32.xlu0 %v5689, 48
        %v9061 = vpop.permute.xlu0 %9060
        %9062 = vrot.lane.b32.xlu0 %v5690, 48
        %v9063 = vpop.permute.xlu0 %9062
        %9064 = vrot.lane.b32.xlu0 %v5691, 48
        %v9065 = vpop.permute.xlu0 %9064
        %9130 = vrot.lane.b32.xlu0 %v5692, 56
        %v9131 = vpop.permute.xlu0 %9130
        %9132 = vrot.lane.b32.xlu0 %v5693, 56
        %v9133 = vpop.permute.xlu0 %9132
        %9134 = vrot.lane.b32.xlu0 %v5694, 56
        %v9135 = vpop.permute.xlu0 %9134
        %9136 = vrot.lane.b32.xlu0 %v5695, 56
        %v9137 = vpop.permute.xlu0 %9136
        %9138 = vrot.lane.b32.xlu0 %v5696, 56
        %v9139 = vpop.permute.xlu0 %9138
        %9140 = vrot.lane.b32.xlu0 %v5697, 56
        %v9141 = vpop.permute.xlu0 %9140
        %9142 = vrot.lane.b32.xlu0 %v5698, 56
        %v9143 = vpop.permute.xlu0 %9142
        %9144 = vrot.lane.b32.xlu0 %v5699, 56
        %v9145 = vpop.permute.xlu0 %9144
        %9146 = vrot.lane.b32.xlu0 %v5700, 56
        %v9147 = vpop.permute.xlu0 %9146
        %9148 = vrot.lane.b32.xlu0 %v5701, 56
        %v9149 = vpop.permute.xlu0 %9148
        %9150 = vrot.lane.b32.xlu0 %v5702, 56
        %v9151 = vpop.permute.xlu0 %9150
        %9152 = vrot.lane.b32.xlu0 %v5703, 56
        %v9153 = vpop.permute.xlu0 %9152
        %9154 = vrot.lane.b32.xlu0 %v5704, 56
        %v9155 = vpop.permute.xlu0 %9154
        %9156 = vrot.lane.b32.xlu0 %v5705, 56
        %v9157 = vpop.permute.xlu0 %9156
        %9158 = vrot.lane.b32.xlu0 %v5706, 56
        %v9159 = vpop.permute.xlu0 %9158
        %9160 = vrot.lane.b32.xlu0 %v5707, 56
        %v9161 = vpop.permute.xlu0 %9160
        %9162 = vrot.lane.b32.xlu0 %v5708, 56
        %v9163 = vpop.permute.xlu0 %9162
        %9164 = vrot.lane.b32.xlu0 %v5709, 56
        %v9165 = vpop.permute.xlu0 %9164
        %9166 = vrot.lane.b32.xlu0 %v5710, 56
        %v9167 = vpop.permute.xlu0 %9166
        %9168 = vrot.lane.b32.xlu0 %v5711, 56
        %v9169 = vpop.permute.xlu0 %9168
        %9170 = vrot.lane.b32.xlu0 %v5712, 56
        %v9171 = vpop.permute.xlu0 %9170
        %9172 = vrot.lane.b32.xlu0 %v5713, 56
        %v9173 = vpop.permute.xlu0 %9172
        %9174 = vrot.lane.b32.xlu0 %v5714, 56
        %v9175 = vpop.permute.xlu0 %9174
        %9176 = vrot.lane.b32.xlu0 %v5715, 56
        %v9177 = vpop.permute.xlu0 %9176
        %9178 = vrot.lane.b32.xlu0 %v5716, 56
        %v9179 = vpop.permute.xlu0 %9178
        %9180 = vrot.lane.b32.xlu0 %v5717, 56
        %v9181 = vpop.permute.xlu0 %9180
        %9182 = vrot.lane.b32.xlu0 %v5718, 56
        %v9183 = vpop.permute.xlu0 %9182
        %9184 = vrot.lane.b32.xlu0 %v5719, 56
        %v9185 = vpop.permute.xlu0 %9184
        %9186 = vrot.lane.b32.xlu0 %v5720, 56
        %v9187 = vpop.permute.xlu0 %9186
        %9188 = vrot.lane.b32.xlu0 %v5721, 56
        %v9189 = vpop.permute.xlu0 %9188
        %9190 = vrot.lane.b32.xlu0 %v5722, 56
        %v9191 = vpop.permute.xlu0 %9190
        %9192 = vrot.lane.b32.xlu0 %v5723, 56
        %v9193 = vpop.permute.xlu0 %9192
        %9258 = vrot.lane.b32.xlu0 %v5724, 60
        %v9259 = vpop.permute.xlu0 %9258
        %9260 = vrot.lane.b32.xlu0 %v5725, 60
        %v9261 = vpop.permute.xlu0 %9260
        %9262 = vrot.lane.b32.xlu0 %v5726, 60
        %v9263 = vpop.permute.xlu0 %9262
        %9264 = vrot.lane.b32.xlu0 %v5727, 60
        %v9265 = vpop.permute.xlu0 %9264
        %9266 = vrot.lane.b32.xlu0 %v5728, 60
        %v9267 = vpop.permute.xlu0 %9266
        %9268 = vrot.lane.b32.xlu0 %v5729, 60
        %v9269 = vpop.permute.xlu0 %9268
        %9270 = vrot.lane.b32.xlu0 %v5730, 60
        %v9271 = vpop.permute.xlu0 %9270
        %9272 = vrot.lane.b32.xlu0 %v5731, 60
        %v9273 = vpop.permute.xlu0 %9272
        %9274 = vrot.lane.b32.xlu0 %v5732, 60
        %v9275 = vpop.permute.xlu0 %9274
        %9276 = vrot.lane.b32.xlu0 %v5733, 60
        %v9277 = vpop.permute.xlu0 %9276
        %9278 = vrot.lane.b32.xlu0 %v5734, 60
        %v9279 = vpop.permute.xlu0 %9278
        %9280 = vrot.lane.b32.xlu0 %v5735, 60
        %v9281 = vpop.permute.xlu0 %9280
        %9282 = vrot.lane.b32.xlu0 %v5736, 60
        %v9283 = vpop.permute.xlu0 %9282
        %9284 = vrot.lane.b32.xlu0 %v5737, 60
        %v9285 = vpop.permute.xlu0 %9284
        %9286 = vrot.lane.b32.xlu0 %v5738, 60
        %v9287 = vpop.permute.xlu0 %9286
        %9288 = vrot.lane.b32.xlu0 %v5739, 60
        %v9289 = vpop.permute.xlu0 %9288
        %9290 = vrot.lane.b32.xlu0 %v5740, 60
        %v9291 = vpop.permute.xlu0 %9290
        %9292 = vrot.lane.b32.xlu0 %v5741, 60
        %v9293 = vpop.permute.xlu0 %9292
        %9294 = vrot.lane.b32.xlu0 %v5742, 60
        %v9295 = vpop.permute.xlu0 %9294
        %9296 = vrot.lane.b32.xlu0 %v5743, 60
        %v9297 = vpop.permute.xlu0 %9296
        %9298 = vrot.lane.b32.xlu0 %v5744, 60
        %v9299 = vpop.permute.xlu0 %9298
        %9300 = vrot.lane.b32.xlu0 %v5745, 60
        %v9301 = vpop.permute.xlu0 %9300
        %9302 = vrot.lane.b32.xlu0 %v5746, 60
        %v9303 = vpop.permute.xlu0 %9302
        %9304 = vrot.lane.b32.xlu0 %v5747, 60
        %v9305 = vpop.permute.xlu0 %9304
        %9306 = vrot.lane.b32.xlu0 %v5748, 60
        %v9307 = vpop.permute.xlu0 %9306
        %9308 = vrot.lane.b32.xlu0 %v5749, 60
        %v9309 = vpop.permute.xlu0 %9308
        %9310 = vrot.lane.b32.xlu0 %v5750, 60
        %v9311 = vpop.permute.xlu0 %9310
        %9312 = vrot.lane.b32.xlu0 %v5751, 60
        %v9313 = vpop.permute.xlu0 %9312
        %9314 = vrot.lane.b32.xlu0 %v5752, 60
        %v9315 = vpop.permute.xlu0 %9314
        %9316 = vrot.lane.b32.xlu0 %v5753, 60
        %v9317 = vpop.permute.xlu0 %9316
        %9318 = vrot.lane.b32.xlu0 %v5754, 60
        %v9319 = vpop.permute.xlu0 %9318
        %9320 = vrot.lane.b32.xlu0 %v5755, 60
        %v9321 = vpop.permute.xlu0 %9320
        %9386 = vrot.lane.b32.xlu0 %v5756, 68
        %v9387 = vpop.permute.xlu0 %9386
        %9388 = vrot.lane.b32.xlu0 %v5757, 68
        %v9389 = vpop.permute.xlu0 %9388
        %9390 = vrot.lane.b32.xlu0 %v5758, 68
        %v9391 = vpop.permute.xlu0 %9390
        %9392 = vrot.lane.b32.xlu0 %v5759, 68
        %v9393 = vpop.permute.xlu0 %9392
        %9394 = vrot.lane.b32.xlu0 %v5760, 68
        %v9395 = vpop.permute.xlu0 %9394
        %9396 = vrot.lane.b32.xlu0 %v5761, 68
        %v9397 = vpop.permute.xlu0 %9396
        %9398 = vrot.lane.b32.xlu0 %v5762, 68
        %v9399 = vpop.permute.xlu0 %9398
        %9400 = vrot.lane.b32.xlu0 %v5763, 68
        %v9401 = vpop.permute.xlu0 %9400
        %9402 = vrot.lane.b32.xlu0 %v5764, 68
        %v9403 = vpop.permute.xlu0 %9402
        %9404 = vrot.lane.b32.xlu0 %v5765, 68
        %v9405 = vpop.permute.xlu0 %9404
        %9406 = vrot.lane.b32.xlu0 %v5766, 68
        %v9407 = vpop.permute.xlu0 %9406
        %9408 = vrot.lane.b32.xlu0 %v5767, 68
        %v9409 = vpop.permute.xlu0 %9408
        %9410 = vrot.lane.b32.xlu0 %v5768, 68
        %v9411 = vpop.permute.xlu0 %9410
        %9412 = vrot.lane.b32.xlu0 %v5769, 68
        %v9413 = vpop.permute.xlu0 %9412
        %9414 = vrot.lane.b32.xlu0 %v5770, 68
        %v9415 = vpop.permute.xlu0 %9414
        %9416 = vrot.lane.b32.xlu0 %v5771, 68
        %v9417 = vpop.permute.xlu0 %9416
        %9418 = vrot.lane.b32.xlu0 %v5772, 68
        %v9419 = vpop.permute.xlu0 %9418
        %9420 = vrot.lane.b32.xlu0 %v5773, 68
        %v9421 = vpop.permute.xlu0 %9420
        %9422 = vrot.lane.b32.xlu0 %v5774, 68
        %v9423 = vpop.permute.xlu0 %9422
        %9424 = vrot.lane.b32.xlu0 %v5775, 68
        %v9425 = vpop.permute.xlu0 %9424
        %9426 = vrot.lane.b32.xlu0 %v5776, 68
        %v9427 = vpop.permute.xlu0 %9426
        %9428 = vrot.lane.b32.xlu0 %v5777, 68
        %v9429 = vpop.permute.xlu0 %9428
        %9430 = vrot.lane.b32.xlu0 %v5778, 68
        %v9431 = vpop.permute.xlu0 %9430
        %9432 = vrot.lane.b32.xlu0 %v5779, 68
        %v9433 = vpop.permute.xlu0 %9432
        %9434 = vrot.lane.b32.xlu0 %v5780, 68
        %v9435 = vpop.permute.xlu0 %9434
        %9436 = vrot.lane.b32.xlu0 %v5781, 68
        %v9437 = vpop.permute.xlu0 %9436
        %9438 = vrot.lane.b32.xlu0 %v5782, 68
        %v9439 = vpop.permute.xlu0 %9438
        %9440 = vrot.lane.b32.xlu0 %v5783, 68
        %v9441 = vpop.permute.xlu0 %9440
        %9442 = vrot.lane.b32.xlu0 %v5784, 68
        %v9443 = vpop.permute.xlu0 %9442
        %9444 = vrot.lane.b32.xlu0 %v5785, 68
        %v9445 = vpop.permute.xlu0 %9444
        %9446 = vrot.lane.b32.xlu0 %v5786, 68
        %v9447 = vpop.permute.xlu0 %9446
        %9448 = vrot.lane.b32.xlu0 %v5787, 68
        %v9449 = vpop.permute.xlu0 %9448
        %v9482 = vsel %vm512, %v5435, %v8235
        %v9483 = vsel %vm512, %v5436, %v8237
        %v9484 = vsel %vm512, %v5437, %v8239
        %v9485 = vsel %vm512, %v5438, %v8241
        %v9486 = vsel %vm512, %v5439, %v8243
        %v9487 = vsel %vm512, %v5440, %v8245
        %v9488 = vsel %vm512, %v5441, %v8247
        %v9489 = vsel %vm512, %v5442, %v8249
        %v9490 = vsel %vm512, %v5443, %v8251
        %v9491 = vsel %vm512, %v5444, %v8253
        %v9492 = vsel %vm512, %v5445, %v8255
        %v9493 = vsel %vm512, %v5446, %v8257
        %v9494 = vsel %vm512, %v5447, %v8259
        %v9495 = vsel %vm512, %v5448, %v8261
        %v9496 = vsel %vm512, %v5449, %v8263
        %v9497 = vsel %vm512, %v5450, %v8265
        %v9498 = vsel %vm512, %v5451, %v8267
        %v9499 = vsel %vm512, %v5452, %v8269
        %v9500 = vsel %vm512, %v5453, %v8271
        %v9501 = vsel %vm512, %v5454, %v8273
        %v9502 = vsel %vm512, %v5455, %v8275
        %v9503 = vsel %vm512, %v5456, %v8277
        %v9504 = vsel %vm512, %v5457, %v8279
        %v9505 = vsel %vm512, %v5458, %v8281
        %v9506 = vsel %vm512, %v5459, %v8283
        %v9507 = vsel %vm512, %v5460, %v8285
        %v9508 = vsel %vm512, %v5461, %v8287
        %v9509 = vsel %vm512, %v5462, %v8289
        %v9510 = vsel %vm512, %v5463, %v8291
        %v9511 = vsel %vm512, %v5464, %v8293
        %v9512 = vsel %vm512, %v5465, %v8295
        %v9513 = vsel %vm512, %v5466, %v8297
        %vm9514 = vcmask 130048
        %v9515 = vsel %vm9514, %v9482, %v8363
        %v9516 = vsel %vm9514, %v9483, %v8365
        %v9517 = vsel %vm9514, %v9484, %v8367
        %v9518 = vsel %vm9514, %v9485, %v8369
        %v9519 = vsel %vm9514, %v9486, %v8371
        %v9520 = vsel %vm9514, %v9487, %v8373
        %v9521 = vsel %vm9514, %v9488, %v8375
        %v9522 = vsel %vm9514, %v9489, %v8377
        %v9523 = vsel %vm9514, %v9490, %v8379
        %v9524 = vsel %vm9514, %v9491, %v8381
        %v9525 = vsel %vm9514, %v9492, %v8383
        %v9526 = vsel %vm9514, %v9493, %v8385
        %v9527 = vsel %vm9514, %v9494, %v8387
        %v9528 = vsel %vm9514, %v9495, %v8389
        %v9529 = vsel %vm9514, %v9496, %v8391
        %v9530 = vsel %vm9514, %v9497, %v8393
        %v9531 = vsel %vm9514, %v9498, %v8395
        %v9532 = vsel %vm9514, %v9499, %v8397
        %v9533 = vsel %vm9514, %v9500, %v8399
        %v9534 = vsel %vm9514, %v9501, %v8401
        %v9535 = vsel %vm9514, %v9502, %v8403
        %v9536 = vsel %vm9514, %v9503, %v8405
        %v9537 = vsel %vm9514, %v9504, %v8407
        %v9538 = vsel %vm9514, %v9505, %v8409
        %v9539 = vsel %vm9514, %v9506, %v8411
        %v9540 = vsel %vm9514, %v9507, %v8413
        %v9541 = vsel %vm9514, %v9508, %v8415
        %v9542 = vsel %vm9514, %v9509, %v8417
        %v9543 = vsel %vm9514, %v9510, %v8419
        %v9544 = vsel %vm9514, %v9511, %v8421
        %v9545 = vsel %vm9514, %v9512, %v8423
        %v9546 = vsel %vm9514, %v9513, %v8425
        %v9547 = vsel %vm7773, %v9515, %v8491
        %v9548 = vsel %vm7773, %v9516, %v8493
        %v9549 = vsel %vm7773, %v9517, %v8495
        %v9550 = vsel %vm7773, %v9518, %v8497
        %v9551 = vsel %vm7773, %v9519, %v8499
        %v9552 = vsel %vm7773, %v9520, %v8501
        %v9553 = vsel %vm7773, %v9521, %v8503
        %v9554 = vsel %vm7773, %v9522, %v8505
        %v9555 = vsel %vm7773, %v9523, %v8507
        %v9556 = vsel %vm7773, %v9524, %v8509
        %v9557 = vsel %vm7773, %v9525, %v8511
        %v9558 = vsel %vm7773, %v9526, %v8513
        %v9559 = vsel %vm7773, %v9527, %v8515
        %v9560 = vsel %vm7773, %v9528, %v8517
        %v9561 = vsel %vm7773, %v9529, %v8519
        %v9562 = vsel %vm7773, %v9530, %v8521
        %v9563 = vsel %vm7773, %v9531, %v8523
        %v9564 = vsel %vm7773, %v9532, %v8525
        %v9565 = vsel %vm7773, %v9533, %v8527
        %v9566 = vsel %vm7773, %v9534, %v8529
        %v9567 = vsel %vm7773, %v9535, %v8531
        %v9568 = vsel %vm7773, %v9536, %v8533
        %v9569 = vsel %vm7773, %v9537, %v8535
        %v9570 = vsel %vm7773, %v9538, %v8537
        %v9571 = vsel %vm7773, %v9539, %v8539
        %v9572 = vsel %vm7773, %v9540, %v8541
        %v9573 = vsel %vm7773, %v9541, %v8543
        %v9574 = vsel %vm7773, %v9542, %v8545
        %v9575 = vsel %vm7773, %v9543, %v8547
        %v9576 = vsel %vm7773, %v9544, %v8549
        %v9577 = vsel %vm7773, %v9545, %v8551
        %v9578 = vsel %vm7773, %v9546, %v8553
        %vm9579 = vcmask 228352
        %v9580 = vsel %vm9579, %v9547, %v8619
        %v9581 = vsel %vm9579, %v9548, %v8621
        %v9582 = vsel %vm9579, %v9549, %v8623
        %v9583 = vsel %vm9579, %v9550, %v8625
        %v9584 = vsel %vm9579, %v9551, %v8627
        %v9585 = vsel %vm9579, %v9552, %v8629
        %v9586 = vsel %vm9579, %v9553, %v8631
        %v9587 = vsel %vm9579, %v9554, %v8633
        %v9588 = vsel %vm9579, %v9555, %v8635
        %v9589 = vsel %vm9579, %v9556, %v8637
        %v9590 = vsel %vm9579, %v9557, %v8639
        %v9591 = vsel %vm9579, %v9558, %v8641
        %v9592 = vsel %vm9579, %v9559, %v8643
        %v9593 = vsel %vm9579, %v9560, %v8645
        %v9594 = vsel %vm9579, %v9561, %v8647
        %v9595 = vsel %vm9579, %v9562, %v8649
        %v9596 = vsel %vm9579, %v9563, %v8651
        %v9597 = vsel %vm9579, %v9564, %v8653
        %v9598 = vsel %vm9579, %v9565, %v8655
        %v9599 = vsel %vm9579, %v9566, %v8657
        %v9600 = vsel %vm9579, %v9567, %v8659
        %v9601 = vsel %vm9579, %v9568, %v8661
        %v9602 = vsel %vm9579, %v9569, %v8663
        %v9603 = vsel %vm9579, %v9570, %v8665
        %v9604 = vsel %vm9579, %v9571, %v8667
        %v9605 = vsel %vm9579, %v9572, %v8669
        %v9606 = vsel %vm9579, %v9573, %v8671
        %v9607 = vsel %vm9579, %v9574, %v8673
        %v9608 = vsel %vm9579, %v9575, %v8675
        %v9609 = vsel %vm9579, %v9576, %v8677
        %v9610 = vsel %vm9579, %v9577, %v8679
        %v9611 = vsel %vm9579, %v9578, %v8681
        %vm9612 = vcmask 293888
        %v9613 = vsel %vm9612, %v9580, %v8747
        %v9614 = vsel %vm9612, %v9581, %v8749
        %v9615 = vsel %vm9612, %v9582, %v8751
        %v9616 = vsel %vm9612, %v9583, %v8753
        %v9617 = vsel %vm9612, %v9584, %v8755
        %v9618 = vsel %vm9612, %v9585, %v8757
        %v9619 = vsel %vm9612, %v9586, %v8759
        %v9620 = vsel %vm9612, %v9587, %v8761
        %v9621 = vsel %vm9612, %v9588, %v8763
        %v9622 = vsel %vm9612, %v9589, %v8765
        %v9623 = vsel %vm9612, %v9590, %v8767
        %v9624 = vsel %vm9612, %v9591, %v8769
        %v9625 = vsel %vm9612, %v9592, %v8771
        %v9626 = vsel %vm9612, %v9593, %v8773
        %v9627 = vsel %vm9612, %v9594, %v8775
        %v9628 = vsel %vm9612, %v9595, %v8777
        %v9629 = vsel %vm9612, %v9596, %v8779
        %v9630 = vsel %vm9612, %v9597, %v8781
        %v9631 = vsel %vm9612, %v9598, %v8783
        %v9632 = vsel %vm9612, %v9599, %v8785
        %v9633 = vsel %vm9612, %v9600, %v8787
        %v9634 = vsel %vm9612, %v9601, %v8789
        %v9635 = vsel %vm9612, %v9602, %v8791
        %v9636 = vsel %vm9612, %v9603, %v8793
        %v9637 = vsel %vm9612, %v9604, %v8795
        %v9638 = vsel %vm9612, %v9605, %v8797
        %v9639 = vsel %vm9612, %v9606, %v8799
        %v9640 = vsel %vm9612, %v9607, %v8801
        %v9641 = vsel %vm9612, %v9608, %v8803
        %v9642 = vsel %vm9612, %v9609, %v8805
        %v9643 = vsel %vm9612, %v9610, %v8807
        %v9644 = vsel %vm9612, %v9611, %v8809
        %v9645 = vsel %vm7872, %v9613, %v8875
        %v9646 = vsel %vm7872, %v9614, %v8877
        %v9647 = vsel %vm7872, %v9615, %v8879
        %v9648 = vsel %vm7872, %v9616, %v8881
        %v9649 = vsel %vm7872, %v9617, %v8883
        %v9650 = vsel %vm7872, %v9618, %v8885
        %v9651 = vsel %vm7872, %v9619, %v8887
        %v9652 = vsel %vm7872, %v9620, %v8889
        %v9653 = vsel %vm7872, %v9621, %v8891
        %v9654 = vsel %vm7872, %v9622, %v8893
        %v9655 = vsel %vm7872, %v9623, %v8895
        %v9656 = vsel %vm7872, %v9624, %v8897
        %v9657 = vsel %vm7872, %v9625, %v8899
        %v9658 = vsel %vm7872, %v9626, %v8901
        %v9659 = vsel %vm7872, %v9627, %v8903
        %v9660 = vsel %vm7872, %v9628, %v8905
        %v9661 = vsel %vm7872, %v9629, %v8907
        %v9662 = vsel %vm7872, %v9630, %v8909
        %v9663 = vsel %vm7872, %v9631, %v8911
        %v9664 = vsel %vm7872, %v9632, %v8913
        %v9665 = vsel %vm7872, %v9633, %v8915
        %v9666 = vsel %vm7872, %v9634, %v8917
        %v9667 = vsel %vm7872, %v9635, %v8919
        %v9668 = vsel %vm7872, %v9636, %v8921
        %v9669 = vsel %vm7872, %v9637, %v8923
        %v9670 = vsel %vm7872, %v9638, %v8925
        %v9671 = vsel %vm7872, %v9639, %v8927
        %v9672 = vsel %vm7872, %v9640, %v8929
        %v9673 = vsel %vm7872, %v9641, %v8931
        %v9674 = vsel %vm7872, %v9642, %v8933
        %v9675 = vsel %vm7872, %v9643, %v8935
        %v9676 = vsel %vm7872, %v9644, %v8937
        %vm9677 = vcmask 392192
        %v9678 = vsel %vm9677, %v9645, %v9003
        %v9679 = vsel %vm9677, %v9646, %v9005
        %v9680 = vsel %vm9677, %v9647, %v9007
        %v9681 = vsel %vm9677, %v9648, %v9009
        %v9682 = vsel %vm9677, %v9649, %v9011
        %v9683 = vsel %vm9677, %v9650, %v9013
        %v9684 = vsel %vm9677, %v9651, %v9015
        %v9685 = vsel %vm9677, %v9652, %v9017
        %v9686 = vsel %vm9677, %v9653, %v9019
        %v9687 = vsel %vm9677, %v9654, %v9021
        %v9688 = vsel %vm9677, %v9655, %v9023
        %v9689 = vsel %vm9677, %v9656, %v9025
        %v9690 = vsel %vm9677, %v9657, %v9027
        %v9691 = vsel %vm9677, %v9658, %v9029
        %v9692 = vsel %vm9677, %v9659, %v9031
        %v9693 = vsel %vm9677, %v9660, %v9033
        %v9694 = vsel %vm9677, %v9661, %v9035
        %v9695 = vsel %vm9677, %v9662, %v9037
        %v9696 = vsel %vm9677, %v9663, %v9039
        %v9697 = vsel %vm9677, %v9664, %v9041
        %v9698 = vsel %vm9677, %v9665, %v9043
        %v9699 = vsel %vm9677, %v9666, %v9045
        %v9700 = vsel %vm9677, %v9667, %v9047
        %v9701 = vsel %vm9677, %v9668, %v9049
        %v9702 = vsel %vm9677, %v9669, %v9051
        %v9703 = vsel %vm9677, %v9670, %v9053
        %v9704 = vsel %vm9677, %v9671, %v9055
        %v9705 = vsel %vm9677, %v9672, %v9057
        %v9706 = vsel %vm9677, %v9673, %v9059
        %v9707 = vsel %vm9677, %v9674, %v9061
        %v9708 = vsel %vm9677, %v9675, %v9063
        %v9709 = vsel %vm9677, %v9676, %v9065
        %vm9710 = vcmask 457728
        %v9711 = vsel %vm9710, %v9678, %v9131
        %v9712 = vsel %vm9710, %v9679, %v9133
        %v9713 = vsel %vm9710, %v9680, %v9135
        %v9714 = vsel %vm9710, %v9681, %v9137
        %v9715 = vsel %vm9710, %v9682, %v9139
        %v9716 = vsel %vm9710, %v9683, %v9141
        %v9717 = vsel %vm9710, %v9684, %v9143
        %v9718 = vsel %vm9710, %v9685, %v9145
        %v9719 = vsel %vm9710, %v9686, %v9147
        %v9720 = vsel %vm9710, %v9687, %v9149
        %v9721 = vsel %vm9710, %v9688, %v9151
        %v9722 = vsel %vm9710, %v9689, %v9153
        %v9723 = vsel %vm9710, %v9690, %v9155
        %v9724 = vsel %vm9710, %v9691, %v9157
        %v9725 = vsel %vm9710, %v9692, %v9159
        %v9726 = vsel %vm9710, %v9693, %v9161
        %v9727 = vsel %vm9710, %v9694, %v9163
        %v9728 = vsel %vm9710, %v9695, %v9165
        %v9729 = vsel %vm9710, %v9696, %v9167
        %v9730 = vsel %vm9710, %v9697, %v9169
        %v9731 = vsel %vm9710, %v9698, %v9171
        %v9732 = vsel %vm9710, %v9699, %v9173
        %v9733 = vsel %vm9710, %v9700, %v9175
        %v9734 = vsel %vm9710, %v9701, %v9177
        %v9735 = vsel %vm9710, %v9702, %v9179
        %v9736 = vsel %vm9710, %v9703, %v9181
        %v9737 = vsel %vm9710, %v9704, %v9183
        %v9738 = vsel %vm9710, %v9705, %v9185
        %v9739 = vsel %vm9710, %v9706, %v9187
        %v9740 = vsel %vm9710, %v9707, %v9189
        %v9741 = vsel %vm9710, %v9708, %v9191
        %v9742 = vsel %vm9710, %v9709, %v9193
        %v9743 = vsel %vm7971, %v9711, %v9259
        %v9744 = vsel %vm7971, %v9712, %v9261
        %v9745 = vsel %vm7971, %v9713, %v9263
        %v9746 = vsel %vm7971, %v9714, %v9265
        %v9747 = vsel %vm7971, %v9715, %v9267
        %v9748 = vsel %vm7971, %v9716, %v9269
        %v9749 = vsel %vm7971, %v9717, %v9271
        %v9750 = vsel %vm7971, %v9718, %v9273
        %v9751 = vsel %vm7971, %v9719, %v9275
        %v9752 = vsel %vm7971, %v9720, %v9277
        %v9753 = vsel %vm7971, %v9721, %v9279
        %v9754 = vsel %vm7971, %v9722, %v9281
        %v9755 = vsel %vm7971, %v9723, %v9283
        %v9756 = vsel %vm7971, %v9724, %v9285
        %v9757 = vsel %vm7971, %v9725, %v9287
        %v9758 = vsel %vm7971, %v9726, %v9289
        %v9759 = vsel %vm7971, %v9727, %v9291
        %v9760 = vsel %vm7971, %v9728, %v9293
        %v9761 = vsel %vm7971, %v9729, %v9295
        %v9762 = vsel %vm7971, %v9730, %v9297
        %v9763 = vsel %vm7971, %v9731, %v9299
        %v9764 = vsel %vm7971, %v9732, %v9301
        %v9765 = vsel %vm7971, %v9733, %v9303
        %v9766 = vsel %vm7971, %v9734, %v9305
        %v9767 = vsel %vm7971, %v9735, %v9307
        %v9768 = vsel %vm7971, %v9736, %v9309
        %v9769 = vsel %vm7971, %v9737, %v9311
        %v9770 = vsel %vm7971, %v9738, %v9313
        %v9771 = vsel %vm7971, %v9739, %v9315
        %v9772 = vsel %vm7971, %v9740, %v9317
        %v9773 = vsel %vm7971, %v9741, %v9319
        %v9774 = vsel %vm7971, %v9742, %v9321
        %vm9775 = vcmask 556032
        %v9776 = vsel %vm9775, %v9743, %v9387
        %v9777 = vsel %vm9775, %v9744, %v9389
        %v9778 = vsel %vm9775, %v9745, %v9391
        %v9779 = vsel %vm9775, %v9746, %v9393
        %v9780 = vsel %vm9775, %v9747, %v9395
        %v9781 = vsel %vm9775, %v9748, %v9397
        %v9782 = vsel %vm9775, %v9749, %v9399
        %v9783 = vsel %vm9775, %v9750, %v9401
        %v9784 = vsel %vm9775, %v9751, %v9403
        %v9785 = vsel %vm9775, %v9752, %v9405
        %v9786 = vsel %vm9775, %v9753, %v9407
        %v9787 = vsel %vm9775, %v9754, %v9409
        %v9788 = vsel %vm9775, %v9755, %v9411
        %v9789 = vsel %vm9775, %v9756, %v9413
        %v9790 = vsel %vm9775, %v9757, %v9415
        %v9791 = vsel %vm9775, %v9758, %v9417
        %v9792 = vsel %vm9775, %v9759, %v9419
        %v9793 = vsel %vm9775, %v9760, %v9421
        %v9794 = vsel %vm9775, %v9761, %v9423
        %v9795 = vsel %vm9775, %v9762, %v9425
        %v9796 = vsel %vm9775, %v9763, %v9427
        %v9797 = vsel %vm9775, %v9764, %v9429
        %v9798 = vsel %vm9775, %v9765, %v9431
        %v9799 = vsel %vm9775, %v9766, %v9433
        %v9800 = vsel %vm9775, %v9767, %v9435
        %v9801 = vsel %vm9775, %v9768, %v9437
        %v9802 = vsel %vm9775, %v9769, %v9439
        %v9803 = vsel %vm9775, %v9770, %v9441
        %v9804 = vsel %vm9775, %v9771, %v9443
        %v9805 = vsel %vm9775, %v9772, %v9445
        %v9806 = vsel %vm9775, %v9773, %v9447
        %v9807 = vsel %vm9775, %v9774, %v9449
        %9840 = vrot.lane.b32.xlu0 %v9776, 104
        %v9841 = vpop.permute.xlu0 %9840
        %9842 = vrot.lane.b32.xlu0 %v9777, 104
        %v9843 = vpop.permute.xlu0 %9842
        %9844 = vrot.lane.b32.xlu0 %v9778, 104
        %v9845 = vpop.permute.xlu0 %9844
        %9846 = vrot.lane.b32.xlu0 %v9779, 104
        %v9847 = vpop.permute.xlu0 %9846
        %9848 = vrot.lane.b32.xlu0 %v9780, 104
        %v9849 = vpop.permute.xlu0 %9848
        %9850 = vrot.lane.b32.xlu0 %v9781, 104
        %v9851 = vpop.permute.xlu0 %9850
        %9852 = vrot.lane.b32.xlu0 %v9782, 104
        %v9853 = vpop.permute.xlu0 %9852
        %9854 = vrot.lane.b32.xlu0 %v9783, 104
        %v9855 = vpop.permute.xlu0 %9854
        %9856 = vrot.lane.b32.xlu0 %v9784, 104
        %v9857 = vpop.permute.xlu0 %9856
        %9858 = vrot.lane.b32.xlu0 %v9785, 104
        %v9859 = vpop.permute.xlu0 %9858
        %9860 = vrot.lane.b32.xlu0 %v9786, 104
        %v9861 = vpop.permute.xlu0 %9860
        %9862 = vrot.lane.b32.xlu0 %v9787, 104
        %v9863 = vpop.permute.xlu0 %9862
        %9864 = vrot.lane.b32.xlu0 %v9788, 104
        %v9865 = vpop.permute.xlu0 %9864
        %9866 = vrot.lane.b32.xlu0 %v9789, 104
        %v9867 = vpop.permute.xlu0 %9866
        %9868 = vrot.lane.b32.xlu0 %v9790, 104
        %v9869 = vpop.permute.xlu0 %9868
        %9870 = vrot.lane.b32.xlu0 %v9791, 104
        %v9871 = vpop.permute.xlu0 %9870
        %9872 = vrot.lane.b32.xlu0 %v9792, 104
        %v9873 = vpop.permute.xlu0 %9872
        %9874 = vrot.lane.b32.xlu0 %v9793, 104
        %v9875 = vpop.permute.xlu0 %9874
        %9876 = vrot.lane.b32.xlu0 %v9794, 104
        %v9877 = vpop.permute.xlu0 %9876
        %9878 = vrot.lane.b32.xlu0 %v9795, 104
        %v9879 = vpop.permute.xlu0 %9878
        %9880 = vrot.lane.b32.xlu0 %v9796, 104
        %v9881 = vpop.permute.xlu0 %9880
        %9882 = vrot.lane.b32.xlu0 %v9797, 104
        %v9883 = vpop.permute.xlu0 %9882
        %9884 = vrot.lane.b32.xlu0 %v9798, 104
        %v9885 = vpop.permute.xlu0 %9884
        %9886 = vrot.lane.b32.xlu0 %v9799, 104
        %v9887 = vpop.permute.xlu0 %9886
        %9888 = vrot.lane.b32.xlu0 %v9800, 104
        %v9889 = vpop.permute.xlu0 %9888
        %9890 = vrot.lane.b32.xlu0 %v9801, 104
        %v9891 = vpop.permute.xlu0 %9890
        %9892 = vrot.lane.b32.xlu0 %v9802, 104
        %v9893 = vpop.permute.xlu0 %9892
        %9894 = vrot.lane.b32.xlu0 %v9803, 104
        %v9895 = vpop.permute.xlu0 %9894
        %9896 = vrot.lane.b32.xlu0 %v9804, 104
        %v9897 = vpop.permute.xlu0 %9896
        %9898 = vrot.lane.b32.xlu0 %v9805, 104
        %v9899 = vpop.permute.xlu0 %9898
        %9900 = vrot.lane.b32.xlu0 %v9806, 104
        %v9901 = vpop.permute.xlu0 %9900
        %9902 = vrot.lane.b32.xlu0 %v9807, 104
        %v9903 = vpop.permute.xlu0 %9902
        %vm9936 = vcmask 850944
        %v9937 = vsel %vm9936, %v8170, %v9841
        %v9938 = vsel %vm9936, %v8171, %v9843
        %v9939 = vsel %vm9936, %v8172, %v9845
        %v9940 = vsel %vm9936, %v8173, %v9847
        %v9941 = vsel %vm9936, %v8174, %v9849
        %v9942 = vsel %vm9936, %v8175, %v9851
        %v9943 = vsel %vm9936, %v8176, %v9853
        %v9944 = vsel %vm9936, %v8177, %v9855
        %v9945 = vsel %vm9936, %v8178, %v9857
        %v9946 = vsel %vm9936, %v8179, %v9859
        %v9947 = vsel %vm9936, %v8180, %v9861
        %v9948 = vsel %vm9936, %v8181, %v9863
        %v9949 = vsel %vm9936, %v8182, %v9865
        %v9950 = vsel %vm9936, %v8183, %v9867
        %v9951 = vsel %vm9936, %v8184, %v9869
        %v9952 = vsel %vm9936, %v8185, %v9871
        %v9953 = vsel %vm9936, %v8186, %v9873
        %v9954 = vsel %vm9936, %v8187, %v9875
        %v9955 = vsel %vm9936, %v8188, %v9877
        %v9956 = vsel %vm9936, %v8189, %v9879
        %v9957 = vsel %vm9936, %v8190, %v9881
        %v9958 = vsel %vm9936, %v8191, %v9883
        %v9959 = vsel %vm9936, %v8192, %v9885
        %v9960 = vsel %vm9936, %v8193, %v9887
        %v9961 = vsel %vm9936, %v8194, %v9889
        %v9962 = vsel %vm9936, %v8195, %v9891
        %v9963 = vsel %vm9936, %v8196, %v9893
        %v9964 = vsel %vm9936, %v8197, %v9895
        %v9965 = vsel %vm9936, %v8198, %v9897
        %v9966 = vsel %vm9936, %v8199, %v9899
        %v9967 = vsel %vm9936, %v8200, %v9901
        %v9968 = vsel %vm9936, %v8201, %v9903
        %v9969 = vld [vmem:[%s12] sm:$0xff]
        %v9970 = vld [vmem:[%s12 + $0x8] sm:$0xff]
        %v9971 = vld [vmem:[%s12 + $0x10] sm:$0xff]
        %v9972 = vld [vmem:[%s12 + $0x18] sm:$0xff]
        %v9973 = vld [vmem:[%s12 + $0x20] sm:$0xff]
        %v9974 = vld [vmem:[%s12 + $0x28] sm:$0xff]
        %v9975 = vld [vmem:[%s12 + $0x30] sm:$0xff]
        %v9976 = vld [vmem:[%s12 + $0x38] sm:$0xff]
        %v9977 = vld [vmem:[%s12 + $0x40] sm:$0xff]
        %v9978 = vld [vmem:[%s12 + $0x48] sm:$0xff]
        %v9979 = vld [vmem:[%s12 + $0x50] sm:$0xff]
        %v9980 = vld [vmem:[%s12 + $0x58] sm:$0xff]
        %v9981 = vld [vmem:[%s12 + $0x60] sm:$0xff]
        %v9982 = vld [vmem:[%s12 + $0x68] sm:$0xff]
        %v9983 = vld [vmem:[%s12 + $0x70] sm:$0xff]
        %v9984 = vld [vmem:[%s12 + $0x78] sm:$0xff]
        %v9985 = vld [vmem:[%s12 + $0x80] sm:$0xff]
        %v9986 = vld [vmem:[%s12 + $0x88] sm:$0xff]
        %v9987 = vld [vmem:[%s12 + $0x90] sm:$0xff]
        %v9988 = vld [vmem:[%s12 + $0x98] sm:$0xff]
        %v9989 = vld [vmem:[%s12 + $0xa0] sm:$0xff]
        %v9990 = vld [vmem:[%s12 + $0xa8] sm:$0xff]
        %v9991 = vld [vmem:[%s12 + $0xb0] sm:$0xf]
        %v9992 = vld [vmem:[%s13] sm:$0x1]
        %v9994 = vlaneseq
        %v9995 = vshrl.u32 %v9994, 7
        %v9996 = vsub.s32 0, %v9995
        %v9997 = vrot.slane %v9992, %v9996
        %v9999 = vsel %vm7938, %v9841, 0
        %v10001 = vsel %vm7938, %v9843, 0
        %v10003 = vsel %vm7938, %v9845, 0
        %v10005 = vsel %vm7938, %v9847, 0
        %v10007 = vsel %vm7938, %v9849, 0
        %v10009 = vsel %vm7938, %v9851, 0
        %v10011 = vsel %vm7938, %v9853, 0
        %v10013 = vsel %vm7938, %v9855, 0
        %v10015 = vsel %vm7938, %v9857, 0
        %v10017 = vsel %vm7938, %v9859, 0
        %v10019 = vsel %vm7938, %v9861, 0
        %v10021 = vsel %vm7938, %v9863, 0
        %v10023 = vsel %vm7938, %v9865, 0
        %v10025 = vsel %vm7938, %v9867, 0
        %v10027 = vsel %vm7938, %v9869, 0
        %v10029 = vsel %vm7938, %v9871, 0
        %v10031 = vsel %vm7938, %v9873, 0
        %v10033 = vsel %vm7938, %v9875, 0
        %v10035 = vsel %vm7938, %v9877, 0
        %v10037 = vsel %vm7938, %v9879, 0
        %v10039 = vsel %vm7938, %v9881, 0
        %v10041 = vsel %vm7938, %v9883, 0
        %v10043 = vsel %vm7938, %v9885, 0
        %v10045 = vsel %vm7938, %v9887, 0
        %v10047 = vsel %vm7938, %v9889, 0
        %v10049 = vsel %vm7938, %v9891, 0
        %v10051 = vsel %vm7938, %v9893, 0
        %v10053 = vsel %vm7938, %v9895, 0
        %v10055 = vsel %vm7938, %v9897, 0
        %v10057 = vsel %vm7938, %v9899, 0
        %v10059 = vsel %vm7938, %v9901, 0
        %v10061 = vsel %vm7938, %v9903, 0
        %v10064 = vsel %vm1785, %v9991, 0
        %10066 = vmatprep.subr.mxu0 0.0
        %10067 = vmatpush1.msra.mxu0 %v9969
        %10068 = vmatprep.subr.mxu0 0.0
        %10069 = vmatpush1.msra.mxu0 %v9970
        %10070 = vmatprep.subr.mxu0 0.0
        %10071 = vmatpush1.msra.mxu0 %v9971
        %10072 = vmatprep.subr.mxu0 0.0
        %10073 = vmatpush1.msra.mxu0 %v9972
        %10074 = vmatprep.subr.mxu0 0.0
        %10075 = vmatpush1.msra.mxu0 %v9973
        %10076 = vmatprep.subr.mxu0 0.0
        %10077 = vmatpush1.msra.mxu0 %v9974
        %10078 = vmatprep.subr.mxu0 0.0
        %10079 = vmatpush1.msra.mxu0 %v9975
        %10080 = vmatprep.subr.mxu0 0.0
        %10081 = vmatpush1.msra.mxu0 %v9976
        %10082 = vmatprep.subr.mxu0 0.0
        %10083 = vmatpush1.msra.mxu0 %v9977
        %10084 = vmatprep.subr.mxu0 0.0
        %10085 = vmatpush1.msra.mxu0 %v9978
        %10086 = vmatprep.subr.mxu0 0.0
        %10087 = vmatpush1.msra.mxu0 %v9979
        %10088 = vmatprep.subr.mxu0 0.0
        %10089 = vmatpush1.msra.mxu0 %v9980
        %10090 = vmatprep.subr.mxu0 0.0
        %10091 = vmatpush1.msra.mxu0 %v9981
        %10092 = vmatprep.subr.mxu0 0.0
        %10093 = vmatpush1.msra.mxu0 %v9982
        %10094 = vmatprep.subr.mxu0 0.0
        %10095 = vmatpush1.msra.mxu0 %v9983
        %10096 = vmatprep.subr.mxu0 0.0
        %10097 = vmatpush1.msra.mxu0 %v9984
        %10098 = vmatprep.subr.mxu0 0.0
        %10099 = vmatpush1.msra.mxu0 %v9985
        %10100 = vmatprep.subr.mxu0 0.0
        %10101 = vmatpush1.msra.mxu0 %v9986
        %10102 = vmatprep.subr.mxu0 0.0
        %10103 = vmatpush1.msra.mxu0 %v9987
        %10104 = vmatprep.subr.mxu0 0.0
        %10105 = vmatpush1.msra.mxu0 %v9988
        %10106 = vmatprep.subr.mxu0 0.0
        %10107 = vmatpush1.msra.mxu0 %v9989
        %10108 = vmatprep.subr.mxu0 0.0
        %10109 = vmatpush1.msra.mxu0 %v9990
        %10110 = vmatprep.subr.mxu0 0.0
        %10111 = vmatpush1.msra.mxu0 %v10064
        %10112 = vmatprep.subr.mxu0 0.0
        %10113 = vmatpush1.msra.mxu0 0.0
        %10114 = vmatprep.subr.mxu0 0.0
        %10115 = vmatpush1.msra.mxu0 0.0
        %10116 = vmatprep.subr.mxu0 0.0
        %10117 = vmatpush1.msra.mxu0 0.0
        %10118 = vmatprep.subr.mxu0 0.0
        %10119 = vmatpush1.msra.mxu0 0.0
        %10120 = vmatprep.subr.mxu0 0.0
        %10121 = vmatpush1.msra.mxu0 0.0
        %10122 = vmatprep.subr.mxu0 0.0
        %10123 = vmatpush1.msra.mxu0 0.0
        %10124 = vmatprep.subr.mxu0 0.0
        %10125 = vmatpush1.msra.mxu0 0.0
        %10126 = vmatprep.subr.mxu0 0.0
        %10127 = vmatpush1.msra.mxu0 0.0
        %10128 = vmatprep.subr.mxu0 0.0
        %10129 = vmatpush1.msra.mxu0 0.0
        %10130 = vmatprep.mubr.f32.mxu0 %v9999
        %10131 = vmatmul.mubr.f32.gmra.mrb[0].mxu0 %v9937
        %v10132 = vpop.f32.mrb[0].mxu0
        %v10133 = vadd.f32 %v9997, %v10132
        %v10134 = vpop.f32.mrb[0].mxu0
        %10135 = vmatprep.mubr.f32.mxu0 %v10001
        %10136 = vmatmul.mubr.f32.gmra.mrb[0].mxu0 %v9938
        %v10137 = vpop.f32.mrb[0].mxu0
        %v10138 = vadd.f32 %v9997, %v10137
        %v10139 = vpop.f32.mrb[0].mxu0
        %10140 = vmatprep.mubr.f32.mxu0 %v10003
        %10141 = vmatmul.mubr.f32.gmra.mrb[0].mxu0 %v9939
        %v10142 = vpop.f32.mrb[0].mxu0
        %v10143 = vadd.f32 %v9997, %v10142
        %v10144 = vpop.f32.mrb[0].mxu0
        %10145 = vmatprep.mubr.f32.mxu0 %v10005
        %10146 = vmatmul.mubr.f32.gmra.mrb[0].mxu0 %v9940
        %v10147 = vpop.f32.mrb[0].mxu0
        %v10148 = vadd.f32 %v9997, %v10147
        %v10149 = vpop.f32.mrb[0].mxu0
        %10150 = vmatprep.mubr.f32.mxu0 %v10007
        %10151 = vmatmul.mubr.f32.gmra.mrb[0].mxu0 %v9941
        %v10152 = vpop.f32.mrb[0].mxu0
        %v10153 = vadd.f32 %v9997, %v10152
        %v10154 = vpop.f32.mrb[0].mxu0
        %10155 = vmatprep.mubr.f32.mxu0 %v10009
        %10156 = vmatmul.mubr.f32.gmra.mrb[0].mxu0 %v9942
        %v10157 = vpop.f32.mrb[0].mxu0
        %v10158 = vadd.f32 %v9997, %v10157
        %v10159 = vpop.f32.mrb[0].mxu0
        %10160 = vmatprep.mubr.f32.mxu0 %v10011
        %10161 = vmatmul.mubr.f32.gmra.mrb[0].mxu0 %v9943
        %v10162 = vpop.f32.mrb[0].mxu0
        %v10163 = vadd.f32 %v9997, %v10162
        %v10164 = vpop.f32.mrb[0].mxu0
        %10165 = vmatprep.mubr.f32.mxu0 %v10013
        %10166 = vmatmul.mubr.f32.gmra.mrb[0].mxu0 %v9944
        %v10167 = vpop.f32.mrb[0].mxu0
        %v10168 = vadd.f32 %v9997, %v10167
        %v10169 = vpop.f32.mrb[0].mxu0
        %10170 = vmatprep.mubr.f32.mxu0 %v10015
        %10171 = vmatmul.mubr.f32.gmra.mrb[0].mxu0 %v9945
        %v10172 = vpop.f32.mrb[0].mxu0
        %v10173 = vadd.f32 %v9997, %v10172
        %v10174 = vpop.f32.mrb[0].mxu0
        %10175 = vmatprep.mubr.f32.mxu0 %v10017
        %10176 = vmatmul.mubr.f32.gmra.mrb[0].mxu0 %v9946
        %v10177 = vpop.f32.mrb[0].mxu0
        %v10178 = vadd.f32 %v9997, %v10177
        %v10179 = vpop.f32.mrb[0].mxu0
        %10180 = vmatprep.mubr.f32.mxu0 %v10019
        %10181 = vmatmul.mubr.f32.gmra.mrb[0].mxu0 %v9947
        %v10182 = vpop.f32.mrb[0].mxu0
        %v10183 = vadd.f32 %v9997, %v10182
        %v10184 = vpop.f32.mrb[0].mxu0
        %10185 = vmatprep.mubr.f32.mxu0 %v10021
        %10186 = vmatmul.mubr.f32.gmra.mrb[0].mxu0 %v9948
        %v10187 = vpop.f32.mrb[0].mxu0
        %v10188 = vadd.f32 %v9997, %v10187
        %v10189 = vpop.f32.mrb[0].mxu0
        %10190 = vmatprep.mubr.f32.mxu0 %v10023
        %10191 = vmatmul.mubr.f32.gmra.mrb[0].mxu0 %v9949
        %v10192 = vpop.f32.mrb[0].mxu0
        %v10193 = vadd.f32 %v9997, %v10192
        %v10194 = vpop.f32.mrb[0].mxu0
        %10195 = vmatprep.mubr.f32.mxu0 %v10025
        %10196 = vmatmul.mubr.f32.gmra.mrb[0].mxu0 %v9950
        %v10197 = vpop.f32.mrb[0].mxu0
        %v10198 = vadd.f32 %v9997, %v10197
        %v10199 = vpop.f32.mrb[0].mxu0
        %10200 = vmatprep.mubr.f32.mxu0 %v10027
        %10201 = vmatmul.mubr.f32.gmra.mrb[0].mxu0 %v9951
        %v10202 = vpop.f32.mrb[0].mxu0
        %v10203 = vadd.f32 %v9997, %v10202
        %v10204 = vpop.f32.mrb[0].mxu0
        %10205 = vmatprep.mubr.f32.mxu0 %v10029
        %10206 = vmatmul.mubr.f32.gmra.mrb[0].mxu0 %v9952
        %v10207 = vpop.f32.mrb[0].mxu0
        %v10208 = vadd.f32 %v9997, %v10207
        %v10209 = vpop.f32.mrb[0].mxu0
        %10210 = vmatprep.mubr.f32.mxu0 %v10031
        %10211 = vmatmul.mubr.f32.gmra.mrb[0].mxu0 %v9953
        %v10212 = vpop.f32.mrb[0].mxu0
        %v10213 = vadd.f32 %v9997, %v10212
        %v10214 = vpop.f32.mrb[0].mxu0
        %10215 = vmatprep.mubr.f32.mxu0 %v10033
        %10216 = vmatmul.mubr.f32.gmra.mrb[0].mxu0 %v9954
        %v10217 = vpop.f32.mrb[0].mxu0
        %v10218 = vadd.f32 %v9997, %v10217
        %v10219 = vpop.f32.mrb[0].mxu0
        %10220 = vmatprep.mubr.f32.mxu0 %v10035
        %10221 = vmatmul.mubr.f32.gmra.mrb[0].mxu0 %v9955
        %v10222 = vpop.f32.mrb[0].mxu0
        %v10223 = vadd.f32 %v9997, %v10222
        %v10224 = vpop.f32.mrb[0].mxu0
        %10225 = vmatprep.mubr.f32.mxu0 %v10037
        %10226 = vmatmul.mubr.f32.gmra.mrb[0].mxu0 %v9956
        %v10227 = vpop.f32.mrb[0].mxu0
        %v10228 = vadd.f32 %v9997, %v10227
        %v10229 = vpop.f32.mrb[0].mxu0
        %10230 = vmatprep.mubr.f32.mxu0 %v10039
        %10231 = vmatmul.mubr.f32.gmra.mrb[0].mxu0 %v9957
        %v10232 = vpop.f32.mrb[0].mxu0
        %v10233 = vadd.f32 %v9997, %v10232
        %v10234 = vpop.f32.mrb[0].mxu0
        %10235 = vmatprep.mubr.f32.mxu0 %v10041
        %10236 = vmatmul.mubr.f32.gmra.mrb[0].mxu0 %v9958
        %v10237 = vpop.f32.mrb[0].mxu0
        %v10238 = vadd.f32 %v9997, %v10237
        %v10239 = vpop.f32.mrb[0].mxu0
        %10240 = vmatprep.mubr.f32.mxu0 %v10043
        %10241 = vmatmul.mubr.f32.gmra.mrb[0].mxu0 %v9959
        %v10242 = vpop.f32.mrb[0].mxu0
        %v10243 = vadd.f32 %v9997, %v10242
        %v10244 = vpop.f32.mrb[0].mxu0
        %10245 = vmatprep.mubr.f32.mxu0 %v10045
        %10246 = vmatmul.mubr.f32.gmra.mrb[0].mxu0 %v9960
        %v10247 = vpop.f32.mrb[0].mxu0
        %v10248 = vadd.f32 %v9997, %v10247
        %v10249 = vpop.f32.mrb[0].mxu0
        %10250 = vmatprep.mubr.f32.mxu0 %v10047
        %10251 = vmatmul.mubr.f32.gmra.mrb[0].mxu0 %v9961
        %v10252 = vpop.f32.mrb[0].mxu0
        %v10253 = vadd.f32 %v9997, %v10252
        %v10254 = vpop.f32.mrb[0].mxu0
        %10255 = vmatprep.mubr.f32.mxu0 %v10049
        %10256 = vmatmul.mubr.f32.gmra.mrb[0].mxu0 %v9962
        %v10257 = vpop.f32.mrb[0].mxu0
        %v10258 = vadd.f32 %v9997, %v10257
        %v10259 = vpop.f32.mrb[0].mxu0
        %10260 = vmatprep.mubr.f32.mxu0 %v10051
        %10261 = vmatmul.mubr.f32.gmra.mrb[0].mxu0 %v9963
        %v10262 = vpop.f32.mrb[0].mxu0
        %v10263 = vadd.f32 %v9997, %v10262
        %v10264 = vpop.f32.mrb[0].mxu0
        %10265 = vmatprep.mubr.f32.mxu0 %v10053
        %10266 = vmatmul.mubr.f32.gmra.mrb[0].mxu0 %v9964
        %v10267 = vpop.f32.mrb[0].mxu0
        %v10268 = vadd.f32 %v9997, %v10267
        %v10269 = vpop.f32.mrb[0].mxu0
        %10270 = vmatprep.mubr.f32.mxu0 %v10055
        %10271 = vmatmul.mubr.f32.gmra.mrb[0].mxu0 %v9965
        %v10272 = vpop.f32.mrb[0].mxu0
        %v10273 = vadd.f32 %v9997, %v10272
        %v10274 = vpop.f32.mrb[0].mxu0
        %10275 = vmatprep.mubr.f32.mxu0 %v10057
        %10276 = vmatmul.mubr.f32.gmra.mrb[0].mxu0 %v9966
        %v10277 = vpop.f32.mrb[0].mxu0
        %v10278 = vadd.f32 %v9997, %v10277
        %v10279 = vpop.f32.mrb[0].mxu0
        %10280 = vmatprep.mubr.f32.mxu0 %v10059
        %10281 = vmatmul.mubr.f32.gmra.mrb[0].mxu0 %v9967
        %v10282 = vpop.f32.mrb[0].mxu0
        %v10283 = vadd.f32 %v9997, %v10282
        %v10284 = vpop.f32.mrb[0].mxu0
        %10285 = vmatprep.mubr.f32.mxu0 %v10061
        %10286 = vmatmul.mubr.f32.gmra.mrb[0].mxu0 %v9968
        %v10287 = vpop.f32.mrb[0].mxu0
        %v10288 = vadd.f32 %v9997, %v10287
        %v10289 = vpop.f32.mrb[0].mxu0
        %10290 = vdwg.mxu0
        %10291 = vxpose.xlu0.b32.start [1/16] %v10133, 128
        %10292 = vxpose.xlu0.b32.cont [2/16] %v10138, 128
        %10293 = vxpose.xlu0.b32.cont [3/16] %v10143, 128
        %10294 = vxpose.xlu0.b32.cont [4/16] %v10148, 128
        %10295 = vxpose.xlu0.b32.cont [5/16] %v10153, 128
        %10296 = vxpose.xlu0.b32.cont [6/16] %v10158, 128
        %10297 = vxpose.xlu0.b32.cont [7/16] %v10163, 128
        %10298 = vxpose.xlu0.b32.cont [8/16] %v10168, 128
        %10299 = vxpose.xlu0.b32.cont [9/16] %v10173, 128
        %10300 = vxpose.xlu0.b32.cont [10/16] %v10178, 128
        %10301 = vxpose.xlu0.b32.cont [11/16] %v10183, 128
        %10302 = vxpose.xlu0.b32.cont [12/16] %v10188, 128
        %10303 = vxpose.xlu0.b32.cont [13/16] %v10193, 128
        %10304 = vxpose.xlu0.b32.cont [14/16] %v10198, 128
        %10305 = vxpose.xlu0.b32.cont [15/16] %v10203, 128
        %10306 = vxpose.xlu0.b32.end [16/16] %v10208, 128
        %v10307 = vpop.trf.xlu0
        %v10308 = vpop.trf.xlu0
        %v10309 = vpop.trf.xlu0
        %v10310 = vpop.trf.xlu0
        %v10311 = vpop.trf.xlu0
        %v10312 = vpop.trf.xlu0
        %v10313 = vpop.trf.xlu0
        %v10314 = vpop.trf.xlu0
        %v10315 = vpop.trf.xlu0
        %v10316 = vpop.trf.xlu0
        %v10317 = vpop.trf.xlu0
        %v10318 = vpop.trf.xlu0
        %v10319 = vpop.trf.xlu0
        %v10320 = vpop.trf.xlu0
        %v10321 = vpop.trf.xlu0
        %v10322 = vpop.trf.xlu0
        %10323 = vxpose.xlu0.b32.start [1/16] %v10213, 128
        %10324 = vxpose.xlu0.b32.cont [2/16] %v10218, 128
        %10325 = vxpose.xlu0.b32.cont [3/16] %v10223, 128
        %10326 = vxpose.xlu0.b32.cont [4/16] %v10228, 128
        %10327 = vxpose.xlu0.b32.cont [5/16] %v10233, 128
        %10328 = vxpose.xlu0.b32.cont [6/16] %v10238, 128
        %10329 = vxpose.xlu0.b32.cont [7/16] %v10243, 128
        %10330 = vxpose.xlu0.b32.cont [8/16] %v10248, 128
        %10331 = vxpose.xlu0.b32.cont [9/16] %v10253, 128
        %10332 = vxpose.xlu0.b32.cont [10/16] %v10258, 128
        %10333 = vxpose.xlu0.b32.cont [11/16] %v10263, 128
        %10334 = vxpose.xlu0.b32.cont [12/16] %v10268, 128
        %10335 = vxpose.xlu0.b32.cont [13/16] %v10273, 128
        %10336 = vxpose.xlu0.b32.cont [14/16] %v10278, 128
        %10337 = vxpose.xlu0.b32.cont [15/16] %v10283, 128
        %10338 = vxpose.xlu0.b32.end [16/16] %v10288, 128
        %v10339 = vpop.trf.xlu0
        %v10340 = vpop.trf.xlu0
        %v10341 = vpop.trf.xlu0
        %v10342 = vpop.trf.xlu0
        %v10343 = vpop.trf.xlu0
        %v10344 = vpop.trf.xlu0
        %v10345 = vpop.trf.xlu0
        %v10346 = vpop.trf.xlu0
        %v10347 = vpop.trf.xlu0
        %v10348 = vpop.trf.xlu0
        %v10349 = vpop.trf.xlu0
        %v10350 = vpop.trf.xlu0
        %v10351 = vpop.trf.xlu0
        %v10352 = vpop.trf.xlu0
        %v10353 = vpop.trf.xlu0
        %v10354 = vpop.trf.xlu0
        %10355 = vst [vmem:[%s460] sm:$0xff] %v10307
        %10356 = vst [vmem:[%s460 + $0x8] sm:$0xff] %v10339
        %s10357 = sand.u32 %s335, 1
        %s10358 = scalar_lea.sflag [#allocation6], %s10357
        %s10359 = sand.u32 %s335, 1
        %s10360 = smul.addr %s10359, 16
        %s10361 = scalar_lea.vmem [#allocation5], %s10360
        // Predicated region
        $region77: #{tpu_custom_call.1} parent=75 // pred_check
          %p10362 = pneg %p345
        $region78: #{tpu_custom_call.1} parent=75 // pred_check_branch
          %10364 = sbr.rel (%p10362) target = $region80
        $region79: #{tpu_custom_call.1} parent=75 // pred_region
          %s10366 = ssub.s32 256, 256
          %10367 = vsyncadd %s10358, %s10366
          %s10368 = smul.addr %s28, 2
          %s10369 = smul.addr %s10368, 128
          %s10370 = scalar_lea.hbm %s14, %s10369
          %s10372 = sshll.u32 %s10361, 4
          %s10373 = int_to_ptr.vmem [resolvable:$true] %s10372
          %10375 = dma.vmem_to_hbm [thread:$0]  %s10373, 256, %s10370, %s10358
        $region80: #{tpu_custom_call.1} parent=75 // pred_fallthru
          _
      $region76: #{tpu_custom_call.1} parent=5 // pred_fallthru
        _
      %p10376 = scmp.le.s32.totalorder 2, %s23
      // Predicated region
      $region81: #{tpu_custom_call.1} parent=5 // pred_check
        %p10377 = pneg %p10376
      $region82: #{tpu_custom_call.1} parent=5 // pred_check_branch
        %10379 = sbr.rel (%p10377) target = $region84
      $region83: #{tpu_custom_call.1} parent=5 // pred_region
        %s10380 = ssub.s32 %s23, 2
        // Predicated region
        $region85: #{tpu_custom_call.1} parent=83 // pred_check
          %p10381 = pneg %p351
        $region86: #{tpu_custom_call.1} parent=83 // pred_check_branch
          %10383 = sbr.rel (%p10381) target = $region88
        $region87: #{tpu_custom_call.1} parent=83 // pred_region
          %s10384 = sand.u32 %s336, 1
          %s10385 = scalar_lea.sflag [#allocation6], %s10384
          %s10386 = sand.u32 %s336, 1
          %s10387 = smul.addr %s10386, 16
          %s10388 = scalar_lea.vmem [#allocation5], %s10387
          %10389 = dma.done %s10385, 256
        $region88: #{tpu_custom_call.1} parent=83 // pred_fallthru
          _
      $region84: #{tpu_custom_call.1} parent=5 // pred_fallthru
        _
    $region6: #{tpu_custom_call.1} parent=1 // loop_footer
      %s27 = sadd.s32 1, %s23
    $region7: #{tpu_custom_call.1} parent=1 // loop_footer_branch
      %22 = sbr.rel target = $region3
    $region8: #{tpu_custom_call.1} parent=1 // loop_exit
      _
    %10390 = vsyncpa [#allocation6], 1
    %s10391 = scalar_lea.sflag [#allocation6], 1
    %10392 = vsyncpa %s10391, 1

</llo_original>
